<compile_context>
chip_gen: v5e
topology: v5e:2x2
jax: 0.10.0
libtpu: 0.0.40
codegen_flags: <defaults>
</compile_context>

<pallas_src>
import jax
import jax.numpy as jnp
from jax.experimental import pallas as pl
from jax.experimental.pallas import tpu as pltpu

VMEM = pltpu.MemorySpace.VMEM
NEG_INF = -1e30                       # Python literal (safe since lengths >= 1)
VMEM_LIMIT = 48 * 1024 * 1024         # < v7x's 64 MiB physical; above defaults


def _softmax(x, axis=-1):
    x = x - jnp.max(x, axis=axis, keepdims=True)
    e = jnp.exp(x)
    return e * pl.reciprocal(jnp.sum(e, axis=axis, keepdims=True))


def _length_mask(T, lengths):
    return (jnp.arange(T)[None, :] < lengths[:, None]).astype(jnp.float32)


def _pick_tile(T):
    """Tc tile that satisfies the (8,128)/full-dim BlockSpec constraint."""
    if T % 256 == 0 and T > 256:
        return 256
    if T % 128 == 0 and T > 128:
        return 128
    return T


# --------------------------------------------------------------------------
# LSTM input projection: one matmul, two per-direction outputs, tiled over M
# --------------------------------------------------------------------------

def _proj_kernel(x_ref, w_ref, b_ref, of_ref, ob_ref):
    # bf16 matmul operands, f32 accumulate; bias add in f32.
    g = jnp.dot(x_ref[...].astype(jnp.bfloat16),
                w_ref[...].astype(jnp.bfloat16),
                preferred_element_type=jnp.float32) + b_ref[...]
    G4 = of_ref.shape[-1]
    of_ref[...] = g[:, :G4]
    ob_ref[...] = g[:, G4:]


def lstm_in_proj(x2d, wih, b):
    """x2d: (M, K), wih: (K, 8H) cols [fwd i,f,o,g | bwd i,f,o,g], b: (1, 8H).
    Returns (gx_fwd, gx_bwd), each (M, 4H) float32."""
    M, K = x2d.shape
    G8 = wih.shape[1]
    G4 = G8 // 2
    tm = 256 if (M % 256 == 0 and M > 256) else M
    nblk = M // tm
    cost = pl.CostEstimate(flops=2 * M * K * G8, transcendentals=0,
                           bytes_accessed=4 * (M * K + K * G8 + G8 + M * G8))
    return pl.pallas_call(
        _proj_kernel,
        out_shape=(jax.ShapeDtypeStruct((M, G4), jnp.float32),
                   jax.ShapeDtypeStruct((M, G4), jnp.float32)),
        grid_spec=pltpu.PrefetchScalarGridSpec(
            num_scalar_prefetch=0,
            grid=(nblk,),
            in_specs=[pl.BlockSpec((tm, K), lambda i: (i, 0)),
                      pl.BlockSpec((K, G8), lambda i: (0, 0)),
                      pl.BlockSpec((1, G8), lambda i: (0, 0))],
            out_specs=[pl.BlockSpec((tm, G4), lambda i: (i, 0)),
                       pl.BlockSpec((tm, G4), lambda i: (i, 0))]),
        compiler_params=pltpu.CompilerParams(
            dimension_semantics=("parallel",),
            vmem_limit_bytes=VMEM_LIMIT),
        cost_estimate=cost,
    )(x2d, wih, b)


# --------------------------------------------------------------------------
# Fused bidirectional LSTM recurrence kernel
# --------------------------------------------------------------------------

def _bilstm_kernel(gxf_ref, gxb_ref, whh_ref, mf_ref, mb_ref, hf_ref, hb_ref,
                   h_sc, c_sc):
    """One TBLK-timestep block of the fused fwd+bwd LSTM recurrence.

    gxf_ref: (B, TBLK, 4H) fwd input gates [i,f,o,g], forward-order block
    gxb_ref: (B, TBLK, 4H) bwd input gates [i,f,o,g], mirrored block
    whh_ref: (2H, 8H) block-diagonal recurrent weights (fwd rows 0:H -> cols
             0:4H, bwd rows H:2H -> cols 4H:8H), gate order [i,f,o,g]
    mf_ref : (B, TBLK, 1) validity mask, forward-order block
    mb_ref : (B, TBLK, 1) validity mask, mirrored block
    hf_ref : (B, TBLK*H) lane-dense fwd hidden slab (forward-order block)
    hb_ref : (B, TBLK*H) lane-dense bwd hidden slab (mirrored block)
    h_sc/c_sc: (B, 2H) carried states [fwd | bwd]
    """
    @pl.when(pl.program_id(0) == 0)
    def _():
        h_sc[...] = jnp.zeros_like(h_sc)
        c_sc[...] = jnp.zeros_like(c_sc)

    B, TBLK, G4 = gxf_ref.shape
    H = G4 // 4
    H3 = 3 * H

    whh = whh_ref[...]               # (2H, 8H), resident across the block
    gxf = gxf_ref[...]
    gxb = gxb_ref[...]
    mf = mf_ref[...]                 # (B, TBLK, 1)
    mb = mb_ref[...]

    h2 = h_sc[...]                   # (B, 2H)  [h_fwd | h_bwd]
    c2 = c_sc[...]                   # (B, 2H)  [c_fwd | c_bwd]

    hf_out = [None] * TBLK
    hb_out = [None] * TBLK
    # TBLK is a small static constant -> unrolled inner loop; all per-step
    # hidden outputs are kept in vregs and stored once per block.
    for k in range(TBLK):
        tb = TBLK - 1 - k

        # ONE fused recurrent matmul for both directions (block-diagonal whh).
        pre = jnp.dot(h2, whh, preferred_element_type=jnp.float32)   # (B, 8H)
        zf = pre[:, :G4] + gxf[:, k, :]
        zb = pre[:, G4:] + gxb[:, tb, :]

        # gate order [i, f, o | g]: one sigmoid + one tanh per direction.
        ifo_f = jax.nn.sigmoid(zf[:, :H3])
        g_f = jnp.tanh(zf[:, H3:])
        ifo_b = jax.nn.sigmoid(zb[:, :H3])
        g_b = jnp.tanh(zb[:, H3:])

        m_b = mb[:, tb, :]                                    # (B, 1)
        c_f = ifo_f[:, H:2 * H] * c2[:, :H] + ifo_f[:, :H] * g_f
        c_b = (ifo_b[:, H:2 * H] * c2[:, H:] + ifo_b[:, :H] * g_b) * m_b
        h_f = ifo_f[:, 2 * H:H3] * jnp.tanh(c_f)
        h_b = ifo_b[:, 2 * H:H3] * jnp.tanh(c_b) * m_b        # stays 0 in pad

        hf_out[k] = h_f * mf[:, k, :]                         # pad_packed zeroing
        hb_out[tb] = h_b
        h2 = jnp.concatenate([h_f, h_b], axis=1)
        c2 = jnp.concatenate([c_f, c_b], axis=1)

    h_sc[...] = h2
    c_sc[...] = c2
    # single lane-dense store per direction per grid step
    hf_ref[...] = jnp.concatenate(hf_out, axis=1)
    hb_ref[...] = jnp.concatenate(hb_out, axis=1)


def bilstm_recurrence(gx_fwd, gx_bwd, whh_blk, mask, tblk=32):
    """gx_*: (B, T, 4H); whh_blk: (2H, 8H) block-diagonal; mask: (B, T) f32.
    Returns (h_fwd, h_bwd), each (B, T, H) with padded timesteps zeroed."""
    B, T, G4 = gx_fwd.shape
    H = G4 // 4
    tblk = min(tblk, T)
    Tp = -(-T // tblk) * tblk
    if Tp != T:
        pad = Tp - T
        gx_fwd = jnp.pad(gx_fwd, ((0, 0), (0, pad), (0, 0)))
        gx_bwd = jnp.pad(gx_bwd, ((0, 0), (0, pad), (0, 0)))
        mask = jnp.pad(mask, ((0, 0), (0, pad)))
    nblk = Tp // tblk
    if nblk > 1 and (tblk * H) % 128 != 0:
        # keep the output slab store lane-dense (full-dim block fallback)
        tblk, nblk = Tp, 1
    mask3 = mask[:, :, None]

    grid_spec = pltpu.PrefetchScalarGridSpec(
        num_scalar_prefetch=0,
        grid=(nblk,),
        in_specs=[
            pl.BlockSpec((B, tblk, G4), lambda i: (0, i, 0)),
            pl.BlockSpec((B, tblk, G4), lambda i: (0, nblk - 1 - i, 0)),
            pl.BlockSpec((2 * H, 8 * H), lambda i: (0, 0)),
            pl.BlockSpec((B, tblk, 1), lambda i: (0, i, 0)),
            pl.BlockSpec((B, tblk, 1), lambda i: (0, nblk - 1 - i, 0)),
        ],
        out_specs=[
            pl.BlockSpec((B, tblk * H), lambda i: (0, i)),
            pl.BlockSpec((B, tblk * H), lambda i: (0, nblk - 1 - i)),
        ],
        scratch_shapes=[pltpu.VMEM((B, 2 * H), jnp.float32),
                        pltpu.VMEM((B, 2 * H), jnp.float32)],
    )
    hf, hb = pl.pallas_call(
        _bilstm_kernel,
        out_shape=(jax.ShapeDtypeStruct((B, Tp * H), jnp.float32),
                   jax.ShapeDtypeStruct((B, Tp * H), jnp.float32)),
        grid_spec=grid_spec,
        compiler_params=pltpu.CompilerParams(
            dimension_semantics=("arbitrary",),     # sequential recurrence
            vmem_limit_bytes=VMEM_LIMIT),
    )(gx_fwd, gx_bwd, whh_blk, mask3, mask3)
    hf = hf.reshape(B, Tp, H)[:, :T]
    hb = hb.reshape(B, Tp, H)[:, :T]
    return hf, hb


def bidir_lstm(x, lengths, p, tblk=32):
    """Bidirectional LSTM with pack/pad semantics. x: (B, T, Din) -> (B, T, 2H)."""
    B, T, Din = x.shape
    H = p['whh'].shape[0] // 2
    gxf, gxb = lstm_in_proj(x.reshape(B * T, Din), p['wih'], p['b'])
    mask = _length_mask(T, lengths)
    hf, hb = bilstm_recurrence(gxf.reshape(B, T, 4 * H),
                               gxb.reshape(B, T, 4 * H),
                               p['whh'], mask, tblk=tblk)
    return jnp.concatenate([hf, hb], axis=-1)     # padding already zeroed


def shared_encoder(xc, clen, xq, qlen, p, tblk=32):
    """Shared contextual bidirectional LSTM; one batched input projection for
    both the context and question token rows."""
    B, Tc, Din = xc.shape
    Tq = xq.shape[1]
    H = p['whh'].shape[0] // 2
    rows = jnp.concatenate([xc.reshape(B * Tc, Din), xq.reshape(B * Tq, Din)],
                           axis=0)
    gf, gb = lstm_in_proj(rows, p['wih'], p['b'])
    gcf = gf[:B * Tc].reshape(B, Tc, 4 * H)
    gcb = gb[:B * Tc].reshape(B, Tc, 4 * H)
    gqf = gf[B * Tc:].reshape(B, Tq, 4 * H)
    gqb = gb[B * Tc:].reshape(B, Tq, 4 * H)
    cmask = _length_mask(Tc, clen)
    qmask = _length_mask(Tq, qlen)
    hcf, hcb = bilstm_recurrence(gcf, gcb, p['whh'], cmask, tblk=tblk)
    hqf, hqb = bilstm_recurrence(gqf, gqb, p['whh'], qmask, tblk=tblk)
    hc = jnp.concatenate([hcf, hcb], axis=-1)
    hq = jnp.concatenate([hqf, hqb], axis=-1)
    return hc, hq


# --------------------------------------------------------------------------
# Attention flow (Similarity + Context2Query + Query2Context -> G), Tc-tiled
# --------------------------------------------------------------------------

def _attn_c2q_kernel(h_ref, u_ref, w_ref, b_ref, cmask_ref, qmask_ref,
                     c2q_ref, m_ref):
    h = h_ref[...]                                  # (B, tc, 2d)
    u = u_ref[...]                                  # (B, Tq, 2d)
    B, tc, D2 = h.shape
    w = w_ref[...]                                  # (3, 2d) rows [w1, w2, w3]
    w1 = w[0:1, :].reshape(1, 1, D2)
    w2 = w[1:2, :].reshape(1, 1, D2)
    w3 = w[2:3, :].reshape(1, 1, D2)

    # S = (h*w3)@u^T + (h.w1) + (u.w2) + bias : one K=2d MXU matmul + rank-1s.
    ub = u.astype(jnp.bfloat16)
    S = jnp.einsum('btk,bjk->btj', (h * w3).astype(jnp.bfloat16), ub,
                   preferred_element_type=jnp.float32)
    s1 = jnp.sum(h * w1, axis=-1, keepdims=True)    # (B, tc, 1)
    s2 = jnp.sum(u * w2, axis=-1)[:, None, :]       # (B, 1, Tq)
    S = S + s1 + s2 + b_ref[...]                    # (B, tc, Tq)

    qm = qmask_ref[...]                             # (B, Tq)
    S = jnp.where(qm[:, None, :] > 0, S, NEG_INF)

    att = _softmax(S, axis=-1)
    c2q_ref[...] = jnp.einsum('btj,bjd->btd', att.astype(jnp.bfloat16), ub,
                              preferred_element_type=jnp.float32)

    cm = cmask_ref[...]                             # (B, tc, 1)
    m_ref[...] = jnp.where(cm > 0, jnp.max(S, axis=-1, keepdims=True), NEG_INF)


def _q2c_kernel(m_ref, h_ref, q2c_ref):
    beta = _softmax(m_ref[...], axis=1)             # (B, Tc, 1), masked already
    q2c_ref[...] = jnp.sum(beta * h_ref[...], axis=1)    # (B, 2d)


def _attn_g_kernel(h_ref, c2q_ref, q2c_ref, g_ref):
    h = h_ref[...]
    c2q = c2q_ref[...]
    q2c = q2c_ref[...][:, None, :]                  # (B, 1, 2d)
    g_ref[...] = jnp.concatenate([h, c2q, h * c2q, h * q2c], axis=-1)


def attention_flow(h_ctx, u_q, sim_w, sim_b, cmask, qmask):
    B, Tc, D2 = h_ctx.shape
    Tq = u_q.shape[1]
    tc = _pick_tile(Tc)
    ntc = Tc // tc
    cmask3 = cmask[:, :, None]
    cparams = pltpu.CompilerParams(dimension_semantics=("parallel",),
                                   vmem_limit_bytes=VMEM_LIMIT)

    c2q, m = pl.pallas_call(
        _attn_c2q_kernel,
        out_shape=(jax.ShapeDtypeStruct((B, Tc, D2), jnp.float32),
                   jax.ShapeDtypeStruct((B, Tc, 1), jnp.float32)),
        grid_spec=pltpu.PrefetchScalarGridSpec(
            num_scalar_prefetch=0,
            grid=(ntc,),
            in_specs=[pl.BlockSpec((B, tc, D2), lambda i: (0, i, 0)),
                      pl.BlockSpec((B, Tq, D2), lambda i: (0, 0, 0)),
                      pl.BlockSpec((3, D2), lambda i: (0, 0)),
                      pl.BlockSpec((1, 1), lambda i: (0, 0)),
                      pl.BlockSpec((B, tc, 1), lambda i: (0, i, 0)),
                      pl.BlockSpec((B, Tq), lambda i: (0, 0))],
            out_specs=[pl.BlockSpec((B, tc, D2), lambda i: (0, i, 0)),
                       pl.BlockSpec((B, tc, 1), lambda i: (0, i, 0))]),
        compiler_params=cparams,
    )(h_ctx, u_q, sim_w, sim_b, cmask3, qmask)

    q2c = pl.pallas_call(
        _q2c_kernel,
        out_shape=jax.ShapeDtypeStruct((B, D2), jnp.float32),
        in_specs=[pl.BlockSpec(memory_space=VMEM),
                  pl.BlockSpec(memory_space=VMEM)],
        out_specs=pl.BlockSpec(memory_space=VMEM),
    )(m, h_ctx)

    G = pl.pallas_call(
        _attn_g_kernel,
        out_shape=jax.ShapeDtypeStruct((B, Tc, 4 * D2), jnp.float32),
        grid_spec=pltpu.PrefetchScalarGridSpec(
            num_scalar_prefetch=0,
            grid=(ntc,),
            in_specs=[pl.BlockSpec((B, tc, D2), lambda i: (0, i, 0)),
                      pl.BlockSpec((B, tc, D2), lambda i: (0, i, 0)),
                      pl.BlockSpec((B, D2), lambda i: (0, 0))],
            out_specs=pl.BlockSpec((B, tc, 4 * D2), lambda i: (0, i, 0))),
        compiler_params=cparams,
    )(h_ctx, c2q, q2c)
    return G


# --------------------------------------------------------------------------
# Fused start/end pointer layers: Tc-tiled MXU logits + tiny softmax kernel
# --------------------------------------------------------------------------

def _out_logits_kernel(g_ref, m_ref, m2_ref, wg_ref, wm_ref, b_ref, cmask_ref,
                       logit_ref):
    g = g_ref[...]                                  # (B, tc, 8d)
    m = m_ref[...]                                  # (B, tc, 2d)
    m2 = m2_ref[...]                                # (B, tc, 2d)
    B, tc, D8 = g.shape
    D2 = m.shape[-1]
    wg = jnp.broadcast_to(wg_ref[...], (B, D8, 2))  # cols [start, end]
    wm = jnp.broadcast_to(wm_ref[...], (B, D2, 2))  # col0 with M, col1 with M2

    # [G; M] . w_start and [G; M2] . w_end on the MXU; the (B,Tc,10d)
    # concatenations never materialize.
    lg = jnp.einsum('btd,bdk->btk', g, wg, preferred_element_type=jnp.float32)
    lm = jnp.einsum('btd,bdk->btk', m, wm, preferred_element_type=jnp.float32)
    lm2 = jnp.einsum('btd,bdk->btk', m2, wm, preferred_element_type=jnp.float32)

    logits = lg + jnp.concatenate([lm[:, :, 0:1], lm2[:, :, 1:2]], axis=-1)
    logits = logits + b_ref[...]                    # (1,2) broadcasts
    cm = cmask_ref[...] > 0                         # (B, tc, 1)
    logit_ref[...] = jnp.where(cm, logits, NEG_INF)


def _softmax_pair_kernel(logit_ref, ps_ref, pe_ref):
    x = logit_ref[...]                              # (B, Tc, 2), masked
    x = x - jnp.max(x, axis=1, keepdims=True)
    e = jnp.exp(x)
    p = e * pl.reciprocal(jnp.sum(e, axis=1, keepdims=True))
    ps_ref[...] = p[:, :, 0:1]
    pe_ref[...] = p[:, :, 1:2]


def output_layers(G, M, M2, w_g, w_m, b, cmask):
    B, Tc, D8 = G.shape
    D2 = M.shape[-1]
    tc = _pick_tile(Tc)
    ntc = Tc // tc
    cmask3 = cmask[:, :, None]

    logits = pl.pallas_call(
        _out_logits_kernel,
        out_shape=jax.ShapeDtypeStruct((B, Tc, 2), jnp.float32),
        grid_spec=pltpu.PrefetchScalarGridSpec(
            num_scalar_prefetch=0,
            grid=(ntc,),
            in_specs=[pl.BlockSpec((B, tc, D8), lambda i: (0, i, 0)),
                      pl.BlockSpec((B, tc, D2), lambda i: (0, i, 0)),
                      pl.BlockSpec((B, tc, D2), lambda i: (0, i, 0)),
                      pl.BlockSpec((D8, 2), lambda i: (0, 0)),
                      pl.BlockSpec((D2, 2), lambda i: (0, 0)),
                      pl.BlockSpec((1, 2), lambda i: (0, 0)),
                      pl.BlockSpec((B, tc, 1), lambda i: (0, i, 0))],
            out_specs=pl.BlockSpec((B, tc, 2), lambda i: (0, i, 0))),
        compiler_params=pltpu.CompilerParams(
            dimension_semantics=("parallel",),
            vmem_limit_bytes=VMEM_LIMIT),
    )(G, M, M2, w_g, w_m, b, cmask3)

    ps, pe = pl.pallas_call(
        _softmax_pair_kernel,
        out_shape=(jax.ShapeDtypeStruct((B, Tc, 1), jnp.float32),
                   jax.ShapeDtypeStruct((B, Tc, 1), jnp.float32)),
        in_specs=[pl.BlockSpec(memory_space=VMEM)],
        out_specs=(pl.BlockSpec(memory_space=VMEM),
                   pl.BlockSpec(memory_space=VMEM)),
    )(logits)
    return ps[..., 0], pe[..., 0]


# --------------------------------------------------------------------------
# Parameters (deterministic synthetic init)
# --------------------------------------------------------------------------

def _bidir_params(key, in_dim, hidden):
    # Gate order per direction is [i, f, o, g] (PyTorch is [i, f, g, o]).
    # To load real PyTorch weights: wih = concat([W_ih_f.T[:, perm],
    # W_ih_b.T[:, perm]], 1); whh = block_diag(W_hh_f.T[:, perm],
    # W_hh_b.T[:, perm]); b = concat([(b_ih+b_hh)_f[perm], (b_ih+b_hh)_b[perm]]).
    k1, k2, k3, k4 = jax.random.split(key, 4)
    H = hidden
    whh_f = 0.1 * jax.random.normal(k2, (H, 4 * H), jnp.float32)
    whh_b = 0.1 * jax.random.normal(k4, (H, 4 * H), jnp.float32)
    whh = jnp.zeros((2 * H, 8 * H), jnp.float32)
    whh = whh.at[:H, :4 * H].set(whh_f).at[H:, 4 * H:].set(whh_b)
    return {
        'wih': 0.1 * jax.random.normal(k1, (in_dim, 8 * H), jnp.float32),
        'whh': whh,
        'b': 0.1 * jax.random.normal(k3, (1, 8 * H), jnp.float32),
    }


def init_params(key, vocab_size, d, padding_idx=0):
    keys = jax.random.split(key, 9)
    emb = 0.1 * jax.random.normal(keys[0], (vocab_size, d), jnp.float32)
    emb = emb.at[padding_idx].set(0.0)
    return {
        'embedding': emb,
        'ctx_lstm': _bidir_params(keys[1], d, d),
        'model_l0': _bidir_params(keys[2], 8 * d, d),
        'model_l1': _bidir_params(keys[3], 2 * d, d),
        'm2_lstm': _bidir_params(keys[4], 2 * d, d),
        # Similarity weight split: rows [w1 (h part), w2 (u part), w3 (h*u part)]
        'sim_w': 0.1 * jax.random.normal(keys[5], (3, 2 * d), jnp.float32),
        'sim_b': jnp.zeros((1, 1), jnp.float32),
        # OutputLayer 10d weight split at 8d (G) / 2d (M or M2); cols [start, end]
        'out_w_g': 0.1 * jax.random.normal(keys[6], (8 * d, 2), jnp.float32),
        'out_w_m': 0.1 * jax.random.normal(keys[7], (2 * d, 2), jnp.float32),
        'out_b': jnp.zeros((1, 2), jnp.float32),
    }


# --------------------------------------------------------------------------
# BIDAF forward
# --------------------------------------------------------------------------

@jax.jit
def bidaf_forward(params, context, context_length, question, question_length):
    Tc = context.shape[1]
    Tq = question.shape[1]
    cmask = _length_mask(Tc, context_length)
    qmask = _length_mask(Tq, question_length)

    # Embedding lookup (glue).
    embed_context = jnp.take(params['embedding'], context, axis=0)
    embed_question = jnp.take(params['embedding'], question, axis=0)

    # Contextual encoding (shared bidirectional LSTM, batched projection).
    contextual_context, contextual_question = shared_encoder(
        embed_context, context_length, embed_question, question_length,
        params['ctx_lstm'])                                  # (B,Tc,2d),(B,Tq,2d)

    # Attention flow: similarity + context2query + query2context -> G.
    G = attention_flow(contextual_context, contextual_question,
                       params['sim_w'], params['sim_b'], cmask, qmask)

    # Modeling layers: 2-layer bidirectional LSTM, then the end-pointer LSTM.
    M = bidir_lstm(G, context_length, params['model_l0'])
    M = bidir_lstm(M, context_length, params['model_l1'])    # (B, Tc, 2d)
    M2 = bidir_lstm(M, context_length, params['m2_lstm'])    # (B, Tc, 2d)

    # Fused start/end pointers.
    probability_start, probability_end = output_layers(
        G, M, M2, params['out_w_g'], params['out_w_m'], params['out_b'], cmask)
    return probability_start, probability_end


# --------------------------------------------------------------------------
# Main
# --------------------------------------------------------------------------

if __name__ == "__main__":
    vocab_size = 50
    embedding_dim = 16
    padding_idx = 0
    B, Tc, Tq = 2, 16, 8

    key = jax.random.PRNGKey(0)
    k_param, k_ctx, k_q = jax.random.split(key, 3)
    params = init_params(k_param, vocab_size, embedding_dim, padding_idx)

    # lengths >= 1 assumed (a fully-masked row would give a uniform softmax).
    context_length = jnp.array([16, 11], jnp.int32)
    question_length = jnp.array([8, 5], jnp.int32)

    context = jax.random.randint(k_ctx, (B, Tc), 1, vocab_size, jnp.int32)
    question = jax.random.randint(k_q, (B, Tq), 1, vocab_size, jnp.int32)
    context = jnp.where(jnp.arange(Tc)[None, :] < context_length[:, None],
                        context, padding_idx)
    question = jnp.where(jnp.arange(Tq)[None, :] < question_length[:, None],
                         question, padding_idx)

    p_start, p_end = bidaf_forward(params, context, context_length,
                                   question, question_length)
    jax.block_until_ready((p_start, p_end))

    assert p_start.shape == (B, Tc) and p_end.shape == (B, Tc)
    assert bool(jnp.all(jnp.isfinite(p_start))) and bool(jnp.all(jnp.isfinite(p_end)))
    print("KERNEL_OK")
</pallas_src>

<mosaic_0001>
module attributes {stable_mosaic.version = 11 : i64} {
  func.func @_proj_kernel(%arg0: i32, %arg1: memref<48x16xf32, #tpu.memory_space<vmem>>, %arg2: memref<16x128xf32, #tpu.memory_space<vmem>>, %arg3: memref<1x128xf32, #tpu.memory_space<vmem>>, %arg4: memref<48x64xf32, #tpu.memory_space<vmem>>, %arg5: memref<48x64xf32, #tpu.memory_space<vmem>>) attributes {dimension_semantics = [#tpu.dimension_semantics<parallel>], iteration_bounds = array<i64: 1>, scalar_prefetch = 0 : i64, scratch_operands = 0 : i64, tpu.core_type = #tpu.core_type<tc>, window_params = [{transform_indices = @transform_0, window_bounds = array<i64: 48, 16>}, {pipeline_mode = #tpu.pipeline_mode<synchronous>, transform_indices = @transform_1, window_bounds = array<i64: 16, 128>}, {pipeline_mode = #tpu.pipeline_mode<synchronous>, transform_indices = @transform_2, window_bounds = array<i64: 1, 128>}, {transform_indices = @transform_3, window_bounds = array<i64: 48, 64>}, {transform_indices = @transform_4, window_bounds = array<i64: 48, 64>}]} {
    %c0 = arith.constant 0 : index
    %c0_0 = arith.constant 0 : index
    %0 = vector.load %arg1[%c0, %c0_0] : memref<48x16xf32, #tpu.memory_space<vmem>>, vector<48x16xf32>
    %1 = arith.truncf %0 : vector<48x16xf32> to vector<48x16xbf16>
    %c0_1 = arith.constant 0 : index
    %c0_2 = arith.constant 0 : index
    %2 = vector.load %arg2[%c0_1, %c0_2] : memref<16x128xf32, #tpu.memory_space<vmem>>, vector<16x128xf32>
    %3 = arith.truncf %2 : vector<16x128xf32> to vector<16x128xbf16>
    %cst = arith.constant dense<0.000000e+00> : vector<48x128xf32>
    %4 = tpu.matmul %1, %3, %cst {dimension_numbers = #tpu.dot_dimension_numbers<[1], [0], [0], [1], [0, 0, 1, 1], [], []>} : vector<48x16xbf16>, vector<16x128xbf16>, vector<48x128xf32> -> vector<48x128xf32>
    %c0_3 = arith.constant 0 : index
    %c0_4 = arith.constant 0 : index
    %5 = vector.load %arg3[%c0_3, %c0_4] : memref<1x128xf32, #tpu.memory_space<vmem>>, vector<1x128xf32>
    %6 = vector.broadcast %5 : vector<1x128xf32> to vector<48x128xf32>
    %7 = arith.addf %4, %6 : vector<48x128xf32>
    %8 = vector.extract_strided_slice %7 {offsets = [0, 0], sizes = [48, 64], strides = [1, 1]} : vector<48x128xf32> to vector<48x64xf32>
    %c0_5 = arith.constant 0 : index
    %c0_6 = arith.constant 0 : index
    %9 = vector.load %arg4[%c0_5, %c0_6] : memref<48x64xf32, #tpu.memory_space<vmem>>, vector<48x64xf32>
    tpu.vector_store %arg4[%c0_5, %c0_6], %8 {strides = array<i32>} : memref<48x64xf32, #tpu.memory_space<vmem>>, vector<48x64xf32>,
    %10 = vector.extract_strided_slice %7 {offsets = [0, 64], sizes = [48, 64], strides = [1, 1]} : vector<48x128xf32> to vector<48x64xf32>
    %c0_7 = arith.constant 0 : index
    %c0_8 = arith.constant 0 : index
    %11 = vector.load %arg5[%c0_7, %c0_8] : memref<48x64xf32, #tpu.memory_space<vmem>>, vector<48x64xf32>
    tpu.vector_store %arg5[%c0_7, %c0_8], %10 {strides = array<i32>} : memref<48x64xf32, #tpu.memory_space<vmem>>, vector<48x64xf32>,
    return
  }
  func.func @transform_0(%arg0: i32) -> (i32, i32) {
    %c0_i32 = arith.constant 0 : i32
    %c0_i32_0 = arith.constant 0 : i32
    return %arg0, %c0_i32 : i32, i32
  }
  func.func @transform_1(%arg0: i32) -> (i32, i32) {
    %c0_i32 = arith.constant 0 : i32
    %c0_i32_0 = arith.constant 0 : i32
    %c0_i32_1 = arith.constant 0 : i32
    return %c0_i32, %c0_i32_0 : i32, i32
  }
  func.func @transform_2(%arg0: i32) -> (i32, i32) {
    %c0_i32 = arith.constant 0 : i32
    %c0_i32_0 = arith.constant 0 : i32
    %c0_i32_1 = arith.constant 0 : i32
    return %c0_i32, %c0_i32_0 : i32, i32
  }
  func.func @transform_3(%arg0: i32) -> (i32, i32) {
    %c0_i32 = arith.constant 0 : i32
    %c0_i32_0 = arith.constant 0 : i32
    return %arg0, %c0_i32 : i32, i32
  }
  func.func @transform_4(%arg0: i32) -> (i32, i32) {
    %c0_i32 = arith.constant 0 : i32
    %c0_i32_0 = arith.constant 0 : i32
    return %arg0, %c0_i32 : i32, i32
  }
}

module attributes {stable_mosaic.version = 11 : i64} {
  func.func @_attn_c2q_kernel(%arg0: i32, %arg1: memref<2x16x32xf32, #tpu.memory_space<vmem>>, %arg2: memref<2x8x32xf32, #tpu.memory_space<vmem>>, %arg3: memref<3x32xf32, #tpu.memory_space<vmem>>, %arg4: memref<1x1xf32, #tpu.memory_space<vmem>>, %arg5: memref<2x16x1xf32, #tpu.memory_space<vmem>>, %arg6: memref<2x8xf32, #tpu.memory_space<vmem>>, %arg7: memref<2x16x32xf32, #tpu.memory_space<vmem>>, %arg8: memref<2x16x1xf32, #tpu.memory_space<vmem>>) attributes {dimension_semantics = [#tpu.dimension_semantics<parallel>], iteration_bounds = array<i64: 1>, scalar_prefetch = 0 : i64, scratch_operands = 0 : i64, tpu.core_type = #tpu.core_type<tc>, window_params = [{transform_indices = @transform_0, window_bounds = array<i64: 2, 16, 32>}, {pipeline_mode = #tpu.pipeline_mode<synchronous>, transform_indices = @transform_1, window_bounds = array<i64: 2, 8, 32>}, {pipeline_mode = #tpu.pipeline_mode<synchronous>, transform_indices = @transform_2, window_bounds = array<i64: 3, 32>}, {pipeline_mode = #tpu.pipeline_mode<synchronous>, transform_indices = @transform_3, window_bounds = array<i64: 1, 1>}, {transform_indices = @transform_4, window_bounds = array<i64: 2, 16, 1>}, {pipeline_mode = #tpu.pipeline_mode<synchronous>, transform_indices = @transform_5, window_bounds = array<i64: 2, 8>}, {transform_indices = @transform_6, window_bounds = array<i64: 2, 16, 32>}, {transform_indices = @transform_7, window_bounds = array<i64: 2, 16, 1>}]} {
    %c0 = arith.constant 0 : index
    %c0_0 = arith.constant 0 : index
    %c0_1 = arith.constant 0 : index
    %0 = vector.load %arg1[%c0, %c0_0, %c0_1] : memref<2x16x32xf32, #tpu.memory_space<vmem>>, vector<2x16x32xf32>
    %c0_2 = arith.constant 0 : index
    %c0_3 = arith.constant 0 : index
    %c0_4 = arith.constant 0 : index
    %1 = vector.load %arg2[%c0_2, %c0_3, %c0_4] : memref<2x8x32xf32, #tpu.memory_space<vmem>>, vector<2x8x32xf32>
    %c0_5 = arith.constant 0 : index
    %c0_6 = arith.constant 0 : index
    %2 = vector.load %arg3[%c0_5, %c0_6] : memref<3x32xf32, #tpu.memory_space<vmem>>, vector<3x32xf32>
    %3 = vector.extract_strided_slice %2 {offsets = [0, 0], sizes = [1, 32], strides = [1, 1]} : vector<3x32xf32> to vector<1x32xf32>
    %4 = vector.shape_cast %3 : vector<1x32xf32> to vector<1x1x32xf32>
    %5 = vector.extract_strided_slice %2 {offsets = [1, 0], sizes = [1, 32], strides = [1, 1]} : vector<3x32xf32> to vector<1x32xf32>
    %6 = vector.shape_cast %5 : vector<1x32xf32> to vector<1x1x32xf32>
    %7 = vector.extract_strided_slice %2 {offsets = [2, 0], sizes = [1, 32], strides = [1, 1]} : vector<3x32xf32> to vector<1x32xf32>
    %8 = vector.shape_cast %7 : vector<1x32xf32> to vector<1x1x32xf32>
    %9 = arith.truncf %1 : vector<2x8x32xf32> to vector<2x8x32xbf16>
    %10 = vector.broadcast %8 : vector<1x1x32xf32> to vector<2x16x32xf32>
    %11 = arith.mulf %0, %10 : vector<2x16x32xf32>
    %12 = arith.truncf %11 : vector<2x16x32xf32> to vector<2x16x32xbf16>
    "tpu.trace_start"() <{level = 10 : i32, message = "btk,bjk->btj"}> : () -> ()
    %cst = arith.constant dense<0.000000e+00> : vector<2x16x8xf32>
    %13 = tpu.matmul %12, %9, %cst {dimension_numbers = #tpu.dot_dimension_numbers<[2], [2], [1], [1], [0, 0, 0, 1, 1, 1], [0], [0]>} : vector<2x16x32xbf16>, vector<2x8x32xbf16>, vector<2x16x8xf32> -> vector<2x16x8xf32>
    "tpu.trace_stop"() : () -> ()
    %14 = vector.broadcast %4 : vector<1x1x32xf32> to vector<2x16x32xf32>
    %15 = arith.mulf %0, %14 : vector<2x16x32xf32>
    %cst_7 = arith.constant dense<0.000000e+00> : vector<2x16xf32>
    %16 = vector.multi_reduction <add>, %15, %cst_7 [2] : vector<2x16x32xf32> to vector<2x16xf32>
    %17 = vector.shape_cast %16 : vector<2x16xf32> to vector<2x16x1xf32>
    %18 = vector.broadcast %6 : vector<1x1x32xf32> to vector<2x8x32xf32>
    %19 = arith.mulf %1, %18 : vector<2x8x32xf32>
    %cst_8 = arith.constant dense<0.000000e+00> : vector<2x8xf32>
    %20 = vector.multi_reduction <add>, %19, %cst_8 [2] : vector<2x8x32xf32> to vector<2x8xf32>
    %21 = vector.shape_cast %20 : vector<2x8xf32> to vector<2x1x8xf32>
    %22 = vector.broadcast %17 : vector<2x16x1xf32> to vector<2x16x8xf32>
    %23 = arith.addf %13, %22 : vector<2x16x8xf32>
    %24 = vector.broadcast %21 : vector<2x1x8xf32> to vector<2x16x8xf32>
    %25 = arith.addf %23, %24 : vector<2x16x8xf32>
    %c0_9 = arith.constant 0 : index
    %c0_10 = arith.constant 0 : index
    %26 = vector.load %arg4[%c0_9, %c0_10] : memref<1x1xf32, #tpu.memory_space<vmem>>, vector<1x1xf32>
    %27 = vector.shape_cast %26 : vector<1x1xf32> to vector<1x1x1xf32>
    %28 = vector.broadcast %27 : vector<1x1x1xf32> to vector<2x16x8xf32>
    %29 = arith.addf %25, %28 : vector<2x16x8xf32>
    %c0_11 = arith.constant 0 : index
    %c0_12 = arith.constant 0 : index
    %30 = vector.load %arg6[%c0_11, %c0_12] : memref<2x8xf32, #tpu.memory_space<vmem>>, vector<2x8xf32>
    %31 = vector.shape_cast %30 : vector<2x8xf32> to vector<2x1x8xf32>
    %cst_13 = arith.constant 0.000000e+00 : f32
    %32 = vector.broadcast %cst_13 : f32 to vector<2x1x8xf32>
    %33 = arith.cmpf ogt, %31, %32 : vector<2x1x8xf32>
    %cst_14 = arith.constant -1.000000e+30 : f32
    %34 = vector.shape_cast %33 : vector<2x1x8xi1> to vector<2x1x8xi1>
    %35 = vector.broadcast %34 : vector<2x1x8xi1> to vector<2x16x8xi1>
    %36 = vector.broadcast %cst_14 : f32 to vector<2x16x8xf32>
    %37 = arith.select %35, %29, %36 : vector<2x16x8xi1>, vector<2x16x8xf32>
    %cst_15 = arith.constant dense<0xFF800000> : vector<2x16xf32>
    %38 = vector.multi_reduction <maximumf>, %37, %cst_15 [2] : vector<2x16x8xf32> to vector<2x16xf32>
    %39 = vector.shape_cast %38 : vector<2x16xf32> to vector<2x16x1xf32>
    %40 = vector.broadcast %39 : vector<2x16x1xf32> to vector<2x16x8xf32>
    %41 = arith.subf %37, %40 : vector<2x16x8xf32>
    %42 = math.exp %41 : vector<2x16x8xf32>
    %cst_16 = arith.constant dense<0.000000e+00> : vector<2x16xf32>
    %43 = vector.multi_reduction <add>, %42, %cst_16 [2] : vector<2x16x8xf32> to vector<2x16xf32>
    %44 = vector.shape_cast %43 : vector<2x16xf32> to vector<2x16x1xf32>
    %45 = tpu.reciprocal %44 : vector<2x16x1xf32> -> vector<2x16x1xf32>
    %46 = vector.broadcast %45 : vector<2x16x1xf32> to vector<2x16x8xf32>
    %47 = arith.mulf %42, %46 : vector<2x16x8xf32>
    %48 = arith.truncf %47 : vector<2x16x8xf32> to vector<2x16x8xbf16>
    "tpu.trace_start"() <{level = 10 : i32, message = "btj,bjd->btd"}> : () -> ()
    %cst_17 = arith.constant dense<0.000000e+00> : vector<2x16x32xf32>
    %49 = tpu.matmul %48, %9, %cst_17 {dimension_numbers = #tpu.dot_dimension_numbers<[2], [1], [1], [2], [0, 0, 0, 1, 1, 2], [0], [0]>} : vector<2x16x8xbf16>, vector<2x8x32xbf16>, vector<2x16x32xf32> -> vector<2x16x32xf32>
    "tpu.trace_stop"() : () -> ()
    %c0_18 = arith.constant 0 : index
    %c0_19 = arith.constant 0 : index
    %c0_20 = arith.constant 0 : index
    %50 = vector.load %arg7[%c0_18, %c0_19, %c0_20] : memref<2x16x32xf32, #tpu.memory_space<vmem>>, vector<2x16x32xf32>
    tpu.vector_store %arg7[%c0_18, %c0_19, %c0_20], %49 {strides = array<i32>} : memref<2x16x32xf32, #tpu.memory_space<vmem>>, vector<2x16x32xf32>,
    %c0_21 = arith.constant 0 : index
    %c0_22 = arith.constant 0 : index
    %c0_23 = arith.constant 0 : index
    %51 = vector.load %arg5[%c0_21, %c0_22, %c0_23] : memref<2x16x1xf32, #tpu.memory_space<vmem>>, vector<2x16x1xf32>
    %cst_24 = arith.constant 0.000000e+00 : f32
    %52 = vector.broadcast %cst_24 : f32 to vector<2x16x1xf32>
    %53 = arith.cmpf ogt, %51, %52 : vector<2x16x1xf32>
    %cst_25 = arith.constant dense<0xFF800000> : vector<2x16xf32>
    %54 = vector.multi_reduction <maximumf>, %37, %cst_25 [2] : vector<2x16x8xf32> to vector<2x16xf32>
    %55 = vector.shape_cast %54 : vector<2x16xf32> to vector<2x16x1xf32>
    %cst_26 = arith.constant -1.000000e+30 : f32
    %56 = vector.broadcast %cst_26 : f32 to vector<2x16x1xf32>
    %57 = arith.select %53, %55, %56 : vector<2x16x1xi1>, vector<2x16x1xf32>
    %c0_27 = arith.constant 0 : index
    %c0_28 = arith.constant 0 : index
    %c0_29 = arith.constant 0 : index
    %58 = vector.load %arg8[%c0_27, %c0_28, %c0_29] : memref<2x16x1xf32, #tpu.memory_space<vmem>>, vector<2x16x1xf32>
    tpu.vector_store %arg8[%c0_27, %c0_28, %c0_29], %57 {strides = array<i32>} : memref<2x16x1xf32, #tpu.memory_space<vmem>>, vector<2x16x1xf32>,
    return
  }
  func.func @transform_0(%arg0: i32) -> (i32, i32, i32) {
    %c0_i32 = arith.constant 0 : i32
    %c0_i32_0 = arith.constant 0 : i32
    %c0_i32_1 = arith.constant 0 : i32
    return %c0_i32, %arg0, %c0_i32_0 : i32, i32, i32
  }
  func.func @transform_1(%arg0: i32) -> (i32, i32, i32) {
    %c0_i32 = arith.constant 0 : i32
    %c0_i32_0 = arith.constant 0 : i32
    %c0_i32_1 = arith.constant 0 : i32
    %c0_i32_2 = arith.constant 0 : i32
    return %c0_i32, %c0_i32_0, %c0_i32_1 : i32, i32, i32
  }
  func.func @transform_2(%arg0: i32) -> (i32, i32) {
    %c0_i32 = arith.constant 0 : i32
    %c0_i32_0 = arith.constant 0 : i32
    %c0_i32_1 = arith.constant 0 : i32
    return %c0_i32, %c0_i32_0 : i32, i32
  }
  func.func @transform_3(%arg0: i32) -> (i32, i32) {
    %c0_i32 = arith.constant 0 : i32
    %c0_i32_0 = arith.constant 0 : i32
    %c0_i32_1 = arith.constant 0 : i32
    return %c0_i32, %c0_i32_0 : i32, i32
  }
  func.func @transform_4(%arg0: i32) -> (i32, i32, i32) {
    %c0_i32 = arith.constant 0 : i32
    %c0_i32_0 = arith.constant 0 : i32
    %c0_i32_1 = arith.constant 0 : i32
    return %c0_i32, %arg0, %c0_i32_0 : i32, i32, i32
  }
  func.func @transform_5(%arg0: i32) -> (i32, i32) {
    %c0_i32 = arith.constant 0 : i32
    %c0_i32_0 = arith.constant 0 : i32
    %c0_i32_1 = arith.constant 0 : i32
    return %c0_i32, %c0_i32_0 : i32, i32
  }
  func.func @transform_6(%arg0: i32) -> (i32, i32, i32) {
    %c0_i32 = arith.constant 0 : i32
    %c0_i32_0 = arith.constant 0 : i32
    %c0_i32_1 = arith.constant 0 : i32
    return %c0_i32, %arg0, %c0_i32_0 : i32, i32, i32
  }
  func.func @transform_7(%arg0: i32) -> (i32, i32, i32) {
    %c0_i32 = arith.constant 0 : i32
    %c0_i32_0 = arith.constant 0 : i32
    %c0_i32_1 = arith.constant 0 : i32
    return %c0_i32, %arg0, %c0_i32_0 : i32, i32, i32
  }
}

module attributes {stable_mosaic.version = 11 : i64} {
  func.func @_bilstm_kernel(%arg0: i32, %arg1: memref<2x8x64xf32, #tpu.memory_space<vmem>>, %arg2: memref<2x8x64xf32, #tpu.memory_space<vmem>>, %arg3: memref<32x128xf32, #tpu.memory_space<vmem>>, %arg4: memref<2x8x1xf32, #tpu.memory_space<vmem>>, %arg5: memref<2x8x1xf32, #tpu.memory_space<vmem>>, %arg6: memref<2x128xf32, #tpu.memory_space<vmem>>, %arg7: memref<2x128xf32, #tpu.memory_space<vmem>>, %arg8: memref<2x32xf32, #tpu.memory_space<vmem>>, %arg9: memref<2x32xf32, #tpu.memory_space<vmem>>) attributes {dimension_semantics = [#tpu.dimension_semantics<arbitrary>], iteration_bounds = array<i64: 1>, scalar_prefetch = 0 : i64, scratch_operands = 2 : i64, tpu.core_type = #tpu.core_type<tc>, window_params = [{transform_indices = @transform_0, window_bounds = array<i64: 2, 8, 64>}, {transform_indices = @transform_1, window_bounds = array<i64: 2, 8, 64>}, {pipeline_mode = #tpu.pipeline_mode<synchronous>, transform_indices = @transform_2, window_bounds = array<i64: 32, 128>}, {transform_indices = @transform_3, window_bounds = array<i64: 2, 8, 1>}, {transform_indices = @transform_4, window_bounds = array<i64: 2, 8, 1>}, {transform_indices = @transform_5, window_bounds = array<i64: 2, 128>}, {transform_indices = @transform_6, window_bounds = array<i64: 2, 128>}]} {
    %c0_i32 = arith.constant 0 : i32
    %0 = arith.cmpi eq, %arg0, %c0_i32 : i32
    %1 = arith.extui %0 : i1 to i32
    %c0_i32_0 = arith.constant 0 : i32
    %2 = arith.cmpi ne, %1, %c0_i32_0 : i32
    scf.if %2 {
      %cst_49 = arith.constant 0.000000e+00 : f32
      %456 = vector.broadcast %cst_49 : f32 to vector<2x32xf32>
      %c0_50 = arith.constant 0 : index
      %c0_51 = arith.constant 0 : index
      %457 = vector.load %arg8[%c0_50, %c0_51] : memref<2x32xf32, #tpu.memory_space<vmem>>, vector<2x32xf32>
      tpu.vector_store %arg8[%c0_50, %c0_51], %456 {strides = array<i32>} : memref<2x32xf32, #tpu.memory_space<vmem>>, vector<2x32xf32>,
      %cst_52 = arith.constant 0.000000e+00 : f32
      %458 = vector.broadcast %cst_52 : f32 to vector<2x32xf32>
      %c0_53 = arith.constant 0 : index
      %c0_54 = arith.constant 0 : index
      %459 = vector.load %arg9[%c0_53, %c0_54] : memref<2x32xf32, #tpu.memory_space<vmem>>, vector<2x32xf32>
      tpu.vector_store %arg9[%c0_53, %c0_54], %458 {strides = array<i32>} : memref<2x32xf32, #tpu.memory_space<vmem>>, vector<2x32xf32>,
    } else {
    }
    %c0 = arith.constant 0 : index
    %c0_1 = arith.constant 0 : index
    %3 = vector.load %arg3[%c0, %c0_1] : memref<32x128xf32, #tpu.memory_space<vmem>>, vector<32x128xf32>
    %c0_2 = arith.constant 0 : index
    %c0_3 = arith.constant 0 : index
    %c0_4 = arith.constant 0 : index
    %4 = vector.load %arg1[%c0_2, %c0_3, %c0_4] : memref<2x8x64xf32, #tpu.memory_space<vmem>>, vector<2x8x64xf32>
    %c0_5 = arith.constant 0 : index
    %c0_6 = arith.constant 0 : index
    %c0_7 = arith.constant 0 : index
    %5 = vector.load %arg2[%c0_5, %c0_6, %c0_7] : memref<2x8x64xf32, #tpu.memory_space<vmem>>, vector<2x8x64xf32>
    %c0_8 = arith.constant 0 : index
    %c0_9 = arith.constant 0 : index
    %c0_10 = arith.constant 0 : index
    %6 = vector.load %arg4[%c0_8, %c0_9, %c0_10] : memref<2x8x1xf32, #tpu.memory_space<vmem>>, vector<2x8x1xf32>
    %c0_11 = arith.constant 0 : index
    %c0_12 = arith.constant 0 : index
    %c0_13 = arith.constant 0 : index
    %7 = vector.load %arg5[%c0_11, %c0_12, %c0_13] : memref<2x8x1xf32, #tpu.memory_space<vmem>>, vector<2x8x1xf32>
    %c0_14 = arith.constant 0 : index
    %c0_15 = arith.constant 0 : index
    %8 = vector.load %arg8[%c0_14, %c0_15] : memref<2x32xf32, #tpu.memory_space<vmem>>, vector<2x32xf32>
    %c0_16 = arith.constant 0 : index
    %c0_17 = arith.constant 0 : index
    %9 = vector.load %arg9[%c0_16, %c0_17] : memref<2x32xf32, #tpu.memory_space<vmem>>, vector<2x32xf32>
    %cst = arith.constant dense<0.000000e+00> : vector<2x128xf32>
    %10 = tpu.matmul %8, %3, %cst {dimension_numbers = #tpu.dot_dimension_numbers<[1], [0], [0], [1], [0, 0, 1, 1], [], []>} : vector<2x32xf32>, vector<32x128xf32>, vector<2x128xf32> -> vector<2x128xf32>
    %11 = vector.extract_strided_slice %10 {offsets = [0, 0], sizes = [2, 64], strides = [1, 1]} : vector<2x128xf32> to vector<2x64xf32>
    %12 = vector.extract_strided_slice %4 {offsets = [0, 0, 0], sizes = [2, 1, 64], strides = [1, 1, 1]} : vector<2x8x64xf32> to vector<2x1x64xf32>
    %13 = vector.shape_cast %12 : vector<2x1x64xf32> to vector<2x64xf32>
    %14 = arith.addf %11, %13 : vector<2x64xf32>
    %15 = vector.extract_strided_slice %10 {offsets = [0, 64], sizes = [2, 64], strides = [1, 1]} : vector<2x128xf32> to vector<2x64xf32>
    %16 = vector.extract_strided_slice %5 {offsets = [0, 7, 0], sizes = [2, 1, 64], strides = [1, 1, 1]} : vector<2x8x64xf32> to vector<2x1x64xf32>
    %17 = vector.shape_cast %16 : vector<2x1x64xf32> to vector<2x64xf32>
    %18 = arith.addf %15, %17 : vector<2x64xf32>
    %19 = vector.extract_strided_slice %14 {offsets = [0, 0], sizes = [2, 48], strides = [1, 1]} : vector<2x64xf32> to vector<2x48xf32>
    %20 = arith.negf %19 : vector<2x48xf32>
    %21 = math.exp %20 : vector<2x48xf32>
    %cst_18 = arith.constant 1.000000e+00 : f32
    %22 = vector.broadcast %cst_18 : f32 to vector<2x48xf32>
    %23 = arith.addf %22, %21 : vector<2x48xf32>
    %24 = arith.divf %22, %23 : vector<2x48xf32>
    %25 = vector.extract_strided_slice %14 {offsets = [0, 48], sizes = [2, 16], strides = [1, 1]} : vector<2x64xf32> to vector<2x16xf32>
    %26 = math.tanh %25 : vector<2x16xf32>
    %27 = vector.extract_strided_slice %18 {offsets = [0, 0], sizes = [2, 48], strides = [1, 1]} : vector<2x64xf32> to vector<2x48xf32>
    %28 = arith.negf %27 : vector<2x48xf32>
    %29 = math.exp %28 : vector<2x48xf32>
    %cst_19 = arith.constant 1.000000e+00 : f32
    %30 = vector.broadcast %cst_19 : f32 to vector<2x48xf32>
    %31 = arith.addf %30, %29 : vector<2x48xf32>
    %32 = arith.divf %30, %31 : vector<2x48xf32>
    %33 = vector.extract_strided_slice %18 {offsets = [0, 48], sizes = [2, 16], strides = [1, 1]} : vector<2x64xf32> to vector<2x16xf32>
    %34 = math.tanh %33 : vector<2x16xf32>
    %35 = vector.extract_strided_slice %7 {offsets = [0, 7, 0], sizes = [2, 1, 1], strides = [1, 1, 1]} : vector<2x8x1xf32> to vector<2x1x1xf32>
    %36 = vector.shape_cast %35 : vector<2x1x1xf32> to vector<2x1xf32>
    %37 = vector.extract_strided_slice %24 {offsets = [0, 16], sizes = [2, 16], strides = [1, 1]} : vector<2x48xf32> to vector<2x16xf32>
    %38 = vector.extract_strided_slice %9 {offsets = [0, 0], sizes = [2, 16], strides = [1, 1]} : vector<2x32xf32> to vector<2x16xf32>
    %39 = arith.mulf %37, %38 : vector<2x16xf32>
    %40 = vector.extract_strided_slice %24 {offsets = [0, 0], sizes = [2, 16], strides = [1, 1]} : vector<2x48xf32> to vector<2x16xf32>
    %41 = arith.mulf %40, %26 : vector<2x16xf32>
    %42 = arith.addf %39, %41 : vector<2x16xf32>
    %43 = vector.extract_strided_slice %32 {offsets = [0, 16], sizes = [2, 16], strides = [1, 1]} : vector<2x48xf32> to vector<2x16xf32>
    %44 = vector.extract_strided_slice %9 {offsets = [0, 16], sizes = [2, 16], strides = [1, 1]} : vector<2x32xf32> to vector<2x16xf32>
    %45 = arith.mulf %43, %44 : vector<2x16xf32>
    %46 = vector.extract_strided_slice %32 {offsets = [0, 0], sizes = [2, 16], strides = [1, 1]} : vector<2x48xf32> to vector<2x16xf32>
    %47 = arith.mulf %46, %34 : vector<2x16xf32>
    %48 = arith.addf %45, %47 : vector<2x16xf32>
    %49 = vector.broadcast %36 : vector<2x1xf32> to vector<2x16xf32>
    %50 = arith.mulf %48, %49 : vector<2x16xf32>
    %51 = vector.extract_strided_slice %24 {offsets = [0, 32], sizes = [2, 16], strides = [1, 1]} : vector<2x48xf32> to vector<2x16xf32>
    %52 = math.tanh %42 : vector<2x16xf32>
    %53 = arith.mulf %51, %52 : vector<2x16xf32>
    %54 = vector.extract_strided_slice %32 {offsets = [0, 32], sizes = [2, 16], strides = [1, 1]} : vector<2x48xf32> to vector<2x16xf32>
    %55 = math.tanh %50 : vector<2x16xf32>
    %56 = arith.mulf %54, %55 : vector<2x16xf32>
    %57 = vector.broadcast %36 : vector<2x1xf32> to vector<2x16xf32>
    %58 = arith.mulf %56, %57 : vector<2x16xf32>
    %59 = vector.extract_strided_slice %6 {offsets = [0, 0, 0], sizes = [2, 1, 1], strides = [1, 1, 1]} : vector<2x8x1xf32> to vector<2x1x1xf32>
    %60 = vector.shape_cast %59 : vector<2x1x1xf32> to vector<2x1xf32>
    %61 = vector.broadcast %60 : vector<2x1xf32> to vector<2x16xf32>
    %62 = arith.mulf %53, %61 : vector<2x16xf32>
    %63 = tpu.concatenate %53, %58 in 1 : vector<2x16xf32>, vector<2x16xf32> -> vector<2x32xf32>
    %64 = tpu.concatenate %42, %50 in 1 : vector<2x16xf32>, vector<2x16xf32> -> vector<2x32xf32>
    %cst_20 = arith.constant dense<0.000000e+00> : vector<2x128xf32>
    %65 = tpu.matmul %63, %3, %cst_20 {dimension_numbers = #tpu.dot_dimension_numbers<[1], [0], [0], [1], [0, 0, 1, 1], [], []>} : vector<2x32xf32>, vector<32x128xf32>, vector<2x128xf32> -> vector<2x128xf32>
    %66 = vector.extract_strided_slice %65 {offsets = [0, 0], sizes = [2, 64], strides = [1, 1]} : vector<2x128xf32> to vector<2x64xf32>
    %67 = vector.extract_strided_slice %4 {offsets = [0, 1, 0], sizes = [2, 1, 64], strides = [1, 1, 1]} : vector<2x8x64xf32> to vector<2x1x64xf32>
    %68 = vector.shape_cast %67 : vector<2x1x64xf32> to vector<2x64xf32>
    %69 = arith.addf %66, %68 : vector<2x64xf32>
    %70 = vector.extract_strided_slice %65 {offsets = [0, 64], sizes = [2, 64], strides = [1, 1]} : vector<2x128xf32> to vector<2x64xf32>
    %71 = vector.extract_strided_slice %5 {offsets = [0, 6, 0], sizes = [2, 1, 64], strides = [1, 1, 1]} : vector<2x8x64xf32> to vector<2x1x64xf32>
    %72 = vector.shape_cast %71 : vector<2x1x64xf32> to vector<2x64xf32>
    %73 = arith.addf %70, %72 : vector<2x64xf32>
    %74 = vector.extract_strided_slice %69 {offsets = [0, 0], sizes = [2, 48], strides = [1, 1]} : vector<2x64xf32> to vector<2x48xf32>
    %75 = arith.negf %74 : vector<2x48xf32>
    %76 = math.exp %75 : vector<2x48xf32>
    %cst_21 = arith.constant 1.000000e+00 : f32
    %77 = vector.broadcast %cst_21 : f32 to vector<2x48xf32>
    %78 = arith.addf %77, %76 : vector<2x48xf32>
    %79 = arith.divf %77, %78 : vector<2x48xf32>
    %80 = vector.extract_strided_slice %69 {offsets = [0, 48], sizes = [2, 16], strides = [1, 1]} : vector<2x64xf32> to vector<2x16xf32>
    %81 = math.tanh %80 : vector<2x16xf32>
    %82 = vector.extract_strided_slice %73 {offsets = [0, 0], sizes = [2, 48], strides = [1, 1]} : vector<2x64xf32> to vector<2x48xf32>
    %83 = arith.negf %82 : vector<2x48xf32>
    %84 = math.exp %83 : vector<2x48xf32>
    %cst_22 = arith.constant 1.000000e+00 : f32
    %85 = vector.broadcast %cst_22 : f32 to vector<2x48xf32>
    %86 = arith.addf %85, %84 : vector<2x48xf32>
    %87 = arith.divf %85, %86 : vector<2x48xf32>
    %88 = vector.extract_strided_slice %73 {offsets = [0, 48], sizes = [2, 16], strides = [1, 1]} : vector<2x64xf32> to vector<2x16xf32>
    %89 = math.tanh %88 : vector<2x16xf32>
    %90 = vector.extract_strided_slice %7 {offsets = [0, 6, 0], sizes = [2, 1, 1], strides = [1, 1, 1]} : vector<2x8x1xf32> to vector<2x1x1xf32>
    %91 = vector.shape_cast %90 : vector<2x1x1xf32> to vector<2x1xf32>
    %92 = vector.extract_strided_slice %79 {offsets = [0, 16], sizes = [2, 16], strides = [1, 1]} : vector<2x48xf32> to vector<2x16xf32>
    %93 = vector.extract_strided_slice %64 {offsets = [0, 0], sizes = [2, 16], strides = [1, 1]} : vector<2x32xf32> to vector<2x16xf32>
    %94 = arith.mulf %92, %93 : vector<2x16xf32>
    %95 = vector.extract_strided_slice %79 {offsets = [0, 0], sizes = [2, 16], strides = [1, 1]} : vector<2x48xf32> to vector<2x16xf32>
    %96 = arith.mulf %95, %81 : vector<2x16xf32>
    %97 = arith.addf %94, %96 : vector<2x16xf32>
    %98 = vector.extract_strided_slice %87 {offsets = [0, 16], sizes = [2, 16], strides = [1, 1]} : vector<2x48xf32> to vector<2x16xf32>
    %99 = vector.extract_strided_slice %64 {offsets = [0, 16], sizes = [2, 16], strides = [1, 1]} : vector<2x32xf32> to vector<2x16xf32>
    %100 = arith.mulf %98, %99 : vector<2x16xf32>
    %101 = vector.extract_strided_slice %87 {offsets = [0, 0], sizes = [2, 16], strides = [1, 1]} : vector<2x48xf32> to vector<2x16xf32>
    %102 = arith.mulf %101, %89 : vector<2x16xf32>
    %103 = arith.addf %100, %102 : vector<2x16xf32>
    %104 = vector.broadcast %91 : vector<2x1xf32> to vector<2x16xf32>
    %105 = arith.mulf %103, %104 : vector<2x16xf32>
    %106 = vector.extract_strided_slice %79 {offsets = [0, 32], sizes = [2, 16], strides = [1, 1]} : vector<2x48xf32> to vector<2x16xf32>
    %107 = math.tanh %97 : vector<2x16xf32>
    %108 = arith.mulf %106, %107 : vector<2x16xf32>
    %109 = vector.extract_strided_slice %87 {offsets = [0, 32], sizes = [2, 16], strides = [1, 1]} : vector<2x48xf32> to vector<2x16xf32>
    %110 = math.tanh %105 : vector<2x16xf32>
    %111 = arith.mulf %109, %110 : vector<2x16xf32>
    %112 = vector.broadcast %91 : vector<2x1xf32> to vector<2x16xf32>
    %113 = arith.mulf %111, %112 : vector<2x16xf32>
    %114 = vector.extract_strided_slice %6 {offsets = [0, 1, 0], sizes = [2, 1, 1], strides = [1, 1, 1]} : vector<2x8x1xf32> to vector<2x1x1xf32>
    %115 = vector.shape_cast %114 : vector<2x1x1xf32> to vector<2x1xf32>
    %116 = vector.broadcast %115 : vector<2x1xf32> to vector<2x16xf32>
    %117 = arith.mulf %108, %116 : vector<2x16xf32>
    %118 = tpu.concatenate %108, %113 in 1 : vector<2x16xf32>, vector<2x16xf32> -> vector<2x32xf32>
    %119 = tpu.concatenate %97, %105 in 1 : vector<2x16xf32>, vector<2x16xf32> -> vector<2x32xf32>
    %cst_23 = arith.constant dense<0.000000e+00> : vector<2x128xf32>
    %120 = tpu.matmul %118, %3, %cst_23 {dimension_numbers = #tpu.dot_dimension_numbers<[1], [0], [0], [1], [0, 0, 1, 1], [], []>} : vector<2x32xf32>, vector<32x128xf32>, vector<2x128xf32> -> vector<2x128xf32>
    %121 = vector.extract_strided_slice %120 {offsets = [0, 0], sizes = [2, 64], strides = [1, 1]} : vector<2x128xf32> to vector<2x64xf32>
    %122 = vector.extract_strided_slice %4 {offsets = [0, 2, 0], sizes = [2, 1, 64], strides = [1, 1, 1]} : vector<2x8x64xf32> to vector<2x1x64xf32>
    %123 = vector.shape_cast %122 : vector<2x1x64xf32> to vector<2x64xf32>
    %124 = arith.addf %121, %123 : vector<2x64xf32>
    %125 = vector.extract_strided_slice %120 {offsets = [0, 64], sizes = [2, 64], strides = [1, 1]} : vector<2x128xf32> to vector<2x64xf32>
    %126 = vector.extract_strided_slice %5 {offsets = [0, 5, 0], sizes = [2, 1, 64], strides = [1, 1, 1]} : vector<2x8x64xf32> to vector<2x1x64xf32>
    %127 = vector.shape_cast %126 : vector<2x1x64xf32> to vector<2x64xf32>
    %128 = arith.addf %125, %127 : vector<2x64xf32>
    %129 = vector.extract_strided_slice %124 {offsets = [0, 0], sizes = [2, 48], strides = [1, 1]} : vector<2x64xf32> to vector<2x48xf32>
    %130 = arith.negf %129 : vector<2x48xf32>
    %131 = math.exp %130 : vector<2x48xf32>
    %cst_24 = arith.constant 1.000000e+00 : f32
    %132 = vector.broadcast %cst_24 : f32 to vector<2x48xf32>
    %133 = arith.addf %132, %131 : vector<2x48xf32>
    %134 = arith.divf %132, %133 : vector<2x48xf32>
    %135 = vector.extract_strided_slice %124 {offsets = [0, 48], sizes = [2, 16], strides = [1, 1]} : vector<2x64xf32> to vector<2x16xf32>
    %136 = math.tanh %135 : vector<2x16xf32>
    %137 = vector.extract_strided_slice %128 {offsets = [0, 0], sizes = [2, 48], strides = [1, 1]} : vector<2x64xf32> to vector<2x48xf32>
    %138 = arith.negf %137 : vector<2x48xf32>
    %139 = math.exp %138 : vector<2x48xf32>
    %cst_25 = arith.constant 1.000000e+00 : f32
    %140 = vector.broadcast %cst_25 : f32 to vector<2x48xf32>
    %141 = arith.addf %140, %139 : vector<2x48xf32>
    %142 = arith.divf %140, %141 : vector<2x48xf32>
    %143 = vector.extract_strided_slice %128 {offsets = [0, 48], sizes = [2, 16], strides = [1, 1]} : vector<2x64xf32> to vector<2x16xf32>
    %144 = math.tanh %143 : vector<2x16xf32>
    %145 = vector.extract_strided_slice %7 {offsets = [0, 5, 0], sizes = [2, 1, 1], strides = [1, 1, 1]} : vector<2x8x1xf32> to vector<2x1x1xf32>
    %146 = vector.shape_cast %145 : vector<2x1x1xf32> to vector<2x1xf32>
    %147 = vector.extract_strided_slice %134 {offsets = [0, 16], sizes = [2, 16], strides = [1, 1]} : vector<2x48xf32> to vector<2x16xf32>
    %148 = vector.extract_strided_slice %119 {offsets = [0, 0], sizes = [2, 16], strides = [1, 1]} : vector<2x32xf32> to vector<2x16xf32>
    %149 = arith.mulf %147, %148 : vector<2x16xf32>
    %150 = vector.extract_strided_slice %134 {offsets = [0, 0], sizes = [2, 16], strides = [1, 1]} : vector<2x48xf32> to vector<2x16xf32>
    %151 = arith.mulf %150, %136 : vector<2x16xf32>
    %152 = arith.addf %149, %151 : vector<2x16xf32>
    %153 = vector.extract_strided_slice %142 {offsets = [0, 16], sizes = [2, 16], strides = [1, 1]} : vector<2x48xf32> to vector<2x16xf32>
    %154 = vector.extract_strided_slice %119 {offsets = [0, 16], sizes = [2, 16], strides = [1, 1]} : vector<2x32xf32> to vector<2x16xf32>
    %155 = arith.mulf %153, %154 : vector<2x16xf32>
    %156 = vector.extract_strided_slice %142 {offsets = [0, 0], sizes = [2, 16], strides = [1, 1]} : vector<2x48xf32> to vector<2x16xf32>
    %157 = arith.mulf %156, %144 : vector<2x16xf32>
    %158 = arith.addf %155, %157 : vector<2x16xf32>
    %159 = vector.broadcast %146 : vector<2x1xf32> to vector<2x16xf32>
    %160 = arith.mulf %158, %159 : vector<2x16xf32>
    %161 = vector.extract_strided_slice %134 {offsets = [0, 32], sizes = [2, 16], strides = [1, 1]} : vector<2x48xf32> to vector<2x16xf32>
    %162 = math.tanh %152 : vector<2x16xf32>
    %163 = arith.mulf %161, %162 : vector<2x16xf32>
    %164 = vector.extract_strided_slice %142 {offsets = [0, 32], sizes = [2, 16], strides = [1, 1]} : vector<2x48xf32> to vector<2x16xf32>
    %165 = math.tanh %160 : vector<2x16xf32>
    %166 = arith.mulf %164, %165 : vector<2x16xf32>
    %167 = vector.broadcast %146 : vector<2x1xf32> to vector<2x16xf32>
    %168 = arith.mulf %166, %167 : vector<2x16xf32>
    %169 = vector.extract_strided_slice %6 {offsets = [0, 2, 0], sizes = [2, 1, 1], strides = [1, 1, 1]} : vector<2x8x1xf32> to vector<2x1x1xf32>
    %170 = vector.shape_cast %169 : vector<2x1x1xf32> to vector<2x1xf32>
    %171 = vector.broadcast %170 : vector<2x1xf32> to vector<2x16xf32>
    %172 = arith.mulf %163, %171 : vector<2x16xf32>
    %173 = tpu.concatenate %163, %168 in 1 : vector<2x16xf32>, vector<2x16xf32> -> vector<2x32xf32>
    %174 = tpu.concatenate %152, %160 in 1 : vector<2x16xf32>, vector<2x16xf32> -> vector<2x32xf32>
    %cst_26 = arith.constant dense<0.000000e+00> : vector<2x128xf32>
    %175 = tpu.matmul %173, %3, %cst_26 {dimension_numbers = #tpu.dot_dimension_numbers<[1], [0], [0], [1], [0, 0, 1, 1], [], []>} : vector<2x32xf32>, vector<32x128xf32>, vector<2x128xf32> -> vector<2x128xf32>
    %176 = vector.extract_strided_slice %175 {offsets = [0, 0], sizes = [2, 64], strides = [1, 1]} : vector<2x128xf32> to vector<2x64xf32>
    %177 = vector.extract_strided_slice %4 {offsets = [0, 3, 0], sizes = [2, 1, 64], strides = [1, 1, 1]} : vector<2x8x64xf32> to vector<2x1x64xf32>
    %178 = vector.shape_cast %177 : vector<2x1x64xf32> to vector<2x64xf32>
    %179 = arith.addf %176, %178 : vector<2x64xf32>
    %180 = vector.extract_strided_slice %175 {offsets = [0, 64], sizes = [2, 64], strides = [1, 1]} : vector<2x128xf32> to vector<2x64xf32>
    %181 = vector.extract_strided_slice %5 {offsets = [0, 4, 0], sizes = [2, 1, 64], strides = [1, 1, 1]} : vector<2x8x64xf32> to vector<2x1x64xf32>
    %182 = vector.shape_cast %181 : vector<2x1x64xf32> to vector<2x64xf32>
    %183 = arith.addf %180, %182 : vector<2x64xf32>
    %184 = vector.extract_strided_slice %179 {offsets = [0, 0], sizes = [2, 48], strides = [1, 1]} : vector<2x64xf32> to vector<2x48xf32>
    %185 = arith.negf %184 : vector<2x48xf32>
    %186 = math.exp %185 : vector<2x48xf32>
    %cst_27 = arith.constant 1.000000e+00 : f32
    %187 = vector.broadcast %cst_27 : f32 to vector<2x48xf32>
    %188 = arith.addf %187, %186 : vector<2x48xf32>
    %189 = arith.divf %187, %188 : vector<2x48xf32>
    %190 = vector.extract_strided_slice %179 {offsets = [0, 48], sizes = [2, 16], strides = [1, 1]} : vector<2x64xf32> to vector<2x16xf32>
    %191 = math.tanh %190 : vector<2x16xf32>
    %192 = vector.extract_strided_slice %183 {offsets = [0, 0], sizes = [2, 48], strides = [1, 1]} : vector<2x64xf32> to vector<2x48xf32>
    %193 = arith.negf %192 : vector<2x48xf32>
    %194 = math.exp %193 : vector<2x48xf32>
    %cst_28 = arith.constant 1.000000e+00 : f32
    %195 = vector.broadcast %cst_28 : f32 to vector<2x48xf32>
    %196 = arith.addf %195, %194 : vector<2x48xf32>
    %197 = arith.divf %195, %196 : vector<2x48xf32>
    %198 = vector.extract_strided_slice %183 {offsets = [0, 48], sizes = [2, 16], strides = [1, 1]} : vector<2x64xf32> to vector<2x16xf32>
    %199 = math.tanh %198 : vector<2x16xf32>
    %200 = vector.extract_strided_slice %7 {offsets = [0, 4, 0], sizes = [2, 1, 1], strides = [1, 1, 1]} : vector<2x8x1xf32> to vector<2x1x1xf32>
    %201 = vector.shape_cast %200 : vector<2x1x1xf32> to vector<2x1xf32>
    %202 = vector.extract_strided_slice %189 {offsets = [0, 16], sizes = [2, 16], strides = [1, 1]} : vector<2x48xf32> to vector<2x16xf32>
    %203 = vector.extract_strided_slice %174 {offsets = [0, 0], sizes = [2, 16], strides = [1, 1]} : vector<2x32xf32> to vector<2x16xf32>
    %204 = arith.mulf %202, %203 : vector<2x16xf32>
    %205 = vector.extract_strided_slice %189 {offsets = [0, 0], sizes = [2, 16], strides = [1, 1]} : vector<2x48xf32> to vector<2x16xf32>
    %206 = arith.mulf %205, %191 : vector<2x16xf32>
    %207 = arith.addf %204, %206 : vector<2x16xf32>
    %208 = vector.extract_strided_slice %197 {offsets = [0, 16], sizes = [2, 16], strides = [1, 1]} : vector<2x48xf32> to vector<2x16xf32>
    %209 = vector.extract_strided_slice %174 {offsets = [0, 16], sizes = [2, 16], strides = [1, 1]} : vector<2x32xf32> to vector<2x16xf32>
    %210 = arith.mulf %208, %209 : vector<2x16xf32>
    %211 = vector.extract_strided_slice %197 {offsets = [0, 0], sizes = [2, 16], strides = [1, 1]} : vector<2x48xf32> to vector<2x16xf32>
    %212 = arith.mulf %211, %199 : vector<2x16xf32>
    %213 = arith.addf %210, %212 : vector<2x16xf32>
    %214 = vector.broadcast %201 : vector<2x1xf32> to vector<2x16xf32>
    %215 = arith.mulf %213, %214 : vector<2x16xf32>
    %216 = vector.extract_strided_slice %189 {offsets = [0, 32], sizes = [2, 16], strides = [1, 1]} : vector<2x48xf32> to vector<2x16xf32>
    %217 = math.tanh %207 : vector<2x16xf32>
    %218 = arith.mulf %216, %217 : vector<2x16xf32>
    %219 = vector.extract_strided_slice %197 {offsets = [0, 32], sizes = [2, 16], strides = [1, 1]} : vector<2x48xf32> to vector<2x16xf32>
    %220 = math.tanh %215 : vector<2x16xf32>
    %221 = arith.mulf %219, %220 : vector<2x16xf32>
    %222 = vector.broadcast %201 : vector<2x1xf32> to vector<2x16xf32>
    %223 = arith.mulf %221, %222 : vector<2x16xf32>
    %224 = vector.extract_strided_slice %6 {offsets = [0, 3, 0], sizes = [2, 1, 1], strides = [1, 1, 1]} : vector<2x8x1xf32> to vector<2x1x1xf32>
    %225 = vector.shape_cast %224 : vector<2x1x1xf32> to vector<2x1xf32>
    %226 = vector.broadcast %225 : vector<2x1xf32> to vector<2x16xf32>
    %227 = arith.mulf %218, %226 : vector<2x16xf32>
    %228 = tpu.concatenate %218, %223 in 1 : vector<2x16xf32>, vector<2x16xf32> -> vector<2x32xf32>
    %229 = tpu.concatenate %207, %215 in 1 : vector<2x16xf32>, vector<2x16xf32> -> vector<2x32xf32>
    %cst_29 = arith.constant dense<0.000000e+00> : vector<2x128xf32>
    %230 = tpu.matmul %228, %3, %cst_29 {dimension_numbers = #tpu.dot_dimension_numbers<[1], [0], [0], [1], [0, 0, 1, 1], [], []>} : vector<2x32xf32>, vector<32x128xf32>, vector<2x128xf32> -> vector<2x128xf32>
    %231 = vector.extract_strided_slice %230 {offsets = [0, 0], sizes = [2, 64], strides = [1, 1]} : vector<2x128xf32> to vector<2x64xf32>
    %232 = vector.extract_strided_slice %4 {offsets = [0, 4, 0], sizes = [2, 1, 64], strides = [1, 1, 1]} : vector<2x8x64xf32> to vector<2x1x64xf32>
    %233 = vector.shape_cast %232 : vector<2x1x64xf32> to vector<2x64xf32>
    %234 = arith.addf %231, %233 : vector<2x64xf32>
    %235 = vector.extract_strided_slice %230 {offsets = [0, 64], sizes = [2, 64], strides = [1, 1]} : vector<2x128xf32> to vector<2x64xf32>
    %236 = vector.extract_strided_slice %5 {offsets = [0, 3, 0], sizes = [2, 1, 64], strides = [1, 1, 1]} : vector<2x8x64xf32> to vector<2x1x64xf32>
    %237 = vector.shape_cast %236 : vector<2x1x64xf32> to vector<2x64xf32>
    %238 = arith.addf %235, %237 : vector<2x64xf32>
    %239 = vector.extract_strided_slice %234 {offsets = [0, 0], sizes = [2, 48], strides = [1, 1]} : vector<2x64xf32> to vector<2x48xf32>
    %240 = arith.negf %239 : vector<2x48xf32>
    %241 = math.exp %240 : vector<2x48xf32>
    %cst_30 = arith.constant 1.000000e+00 : f32
    %242 = vector.broadcast %cst_30 : f32 to vector<2x48xf32>
    %243 = arith.addf %242, %241 : vector<2x48xf32>
    %244 = arith.divf %242, %243 : vector<2x48xf32>
    %245 = vector.extract_strided_slice %234 {offsets = [0, 48], sizes = [2, 16], strides = [1, 1]} : vector<2x64xf32> to vector<2x16xf32>
    %246 = math.tanh %245 : vector<2x16xf32>
    %247 = vector.extract_strided_slice %238 {offsets = [0, 0], sizes = [2, 48], strides = [1, 1]} : vector<2x64xf32> to vector<2x48xf32>
    %248 = arith.negf %247 : vector<2x48xf32>
    %249 = math.exp %248 : vector<2x48xf32>
    %cst_31 = arith.constant 1.000000e+00 : f32
    %250 = vector.broadcast %cst_31 : f32 to vector<2x48xf32>
    %251 = arith.addf %250, %249 : vector<2x48xf32>
    %252 = arith.divf %250, %251 : vector<2x48xf32>
    %253 = vector.extract_strided_slice %238 {offsets = [0, 48], sizes = [2, 16], strides = [1, 1]} : vector<2x64xf32> to vector<2x16xf32>
    %254 = math.tanh %253 : vector<2x16xf32>
    %255 = vector.extract_strided_slice %7 {offsets = [0, 3, 0], sizes = [2, 1, 1], strides = [1, 1, 1]} : vector<2x8x1xf32> to vector<2x1x1xf32>
    %256 = vector.shape_cast %255 : vector<2x1x1xf32> to vector<2x1xf32>
    %257 = vector.extract_strided_slice %244 {offsets = [0, 16], sizes = [2, 16], strides = [1, 1]} : vector<2x48xf32> to vector<2x16xf32>
    %258 = vector.extract_strided_slice %229 {offsets = [0, 0], sizes = [2, 16], strides = [1, 1]} : vector<2x32xf32> to vector<2x16xf32>
    %259 = arith.mulf %257, %258 : vector<2x16xf32>
    %260 = vector.extract_strided_slice %244 {offsets = [0, 0], sizes = [2, 16], strides = [1, 1]} : vector<2x48xf32> to vector<2x16xf32>
    %261 = arith.mulf %260, %246 : vector<2x16xf32>
    %262 = arith.addf %259, %261 : vector<2x16xf32>
    %263 = vector.extract_strided_slice %252 {offsets = [0, 16], sizes = [2, 16], strides = [1, 1]} : vector<2x48xf32> to vector<2x16xf32>
    %264 = vector.extract_strided_slice %229 {offsets = [0, 16], sizes = [2, 16], strides = [1, 1]} : vector<2x32xf32> to vector<2x16xf32>
    %265 = arith.mulf %263, %264 : vector<2x16xf32>
    %266 = vector.extract_strided_slice %252 {offsets = [0, 0], sizes = [2, 16], strides = [1, 1]} : vector<2x48xf32> to vector<2x16xf32>
    %267 = arith.mulf %266, %254 : vector<2x16xf32>
    %268 = arith.addf %265, %267 : vector<2x16xf32>
    %269 = vector.broadcast %256 : vector<2x1xf32> to vector<2x16xf32>
    %270 = arith.mulf %268, %269 : vector<2x16xf32>
    %271 = vector.extract_strided_slice %244 {offsets = [0, 32], sizes = [2, 16], strides = [1, 1]} : vector<2x48xf32> to vector<2x16xf32>
    %272 = math.tanh %262 : vector<2x16xf32>
    %273 = arith.mulf %271, %272 : vector<2x16xf32>
    %274 = vector.extract_strided_slice %252 {offsets = [0, 32], sizes = [2, 16], strides = [1, 1]} : vector<2x48xf32> to vector<2x16xf32>
    %275 = math.tanh %270 : vector<2x16xf32>
    %276 = arith.mulf %274, %275 : vector<2x16xf32>
    %277 = vector.broadcast %256 : vector<2x1xf32> to vector<2x16xf32>
    %278 = arith.mulf %276, %277 : vector<2x16xf32>
    %279 = vector.extract_strided_slice %6 {offsets = [0, 4, 0], sizes = [2, 1, 1], strides = [1, 1, 1]} : vector<2x8x1xf32> to vector<2x1x1xf32>
    %280 = vector.shape_cast %279 : vector<2x1x1xf32> to vector<2x1xf32>
    %281 = vector.broadcast %280 : vector<2x1xf32> to vector<2x16xf32>
    %282 = arith.mulf %273, %281 : vector<2x16xf32>
    %283 = tpu.concatenate %273, %278 in 1 : vector<2x16xf32>, vector<2x16xf32> -> vector<2x32xf32>
    %284 = tpu.concatenate %262, %270 in 1 : vector<2x16xf32>, vector<2x16xf32> -> vector<2x32xf32>
    %cst_32 = arith.constant dense<0.000000e+00> : vector<2x128xf32>
    %285 = tpu.matmul %283, %3, %cst_32 {dimension_numbers = #tpu.dot_dimension_numbers<[1], [0], [0], [1], [0, 0, 1, 1], [], []>} : vector<2x32xf32>, vector<32x128xf32>, vector<2x128xf32> -> vector<2x128xf32>
    %286 = vector.extract_strided_slice %285 {offsets = [0, 0], sizes = [2, 64], strides = [1, 1]} : vector<2x128xf32> to vector<2x64xf32>
    %287 = vector.extract_strided_slice %4 {offsets = [0, 5, 0], sizes = [2, 1, 64], strides = [1, 1, 1]} : vector<2x8x64xf32> to vector<2x1x64xf32>
    %288 = vector.shape_cast %287 : vector<2x1x64xf32> to vector<2x64xf32>
    %289 = arith.addf %286, %288 : vector<2x64xf32>
    %290 = vector.extract_strided_slice %285 {offsets = [0, 64], sizes = [2, 64], strides = [1, 1]} : vector<2x128xf32> to vector<2x64xf32>
    %291 = vector.extract_strided_slice %5 {offsets = [0, 2, 0], sizes = [2, 1, 64], strides = [1, 1, 1]} : vector<2x8x64xf32> to vector<2x1x64xf32>
    %292 = vector.shape_cast %291 : vector<2x1x64xf32> to vector<2x64xf32>
    %293 = arith.addf %290, %292 : vector<2x64xf32>
    %294 = vector.extract_strided_slice %289 {offsets = [0, 0], sizes = [2, 48], strides = [1, 1]} : vector<2x64xf32> to vector<2x48xf32>
    %295 = arith.negf %294 : vector<2x48xf32>
    %296 = math.exp %295 : vector<2x48xf32>
    %cst_33 = arith.constant 1.000000e+00 : f32
    %297 = vector.broadcast %cst_33 : f32 to vector<2x48xf32>
    %298 = arith.addf %297, %296 : vector<2x48xf32>
    %299 = arith.divf %297, %298 : vector<2x48xf32>
    %300 = vector.extract_strided_slice %289 {offsets = [0, 48], sizes = [2, 16], strides = [1, 1]} : vector<2x64xf32> to vector<2x16xf32>
    %301 = math.tanh %300 : vector<2x16xf32>
    %302 = vector.extract_strided_slice %293 {offsets = [0, 0], sizes = [2, 48], strides = [1, 1]} : vector<2x64xf32> to vector<2x48xf32>
    %303 = arith.negf %302 : vector<2x48xf32>
    %304 = math.exp %303 : vector<2x48xf32>
    %cst_34 = arith.constant 1.000000e+00 : f32
    %305 = vector.broadcast %cst_34 : f32 to vector<2x48xf32>
    %306 = arith.addf %305, %304 : vector<2x48xf32>
    %307 = arith.divf %305, %306 : vector<2x48xf32>
    %308 = vector.extract_strided_slice %293 {offsets = [0, 48], sizes = [2, 16], strides = [1, 1]} : vector<2x64xf32> to vector<2x16xf32>
    %309 = math.tanh %308 : vector<2x16xf32>
    %310 = vector.extract_strided_slice %7 {offsets = [0, 2, 0], sizes = [2, 1, 1], strides = [1, 1, 1]} : vector<2x8x1xf32> to vector<2x1x1xf32>
    %311 = vector.shape_cast %310 : vector<2x1x1xf32> to vector<2x1xf32>
    %312 = vector.extract_strided_slice %299 {offsets = [0, 16], sizes = [2, 16], strides = [1, 1]} : vector<2x48xf32> to vector<2x16xf32>
    %313 = vector.extract_strided_slice %284 {offsets = [0, 0], sizes = [2, 16], strides = [1, 1]} : vector<2x32xf32> to vector<2x16xf32>
    %314 = arith.mulf %312, %313 : vector<2x16xf32>
    %315 = vector.extract_strided_slice %299 {offsets = [0, 0], sizes = [2, 16], strides = [1, 1]} : vector<2x48xf32> to vector<2x16xf32>
    %316 = arith.mulf %315, %301 : vector<2x16xf32>
    %317 = arith.addf %314, %316 : vector<2x16xf32>
    %318 = vector.extract_strided_slice %307 {offsets = [0, 16], sizes = [2, 16], strides = [1, 1]} : vector<2x48xf32> to vector<2x16xf32>
    %319 = vector.extract_strided_slice %284 {offsets = [0, 16], sizes = [2, 16], strides = [1, 1]} : vector<2x32xf32> to vector<2x16xf32>
    %320 = arith.mulf %318, %319 : vector<2x16xf32>
    %321 = vector.extract_strided_slice %307 {offsets = [0, 0], sizes = [2, 16], strides = [1, 1]} : vector<2x48xf32> to vector<2x16xf32>
    %322 = arith.mulf %321, %309 : vector<2x16xf32>
    %323 = arith.addf %320, %322 : vector<2x16xf32>
    %324 = vector.broadcast %311 : vector<2x1xf32> to vector<2x16xf32>
    %325 = arith.mulf %323, %324 : vector<2x16xf32>
    %326 = vector.extract_strided_slice %299 {offsets = [0, 32], sizes = [2, 16], strides = [1, 1]} : vector<2x48xf32> to vector<2x16xf32>
    %327 = math.tanh %317 : vector<2x16xf32>
    %328 = arith.mulf %326, %327 : vector<2x16xf32>
    %329 = vector.extract_strided_slice %307 {offsets = [0, 32], sizes = [2, 16], strides = [1, 1]} : vector<2x48xf32> to vector<2x16xf32>
    %330 = math.tanh %325 : vector<2x16xf32>
    %331 = arith.mulf %329, %330 : vector<2x16xf32>
    %332 = vector.broadcast %311 : vector<2x1xf32> to vector<2x16xf32>
    %333 = arith.mulf %331, %332 : vector<2x16xf32>
    %334 = vector.extract_strided_slice %6 {offsets = [0, 5, 0], sizes = [2, 1, 1], strides = [1, 1, 1]} : vector<2x8x1xf32> to vector<2x1x1xf32>
    %335 = vector.shape_cast %334 : vector<2x1x1xf32> to vector<2x1xf32>
    %336 = vector.broadcast %335 : vector<2x1xf32> to vector<2x16xf32>
    %337 = arith.mulf %328, %336 : vector<2x16xf32>
    %338 = tpu.concatenate %328, %333 in 1 : vector<2x16xf32>, vector<2x16xf32> -> vector<2x32xf32>
    %339 = tpu.concatenate %317, %325 in 1 : vector<2x16xf32>, vector<2x16xf32> -> vector<2x32xf32>
    %cst_35 = arith.constant dense<0.000000e+00> : vector<2x128xf32>
    %340 = tpu.matmul %338, %3, %cst_35 {dimension_numbers = #tpu.dot_dimension_numbers<[1], [0], [0], [1], [0, 0, 1, 1], [], []>} : vector<2x32xf32>, vector<32x128xf32>, vector<2x128xf32> -> vector<2x128xf32>
    %341 = vector.extract_strided_slice %340 {offsets = [0, 0], sizes = [2, 64], strides = [1, 1]} : vector<2x128xf32> to vector<2x64xf32>
    %342 = vector.extract_strided_slice %4 {offsets = [0, 6, 0], sizes = [2, 1, 64], strides = [1, 1, 1]} : vector<2x8x64xf32> to vector<2x1x64xf32>
    %343 = vector.shape_cast %342 : vector<2x1x64xf32> to vector<2x64xf32>
    %344 = arith.addf %341, %343 : vector<2x64xf32>
    %345 = vector.extract_strided_slice %340 {offsets = [0, 64], sizes = [2, 64], strides = [1, 1]} : vector<2x128xf32> to vector<2x64xf32>
    %346 = vector.extract_strided_slice %5 {offsets = [0, 1, 0], sizes = [2, 1, 64], strides = [1, 1, 1]} : vector<2x8x64xf32> to vector<2x1x64xf32>
    %347 = vector.shape_cast %346 : vector<2x1x64xf32> to vector<2x64xf32>
    %348 = arith.addf %345, %347 : vector<2x64xf32>
    %349 = vector.extract_strided_slice %344 {offsets = [0, 0], sizes = [2, 48], strides = [1, 1]} : vector<2x64xf32> to vector<2x48xf32>
    %350 = arith.negf %349 : vector<2x48xf32>
    %351 = math.exp %350 : vector<2x48xf32>
    %cst_36 = arith.constant 1.000000e+00 : f32
    %352 = vector.broadcast %cst_36 : f32 to vector<2x48xf32>
    %353 = arith.addf %352, %351 : vector<2x48xf32>
    %354 = arith.divf %352, %353 : vector<2x48xf32>
    %355 = vector.extract_strided_slice %344 {offsets = [0, 48], sizes = [2, 16], strides = [1, 1]} : vector<2x64xf32> to vector<2x16xf32>
    %356 = math.tanh %355 : vector<2x16xf32>
    %357 = vector.extract_strided_slice %348 {offsets = [0, 0], sizes = [2, 48], strides = [1, 1]} : vector<2x64xf32> to vector<2x48xf32>
    %358 = arith.negf %357 : vector<2x48xf32>
    %359 = math.exp %358 : vector<2x48xf32>
    %cst_37 = arith.constant 1.000000e+00 : f32
    %360 = vector.broadcast %cst_37 : f32 to vector<2x48xf32>
    %361 = arith.addf %360, %359 : vector<2x48xf32>
    %362 = arith.divf %360, %361 : vector<2x48xf32>
    %363 = vector.extract_strided_slice %348 {offsets = [0, 48], sizes = [2, 16], strides = [1, 1]} : vector<2x64xf32> to vector<2x16xf32>
    %364 = math.tanh %363 : vector<2x16xf32>
    %365 = vector.extract_strided_slice %7 {offsets = [0, 1, 0], sizes = [2, 1, 1], strides = [1, 1, 1]} : vector<2x8x1xf32> to vector<2x1x1xf32>
    %366 = vector.shape_cast %365 : vector<2x1x1xf32> to vector<2x1xf32>
    %367 = vector.extract_strided_slice %354 {offsets = [0, 16], sizes = [2, 16], strides = [1, 1]} : vector<2x48xf32> to vector<2x16xf32>
    %368 = vector.extract_strided_slice %339 {offsets = [0, 0], sizes = [2, 16], strides = [1, 1]} : vector<2x32xf32> to vector<2x16xf32>
    %369 = arith.mulf %367, %368 : vector<2x16xf32>
    %370 = vector.extract_strided_slice %354 {offsets = [0, 0], sizes = [2, 16], strides = [1, 1]} : vector<2x48xf32> to vector<2x16xf32>
    %371 = arith.mulf %370, %356 : vector<2x16xf32>
    %372 = arith.addf %369, %371 : vector<2x16xf32>
    %373 = vector.extract_strided_slice %362 {offsets = [0, 16], sizes = [2, 16], strides = [1, 1]} : vector<2x48xf32> to vector<2x16xf32>
    %374 = vector.extract_strided_slice %339 {offsets = [0, 16], sizes = [2, 16], strides = [1, 1]} : vector<2x32xf32> to vector<2x16xf32>
    %375 = arith.mulf %373, %374 : vector<2x16xf32>
    %376 = vector.extract_strided_slice %362 {offsets = [0, 0], sizes = [2, 16], strides = [1, 1]} : vector<2x48xf32> to vector<2x16xf32>
    %377 = arith.mulf %376, %364 : vector<2x16xf32>
    %378 = arith.addf %375, %377 : vector<2x16xf32>
    %379 = vector.broadcast %366 : vector<2x1xf32> to vector<2x16xf32>
    %380 = arith.mulf %378, %379 : vector<2x16xf32>
    %381 = vector.extract_strided_slice %354 {offsets = [0, 32], sizes = [2, 16], strides = [1, 1]} : vector<2x48xf32> to vector<2x16xf32>
    %382 = math.tanh %372 : vector<2x16xf32>
    %383 = arith.mulf %381, %382 : vector<2x16xf32>
    %384 = vector.extract_strided_slice %362 {offsets = [0, 32], sizes = [2, 16], strides = [1, 1]} : vector<2x48xf32> to vector<2x16xf32>
    %385 = math.tanh %380 : vector<2x16xf32>
    %386 = arith.mulf %384, %385 : vector<2x16xf32>
    %387 = vector.broadcast %366 : vector<2x1xf32> to vector<2x16xf32>
    %388 = arith.mulf %386, %387 : vector<2x16xf32>
    %389 = vector.extract_strided_slice %6 {offsets = [0, 6, 0], sizes = [2, 1, 1], strides = [1, 1, 1]} : vector<2x8x1xf32> to vector<2x1x1xf32>
    %390 = vector.shape_cast %389 : vector<2x1x1xf32> to vector<2x1xf32>
    %391 = vector.broadcast %390 : vector<2x1xf32> to vector<2x16xf32>
    %392 = arith.mulf %383, %391 : vector<2x16xf32>
    %393 = tpu.concatenate %383, %388 in 1 : vector<2x16xf32>, vector<2x16xf32> -> vector<2x32xf32>
    %394 = tpu.concatenate %372, %380 in 1 : vector<2x16xf32>, vector<2x16xf32> -> vector<2x32xf32>
    %cst_38 = arith.constant dense<0.000000e+00> : vector<2x128xf32>
    %395 = tpu.matmul %393, %3, %cst_38 {dimension_numbers = #tpu.dot_dimension_numbers<[1], [0], [0], [1], [0, 0, 1, 1], [], []>} : vector<2x32xf32>, vector<32x128xf32>, vector<2x128xf32> -> vector<2x128xf32>
    %396 = vector.extract_strided_slice %395 {offsets = [0, 0], sizes = [2, 64], strides = [1, 1]} : vector<2x128xf32> to vector<2x64xf32>
    %397 = vector.extract_strided_slice %4 {offsets = [0, 7, 0], sizes = [2, 1, 64], strides = [1, 1, 1]} : vector<2x8x64xf32> to vector<2x1x64xf32>
    %398 = vector.shape_cast %397 : vector<2x1x64xf32> to vector<2x64xf32>
    %399 = arith.addf %396, %398 : vector<2x64xf32>
    %400 = vector.extract_strided_slice %395 {offsets = [0, 64], sizes = [2, 64], strides = [1, 1]} : vector<2x128xf32> to vector<2x64xf32>
    %401 = vector.extract_strided_slice %5 {offsets = [0, 0, 0], sizes = [2, 1, 64], strides = [1, 1, 1]} : vector<2x8x64xf32> to vector<2x1x64xf32>
    %402 = vector.shape_cast %401 : vector<2x1x64xf32> to vector<2x64xf32>
    %403 = arith.addf %400, %402 : vector<2x64xf32>
    %404 = vector.extract_strided_slice %399 {offsets = [0, 0], sizes = [2, 48], strides = [1, 1]} : vector<2x64xf32> to vector<2x48xf32>
    %405 = arith.negf %404 : vector<2x48xf32>
    %406 = math.exp %405 : vector<2x48xf32>
    %cst_39 = arith.constant 1.000000e+00 : f32
    %407 = vector.broadcast %cst_39 : f32 to vector<2x48xf32>
    %408 = arith.addf %407, %406 : vector<2x48xf32>
    %409 = arith.divf %407, %408 : vector<2x48xf32>
    %410 = vector.extract_strided_slice %399 {offsets = [0, 48], sizes = [2, 16], strides = [1, 1]} : vector<2x64xf32> to vector<2x16xf32>
    %411 = math.tanh %410 : vector<2x16xf32>
    %412 = vector.extract_strided_slice %403 {offsets = [0, 0], sizes = [2, 48], strides = [1, 1]} : vector<2x64xf32> to vector<2x48xf32>
    %413 = arith.negf %412 : vector<2x48xf32>
    %414 = math.exp %413 : vector<2x48xf32>
    %cst_40 = arith.constant 1.000000e+00 : f32
    %415 = vector.broadcast %cst_40 : f32 to vector<2x48xf32>
    %416 = arith.addf %415, %414 : vector<2x48xf32>
    %417 = arith.divf %415, %416 : vector<2x48xf32>
    %418 = vector.extract_strided_slice %403 {offsets = [0, 48], sizes = [2, 16], strides = [1, 1]} : vector<2x64xf32> to vector<2x16xf32>
    %419 = math.tanh %418 : vector<2x16xf32>
    %420 = vector.extract_strided_slice %7 {offsets = [0, 0, 0], sizes = [2, 1, 1], strides = [1, 1, 1]} : vector<2x8x1xf32> to vector<2x1x1xf32>
    %421 = vector.shape_cast %420 : vector<2x1x1xf32> to vector<2x1xf32>
    %422 = vector.extract_strided_slice %409 {offsets = [0, 16], sizes = [2, 16], strides = [1, 1]} : vector<2x48xf32> to vector<2x16xf32>
    %423 = vector.extract_strided_slice %394 {offsets = [0, 0], sizes = [2, 16], strides = [1, 1]} : vector<2x32xf32> to vector<2x16xf32>
    %424 = arith.mulf %422, %423 : vector<2x16xf32>
    %425 = vector.extract_strided_slice %409 {offsets = [0, 0], sizes = [2, 16], strides = [1, 1]} : vector<2x48xf32> to vector<2x16xf32>
    %426 = arith.mulf %425, %411 : vector<2x16xf32>
    %427 = arith.addf %424, %426 : vector<2x16xf32>
    %428 = vector.extract_strided_slice %417 {offsets = [0, 16], sizes = [2, 16], strides = [1, 1]} : vector<2x48xf32> to vector<2x16xf32>
    %429 = vector.extract_strided_slice %394 {offsets = [0, 16], sizes = [2, 16], strides = [1, 1]} : vector<2x32xf32> to vector<2x16xf32>
    %430 = arith.mulf %428, %429 : vector<2x16xf32>
    %431 = vector.extract_strided_slice %417 {offsets = [0, 0], sizes = [2, 16], strides = [1, 1]} : vector<2x48xf32> to vector<2x16xf32>
    %432 = arith.mulf %431, %419 : vector<2x16xf32>
    %433 = arith.addf %430, %432 : vector<2x16xf32>
    %434 = vector.broadcast %421 : vector<2x1xf32> to vector<2x16xf32>
    %435 = arith.mulf %433, %434 : vector<2x16xf32>
    %436 = vector.extract_strided_slice %409 {offsets = [0, 32], sizes = [2, 16], strides = [1, 1]} : vector<2x48xf32> to vector<2x16xf32>
    %437 = math.tanh %427 : vector<2x16xf32>
    %438 = arith.mulf %436, %437 : vector<2x16xf32>
    %439 = vector.extract_strided_slice %417 {offsets = [0, 32], sizes = [2, 16], strides = [1, 1]} : vector<2x48xf32> to vector<2x16xf32>
    %440 = math.tanh %435 : vector<2x16xf32>
    %441 = arith.mulf %439, %440 : vector<2x16xf32>
    %442 = vector.broadcast %421 : vector<2x1xf32> to vector<2x16xf32>
    %443 = arith.mulf %441, %442 : vector<2x16xf32>
    %444 = vector.extract_strided_slice %6 {offsets = [0, 7, 0], sizes = [2, 1, 1], strides = [1, 1, 1]} : vector<2x8x1xf32> to vector<2x1x1xf32>
    %445 = vector.shape_cast %444 : vector<2x1x1xf32> to vector<2x1xf32>
    %446 = vector.broadcast %445 : vector<2x1xf32> to vector<2x16xf32>
    %447 = arith.mulf %438, %446 : vector<2x16xf32>
    %448 = tpu.concatenate %438, %443 in 1 : vector<2x16xf32>, vector<2x16xf32> -> vector<2x32xf32>
    %449 = tpu.concatenate %427, %435 in 1 : vector<2x16xf32>, vector<2x16xf32> -> vector<2x32xf32>
    %c0_41 = arith.constant 0 : index
    %c0_42 = arith.constant 0 : index
    %450 = vector.load %arg8[%c0_41, %c0_42] : memref<2x32xf32, #tpu.memory_space<vmem>>, vector<2x32xf32>
    tpu.vector_store %arg8[%c0_41, %c0_42], %448 {strides = array<i32>} : memref<2x32xf32, #tpu.memory_space<vmem>>, vector<2x32xf32>,
    %c0_43 = arith.constant 0 : index
    %c0_44 = arith.constant 0 : index
    %451 = vector.load %arg9[%c0_43, %c0_44] : memref<2x32xf32, #tpu.memory_space<vmem>>, vector<2x32xf32>
    tpu.vector_store %arg9[%c0_43, %c0_44], %449 {strides = array<i32>} : memref<2x32xf32, #tpu.memory_space<vmem>>, vector<2x32xf32>,
    %452 = tpu.concatenate %62, %117, %172, %227, %282, %337, %392, %447 in 1 : vector<2x16xf32>, vector<2x16xf32>, vector<2x16xf32>, vector<2x16xf32>, vector<2x16xf32>, vector<2x16xf32>, vector<2x16xf32>, vector<2x16xf32> -> vector<2x128xf32>
    %c0_45 = arith.constant 0 : index
    %c0_46 = arith.constant 0 : index
    %453 = vector.load %arg6[%c0_45, %c0_46] : memref<2x128xf32, #tpu.memory_space<vmem>>, vector<2x128xf32>
    tpu.vector_store %arg6[%c0_45, %c0_46], %452 {strides = array<i32>} : memref<2x128xf32, #tpu.memory_space<vmem>>, vector<2x128xf32>,
    %454 = tpu.concatenate %443, %388, %333, %278, %223, %168, %113, %58 in 1 : vector<2x16xf32>, vector<2x16xf32>, vector<2x16xf32>, vector<2x16xf32>, vector<2x16xf32>, vector<2x16xf32>, vector<2x16xf32>, vector<2x16xf32> -> vector<2x128xf32>
    %c0_47 = arith.constant 0 : index
    %c0_48 = arith.constant 0 : index
    %455 = vector.load %arg7[%c0_47, %c0_48] : memref<2x128xf32, #tpu.memory_space<vmem>>, vector<2x128xf32>
    tpu.vector_store %arg7[%c0_47, %c0_48], %454 {strides = array<i32>} : memref<2x128xf32, #tpu.memory_space<vmem>>, vector<2x128xf32>,
    return
  }
  func.func @transform_0(%arg0: i32) -> (i32, i32, i32) {
    %c0_i32 = arith.constant 0 : i32
    %c0_i32_0 = arith.constant 0 : i32
    %c0_i32_1 = arith.constant 0 : i32
    return %c0_i32, %arg0, %c0_i32_0 : i32, i32, i32
  }
  func.func @transform_1(%arg0: i32) -> (i32, i32, i32) {
    %c0_i32 = arith.constant 0 : i32
    %0 = arith.subi %c0_i32, %arg0 : i32
    %c0_i32_0 = arith.constant 0 : i32
    %c0_i32_1 = arith.constant 0 : i32
    %c0_i32_2 = arith.constant 0 : i32
    return %c0_i32_0, %0, %c0_i32_1 : i32, i32, i32
  }
  func.func @transform_2(%arg0: i32) -> (i32, i32) {
    %c0_i32 = arith.constant 0 : i32
    %c0_i32_0 = arith.constant 0 : i32
    %c0_i32_1 = arith.constant 0 : i32
    return %c0_i32, %c0_i32_0 : i32, i32
  }
  func.func @transform_3(%arg0: i32) -> (i32, i32, i32) {
    %c0_i32 = arith.constant 0 : i32
    %c0_i32_0 = arith.constant 0 : i32
    %c0_i32_1 = arith.constant 0 : i32
    return %c0_i32, %arg0, %c0_i32_0 : i32, i32, i32
  }
  func.func @transform_4(%arg0: i32) -> (i32, i32, i32) {
    %c0_i32 = arith.constant 0 : i32
    %0 = arith.subi %c0_i32, %arg0 : i32
    %c0_i32_0 = arith.constant 0 : i32
    %c0_i32_1 = arith.constant 0 : i32
    %c0_i32_2 = arith.constant 0 : i32
    return %c0_i32_0, %0, %c0_i32_1 : i32, i32, i32
  }
  func.func @transform_5(%arg0: i32) -> (i32, i32) {
    %c0_i32 = arith.constant 0 : i32
    %c0_i32_0 = arith.constant 0 : i32
    return %c0_i32, %arg0 : i32, i32
  }
  func.func @transform_6(%arg0: i32) -> (i32, i32) {
    %c0_i32 = arith.constant 0 : i32
    %0 = arith.subi %c0_i32, %arg0 : i32
    %c0_i32_0 = arith.constant 0 : i32
    %c0_i32_1 = arith.constant 0 : i32
    return %c0_i32_0, %0 : i32, i32
  }
}

module attributes {stable_mosaic.version = 11 : i64} {
  func.func @_bilstm_kernel(%arg0: i32, %arg1: memref<2x16x64xf32, #tpu.memory_space<vmem>>, %arg2: memref<2x16x64xf32, #tpu.memory_space<vmem>>, %arg3: memref<32x128xf32, #tpu.memory_space<vmem>>, %arg4: memref<2x16x1xf32, #tpu.memory_space<vmem>>, %arg5: memref<2x16x1xf32, #tpu.memory_space<vmem>>, %arg6: memref<2x256xf32, #tpu.memory_space<vmem>>, %arg7: memref<2x256xf32, #tpu.memory_space<vmem>>, %arg8: memref<2x32xf32, #tpu.memory_space<vmem>>, %arg9: memref<2x32xf32, #tpu.memory_space<vmem>>) attributes {dimension_semantics = [#tpu.dimension_semantics<arbitrary>], iteration_bounds = array<i64: 1>, scalar_prefetch = 0 : i64, scratch_operands = 2 : i64, tpu.core_type = #tpu.core_type<tc>, window_params = [{transform_indices = @transform_0, window_bounds = array<i64: 2, 16, 64>}, {transform_indices = @transform_1, window_bounds = array<i64: 2, 16, 64>}, {pipeline_mode = #tpu.pipeline_mode<synchronous>, transform_indices = @transform_2, window_bounds = array<i64: 32, 128>}, {transform_indices = @transform_3, window_bounds = array<i64: 2, 16, 1>}, {transform_indices = @transform_4, window_bounds = array<i64: 2, 16, 1>}, {transform_indices = @transform_5, window_bounds = array<i64: 2, 256>}, {transform_indices = @transform_6, window_bounds = array<i64: 2, 256>}]} {
    %c0_i32 = arith.constant 0 : i32
    %0 = arith.cmpi eq, %arg0, %c0_i32 : i32
    %1 = arith.extui %0 : i1 to i32
    %c0_i32_0 = arith.constant 0 : i32
    %2 = arith.cmpi ne, %1, %c0_i32_0 : i32
    scf.if %2 {
      %cst_73 = arith.constant 0.000000e+00 : f32
      %896 = vector.broadcast %cst_73 : f32 to vector<2x32xf32>
      %c0_74 = arith.constant 0 : index
      %c0_75 = arith.constant 0 : index
      %897 = vector.load %arg8[%c0_74, %c0_75] : memref<2x32xf32, #tpu.memory_space<vmem>>, vector<2x32xf32>
      tpu.vector_store %arg8[%c0_74, %c0_75], %896 {strides = array<i32>} : memref<2x32xf32, #tpu.memory_space<vmem>>, vector<2x32xf32>,
      %cst_76 = arith.constant 0.000000e+00 : f32
      %898 = vector.broadcast %cst_76 : f32 to vector<2x32xf32>
      %c0_77 = arith.constant 0 : index
      %c0_78 = arith.constant 0 : index
      %899 = vector.load %arg9[%c0_77, %c0_78] : memref<2x32xf32, #tpu.memory_space<vmem>>, vector<2x32xf32>
      tpu.vector_store %arg9[%c0_77, %c0_78], %898 {strides = array<i32>} : memref<2x32xf32, #tpu.memory_space<vmem>>, vector<2x32xf32>,
    } else {
    }
    %c0 = arith.constant 0 : index
    %c0_1 = arith.constant 0 : index
    %3 = vector.load %arg3[%c0, %c0_1] : memref<32x128xf32, #tpu.memory_space<vmem>>, vector<32x128xf32>
    %c0_2 = arith.constant 0 : index
    %c0_3 = arith.constant 0 : index
    %c0_4 = arith.constant 0 : index
    %4 = vector.load %arg1[%c0_2, %c0_3, %c0_4] : memref<2x16x64xf32, #tpu.memory_space<vmem>>, vector<2x16x64xf32>
    %c0_5 = arith.constant 0 : index
    %c0_6 = arith.constant 0 : index
    %c0_7 = arith.constant 0 : index
    %5 = vector.load %arg2[%c0_5, %c0_6, %c0_7] : memref<2x16x64xf32, #tpu.memory_space<vmem>>, vector<2x16x64xf32>
    %c0_8 = arith.constant 0 : index
    %c0_9 = arith.constant 0 : index
    %c0_10 = arith.constant 0 : index
    %6 = vector.load %arg4[%c0_8, %c0_9, %c0_10] : memref<2x16x1xf32, #tpu.memory_space<vmem>>, vector<2x16x1xf32>
    %c0_11 = arith.constant 0 : index
    %c0_12 = arith.constant 0 : index
    %c0_13 = arith.constant 0 : index
    %7 = vector.load %arg5[%c0_11, %c0_12, %c0_13] : memref<2x16x1xf32, #tpu.memory_space<vmem>>, vector<2x16x1xf32>
    %c0_14 = arith.constant 0 : index
    %c0_15 = arith.constant 0 : index
    %8 = vector.load %arg8[%c0_14, %c0_15] : memref<2x32xf32, #tpu.memory_space<vmem>>, vector<2x32xf32>
    %c0_16 = arith.constant 0 : index
    %c0_17 = arith.constant 0 : index
    %9 = vector.load %arg9[%c0_16, %c0_17] : memref<2x32xf32, #tpu.memory_space<vmem>>, vector<2x32xf32>
    %cst = arith.constant dense<0.000000e+00> : vector<2x128xf32>
    %10 = tpu.matmul %8, %3, %cst {dimension_numbers = #tpu.dot_dimension_numbers<[1], [0], [0], [1], [0, 0, 1, 1], [], []>} : vector<2x32xf32>, vector<32x128xf32>, vector<2x128xf32> -> vector<2x128xf32>
    %11 = vector.extract_strided_slice %10 {offsets = [0, 0], sizes = [2, 64], strides = [1, 1]} : vector<2x128xf32> to vector<2x64xf32>
    %12 = vector.extract_strided_slice %4 {offsets = [0, 0, 0], sizes = [2, 1, 64], strides = [1, 1, 1]} : vector<2x16x64xf32> to vector<2x1x64xf32>
    %13 = vector.shape_cast %12 : vector<2x1x64xf32> to vector<2x64xf32>
    %14 = arith.addf %11, %13 : vector<2x64xf32>
    %15 = vector.extract_strided_slice %10 {offsets = [0, 64], sizes = [2, 64], strides = [1, 1]} : vector<2x128xf32> to vector<2x64xf32>
    %16 = vector.extract_strided_slice %5 {offsets = [0, 15, 0], sizes = [2, 1, 64], strides = [1, 1, 1]} : vector<2x16x64xf32> to vector<2x1x64xf32>
    %17 = vector.shape_cast %16 : vector<2x1x64xf32> to vector<2x64xf32>
    %18 = arith.addf %15, %17 : vector<2x64xf32>
    %19 = vector.extract_strided_slice %14 {offsets = [0, 0], sizes = [2, 48], strides = [1, 1]} : vector<2x64xf32> to vector<2x48xf32>
    %20 = arith.negf %19 : vector<2x48xf32>
    %21 = math.exp %20 : vector<2x48xf32>
    %cst_18 = arith.constant 1.000000e+00 : f32
    %22 = vector.broadcast %cst_18 : f32 to vector<2x48xf32>
    %23 = arith.addf %22, %21 : vector<2x48xf32>
    %24 = arith.divf %22, %23 : vector<2x48xf32>
    %25 = vector.extract_strided_slice %14 {offsets = [0, 48], sizes = [2, 16], strides = [1, 1]} : vector<2x64xf32> to vector<2x16xf32>
    %26 = math.tanh %25 : vector<2x16xf32>
    %27 = vector.extract_strided_slice %18 {offsets = [0, 0], sizes = [2, 48], strides = [1, 1]} : vector<2x64xf32> to vector<2x48xf32>
    %28 = arith.negf %27 : vector<2x48xf32>
    %29 = math.exp %28 : vector<2x48xf32>
    %cst_19 = arith.constant 1.000000e+00 : f32
    %30 = vector.broadcast %cst_19 : f32 to vector<2x48xf32>
    %31 = arith.addf %30, %29 : vector<2x48xf32>
    %32 = arith.divf %30, %31 : vector<2x48xf32>
    %33 = vector.extract_strided_slice %18 {offsets = [0, 48], sizes = [2, 16], strides = [1, 1]} : vector<2x64xf32> to vector<2x16xf32>
    %34 = math.tanh %33 : vector<2x16xf32>
    %35 = vector.extract_strided_slice %7 {offsets = [0, 15, 0], sizes = [2, 1, 1], strides = [1, 1, 1]} : vector<2x16x1xf32> to vector<2x1x1xf32>
    %36 = vector.shape_cast %35 : vector<2x1x1xf32> to vector<2x1xf32>
    %37 = vector.extract_strided_slice %24 {offsets = [0, 16], sizes = [2, 16], strides = [1, 1]} : vector<2x48xf32> to vector<2x16xf32>
    %38 = vector.extract_strided_slice %9 {offsets = [0, 0], sizes = [2, 16], strides = [1, 1]} : vector<2x32xf32> to vector<2x16xf32>
    %39 = arith.mulf %37, %38 : vector<2x16xf32>
    %40 = vector.extract_strided_slice %24 {offsets = [0, 0], sizes = [2, 16], strides = [1, 1]} : vector<2x48xf32> to vector<2x16xf32>
    %41 = arith.mulf %40, %26 : vector<2x16xf32>
    %42 = arith.addf %39, %41 : vector<2x16xf32>
    %43 = vector.extract_strided_slice %32 {offsets = [0, 16], sizes = [2, 16], strides = [1, 1]} : vector<2x48xf32> to vector<2x16xf32>
    %44 = vector.extract_strided_slice %9 {offsets = [0, 16], sizes = [2, 16], strides = [1, 1]} : vector<2x32xf32> to vector<2x16xf32>
    %45 = arith.mulf %43, %44 : vector<2x16xf32>
    %46 = vector.extract_strided_slice %32 {offsets = [0, 0], sizes = [2, 16], strides = [1, 1]} : vector<2x48xf32> to vector<2x16xf32>
    %47 = arith.mulf %46, %34 : vector<2x16xf32>
    %48 = arith.addf %45, %47 : vector<2x16xf32>
    %49 = vector.broadcast %36 : vector<2x1xf32> to vector<2x16xf32>
    %50 = arith.mulf %48, %49 : vector<2x16xf32>
    %51 = vector.extract_strided_slice %24 {offsets = [0, 32], sizes = [2, 16], strides = [1, 1]} : vector<2x48xf32> to vector<2x16xf32>
    %52 = math.tanh %42 : vector<2x16xf32>
    %53 = arith.mulf %51, %52 : vector<2x16xf32>
    %54 = vector.extract_strided_slice %32 {offsets = [0, 32], sizes = [2, 16], strides = [1, 1]} : vector<2x48xf32> to vector<2x16xf32>
    %55 = math.tanh %50 : vector<2x16xf32>
    %56 = arith.mulf %54, %55 : vector<2x16xf32>
    %57 = vector.broadcast %36 : vector<2x1xf32> to vector<2x16xf32>
    %58 = arith.mulf %56, %57 : vector<2x16xf32>
    %59 = vector.extract_strided_slice %6 {offsets = [0, 0, 0], sizes = [2, 1, 1], strides = [1, 1, 1]} : vector<2x16x1xf32> to vector<2x1x1xf32>
    %60 = vector.shape_cast %59 : vector<2x1x1xf32> to vector<2x1xf32>
    %61 = vector.broadcast %60 : vector<2x1xf32> to vector<2x16xf32>
    %62 = arith.mulf %53, %61 : vector<2x16xf32>
    %63 = tpu.concatenate %53, %58 in 1 : vector<2x16xf32>, vector<2x16xf32> -> vector<2x32xf32>
    %64 = tpu.concatenate %42, %50 in 1 : vector<2x16xf32>, vector<2x16xf32> -> vector<2x32xf32>
    %cst_20 = arith.constant dense<0.000000e+00> : vector<2x128xf32>
    %65 = tpu.matmul %63, %3, %cst_20 {dimension_numbers = #tpu.dot_dimension_numbers<[1], [0], [0], [1], [0, 0, 1, 1], [], []>} : vector<2x32xf32>, vector<32x128xf32>, vector<2x128xf32> -> vector<2x128xf32>
    %66 = vector.extract_strided_slice %65 {offsets = [0, 0], sizes = [2, 64], strides = [1, 1]} : vector<2x128xf32> to vector<2x64xf32>
    %67 = vector.extract_strided_slice %4 {offsets = [0, 1, 0], sizes = [2, 1, 64], strides = [1, 1, 1]} : vector<2x16x64xf32> to vector<2x1x64xf32>
    %68 = vector.shape_cast %67 : vector<2x1x64xf32> to vector<2x64xf32>
    %69 = arith.addf %66, %68 : vector<2x64xf32>
    %70 = vector.extract_strided_slice %65 {offsets = [0, 64], sizes = [2, 64], strides = [1, 1]} : vector<2x128xf32> to vector<2x64xf32>
    %71 = vector.extract_strided_slice %5 {offsets = [0, 14, 0], sizes = [2, 1, 64], strides = [1, 1, 1]} : vector<2x16x64xf32> to vector<2x1x64xf32>
    %72 = vector.shape_cast %71 : vector<2x1x64xf32> to vector<2x64xf32>
    %73 = arith.addf %70, %72 : vector<2x64xf32>
    %74 = vector.extract_strided_slice %69 {offsets = [0, 0], sizes = [2, 48], strides = [1, 1]} : vector<2x64xf32> to vector<2x48xf32>
    %75 = arith.negf %74 : vector<2x48xf32>
    %76 = math.exp %75 : vector<2x48xf32>
    %cst_21 = arith.constant 1.000000e+00 : f32
    %77 = vector.broadcast %cst_21 : f32 to vector<2x48xf32>
    %78 = arith.addf %77, %76 : vector<2x48xf32>
    %79 = arith.divf %77, %78 : vector<2x48xf32>
    %80 = vector.extract_strided_slice %69 {offsets = [0, 48], sizes = [2, 16], strides = [1, 1]} : vector<2x64xf32> to vector<2x16xf32>
    %81 = math.tanh %80 : vector<2x16xf32>
    %82 = vector.extract_strided_slice %73 {offsets = [0, 0], sizes = [2, 48], strides = [1, 1]} : vector<2x64xf32> to vector<2x48xf32>
    %83 = arith.negf %82 : vector<2x48xf32>
    %84 = math.exp %83 : vector<2x48xf32>
    %cst_22 = arith.constant 1.000000e+00 : f32
    %85 = vector.broadcast %cst_22 : f32 to vector<2x48xf32>
    %86 = arith.addf %85, %84 : vector<2x48xf32>
    %87 = arith.divf %85, %86 : vector<2x48xf32>
    %88 = vector.extract_strided_slice %73 {offsets = [0, 48], sizes = [2, 16], strides = [1, 1]} : vector<2x64xf32> to vector<2x16xf32>
    %89 = math.tanh %88 : vector<2x16xf32>
    %90 = vector.extract_strided_slice %7 {offsets = [0, 14, 0], sizes = [2, 1, 1], strides = [1, 1, 1]} : vector<2x16x1xf32> to vector<2x1x1xf32>
    %91 = vector.shape_cast %90 : vector<2x1x1xf32> to vector<2x1xf32>
    %92 = vector.extract_strided_slice %79 {offsets = [0, 16], sizes = [2, 16], strides = [1, 1]} : vector<2x48xf32> to vector<2x16xf32>
    %93 = vector.extract_strided_slice %64 {offsets = [0, 0], sizes = [2, 16], strides = [1, 1]} : vector<2x32xf32> to vector<2x16xf32>
    %94 = arith.mulf %92, %93 : vector<2x16xf32>
    %95 = vector.extract_strided_slice %79 {offsets = [0, 0], sizes = [2, 16], strides = [1, 1]} : vector<2x48xf32> to vector<2x16xf32>
    %96 = arith.mulf %95, %81 : vector<2x16xf32>
    %97 = arith.addf %94, %96 : vector<2x16xf32>
    %98 = vector.extract_strided_slice %87 {offsets = [0, 16], sizes = [2, 16], strides = [1, 1]} : vector<2x48xf32> to vector<2x16xf32>
    %99 = vector.extract_strided_slice %64 {offsets = [0, 16], sizes = [2, 16], strides = [1, 1]} : vector<2x32xf32> to vector<2x16xf32>
    %100 = arith.mulf %98, %99 : vector<2x16xf32>
    %101 = vector.extract_strided_slice %87 {offsets = [0, 0], sizes = [2, 16], strides = [1, 1]} : vector<2x48xf32> to vector<2x16xf32>
    %102 = arith.mulf %101, %89 : vector<2x16xf32>
    %103 = arith.addf %100, %102 : vector<2x16xf32>
    %104 = vector.broadcast %91 : vector<2x1xf32> to vector<2x16xf32>
    %105 = arith.mulf %103, %104 : vector<2x16xf32>
    %106 = vector.extract_strided_slice %79 {offsets = [0, 32], sizes = [2, 16], strides = [1, 1]} : vector<2x48xf32> to vector<2x16xf32>
    %107 = math.tanh %97 : vector<2x16xf32>
    %108 = arith.mulf %106, %107 : vector<2x16xf32>
    %109 = vector.extract_strided_slice %87 {offsets = [0, 32], sizes = [2, 16], strides = [1, 1]} : vector<2x48xf32> to vector<2x16xf32>
    %110 = math.tanh %105 : vector<2x16xf32>
    %111 = arith.mulf %109, %110 : vector<2x16xf32>
    %112 = vector.broadcast %91 : vector<2x1xf32> to vector<2x16xf32>
    %113 = arith.mulf %111, %112 : vector<2x16xf32>
    %114 = vector.extract_strided_slice %6 {offsets = [0, 1, 0], sizes = [2, 1, 1], strides = [1, 1, 1]} : vector<2x16x1xf32> to vector<2x1x1xf32>
    %115 = vector.shape_cast %114 : vector<2x1x1xf32> to vector<2x1xf32>
    %116 = vector.broadcast %115 : vector<2x1xf32> to vector<2x16xf32>
    %117 = arith.mulf %108, %116 : vector<2x16xf32>
    %118 = tpu.concatenate %108, %113 in 1 : vector<2x16xf32>, vector<2x16xf32> -> vector<2x32xf32>
    %119 = tpu.concatenate %97, %105 in 1 : vector<2x16xf32>, vector<2x16xf32> -> vector<2x32xf32>
    %cst_23 = arith.constant dense<0.000000e+00> : vector<2x128xf32>
    %120 = tpu.matmul %118, %3, %cst_23 {dimension_numbers = #tpu.dot_dimension_numbers<[1], [0], [0], [1], [0, 0, 1, 1], [], []>} : vector<2x32xf32>, vector<32x128xf32>, vector<2x128xf32> -> vector<2x128xf32>
    %121 = vector.extract_strided_slice %120 {offsets = [0, 0], sizes = [2, 64], strides = [1, 1]} : vector<2x128xf32> to vector<2x64xf32>
    %122 = vector.extract_strided_slice %4 {offsets = [0, 2, 0], sizes = [2, 1, 64], strides = [1, 1, 1]} : vector<2x16x64xf32> to vector<2x1x64xf32>
    %123 = vector.shape_cast %122 : vector<2x1x64xf32> to vector<2x64xf32>
    %124 = arith.addf %121, %123 : vector<2x64xf32>
    %125 = vector.extract_strided_slice %120 {offsets = [0, 64], sizes = [2, 64], strides = [1, 1]} : vector<2x128xf32> to vector<2x64xf32>
    %126 = vector.extract_strided_slice %5 {offsets = [0, 13, 0], sizes = [2, 1, 64], strides = [1, 1, 1]} : vector<2x16x64xf32> to vector<2x1x64xf32>
    %127 = vector.shape_cast %126 : vector<2x1x64xf32> to vector<2x64xf32>
    %128 = arith.addf %125, %127 : vector<2x64xf32>
    %129 = vector.extract_strided_slice %124 {offsets = [0, 0], sizes = [2, 48], strides = [1, 1]} : vector<2x64xf32> to vector<2x48xf32>
    %130 = arith.negf %129 : vector<2x48xf32>
    %131 = math.exp %130 : vector<2x48xf32>
    %cst_24 = arith.constant 1.000000e+00 : f32
    %132 = vector.broadcast %cst_24 : f32 to vector<2x48xf32>
    %133 = arith.addf %132, %131 : vector<2x48xf32>
    %134 = arith.divf %132, %133 : vector<2x48xf32>
    %135 = vector.extract_strided_slice %124 {offsets = [0, 48], sizes = [2, 16], strides = [1, 1]} : vector<2x64xf32> to vector<2x16xf32>
    %136 = math.tanh %135 : vector<2x16xf32>
    %137 = vector.extract_strided_slice %128 {offsets = [0, 0], sizes = [2, 48], strides = [1, 1]} : vector<2x64xf32> to vector<2x48xf32>
    %138 = arith.negf %137 : vector<2x48xf32>
    %139 = math.exp %138 : vector<2x48xf32>
    %cst_25 = arith.constant 1.000000e+00 : f32
    %140 = vector.broadcast %cst_25 : f32 to vector<2x48xf32>
    %141 = arith.addf %140, %139 : vector<2x48xf32>
    %142 = arith.divf %140, %141 : vector<2x48xf32>
    %143 = vector.extract_strided_slice %128 {offsets = [0, 48], sizes = [2, 16], strides = [1, 1]} : vector<2x64xf32> to vector<2x16xf32>
    %144 = math.tanh %143 : vector<2x16xf32>
    %145 = vector.extract_strided_slice %7 {offsets = [0, 13, 0], sizes = [2, 1, 1], strides = [1, 1, 1]} : vector<2x16x1xf32> to vector<2x1x1xf32>
    %146 = vector.shape_cast %145 : vector<2x1x1xf32> to vector<2x1xf32>
    %147 = vector.extract_strided_slice %134 {offsets = [0, 16], sizes = [2, 16], strides = [1, 1]} : vector<2x48xf32> to vector<2x16xf32>
    %148 = vector.extract_strided_slice %119 {offsets = [0, 0], sizes = [2, 16], strides = [1, 1]} : vector<2x32xf32> to vector<2x16xf32>
    %149 = arith.mulf %147, %148 : vector<2x16xf32>
    %150 = vector.extract_strided_slice %134 {offsets = [0, 0], sizes = [2, 16], strides = [1, 1]} : vector<2x48xf32> to vector<2x16xf32>
    %151 = arith.mulf %150, %136 : vector<2x16xf32>
    %152 = arith.addf %149, %151 : vector<2x16xf32>
    %153 = vector.extract_strided_slice %142 {offsets = [0, 16], sizes = [2, 16], strides = [1, 1]} : vector<2x48xf32> to vector<2x16xf32>
    %154 = vector.extract_strided_slice %119 {offsets = [0, 16], sizes = [2, 16], strides = [1, 1]} : vector<2x32xf32> to vector<2x16xf32>
    %155 = arith.mulf %153, %154 : vector<2x16xf32>
    %156 = vector.extract_strided_slice %142 {offsets = [0, 0], sizes = [2, 16], strides = [1, 1]} : vector<2x48xf32> to vector<2x16xf32>
    %157 = arith.mulf %156, %144 : vector<2x16xf32>
    %158 = arith.addf %155, %157 : vector<2x16xf32>
    %159 = vector.broadcast %146 : vector<2x1xf32> to vector<2x16xf32>
    %160 = arith.mulf %158, %159 : vector<2x16xf32>
    %161 = vector.extract_strided_slice %134 {offsets = [0, 32], sizes = [2, 16], strides = [1, 1]} : vector<2x48xf32> to vector<2x16xf32>
    %162 = math.tanh %152 : vector<2x16xf32>
    %163 = arith.mulf %161, %162 : vector<2x16xf32>
    %164 = vector.extract_strided_slice %142 {offsets = [0, 32], sizes = [2, 16], strides = [1, 1]} : vector<2x48xf32> to vector<2x16xf32>
    %165 = math.tanh %160 : vector<2x16xf32>
    %166 = arith.mulf %164, %165 : vector<2x16xf32>
    %167 = vector.broadcast %146 : vector<2x1xf32> to vector<2x16xf32>
    %168 = arith.mulf %166, %167 : vector<2x16xf32>
    %169 = vector.extract_strided_slice %6 {offsets = [0, 2, 0], sizes = [2, 1, 1], strides = [1, 1, 1]} : vector<2x16x1xf32> to vector<2x1x1xf32>
    %170 = vector.shape_cast %169 : vector<2x1x1xf32> to vector<2x1xf32>
    %171 = vector.broadcast %170 : vector<2x1xf32> to vector<2x16xf32>
    %172 = arith.mulf %163, %171 : vector<2x16xf32>
    %173 = tpu.concatenate %163, %168 in 1 : vector<2x16xf32>, vector<2x16xf32> -> vector<2x32xf32>
    %174 = tpu.concatenate %152, %160 in 1 : vector<2x16xf32>, vector<2x16xf32> -> vector<2x32xf32>
    %cst_26 = arith.constant dense<0.000000e+00> : vector<2x128xf32>
    %175 = tpu.matmul %173, %3, %cst_26 {dimension_numbers = #tpu.dot_dimension_numbers<[1], [0], [0], [1], [0, 0, 1, 1], [], []>} : vector<2x32xf32>, vector<32x128xf32>, vector<2x128xf32> -> vector<2x128xf32>
    %176 = vector.extract_strided_slice %175 {offsets = [0, 0], sizes = [2, 64], strides = [1, 1]} : vector<2x128xf32> to vector<2x64xf32>
    %177 = vector.extract_strided_slice %4 {offsets = [0, 3, 0], sizes = [2, 1, 64], strides = [1, 1, 1]} : vector<2x16x64xf32> to vector<2x1x64xf32>
    %178 = vector.shape_cast %177 : vector<2x1x64xf32> to vector<2x64xf32>
    %179 = arith.addf %176, %178 : vector<2x64xf32>
    %180 = vector.extract_strided_slice %175 {offsets = [0, 64], sizes = [2, 64], strides = [1, 1]} : vector<2x128xf32> to vector<2x64xf32>
    %181 = vector.extract_strided_slice %5 {offsets = [0, 12, 0], sizes = [2, 1, 64], strides = [1, 1, 1]} : vector<2x16x64xf32> to vector<2x1x64xf32>
    %182 = vector.shape_cast %181 : vector<2x1x64xf32> to vector<2x64xf32>
    %183 = arith.addf %180, %182 : vector<2x64xf32>
    %184 = vector.extract_strided_slice %179 {offsets = [0, 0], sizes = [2, 48], strides = [1, 1]} : vector<2x64xf32> to vector<2x48xf32>
    %185 = arith.negf %184 : vector<2x48xf32>
    %186 = math.exp %185 : vector<2x48xf32>
    %cst_27 = arith.constant 1.000000e+00 : f32
    %187 = vector.broadcast %cst_27 : f32 to vector<2x48xf32>
    %188 = arith.addf %187, %186 : vector<2x48xf32>
    %189 = arith.divf %187, %188 : vector<2x48xf32>
    %190 = vector.extract_strided_slice %179 {offsets = [0, 48], sizes = [2, 16], strides = [1, 1]} : vector<2x64xf32> to vector<2x16xf32>
    %191 = math.tanh %190 : vector<2x16xf32>
    %192 = vector.extract_strided_slice %183 {offsets = [0, 0], sizes = [2, 48], strides = [1, 1]} : vector<2x64xf32> to vector<2x48xf32>
    %193 = arith.negf %192 : vector<2x48xf32>
    %194 = math.exp %193 : vector<2x48xf32>
    %cst_28 = arith.constant 1.000000e+00 : f32
    %195 = vector.broadcast %cst_28 : f32 to vector<2x48xf32>
    %196 = arith.addf %195, %194 : vector<2x48xf32>
    %197 = arith.divf %195, %196 : vector<2x48xf32>
    %198 = vector.extract_strided_slice %183 {offsets = [0, 48], sizes = [2, 16], strides = [1, 1]} : vector<2x64xf32> to vector<2x16xf32>
    %199 = math.tanh %198 : vector<2x16xf32>
    %200 = vector.extract_strided_slice %7 {offsets = [0, 12, 0], sizes = [2, 1, 1], strides = [1, 1, 1]} : vector<2x16x1xf32> to vector<2x1x1xf32>
    %201 = vector.shape_cast %200 : vector<2x1x1xf32> to vector<2x1xf32>
    %202 = vector.extract_strided_slice %189 {offsets = [0, 16], sizes = [2, 16], strides = [1, 1]} : vector<2x48xf32> to vector<2x16xf32>
    %203 = vector.extract_strided_slice %174 {offsets = [0, 0], sizes = [2, 16], strides = [1, 1]} : vector<2x32xf32> to vector<2x16xf32>
    %204 = arith.mulf %202, %203 : vector<2x16xf32>
    %205 = vector.extract_strided_slice %189 {offsets = [0, 0], sizes = [2, 16], strides = [1, 1]} : vector<2x48xf32> to vector<2x16xf32>
    %206 = arith.mulf %205, %191 : vector<2x16xf32>
    %207 = arith.addf %204, %206 : vector<2x16xf32>
    %208 = vector.extract_strided_slice %197 {offsets = [0, 16], sizes = [2, 16], strides = [1, 1]} : vector<2x48xf32> to vector<2x16xf32>
    %209 = vector.extract_strided_slice %174 {offsets = [0, 16], sizes = [2, 16], strides = [1, 1]} : vector<2x32xf32> to vector<2x16xf32>
    %210 = arith.mulf %208, %209 : vector<2x16xf32>
    %211 = vector.extract_strided_slice %197 {offsets = [0, 0], sizes = [2, 16], strides = [1, 1]} : vector<2x48xf32> to vector<2x16xf32>
    %212 = arith.mulf %211, %199 : vector<2x16xf32>
    %213 = arith.addf %210, %212 : vector<2x16xf32>
    %214 = vector.broadcast %201 : vector<2x1xf32> to vector<2x16xf32>
    %215 = arith.mulf %213, %214 : vector<2x16xf32>
    %216 = vector.extract_strided_slice %189 {offsets = [0, 32], sizes = [2, 16], strides = [1, 1]} : vector<2x48xf32> to vector<2x16xf32>
    %217 = math.tanh %207 : vector<2x16xf32>
    %218 = arith.mulf %216, %217 : vector<2x16xf32>
    %219 = vector.extract_strided_slice %197 {offsets = [0, 32], sizes = [2, 16], strides = [1, 1]} : vector<2x48xf32> to vector<2x16xf32>
    %220 = math.tanh %215 : vector<2x16xf32>
    %221 = arith.mulf %219, %220 : vector<2x16xf32>
    %222 = vector.broadcast %201 : vector<2x1xf32> to vector<2x16xf32>
    %223 = arith.mulf %221, %222 : vector<2x16xf32>
    %224 = vector.extract_strided_slice %6 {offsets = [0, 3, 0], sizes = [2, 1, 1], strides = [1, 1, 1]} : vector<2x16x1xf32> to vector<2x1x1xf32>
    %225 = vector.shape_cast %224 : vector<2x1x1xf32> to vector<2x1xf32>
    %226 = vector.broadcast %225 : vector<2x1xf32> to vector<2x16xf32>
    %227 = arith.mulf %218, %226 : vector<2x16xf32>
    %228 = tpu.concatenate %218, %223 in 1 : vector<2x16xf32>, vector<2x16xf32> -> vector<2x32xf32>
    %229 = tpu.concatenate %207, %215 in 1 : vector<2x16xf32>, vector<2x16xf32> -> vector<2x32xf32>
    %cst_29 = arith.constant dense<0.000000e+00> : vector<2x128xf32>
    %230 = tpu.matmul %228, %3, %cst_29 {dimension_numbers = #tpu.dot_dimension_numbers<[1], [0], [0], [1], [0, 0, 1, 1], [], []>} : vector<2x32xf32>, vector<32x128xf32>, vector<2x128xf32> -> vector<2x128xf32>
    %231 = vector.extract_strided_slice %230 {offsets = [0, 0], sizes = [2, 64], strides = [1, 1]} : vector<2x128xf32> to vector<2x64xf32>
    %232 = vector.extract_strided_slice %4 {offsets = [0, 4, 0], sizes = [2, 1, 64], strides = [1, 1, 1]} : vector<2x16x64xf32> to vector<2x1x64xf32>
    %233 = vector.shape_cast %232 : vector<2x1x64xf32> to vector<2x64xf32>
    %234 = arith.addf %231, %233 : vector<2x64xf32>
    %235 = vector.extract_strided_slice %230 {offsets = [0, 64], sizes = [2, 64], strides = [1, 1]} : vector<2x128xf32> to vector<2x64xf32>
    %236 = vector.extract_strided_slice %5 {offsets = [0, 11, 0], sizes = [2, 1, 64], strides = [1, 1, 1]} : vector<2x16x64xf32> to vector<2x1x64xf32>
    %237 = vector.shape_cast %236 : vector<2x1x64xf32> to vector<2x64xf32>
    %238 = arith.addf %235, %237 : vector<2x64xf32>
    %239 = vector.extract_strided_slice %234 {offsets = [0, 0], sizes = [2, 48], strides = [1, 1]} : vector<2x64xf32> to vector<2x48xf32>
    %240 = arith.negf %239 : vector<2x48xf32>
    %241 = math.exp %240 : vector<2x48xf32>
    %cst_30 = arith.constant 1.000000e+00 : f32
    %242 = vector.broadcast %cst_30 : f32 to vector<2x48xf32>
    %243 = arith.addf %242, %241 : vector<2x48xf32>
    %244 = arith.divf %242, %243 : vector<2x48xf32>
    %245 = vector.extract_strided_slice %234 {offsets = [0, 48], sizes = [2, 16], strides = [1, 1]} : vector<2x64xf32> to vector<2x16xf32>
    %246 = math.tanh %245 : vector<2x16xf32>
    %247 = vector.extract_strided_slice %238 {offsets = [0, 0], sizes = [2, 48], strides = [1, 1]} : vector<2x64xf32> to vector<2x48xf32>
    %248 = arith.negf %247 : vector<2x48xf32>
    %249 = math.exp %248 : vector<2x48xf32>
    %cst_31 = arith.constant 1.000000e+00 : f32
    %250 = vector.broadcast %cst_31 : f32 to vector<2x48xf32>
    %251 = arith.addf %250, %249 : vector<2x48xf32>
    %252 = arith.divf %250, %251 : vector<2x48xf32>
    %253 = vector.extract_strided_slice %238 {offsets = [0, 48], sizes = [2, 16], strides = [1, 1]} : vector<2x64xf32> to vector<2x16xf32>
    %254 = math.tanh %253 : vector<2x16xf32>
    %255 = vector.extract_strided_slice %7 {offsets = [0, 11, 0], sizes = [2, 1, 1], strides = [1, 1, 1]} : vector<2x16x1xf32> to vector<2x1x1xf32>
    %256 = vector.shape_cast %255 : vector<2x1x1xf32> to vector<2x1xf32>
    %257 = vector.extract_strided_slice %244 {offsets = [0, 16], sizes = [2, 16], strides = [1, 1]} : vector<2x48xf32> to vector<2x16xf32>
    %258 = vector.extract_strided_slice %229 {offsets = [0, 0], sizes = [2, 16], strides = [1, 1]} : vector<2x32xf32> to vector<2x16xf32>
    %259 = arith.mulf %257, %258 : vector<2x16xf32>
    %260 = vector.extract_strided_slice %244 {offsets = [0, 0], sizes = [2, 16], strides = [1, 1]} : vector<2x48xf32> to vector<2x16xf32>
    %261 = arith.mulf %260, %246 : vector<2x16xf32>
    %262 = arith.addf %259, %261 : vector<2x16xf32>
    %263 = vector.extract_strided_slice %252 {offsets = [0, 16], sizes = [2, 16], strides = [1, 1]} : vector<2x48xf32> to vector<2x16xf32>
    %264 = vector.extract_strided_slice %229 {offsets = [0, 16], sizes = [2, 16], strides = [1, 1]} : vector<2x32xf32> to vector<2x16xf32>
    %265 = arith.mulf %263, %264 : vector<2x16xf32>
    %266 = vector.extract_strided_slice %252 {offsets = [0, 0], sizes = [2, 16], strides = [1, 1]} : vector<2x48xf32> to vector<2x16xf32>
    %267 = arith.mulf %266, %254 : vector<2x16xf32>
    %268 = arith.addf %265, %267 : vector<2x16xf32>
    %269 = vector.broadcast %256 : vector<2x1xf32> to vector<2x16xf32>
    %270 = arith.mulf %268, %269 : vector<2x16xf32>
    %271 = vector.extract_strided_slice %244 {offsets = [0, 32], sizes = [2, 16], strides = [1, 1]} : vector<2x48xf32> to vector<2x16xf32>
    %272 = math.tanh %262 : vector<2x16xf32>
    %273 = arith.mulf %271, %272 : vector<2x16xf32>
    %274 = vector.extract_strided_slice %252 {offsets = [0, 32], sizes = [2, 16], strides = [1, 1]} : vector<2x48xf32> to vector<2x16xf32>
    %275 = math.tanh %270 : vector<2x16xf32>
    %276 = arith.mulf %274, %275 : vector<2x16xf32>
    %277 = vector.broadcast %256 : vector<2x1xf32> to vector<2x16xf32>
    %278 = arith.mulf %276, %277 : vector<2x16xf32>
    %279 = vector.extract_strided_slice %6 {offsets = [0, 4, 0], sizes = [2, 1, 1], strides = [1, 1, 1]} : vector<2x16x1xf32> to vector<2x1x1xf32>
    %280 = vector.shape_cast %279 : vector<2x1x1xf32> to vector<2x1xf32>
    %281 = vector.broadcast %280 : vector<2x1xf32> to vector<2x16xf32>
    %282 = arith.mulf %273, %281 : vector<2x16xf32>
    %283 = tpu.concatenate %273, %278 in 1 : vector<2x16xf32>, vector<2x16xf32> -> vector<2x32xf32>
    %284 = tpu.concatenate %262, %270 in 1 : vector<2x16xf32>, vector<2x16xf32> -> vector<2x32xf32>
    %cst_32 = arith.constant dense<0.000000e+00> : vector<2x128xf32>
    %285 = tpu.matmul %283, %3, %cst_32 {dimension_numbers = #tpu.dot_dimension_numbers<[1], [0], [0], [1], [0, 0, 1, 1], [], []>} : vector<2x32xf32>, vector<32x128xf32>, vector<2x128xf32> -> vector<2x128xf32>
    %286 = vector.extract_strided_slice %285 {offsets = [0, 0], sizes = [2, 64], strides = [1, 1]} : vector<2x128xf32> to vector<2x64xf32>
    %287 = vector.extract_strided_slice %4 {offsets = [0, 5, 0], sizes = [2, 1, 64], strides = [1, 1, 1]} : vector<2x16x64xf32> to vector<2x1x64xf32>
    %288 = vector.shape_cast %287 : vector<2x1x64xf32> to vector<2x64xf32>
    %289 = arith.addf %286, %288 : vector<2x64xf32>
    %290 = vector.extract_strided_slice %285 {offsets = [0, 64], sizes = [2, 64], strides = [1, 1]} : vector<2x128xf32> to vector<2x64xf32>
    %291 = vector.extract_strided_slice %5 {offsets = [0, 10, 0], sizes = [2, 1, 64], strides = [1, 1, 1]} : vector<2x16x64xf32> to vector<2x1x64xf32>
    %292 = vector.shape_cast %291 : vector<2x1x64xf32> to vector<2x64xf32>
    %293 = arith.addf %290, %292 : vector<2x64xf32>
    %294 = vector.extract_strided_slice %289 {offsets = [0, 0], sizes = [2, 48], strides = [1, 1]} : vector<2x64xf32> to vector<2x48xf32>
    %295 = arith.negf %294 : vector<2x48xf32>
    %296 = math.exp %295 : vector<2x48xf32>
    %cst_33 = arith.constant 1.000000e+00 : f32
    %297 = vector.broadcast %cst_33 : f32 to vector<2x48xf32>
    %298 = arith.addf %297, %296 : vector<2x48xf32>
    %299 = arith.divf %297, %298 : vector<2x48xf32>
    %300 = vector.extract_strided_slice %289 {offsets = [0, 48], sizes = [2, 16], strides = [1, 1]} : vector<2x64xf32> to vector<2x16xf32>
    %301 = math.tanh %300 : vector<2x16xf32>
    %302 = vector.extract_strided_slice %293 {offsets = [0, 0], sizes = [2, 48], strides = [1, 1]} : vector<2x64xf32> to vector<2x48xf32>
    %303 = arith.negf %302 : vector<2x48xf32>
    %304 = math.exp %303 : vector<2x48xf32>
    %cst_34 = arith.constant 1.000000e+00 : f32
    %305 = vector.broadcast %cst_34 : f32 to vector<2x48xf32>
    %306 = arith.addf %305, %304 : vector<2x48xf32>
    %307 = arith.divf %305, %306 : vector<2x48xf32>
    %308 = vector.extract_strided_slice %293 {offsets = [0, 48], sizes = [2, 16], strides = [1, 1]} : vector<2x64xf32> to vector<2x16xf32>
    %309 = math.tanh %308 : vector<2x16xf32>
    %310 = vector.extract_strided_slice %7 {offsets = [0, 10, 0], sizes = [2, 1, 1], strides = [1, 1, 1]} : vector<2x16x1xf32> to vector<2x1x1xf32>
    %311 = vector.shape_cast %310 : vector<2x1x1xf32> to vector<2x1xf32>
    %312 = vector.extract_strided_slice %299 {offsets = [0, 16], sizes = [2, 16], strides = [1, 1]} : vector<2x48xf32> to vector<2x16xf32>
    %313 = vector.extract_strided_slice %284 {offsets = [0, 0], sizes = [2, 16], strides = [1, 1]} : vector<2x32xf32> to vector<2x16xf32>
    %314 = arith.mulf %312, %313 : vector<2x16xf32>
    %315 = vector.extract_strided_slice %299 {offsets = [0, 0], sizes = [2, 16], strides = [1, 1]} : vector<2x48xf32> to vector<2x16xf32>
    %316 = arith.mulf %315, %301 : vector<2x16xf32>
    %317 = arith.addf %314, %316 : vector<2x16xf32>
    %318 = vector.extract_strided_slice %307 {offsets = [0, 16], sizes = [2, 16], strides = [1, 1]} : vector<2x48xf32> to vector<2x16xf32>
    %319 = vector.extract_strided_slice %284 {offsets = [0, 16], sizes = [2, 16], strides = [1, 1]} : vector<2x32xf32> to vector<2x16xf32>
    %320 = arith.mulf %318, %319 : vector<2x16xf32>
    %321 = vector.extract_strided_slice %307 {offsets = [0, 0], sizes = [2, 16], strides = [1, 1]} : vector<2x48xf32> to vector<2x16xf32>
    %322 = arith.mulf %321, %309 : vector<2x16xf32>
    %323 = arith.addf %320, %322 : vector<2x16xf32>
    %324 = vector.broadcast %311 : vector<2x1xf32> to vector<2x16xf32>
    %325 = arith.mulf %323, %324 : vector<2x16xf32>
    %326 = vector.extract_strided_slice %299 {offsets = [0, 32], sizes = [2, 16], strides = [1, 1]} : vector<2x48xf32> to vector<2x16xf32>
    %327 = math.tanh %317 : vector<2x16xf32>
    %328 = arith.mulf %326, %327 : vector<2x16xf32>
    %329 = vector.extract_strided_slice %307 {offsets = [0, 32], sizes = [2, 16], strides = [1, 1]} : vector<2x48xf32> to vector<2x16xf32>
    %330 = math.tanh %325 : vector<2x16xf32>
    %331 = arith.mulf %329, %330 : vector<2x16xf32>
    %332 = vector.broadcast %311 : vector<2x1xf32> to vector<2x16xf32>
    %333 = arith.mulf %331, %332 : vector<2x16xf32>
    %334 = vector.extract_strided_slice %6 {offsets = [0, 5, 0], sizes = [2, 1, 1], strides = [1, 1, 1]} : vector<2x16x1xf32> to vector<2x1x1xf32>
    %335 = vector.shape_cast %334 : vector<2x1x1xf32> to vector<2x1xf32>
    %336 = vector.broadcast %335 : vector<2x1xf32> to vector<2x16xf32>
    %337 = arith.mulf %328, %336 : vector<2x16xf32>
    %338 = tpu.concatenate %328, %333 in 1 : vector<2x16xf32>, vector<2x16xf32> -> vector<2x32xf32>
    %339 = tpu.concatenate %317, %325 in 1 : vector<2x16xf32>, vector<2x16xf32> -> vector<2x32xf32>
    %cst_35 = arith.constant dense<0.000000e+00> : vector<2x128xf32>
    %340 = tpu.matmul %338, %3, %cst_35 {dimension_numbers = #tpu.dot_dimension_numbers<[1], [0], [0], [1], [0, 0, 1, 1], [], []>} : vector<2x32xf32>, vector<32x128xf32>, vector<2x128xf32> -> vector<2x128xf32>
    %341 = vector.extract_strided_slice %340 {offsets = [0, 0], sizes = [2, 64], strides = [1, 1]} : vector<2x128xf32> to vector<2x64xf32>
    %342 = vector.extract_strided_slice %4 {offsets = [0, 6, 0], sizes = [2, 1, 64], strides = [1, 1, 1]} : vector<2x16x64xf32> to vector<2x1x64xf32>
    %343 = vector.shape_cast %342 : vector<2x1x64xf32> to vector<2x64xf32>
    %344 = arith.addf %341, %343 : vector<2x64xf32>
    %345 = vector.extract_strided_slice %340 {offsets = [0, 64], sizes = [2, 64], strides = [1, 1]} : vector<2x128xf32> to vector<2x64xf32>
    %346 = vector.extract_strided_slice %5 {offsets = [0, 9, 0], sizes = [2, 1, 64], strides = [1, 1, 1]} : vector<2x16x64xf32> to vector<2x1x64xf32>
    %347 = vector.shape_cast %346 : vector<2x1x64xf32> to vector<2x64xf32>
    %348 = arith.addf %345, %347 : vector<2x64xf32>
    %349 = vector.extract_strided_slice %344 {offsets = [0, 0], sizes = [2, 48], strides = [1, 1]} : vector<2x64xf32> to vector<2x48xf32>
    %350 = arith.negf %349 : vector<2x48xf32>
    %351 = math.exp %350 : vector<2x48xf32>
    %cst_36 = arith.constant 1.000000e+00 : f32
    %352 = vector.broadcast %cst_36 : f32 to vector<2x48xf32>
    %353 = arith.addf %352, %351 : vector<2x48xf32>
    %354 = arith.divf %352, %353 : vector<2x48xf32>
    %355 = vector.extract_strided_slice %344 {offsets = [0, 48], sizes = [2, 16], strides = [1, 1]} : vector<2x64xf32> to vector<2x16xf32>
    %356 = math.tanh %355 : vector<2x16xf32>
    %357 = vector.extract_strided_slice %348 {offsets = [0, 0], sizes = [2, 48], strides = [1, 1]} : vector<2x64xf32> to vector<2x48xf32>
    %358 = arith.negf %357 : vector<2x48xf32>
    %359 = math.exp %358 : vector<2x48xf32>
    %cst_37 = arith.constant 1.000000e+00 : f32
    %360 = vector.broadcast %cst_37 : f32 to vector<2x48xf32>
    %361 = arith.addf %360, %359 : vector<2x48xf32>
    %362 = arith.divf %360, %361 : vector<2x48xf32>
    %363 = vector.extract_strided_slice %348 {offsets = [0, 48], sizes = [2, 16], strides = [1, 1]} : vector<2x64xf32> to vector<2x16xf32>
    %364 = math.tanh %363 : vector<2x16xf32>
    %365 = vector.extract_strided_slice %7 {offsets = [0, 9, 0], sizes = [2, 1, 1], strides = [1, 1, 1]} : vector<2x16x1xf32> to vector<2x1x1xf32>
    %366 = vector.shape_cast %365 : vector<2x1x1xf32> to vector<2x1xf32>
    %367 = vector.extract_strided_slice %354 {offsets = [0, 16], sizes = [2, 16], strides = [1, 1]} : vector<2x48xf32> to vector<2x16xf32>
    %368 = vector.extract_strided_slice %339 {offsets = [0, 0], sizes = [2, 16], strides = [1, 1]} : vector<2x32xf32> to vector<2x16xf32>
    %369 = arith.mulf %367, %368 : vector<2x16xf32>
    %370 = vector.extract_strided_slice %354 {offsets = [0, 0], sizes = [2, 16], strides = [1, 1]} : vector<2x48xf32> to vector<2x16xf32>
    %371 = arith.mulf %370, %356 : vector<2x16xf32>
    %372 = arith.addf %369, %371 : vector<2x16xf32>
    %373 = vector.extract_strided_slice %362 {offsets = [0, 16], sizes = [2, 16], strides = [1, 1]} : vector<2x48xf32> to vector<2x16xf32>
    %374 = vector.extract_strided_slice %339 {offsets = [0, 16], sizes = [2, 16], strides = [1, 1]} : vector<2x32xf32> to vector<2x16xf32>
    %375 = arith.mulf %373, %374 : vector<2x16xf32>
    %376 = vector.extract_strided_slice %362 {offsets = [0, 0], sizes = [2, 16], strides = [1, 1]} : vector<2x48xf32> to vector<2x16xf32>
    %377 = arith.mulf %376, %364 : vector<2x16xf32>
    %378 = arith.addf %375, %377 : vector<2x16xf32>
    %379 = vector.broadcast %366 : vector<2x1xf32> to vector<2x16xf32>
    %380 = arith.mulf %378, %379 : vector<2x16xf32>
    %381 = vector.extract_strided_slice %354 {offsets = [0, 32], sizes = [2, 16], strides = [1, 1]} : vector<2x48xf32> to vector<2x16xf32>
    %382 = math.tanh %372 : vector<2x16xf32>
    %383 = arith.mulf %381, %382 : vector<2x16xf32>
    %384 = vector.extract_strided_slice %362 {offsets = [0, 32], sizes = [2, 16], strides = [1, 1]} : vector<2x48xf32> to vector<2x16xf32>
    %385 = math.tanh %380 : vector<2x16xf32>
    %386 = arith.mulf %384, %385 : vector<2x16xf32>
    %387 = vector.broadcast %366 : vector<2x1xf32> to vector<2x16xf32>
    %388 = arith.mulf %386, %387 : vector<2x16xf32>
    %389 = vector.extract_strided_slice %6 {offsets = [0, 6, 0], sizes = [2, 1, 1], strides = [1, 1, 1]} : vector<2x16x1xf32> to vector<2x1x1xf32>
    %390 = vector.shape_cast %389 : vector<2x1x1xf32> to vector<2x1xf32>
    %391 = vector.broadcast %390 : vector<2x1xf32> to vector<2x16xf32>
    %392 = arith.mulf %383, %391 : vector<2x16xf32>
    %393 = tpu.concatenate %383, %388 in 1 : vector<2x16xf32>, vector<2x16xf32> -> vector<2x32xf32>
    %394 = tpu.concatenate %372, %380 in 1 : vector<2x16xf32>, vector<2x16xf32> -> vector<2x32xf32>
    %cst_38 = arith.constant dense<0.000000e+00> : vector<2x128xf32>
    %395 = tpu.matmul %393, %3, %cst_38 {dimension_numbers = #tpu.dot_dimension_numbers<[1], [0], [0], [1], [0, 0, 1, 1], [], []>} : vector<2x32xf32>, vector<32x128xf32>, vector<2x128xf32> -> vector<2x128xf32>
    %396 = vector.extract_strided_slice %395 {offsets = [0, 0], sizes = [2, 64], strides = [1, 1]} : vector<2x128xf32> to vector<2x64xf32>
    %397 = vector.extract_strided_slice %4 {offsets = [0, 7, 0], sizes = [2, 1, 64], strides = [1, 1, 1]} : vector<2x16x64xf32> to vector<2x1x64xf32>
    %398 = vector.shape_cast %397 : vector<2x1x64xf32> to vector<2x64xf32>
    %399 = arith.addf %396, %398 : vector<2x64xf32>
    %400 = vector.extract_strided_slice %395 {offsets = [0, 64], sizes = [2, 64], strides = [1, 1]} : vector<2x128xf32> to vector<2x64xf32>
    %401 = vector.extract_strided_slice %5 {offsets = [0, 8, 0], sizes = [2, 1, 64], strides = [1, 1, 1]} : vector<2x16x64xf32> to vector<2x1x64xf32>
    %402 = vector.shape_cast %401 : vector<2x1x64xf32> to vector<2x64xf32>
    %403 = arith.addf %400, %402 : vector<2x64xf32>
    %404 = vector.extract_strided_slice %399 {offsets = [0, 0], sizes = [2, 48], strides = [1, 1]} : vector<2x64xf32> to vector<2x48xf32>
    %405 = arith.negf %404 : vector<2x48xf32>
    %406 = math.exp %405 : vector<2x48xf32>
    %cst_39 = arith.constant 1.000000e+00 : f32
    %407 = vector.broadcast %cst_39 : f32 to vector<2x48xf32>
    %408 = arith.addf %407, %406 : vector<2x48xf32>
    %409 = arith.divf %407, %408 : vector<2x48xf32>
    %410 = vector.extract_strided_slice %399 {offsets = [0, 48], sizes = [2, 16], strides = [1, 1]} : vector<2x64xf32> to vector<2x16xf32>
    %411 = math.tanh %410 : vector<2x16xf32>
    %412 = vector.extract_strided_slice %403 {offsets = [0, 0], sizes = [2, 48], strides = [1, 1]} : vector<2x64xf32> to vector<2x48xf32>
    %413 = arith.negf %412 : vector<2x48xf32>
    %414 = math.exp %413 : vector<2x48xf32>
    %cst_40 = arith.constant 1.000000e+00 : f32
    %415 = vector.broadcast %cst_40 : f32 to vector<2x48xf32>
    %416 = arith.addf %415, %414 : vector<2x48xf32>
    %417 = arith.divf %415, %416 : vector<2x48xf32>
    %418 = vector.extract_strided_slice %403 {offsets = [0, 48], sizes = [2, 16], strides = [1, 1]} : vector<2x64xf32> to vector<2x16xf32>
    %419 = math.tanh %418 : vector<2x16xf32>
    %420 = vector.extract_strided_slice %7 {offsets = [0, 8, 0], sizes = [2, 1, 1], strides = [1, 1, 1]} : vector<2x16x1xf32> to vector<2x1x1xf32>
    %421 = vector.shape_cast %420 : vector<2x1x1xf32> to vector<2x1xf32>
    %422 = vector.extract_strided_slice %409 {offsets = [0, 16], sizes = [2, 16], strides = [1, 1]} : vector<2x48xf32> to vector<2x16xf32>
    %423 = vector.extract_strided_slice %394 {offsets = [0, 0], sizes = [2, 16], strides = [1, 1]} : vector<2x32xf32> to vector<2x16xf32>
    %424 = arith.mulf %422, %423 : vector<2x16xf32>
    %425 = vector.extract_strided_slice %409 {offsets = [0, 0], sizes = [2, 16], strides = [1, 1]} : vector<2x48xf32> to vector<2x16xf32>
    %426 = arith.mulf %425, %411 : vector<2x16xf32>
    %427 = arith.addf %424, %426 : vector<2x16xf32>
    %428 = vector.extract_strided_slice %417 {offsets = [0, 16], sizes = [2, 16], strides = [1, 1]} : vector<2x48xf32> to vector<2x16xf32>
    %429 = vector.extract_strided_slice %394 {offsets = [0, 16], sizes = [2, 16], strides = [1, 1]} : vector<2x32xf32> to vector<2x16xf32>
    %430 = arith.mulf %428, %429 : vector<2x16xf32>
    %431 = vector.extract_strided_slice %417 {offsets = [0, 0], sizes = [2, 16], strides = [1, 1]} : vector<2x48xf32> to vector<2x16xf32>
    %432 = arith.mulf %431, %419 : vector<2x16xf32>
    %433 = arith.addf %430, %432 : vector<2x16xf32>
    %434 = vector.broadcast %421 : vector<2x1xf32> to vector<2x16xf32>
    %435 = arith.mulf %433, %434 : vector<2x16xf32>
    %436 = vector.extract_strided_slice %409 {offsets = [0, 32], sizes = [2, 16], strides = [1, 1]} : vector<2x48xf32> to vector<2x16xf32>
    %437 = math.tanh %427 : vector<2x16xf32>
    %438 = arith.mulf %436, %437 : vector<2x16xf32>
    %439 = vector.extract_strided_slice %417 {offsets = [0, 32], sizes = [2, 16], strides = [1, 1]} : vector<2x48xf32> to vector<2x16xf32>
    %440 = math.tanh %435 : vector<2x16xf32>
    %441 = arith.mulf %439, %440 : vector<2x16xf32>
    %442 = vector.broadcast %421 : vector<2x1xf32> to vector<2x16xf32>
    %443 = arith.mulf %441, %442 : vector<2x16xf32>
    %444 = vector.extract_strided_slice %6 {offsets = [0, 7, 0], sizes = [2, 1, 1], strides = [1, 1, 1]} : vector<2x16x1xf32> to vector<2x1x1xf32>
    %445 = vector.shape_cast %444 : vector<2x1x1xf32> to vector<2x1xf32>
    %446 = vector.broadcast %445 : vector<2x1xf32> to vector<2x16xf32>
    %447 = arith.mulf %438, %446 : vector<2x16xf32>
    %448 = tpu.concatenate %438, %443 in 1 : vector<2x16xf32>, vector<2x16xf32> -> vector<2x32xf32>
    %449 = tpu.concatenate %427, %435 in 1 : vector<2x16xf32>, vector<2x16xf32> -> vector<2x32xf32>
    %cst_41 = arith.constant dense<0.000000e+00> : vector<2x128xf32>
    %450 = tpu.matmul %448, %3, %cst_41 {dimension_numbers = #tpu.dot_dimension_numbers<[1], [0], [0], [1], [0, 0, 1, 1], [], []>} : vector<2x32xf32>, vector<32x128xf32>, vector<2x128xf32> -> vector<2x128xf32>
    %451 = vector.extract_strided_slice %450 {offsets = [0, 0], sizes = [2, 64], strides = [1, 1]} : vector<2x128xf32> to vector<2x64xf32>
    %452 = vector.extract_strided_slice %4 {offsets = [0, 8, 0], sizes = [2, 1, 64], strides = [1, 1, 1]} : vector<2x16x64xf32> to vector<2x1x64xf32>
    %453 = vector.shape_cast %452 : vector<2x1x64xf32> to vector<2x64xf32>
    %454 = arith.addf %451, %453 : vector<2x64xf32>
    %455 = vector.extract_strided_slice %450 {offsets = [0, 64], sizes = [2, 64], strides = [1, 1]} : vector<2x128xf32> to vector<2x64xf32>
    %456 = vector.extract_strided_slice %5 {offsets = [0, 7, 0], sizes = [2, 1, 64], strides = [1, 1, 1]} : vector<2x16x64xf32> to vector<2x1x64xf32>
    %457 = vector.shape_cast %456 : vector<2x1x64xf32> to vector<2x64xf32>
    %458 = arith.addf %455, %457 : vector<2x64xf32>
    %459 = vector.extract_strided_slice %454 {offsets = [0, 0], sizes = [2, 48], strides = [1, 1]} : vector<2x64xf32> to vector<2x48xf32>
    %460 = arith.negf %459 : vector<2x48xf32>
    %461 = math.exp %460 : vector<2x48xf32>
    %cst_42 = arith.constant 1.000000e+00 : f32
    %462 = vector.broadcast %cst_42 : f32 to vector<2x48xf32>
    %463 = arith.addf %462, %461 : vector<2x48xf32>
    %464 = arith.divf %462, %463 : vector<2x48xf32>
    %465 = vector.extract_strided_slice %454 {offsets = [0, 48], sizes = [2, 16], strides = [1, 1]} : vector<2x64xf32> to vector<2x16xf32>
    %466 = math.tanh %465 : vector<2x16xf32>
    %467 = vector.extract_strided_slice %458 {offsets = [0, 0], sizes = [2, 48], strides = [1, 1]} : vector<2x64xf32> to vector<2x48xf32>
    %468 = arith.negf %467 : vector<2x48xf32>
    %469 = math.exp %468 : vector<2x48xf32>
    %cst_43 = arith.constant 1.000000e+00 : f32
    %470 = vector.broadcast %cst_43 : f32 to vector<2x48xf32>
    %471 = arith.addf %470, %469 : vector<2x48xf32>
    %472 = arith.divf %470, %471 : vector<2x48xf32>
    %473 = vector.extract_strided_slice %458 {offsets = [0, 48], sizes = [2, 16], strides = [1, 1]} : vector<2x64xf32> to vector<2x16xf32>
    %474 = math.tanh %473 : vector<2x16xf32>
    %475 = vector.extract_strided_slice %7 {offsets = [0, 7, 0], sizes = [2, 1, 1], strides = [1, 1, 1]} : vector<2x16x1xf32> to vector<2x1x1xf32>
    %476 = vector.shape_cast %475 : vector<2x1x1xf32> to vector<2x1xf32>
    %477 = vector.extract_strided_slice %464 {offsets = [0, 16], sizes = [2, 16], strides = [1, 1]} : vector<2x48xf32> to vector<2x16xf32>
    %478 = vector.extract_strided_slice %449 {offsets = [0, 0], sizes = [2, 16], strides = [1, 1]} : vector<2x32xf32> to vector<2x16xf32>
    %479 = arith.mulf %477, %478 : vector<2x16xf32>
    %480 = vector.extract_strided_slice %464 {offsets = [0, 0], sizes = [2, 16], strides = [1, 1]} : vector<2x48xf32> to vector<2x16xf32>
    %481 = arith.mulf %480, %466 : vector<2x16xf32>
    %482 = arith.addf %479, %481 : vector<2x16xf32>
    %483 = vector.extract_strided_slice %472 {offsets = [0, 16], sizes = [2, 16], strides = [1, 1]} : vector<2x48xf32> to vector<2x16xf32>
    %484 = vector.extract_strided_slice %449 {offsets = [0, 16], sizes = [2, 16], strides = [1, 1]} : vector<2x32xf32> to vector<2x16xf32>
    %485 = arith.mulf %483, %484 : vector<2x16xf32>
    %486 = vector.extract_strided_slice %472 {offsets = [0, 0], sizes = [2, 16], strides = [1, 1]} : vector<2x48xf32> to vector<2x16xf32>
    %487 = arith.mulf %486, %474 : vector<2x16xf32>
    %488 = arith.addf %485, %487 : vector<2x16xf32>
    %489 = vector.broadcast %476 : vector<2x1xf32> to vector<2x16xf32>
    %490 = arith.mulf %488, %489 : vector<2x16xf32>
    %491 = vector.extract_strided_slice %464 {offsets = [0, 32], sizes = [2, 16], strides = [1, 1]} : vector<2x48xf32> to vector<2x16xf32>
    %492 = math.tanh %482 : vector<2x16xf32>
    %493 = arith.mulf %491, %492 : vector<2x16xf32>
    %494 = vector.extract_strided_slice %472 {offsets = [0, 32], sizes = [2, 16], strides = [1, 1]} : vector<2x48xf32> to vector<2x16xf32>
    %495 = math.tanh %490 : vector<2x16xf32>
    %496 = arith.mulf %494, %495 : vector<2x16xf32>
    %497 = vector.broadcast %476 : vector<2x1xf32> to vector<2x16xf32>
    %498 = arith.mulf %496, %497 : vector<2x16xf32>
    %499 = vector.extract_strided_slice %6 {offsets = [0, 8, 0], sizes = [2, 1, 1], strides = [1, 1, 1]} : vector<2x16x1xf32> to vector<2x1x1xf32>
    %500 = vector.shape_cast %499 : vector<2x1x1xf32> to vector<2x1xf32>
    %501 = vector.broadcast %500 : vector<2x1xf32> to vector<2x16xf32>
    %502 = arith.mulf %493, %501 : vector<2x16xf32>
    %503 = tpu.concatenate %493, %498 in 1 : vector<2x16xf32>, vector<2x16xf32> -> vector<2x32xf32>
    %504 = tpu.concatenate %482, %490 in 1 : vector<2x16xf32>, vector<2x16xf32> -> vector<2x32xf32>
    %cst_44 = arith.constant dense<0.000000e+00> : vector<2x128xf32>
    %505 = tpu.matmul %503, %3, %cst_44 {dimension_numbers = #tpu.dot_dimension_numbers<[1], [0], [0], [1], [0, 0, 1, 1], [], []>} : vector<2x32xf32>, vector<32x128xf32>, vector<2x128xf32> -> vector<2x128xf32>
    %506 = vector.extract_strided_slice %505 {offsets = [0, 0], sizes = [2, 64], strides = [1, 1]} : vector<2x128xf32> to vector<2x64xf32>
    %507 = vector.extract_strided_slice %4 {offsets = [0, 9, 0], sizes = [2, 1, 64], strides = [1, 1, 1]} : vector<2x16x64xf32> to vector<2x1x64xf32>
    %508 = vector.shape_cast %507 : vector<2x1x64xf32> to vector<2x64xf32>
    %509 = arith.addf %506, %508 : vector<2x64xf32>
    %510 = vector.extract_strided_slice %505 {offsets = [0, 64], sizes = [2, 64], strides = [1, 1]} : vector<2x128xf32> to vector<2x64xf32>
    %511 = vector.extract_strided_slice %5 {offsets = [0, 6, 0], sizes = [2, 1, 64], strides = [1, 1, 1]} : vector<2x16x64xf32> to vector<2x1x64xf32>
    %512 = vector.shape_cast %511 : vector<2x1x64xf32> to vector<2x64xf32>
    %513 = arith.addf %510, %512 : vector<2x64xf32>
    %514 = vector.extract_strided_slice %509 {offsets = [0, 0], sizes = [2, 48], strides = [1, 1]} : vector<2x64xf32> to vector<2x48xf32>
    %515 = arith.negf %514 : vector<2x48xf32>
    %516 = math.exp %515 : vector<2x48xf32>
    %cst_45 = arith.constant 1.000000e+00 : f32
    %517 = vector.broadcast %cst_45 : f32 to vector<2x48xf32>
    %518 = arith.addf %517, %516 : vector<2x48xf32>
    %519 = arith.divf %517, %518 : vector<2x48xf32>
    %520 = vector.extract_strided_slice %509 {offsets = [0, 48], sizes = [2, 16], strides = [1, 1]} : vector<2x64xf32> to vector<2x16xf32>
    %521 = math.tanh %520 : vector<2x16xf32>
    %522 = vector.extract_strided_slice %513 {offsets = [0, 0], sizes = [2, 48], strides = [1, 1]} : vector<2x64xf32> to vector<2x48xf32>
    %523 = arith.negf %522 : vector<2x48xf32>
    %524 = math.exp %523 : vector<2x48xf32>
    %cst_46 = arith.constant 1.000000e+00 : f32
    %525 = vector.broadcast %cst_46 : f32 to vector<2x48xf32>
    %526 = arith.addf %525, %524 : vector<2x48xf32>
    %527 = arith.divf %525, %526 : vector<2x48xf32>
    %528 = vector.extract_strided_slice %513 {offsets = [0, 48], sizes = [2, 16], strides = [1, 1]} : vector<2x64xf32> to vector<2x16xf32>
    %529 = math.tanh %528 : vector<2x16xf32>
    %530 = vector.extract_strided_slice %7 {offsets = [0, 6, 0], sizes = [2, 1, 1], strides = [1, 1, 1]} : vector<2x16x1xf32> to vector<2x1x1xf32>
    %531 = vector.shape_cast %530 : vector<2x1x1xf32> to vector<2x1xf32>
    %532 = vector.extract_strided_slice %519 {offsets = [0, 16], sizes = [2, 16], strides = [1, 1]} : vector<2x48xf32> to vector<2x16xf32>
    %533 = vector.extract_strided_slice %504 {offsets = [0, 0], sizes = [2, 16], strides = [1, 1]} : vector<2x32xf32> to vector<2x16xf32>
    %534 = arith.mulf %532, %533 : vector<2x16xf32>
    %535 = vector.extract_strided_slice %519 {offsets = [0, 0], sizes = [2, 16], strides = [1, 1]} : vector<2x48xf32> to vector<2x16xf32>
    %536 = arith.mulf %535, %521 : vector<2x16xf32>
    %537 = arith.addf %534, %536 : vector<2x16xf32>
    %538 = vector.extract_strided_slice %527 {offsets = [0, 16], sizes = [2, 16], strides = [1, 1]} : vector<2x48xf32> to vector<2x16xf32>
    %539 = vector.extract_strided_slice %504 {offsets = [0, 16], sizes = [2, 16], strides = [1, 1]} : vector<2x32xf32> to vector<2x16xf32>
    %540 = arith.mulf %538, %539 : vector<2x16xf32>
    %541 = vector.extract_strided_slice %527 {offsets = [0, 0], sizes = [2, 16], strides = [1, 1]} : vector<2x48xf32> to vector<2x16xf32>
    %542 = arith.mulf %541, %529 : vector<2x16xf32>
    %543 = arith.addf %540, %542 : vector<2x16xf32>
    %544 = vector.broadcast %531 : vector<2x1xf32> to vector<2x16xf32>
    %545 = arith.mulf %543, %544 : vector<2x16xf32>
    %546 = vector.extract_strided_slice %519 {offsets = [0, 32], sizes = [2, 16], strides = [1, 1]} : vector<2x48xf32> to vector<2x16xf32>
    %547 = math.tanh %537 : vector<2x16xf32>
    %548 = arith.mulf %546, %547 : vector<2x16xf32>
    %549 = vector.extract_strided_slice %527 {offsets = [0, 32], sizes = [2, 16], strides = [1, 1]} : vector<2x48xf32> to vector<2x16xf32>
    %550 = math.tanh %545 : vector<2x16xf32>
    %551 = arith.mulf %549, %550 : vector<2x16xf32>
    %552 = vector.broadcast %531 : vector<2x1xf32> to vector<2x16xf32>
    %553 = arith.mulf %551, %552 : vector<2x16xf32>
    %554 = vector.extract_strided_slice %6 {offsets = [0, 9, 0], sizes = [2, 1, 1], strides = [1, 1, 1]} : vector<2x16x1xf32> to vector<2x1x1xf32>
    %555 = vector.shape_cast %554 : vector<2x1x1xf32> to vector<2x1xf32>
    %556 = vector.broadcast %555 : vector<2x1xf32> to vector<2x16xf32>
    %557 = arith.mulf %548, %556 : vector<2x16xf32>
    %558 = tpu.concatenate %548, %553 in 1 : vector<2x16xf32>, vector<2x16xf32> -> vector<2x32xf32>
    %559 = tpu.concatenate %537, %545 in 1 : vector<2x16xf32>, vector<2x16xf32> -> vector<2x32xf32>
    %cst_47 = arith.constant dense<0.000000e+00> : vector<2x128xf32>
    %560 = tpu.matmul %558, %3, %cst_47 {dimension_numbers = #tpu.dot_dimension_numbers<[1], [0], [0], [1], [0, 0, 1, 1], [], []>} : vector<2x32xf32>, vector<32x128xf32>, vector<2x128xf32> -> vector<2x128xf32>
    %561 = vector.extract_strided_slice %560 {offsets = [0, 0], sizes = [2, 64], strides = [1, 1]} : vector<2x128xf32> to vector<2x64xf32>
    %562 = vector.extract_strided_slice %4 {offsets = [0, 10, 0], sizes = [2, 1, 64], strides = [1, 1, 1]} : vector<2x16x64xf32> to vector<2x1x64xf32>
    %563 = vector.shape_cast %562 : vector<2x1x64xf32> to vector<2x64xf32>
    %564 = arith.addf %561, %563 : vector<2x64xf32>
    %565 = vector.extract_strided_slice %560 {offsets = [0, 64], sizes = [2, 64], strides = [1, 1]} : vector<2x128xf32> to vector<2x64xf32>
    %566 = vector.extract_strided_slice %5 {offsets = [0, 5, 0], sizes = [2, 1, 64], strides = [1, 1, 1]} : vector<2x16x64xf32> to vector<2x1x64xf32>
    %567 = vector.shape_cast %566 : vector<2x1x64xf32> to vector<2x64xf32>
    %568 = arith.addf %565, %567 : vector<2x64xf32>
    %569 = vector.extract_strided_slice %564 {offsets = [0, 0], sizes = [2, 48], strides = [1, 1]} : vector<2x64xf32> to vector<2x48xf32>
    %570 = arith.negf %569 : vector<2x48xf32>
    %571 = math.exp %570 : vector<2x48xf32>
    %cst_48 = arith.constant 1.000000e+00 : f32
    %572 = vector.broadcast %cst_48 : f32 to vector<2x48xf32>
    %573 = arith.addf %572, %571 : vector<2x48xf32>
    %574 = arith.divf %572, %573 : vector<2x48xf32>
    %575 = vector.extract_strided_slice %564 {offsets = [0, 48], sizes = [2, 16], strides = [1, 1]} : vector<2x64xf32> to vector<2x16xf32>
    %576 = math.tanh %575 : vector<2x16xf32>
    %577 = vector.extract_strided_slice %568 {offsets = [0, 0], sizes = [2, 48], strides = [1, 1]} : vector<2x64xf32> to vector<2x48xf32>
    %578 = arith.negf %577 : vector<2x48xf32>
    %579 = math.exp %578 : vector<2x48xf32>
    %cst_49 = arith.constant 1.000000e+00 : f32
    %580 = vector.broadcast %cst_49 : f32 to vector<2x48xf32>
    %581 = arith.addf %580, %579 : vector<2x48xf32>
    %582 = arith.divf %580, %581 : vector<2x48xf32>
    %583 = vector.extract_strided_slice %568 {offsets = [0, 48], sizes = [2, 16], strides = [1, 1]} : vector<2x64xf32> to vector<2x16xf32>
    %584 = math.tanh %583 : vector<2x16xf32>
    %585 = vector.extract_strided_slice %7 {offsets = [0, 5, 0], sizes = [2, 1, 1], strides = [1, 1, 1]} : vector<2x16x1xf32> to vector<2x1x1xf32>
    %586 = vector.shape_cast %585 : vector<2x1x1xf32> to vector<2x1xf32>
    %587 = vector.extract_strided_slice %574 {offsets = [0, 16], sizes = [2, 16], strides = [1, 1]} : vector<2x48xf32> to vector<2x16xf32>
    %588 = vector.extract_strided_slice %559 {offsets = [0, 0], sizes = [2, 16], strides = [1, 1]} : vector<2x32xf32> to vector<2x16xf32>
    %589 = arith.mulf %587, %588 : vector<2x16xf32>
    %590 = vector.extract_strided_slice %574 {offsets = [0, 0], sizes = [2, 16], strides = [1, 1]} : vector<2x48xf32> to vector<2x16xf32>
    %591 = arith.mulf %590, %576 : vector<2x16xf32>
    %592 = arith.addf %589, %591 : vector<2x16xf32>
    %593 = vector.extract_strided_slice %582 {offsets = [0, 16], sizes = [2, 16], strides = [1, 1]} : vector<2x48xf32> to vector<2x16xf32>
    %594 = vector.extract_strided_slice %559 {offsets = [0, 16], sizes = [2, 16], strides = [1, 1]} : vector<2x32xf32> to vector<2x16xf32>
    %595 = arith.mulf %593, %594 : vector<2x16xf32>
    %596 = vector.extract_strided_slice %582 {offsets = [0, 0], sizes = [2, 16], strides = [1, 1]} : vector<2x48xf32> to vector<2x16xf32>
    %597 = arith.mulf %596, %584 : vector<2x16xf32>
    %598 = arith.addf %595, %597 : vector<2x16xf32>
    %599 = vector.broadcast %586 : vector<2x1xf32> to vector<2x16xf32>
    %600 = arith.mulf %598, %599 : vector<2x16xf32>
    %601 = vector.extract_strided_slice %574 {offsets = [0, 32], sizes = [2, 16], strides = [1, 1]} : vector<2x48xf32> to vector<2x16xf32>
    %602 = math.tanh %592 : vector<2x16xf32>
    %603 = arith.mulf %601, %602 : vector<2x16xf32>
    %604 = vector.extract_strided_slice %582 {offsets = [0, 32], sizes = [2, 16], strides = [1, 1]} : vector<2x48xf32> to vector<2x16xf32>
    %605 = math.tanh %600 : vector<2x16xf32>
    %606 = arith.mulf %604, %605 : vector<2x16xf32>
    %607 = vector.broadcast %586 : vector<2x1xf32> to vector<2x16xf32>
    %608 = arith.mulf %606, %607 : vector<2x16xf32>
    %609 = vector.extract_strided_slice %6 {offsets = [0, 10, 0], sizes = [2, 1, 1], strides = [1, 1, 1]} : vector<2x16x1xf32> to vector<2x1x1xf32>
    %610 = vector.shape_cast %609 : vector<2x1x1xf32> to vector<2x1xf32>
    %611 = vector.broadcast %610 : vector<2x1xf32> to vector<2x16xf32>
    %612 = arith.mulf %603, %611 : vector<2x16xf32>
    %613 = tpu.concatenate %603, %608 in 1 : vector<2x16xf32>, vector<2x16xf32> -> vector<2x32xf32>
    %614 = tpu.concatenate %592, %600 in 1 : vector<2x16xf32>, vector<2x16xf32> -> vector<2x32xf32>
    %cst_50 = arith.constant dense<0.000000e+00> : vector<2x128xf32>
    %615 = tpu.matmul %613, %3, %cst_50 {dimension_numbers = #tpu.dot_dimension_numbers<[1], [0], [0], [1], [0, 0, 1, 1], [], []>} : vector<2x32xf32>, vector<32x128xf32>, vector<2x128xf32> -> vector<2x128xf32>
    %616 = vector.extract_strided_slice %615 {offsets = [0, 0], sizes = [2, 64], strides = [1, 1]} : vector<2x128xf32> to vector<2x64xf32>
    %617 = vector.extract_strided_slice %4 {offsets = [0, 11, 0], sizes = [2, 1, 64], strides = [1, 1, 1]} : vector<2x16x64xf32> to vector<2x1x64xf32>
    %618 = vector.shape_cast %617 : vector<2x1x64xf32> to vector<2x64xf32>
    %619 = arith.addf %616, %618 : vector<2x64xf32>
    %620 = vector.extract_strided_slice %615 {offsets = [0, 64], sizes = [2, 64], strides = [1, 1]} : vector<2x128xf32> to vector<2x64xf32>
    %621 = vector.extract_strided_slice %5 {offsets = [0, 4, 0], sizes = [2, 1, 64], strides = [1, 1, 1]} : vector<2x16x64xf32> to vector<2x1x64xf32>
    %622 = vector.shape_cast %621 : vector<2x1x64xf32> to vector<2x64xf32>
    %623 = arith.addf %620, %622 : vector<2x64xf32>
    %624 = vector.extract_strided_slice %619 {offsets = [0, 0], sizes = [2, 48], strides = [1, 1]} : vector<2x64xf32> to vector<2x48xf32>
    %625 = arith.negf %624 : vector<2x48xf32>
    %626 = math.exp %625 : vector<2x48xf32>
    %cst_51 = arith.constant 1.000000e+00 : f32
    %627 = vector.broadcast %cst_51 : f32 to vector<2x48xf32>
    %628 = arith.addf %627, %626 : vector<2x48xf32>
    %629 = arith.divf %627, %628 : vector<2x48xf32>
    %630 = vector.extract_strided_slice %619 {offsets = [0, 48], sizes = [2, 16], strides = [1, 1]} : vector<2x64xf32> to vector<2x16xf32>
    %631 = math.tanh %630 : vector<2x16xf32>
    %632 = vector.extract_strided_slice %623 {offsets = [0, 0], sizes = [2, 48], strides = [1, 1]} : vector<2x64xf32> to vector<2x48xf32>
    %633 = arith.negf %632 : vector<2x48xf32>
    %634 = math.exp %633 : vector<2x48xf32>
    %cst_52 = arith.constant 1.000000e+00 : f32
    %635 = vector.broadcast %cst_52 : f32 to vector<2x48xf32>
    %636 = arith.addf %635, %634 : vector<2x48xf32>
    %637 = arith.divf %635, %636 : vector<2x48xf32>
    %638 = vector.extract_strided_slice %623 {offsets = [0, 48], sizes = [2, 16], strides = [1, 1]} : vector<2x64xf32> to vector<2x16xf32>
    %639 = math.tanh %638 : vector<2x16xf32>
    %640 = vector.extract_strided_slice %7 {offsets = [0, 4, 0], sizes = [2, 1, 1], strides = [1, 1, 1]} : vector<2x16x1xf32> to vector<2x1x1xf32>
    %641 = vector.shape_cast %640 : vector<2x1x1xf32> to vector<2x1xf32>
    %642 = vector.extract_strided_slice %629 {offsets = [0, 16], sizes = [2, 16], strides = [1, 1]} : vector<2x48xf32> to vector<2x16xf32>
    %643 = vector.extract_strided_slice %614 {offsets = [0, 0], sizes = [2, 16], strides = [1, 1]} : vector<2x32xf32> to vector<2x16xf32>
    %644 = arith.mulf %642, %643 : vector<2x16xf32>
    %645 = vector.extract_strided_slice %629 {offsets = [0, 0], sizes = [2, 16], strides = [1, 1]} : vector<2x48xf32> to vector<2x16xf32>
    %646 = arith.mulf %645, %631 : vector<2x16xf32>
    %647 = arith.addf %644, %646 : vector<2x16xf32>
    %648 = vector.extract_strided_slice %637 {offsets = [0, 16], sizes = [2, 16], strides = [1, 1]} : vector<2x48xf32> to vector<2x16xf32>
    %649 = vector.extract_strided_slice %614 {offsets = [0, 16], sizes = [2, 16], strides = [1, 1]} : vector<2x32xf32> to vector<2x16xf32>
    %650 = arith.mulf %648, %649 : vector<2x16xf32>
    %651 = vector.extract_strided_slice %637 {offsets = [0, 0], sizes = [2, 16], strides = [1, 1]} : vector<2x48xf32> to vector<2x16xf32>
    %652 = arith.mulf %651, %639 : vector<2x16xf32>
    %653 = arith.addf %650, %652 : vector<2x16xf32>
    %654 = vector.broadcast %641 : vector<2x1xf32> to vector<2x16xf32>
    %655 = arith.mulf %653, %654 : vector<2x16xf32>
    %656 = vector.extract_strided_slice %629 {offsets = [0, 32], sizes = [2, 16], strides = [1, 1]} : vector<2x48xf32> to vector<2x16xf32>
    %657 = math.tanh %647 : vector<2x16xf32>
    %658 = arith.mulf %656, %657 : vector<2x16xf32>
    %659 = vector.extract_strided_slice %637 {offsets = [0, 32], sizes = [2, 16], strides = [1, 1]} : vector<2x48xf32> to vector<2x16xf32>
    %660 = math.tanh %655 : vector<2x16xf32>
    %661 = arith.mulf %659, %660 : vector<2x16xf32>
    %662 = vector.broadcast %641 : vector<2x1xf32> to vector<2x16xf32>
    %663 = arith.mulf %661, %662 : vector<2x16xf32>
    %664 = vector.extract_strided_slice %6 {offsets = [0, 11, 0], sizes = [2, 1, 1], strides = [1, 1, 1]} : vector<2x16x1xf32> to vector<2x1x1xf32>
    %665 = vector.shape_cast %664 : vector<2x1x1xf32> to vector<2x1xf32>
    %666 = vector.broadcast %665 : vector<2x1xf32> to vector<2x16xf32>
    %667 = arith.mulf %658, %666 : vector<2x16xf32>
    %668 = tpu.concatenate %658, %663 in 1 : vector<2x16xf32>, vector<2x16xf32> -> vector<2x32xf32>
    %669 = tpu.concatenate %647, %655 in 1 : vector<2x16xf32>, vector<2x16xf32> -> vector<2x32xf32>
    %cst_53 = arith.constant dense<0.000000e+00> : vector<2x128xf32>
    %670 = tpu.matmul %668, %3, %cst_53 {dimension_numbers = #tpu.dot_dimension_numbers<[1], [0], [0], [1], [0, 0, 1, 1], [], []>} : vector<2x32xf32>, vector<32x128xf32>, vector<2x128xf32> -> vector<2x128xf32>
    %671 = vector.extract_strided_slice %670 {offsets = [0, 0], sizes = [2, 64], strides = [1, 1]} : vector<2x128xf32> to vector<2x64xf32>
    %672 = vector.extract_strided_slice %4 {offsets = [0, 12, 0], sizes = [2, 1, 64], strides = [1, 1, 1]} : vector<2x16x64xf32> to vector<2x1x64xf32>
    %673 = vector.shape_cast %672 : vector<2x1x64xf32> to vector<2x64xf32>
    %674 = arith.addf %671, %673 : vector<2x64xf32>
    %675 = vector.extract_strided_slice %670 {offsets = [0, 64], sizes = [2, 64], strides = [1, 1]} : vector<2x128xf32> to vector<2x64xf32>
    %676 = vector.extract_strided_slice %5 {offsets = [0, 3, 0], sizes = [2, 1, 64], strides = [1, 1, 1]} : vector<2x16x64xf32> to vector<2x1x64xf32>
    %677 = vector.shape_cast %676 : vector<2x1x64xf32> to vector<2x64xf32>
    %678 = arith.addf %675, %677 : vector<2x64xf32>
    %679 = vector.extract_strided_slice %674 {offsets = [0, 0], sizes = [2, 48], strides = [1, 1]} : vector<2x64xf32> to vector<2x48xf32>
    %680 = arith.negf %679 : vector<2x48xf32>
    %681 = math.exp %680 : vector<2x48xf32>
    %cst_54 = arith.constant 1.000000e+00 : f32
    %682 = vector.broadcast %cst_54 : f32 to vector<2x48xf32>
    %683 = arith.addf %682, %681 : vector<2x48xf32>
    %684 = arith.divf %682, %683 : vector<2x48xf32>
    %685 = vector.extract_strided_slice %674 {offsets = [0, 48], sizes = [2, 16], strides = [1, 1]} : vector<2x64xf32> to vector<2x16xf32>
    %686 = math.tanh %685 : vector<2x16xf32>
    %687 = vector.extract_strided_slice %678 {offsets = [0, 0], sizes = [2, 48], strides = [1, 1]} : vector<2x64xf32> to vector<2x48xf32>
    %688 = arith.negf %687 : vector<2x48xf32>
    %689 = math.exp %688 : vector<2x48xf32>
    %cst_55 = arith.constant 1.000000e+00 : f32
    %690 = vector.broadcast %cst_55 : f32 to vector<2x48xf32>
    %691 = arith.addf %690, %689 : vector<2x48xf32>
    %692 = arith.divf %690, %691 : vector<2x48xf32>
    %693 = vector.extract_strided_slice %678 {offsets = [0, 48], sizes = [2, 16], strides = [1, 1]} : vector<2x64xf32> to vector<2x16xf32>
    %694 = math.tanh %693 : vector<2x16xf32>
    %695 = vector.extract_strided_slice %7 {offsets = [0, 3, 0], sizes = [2, 1, 1], strides = [1, 1, 1]} : vector<2x16x1xf32> to vector<2x1x1xf32>
    %696 = vector.shape_cast %695 : vector<2x1x1xf32> to vector<2x1xf32>
    %697 = vector.extract_strided_slice %684 {offsets = [0, 16], sizes = [2, 16], strides = [1, 1]} : vector<2x48xf32> to vector<2x16xf32>
    %698 = vector.extract_strided_slice %669 {offsets = [0, 0], sizes = [2, 16], strides = [1, 1]} : vector<2x32xf32> to vector<2x16xf32>
    %699 = arith.mulf %697, %698 : vector<2x16xf32>
    %700 = vector.extract_strided_slice %684 {offsets = [0, 0], sizes = [2, 16], strides = [1, 1]} : vector<2x48xf32> to vector<2x16xf32>
    %701 = arith.mulf %700, %686 : vector<2x16xf32>
    %702 = arith.addf %699, %701 : vector<2x16xf32>
    %703 = vector.extract_strided_slice %692 {offsets = [0, 16], sizes = [2, 16], strides = [1, 1]} : vector<2x48xf32> to vector<2x16xf32>
    %704 = vector.extract_strided_slice %669 {offsets = [0, 16], sizes = [2, 16], strides = [1, 1]} : vector<2x32xf32> to vector<2x16xf32>
    %705 = arith.mulf %703, %704 : vector<2x16xf32>
    %706 = vector.extract_strided_slice %692 {offsets = [0, 0], sizes = [2, 16], strides = [1, 1]} : vector<2x48xf32> to vector<2x16xf32>
    %707 = arith.mulf %706, %694 : vector<2x16xf32>
    %708 = arith.addf %705, %707 : vector<2x16xf32>
    %709 = vector.broadcast %696 : vector<2x1xf32> to vector<2x16xf32>
    %710 = arith.mulf %708, %709 : vector<2x16xf32>
    %711 = vector.extract_strided_slice %684 {offsets = [0, 32], sizes = [2, 16], strides = [1, 1]} : vector<2x48xf32> to vector<2x16xf32>
    %712 = math.tanh %702 : vector<2x16xf32>
    %713 = arith.mulf %711, %712 : vector<2x16xf32>
    %714 = vector.extract_strided_slice %692 {offsets = [0, 32], sizes = [2, 16], strides = [1, 1]} : vector<2x48xf32> to vector<2x16xf32>
    %715 = math.tanh %710 : vector<2x16xf32>
    %716 = arith.mulf %714, %715 : vector<2x16xf32>
    %717 = vector.broadcast %696 : vector<2x1xf32> to vector<2x16xf32>
    %718 = arith.mulf %716, %717 : vector<2x16xf32>
    %719 = vector.extract_strided_slice %6 {offsets = [0, 12, 0], sizes = [2, 1, 1], strides = [1, 1, 1]} : vector<2x16x1xf32> to vector<2x1x1xf32>
    %720 = vector.shape_cast %719 : vector<2x1x1xf32> to vector<2x1xf32>
    %721 = vector.broadcast %720 : vector<2x1xf32> to vector<2x16xf32>
    %722 = arith.mulf %713, %721 : vector<2x16xf32>
    %723 = tpu.concatenate %713, %718 in 1 : vector<2x16xf32>, vector<2x16xf32> -> vector<2x32xf32>
    %724 = tpu.concatenate %702, %710 in 1 : vector<2x16xf32>, vector<2x16xf32> -> vector<2x32xf32>
    %cst_56 = arith.constant dense<0.000000e+00> : vector<2x128xf32>
    %725 = tpu.matmul %723, %3, %cst_56 {dimension_numbers = #tpu.dot_dimension_numbers<[1], [0], [0], [1], [0, 0, 1, 1], [], []>} : vector<2x32xf32>, vector<32x128xf32>, vector<2x128xf32> -> vector<2x128xf32>
    %726 = vector.extract_strided_slice %725 {offsets = [0, 0], sizes = [2, 64], strides = [1, 1]} : vector<2x128xf32> to vector<2x64xf32>
    %727 = vector.extract_strided_slice %4 {offsets = [0, 13, 0], sizes = [2, 1, 64], strides = [1, 1, 1]} : vector<2x16x64xf32> to vector<2x1x64xf32>
    %728 = vector.shape_cast %727 : vector<2x1x64xf32> to vector<2x64xf32>
    %729 = arith.addf %726, %728 : vector<2x64xf32>
    %730 = vector.extract_strided_slice %725 {offsets = [0, 64], sizes = [2, 64], strides = [1, 1]} : vector<2x128xf32> to vector<2x64xf32>
    %731 = vector.extract_strided_slice %5 {offsets = [0, 2, 0], sizes = [2, 1, 64], strides = [1, 1, 1]} : vector<2x16x64xf32> to vector<2x1x64xf32>
    %732 = vector.shape_cast %731 : vector<2x1x64xf32> to vector<2x64xf32>
    %733 = arith.addf %730, %732 : vector<2x64xf32>
    %734 = vector.extract_strided_slice %729 {offsets = [0, 0], sizes = [2, 48], strides = [1, 1]} : vector<2x64xf32> to vector<2x48xf32>
    %735 = arith.negf %734 : vector<2x48xf32>
    %736 = math.exp %735 : vector<2x48xf32>
    %cst_57 = arith.constant 1.000000e+00 : f32
    %737 = vector.broadcast %cst_57 : f32 to vector<2x48xf32>
    %738 = arith.addf %737, %736 : vector<2x48xf32>
    %739 = arith.divf %737, %738 : vector<2x48xf32>
    %740 = vector.extract_strided_slice %729 {offsets = [0, 48], sizes = [2, 16], strides = [1, 1]} : vector<2x64xf32> to vector<2x16xf32>
    %741 = math.tanh %740 : vector<2x16xf32>
    %742 = vector.extract_strided_slice %733 {offsets = [0, 0], sizes = [2, 48], strides = [1, 1]} : vector<2x64xf32> to vector<2x48xf32>
    %743 = arith.negf %742 : vector<2x48xf32>
    %744 = math.exp %743 : vector<2x48xf32>
    %cst_58 = arith.constant 1.000000e+00 : f32
    %745 = vector.broadcast %cst_58 : f32 to vector<2x48xf32>
    %746 = arith.addf %745, %744 : vector<2x48xf32>
    %747 = arith.divf %745, %746 : vector<2x48xf32>
    %748 = vector.extract_strided_slice %733 {offsets = [0, 48], sizes = [2, 16], strides = [1, 1]} : vector<2x64xf32> to vector<2x16xf32>
    %749 = math.tanh %748 : vector<2x16xf32>
    %750 = vector.extract_strided_slice %7 {offsets = [0, 2, 0], sizes = [2, 1, 1], strides = [1, 1, 1]} : vector<2x16x1xf32> to vector<2x1x1xf32>
    %751 = vector.shape_cast %750 : vector<2x1x1xf32> to vector<2x1xf32>
    %752 = vector.extract_strided_slice %739 {offsets = [0, 16], sizes = [2, 16], strides = [1, 1]} : vector<2x48xf32> to vector<2x16xf32>
    %753 = vector.extract_strided_slice %724 {offsets = [0, 0], sizes = [2, 16], strides = [1, 1]} : vector<2x32xf32> to vector<2x16xf32>
    %754 = arith.mulf %752, %753 : vector<2x16xf32>
    %755 = vector.extract_strided_slice %739 {offsets = [0, 0], sizes = [2, 16], strides = [1, 1]} : vector<2x48xf32> to vector<2x16xf32>
    %756 = arith.mulf %755, %741 : vector<2x16xf32>
    %757 = arith.addf %754, %756 : vector<2x16xf32>
    %758 = vector.extract_strided_slice %747 {offsets = [0, 16], sizes = [2, 16], strides = [1, 1]} : vector<2x48xf32> to vector<2x16xf32>
    %759 = vector.extract_strided_slice %724 {offsets = [0, 16], sizes = [2, 16], strides = [1, 1]} : vector<2x32xf32> to vector<2x16xf32>
    %760 = arith.mulf %758, %759 : vector<2x16xf32>
    %761 = vector.extract_strided_slice %747 {offsets = [0, 0], sizes = [2, 16], strides = [1, 1]} : vector<2x48xf32> to vector<2x16xf32>
    %762 = arith.mulf %761, %749 : vector<2x16xf32>
    %763 = arith.addf %760, %762 : vector<2x16xf32>
    %764 = vector.broadcast %751 : vector<2x1xf32> to vector<2x16xf32>
    %765 = arith.mulf %763, %764 : vector<2x16xf32>
    %766 = vector.extract_strided_slice %739 {offsets = [0, 32], sizes = [2, 16], strides = [1, 1]} : vector<2x48xf32> to vector<2x16xf32>
    %767 = math.tanh %757 : vector<2x16xf32>
    %768 = arith.mulf %766, %767 : vector<2x16xf32>
    %769 = vector.extract_strided_slice %747 {offsets = [0, 32], sizes = [2, 16], strides = [1, 1]} : vector<2x48xf32> to vector<2x16xf32>
    %770 = math.tanh %765 : vector<2x16xf32>
    %771 = arith.mulf %769, %770 : vector<2x16xf32>
    %772 = vector.broadcast %751 : vector<2x1xf32> to vector<2x16xf32>
    %773 = arith.mulf %771, %772 : vector<2x16xf32>
    %774 = vector.extract_strided_slice %6 {offsets = [0, 13, 0], sizes = [2, 1, 1], strides = [1, 1, 1]} : vector<2x16x1xf32> to vector<2x1x1xf32>
    %775 = vector.shape_cast %774 : vector<2x1x1xf32> to vector<2x1xf32>
    %776 = vector.broadcast %775 : vector<2x1xf32> to vector<2x16xf32>
    %777 = arith.mulf %768, %776 : vector<2x16xf32>
    %778 = tpu.concatenate %768, %773 in 1 : vector<2x16xf32>, vector<2x16xf32> -> vector<2x32xf32>
    %779 = tpu.concatenate %757, %765 in 1 : vector<2x16xf32>, vector<2x16xf32> -> vector<2x32xf32>
    %cst_59 = arith.constant dense<0.000000e+00> : vector<2x128xf32>
    %780 = tpu.matmul %778, %3, %cst_59 {dimension_numbers = #tpu.dot_dimension_numbers<[1], [0], [0], [1], [0, 0, 1, 1], [], []>} : vector<2x32xf32>, vector<32x128xf32>, vector<2x128xf32> -> vector<2x128xf32>
    %781 = vector.extract_strided_slice %780 {offsets = [0, 0], sizes = [2, 64], strides = [1, 1]} : vector<2x128xf32> to vector<2x64xf32>
    %782 = vector.extract_strided_slice %4 {offsets = [0, 14, 0], sizes = [2, 1, 64], strides = [1, 1, 1]} : vector<2x16x64xf32> to vector<2x1x64xf32>
    %783 = vector.shape_cast %782 : vector<2x1x64xf32> to vector<2x64xf32>
    %784 = arith.addf %781, %783 : vector<2x64xf32>
    %785 = vector.extract_strided_slice %780 {offsets = [0, 64], sizes = [2, 64], strides = [1, 1]} : vector<2x128xf32> to vector<2x64xf32>
    %786 = vector.extract_strided_slice %5 {offsets = [0, 1, 0], sizes = [2, 1, 64], strides = [1, 1, 1]} : vector<2x16x64xf32> to vector<2x1x64xf32>
    %787 = vector.shape_cast %786 : vector<2x1x64xf32> to vector<2x64xf32>
    %788 = arith.addf %785, %787 : vector<2x64xf32>
    %789 = vector.extract_strided_slice %784 {offsets = [0, 0], sizes = [2, 48], strides = [1, 1]} : vector<2x64xf32> to vector<2x48xf32>
    %790 = arith.negf %789 : vector<2x48xf32>
    %791 = math.exp %790 : vector<2x48xf32>
    %cst_60 = arith.constant 1.000000e+00 : f32
    %792 = vector.broadcast %cst_60 : f32 to vector<2x48xf32>
    %793 = arith.addf %792, %791 : vector<2x48xf32>
    %794 = arith.divf %792, %793 : vector<2x48xf32>
    %795 = vector.extract_strided_slice %784 {offsets = [0, 48], sizes = [2, 16], strides = [1, 1]} : vector<2x64xf32> to vector<2x16xf32>
    %796 = math.tanh %795 : vector<2x16xf32>
    %797 = vector.extract_strided_slice %788 {offsets = [0, 0], sizes = [2, 48], strides = [1, 1]} : vector<2x64xf32> to vector<2x48xf32>
    %798 = arith.negf %797 : vector<2x48xf32>
    %799 = math.exp %798 : vector<2x48xf32>
    %cst_61 = arith.constant 1.000000e+00 : f32
    %800 = vector.broadcast %cst_61 : f32 to vector<2x48xf32>
    %801 = arith.addf %800, %799 : vector<2x48xf32>
    %802 = arith.divf %800, %801 : vector<2x48xf32>
    %803 = vector.extract_strided_slice %788 {offsets = [0, 48], sizes = [2, 16], strides = [1, 1]} : vector<2x64xf32> to vector<2x16xf32>
    %804 = math.tanh %803 : vector<2x16xf32>
    %805 = vector.extract_strided_slice %7 {offsets = [0, 1, 0], sizes = [2, 1, 1], strides = [1, 1, 1]} : vector<2x16x1xf32> to vector<2x1x1xf32>
    %806 = vector.shape_cast %805 : vector<2x1x1xf32> to vector<2x1xf32>
    %807 = vector.extract_strided_slice %794 {offsets = [0, 16], sizes = [2, 16], strides = [1, 1]} : vector<2x48xf32> to vector<2x16xf32>
    %808 = vector.extract_strided_slice %779 {offsets = [0, 0], sizes = [2, 16], strides = [1, 1]} : vector<2x32xf32> to vector<2x16xf32>
    %809 = arith.mulf %807, %808 : vector<2x16xf32>
    %810 = vector.extract_strided_slice %794 {offsets = [0, 0], sizes = [2, 16], strides = [1, 1]} : vector<2x48xf32> to vector<2x16xf32>
    %811 = arith.mulf %810, %796 : vector<2x16xf32>
    %812 = arith.addf %809, %811 : vector<2x16xf32>
    %813 = vector.extract_strided_slice %802 {offsets = [0, 16], sizes = [2, 16], strides = [1, 1]} : vector<2x48xf32> to vector<2x16xf32>
    %814 = vector.extract_strided_slice %779 {offsets = [0, 16], sizes = [2, 16], strides = [1, 1]} : vector<2x32xf32> to vector<2x16xf32>
    %815 = arith.mulf %813, %814 : vector<2x16xf32>
    %816 = vector.extract_strided_slice %802 {offsets = [0, 0], sizes = [2, 16], strides = [1, 1]} : vector<2x48xf32> to vector<2x16xf32>
    %817 = arith.mulf %816, %804 : vector<2x16xf32>
    %818 = arith.addf %815, %817 : vector<2x16xf32>
    %819 = vector.broadcast %806 : vector<2x1xf32> to vector<2x16xf32>
    %820 = arith.mulf %818, %819 : vector<2x16xf32>
    %821 = vector.extract_strided_slice %794 {offsets = [0, 32], sizes = [2, 16], strides = [1, 1]} : vector<2x48xf32> to vector<2x16xf32>
    %822 = math.tanh %812 : vector<2x16xf32>
    %823 = arith.mulf %821, %822 : vector<2x16xf32>
    %824 = vector.extract_strided_slice %802 {offsets = [0, 32], sizes = [2, 16], strides = [1, 1]} : vector<2x48xf32> to vector<2x16xf32>
    %825 = math.tanh %820 : vector<2x16xf32>
    %826 = arith.mulf %824, %825 : vector<2x16xf32>
    %827 = vector.broadcast %806 : vector<2x1xf32> to vector<2x16xf32>
    %828 = arith.mulf %826, %827 : vector<2x16xf32>
    %829 = vector.extract_strided_slice %6 {offsets = [0, 14, 0], sizes = [2, 1, 1], strides = [1, 1, 1]} : vector<2x16x1xf32> to vector<2x1x1xf32>
    %830 = vector.shape_cast %829 : vector<2x1x1xf32> to vector<2x1xf32>
    %831 = vector.broadcast %830 : vector<2x1xf32> to vector<2x16xf32>
    %832 = arith.mulf %823, %831 : vector<2x16xf32>
    %833 = tpu.concatenate %823, %828 in 1 : vector<2x16xf32>, vector<2x16xf32> -> vector<2x32xf32>
    %834 = tpu.concatenate %812, %820 in 1 : vector<2x16xf32>, vector<2x16xf32> -> vector<2x32xf32>
    %cst_62 = arith.constant dense<0.000000e+00> : vector<2x128xf32>
    %835 = tpu.matmul %833, %3, %cst_62 {dimension_numbers = #tpu.dot_dimension_numbers<[1], [0], [0], [1], [0, 0, 1, 1], [], []>} : vector<2x32xf32>, vector<32x128xf32>, vector<2x128xf32> -> vector<2x128xf32>
    %836 = vector.extract_strided_slice %835 {offsets = [0, 0], sizes = [2, 64], strides = [1, 1]} : vector<2x128xf32> to vector<2x64xf32>
    %837 = vector.extract_strided_slice %4 {offsets = [0, 15, 0], sizes = [2, 1, 64], strides = [1, 1, 1]} : vector<2x16x64xf32> to vector<2x1x64xf32>
    %838 = vector.shape_cast %837 : vector<2x1x64xf32> to vector<2x64xf32>
    %839 = arith.addf %836, %838 : vector<2x64xf32>
    %840 = vector.extract_strided_slice %835 {offsets = [0, 64], sizes = [2, 64], strides = [1, 1]} : vector<2x128xf32> to vector<2x64xf32>
    %841 = vector.extract_strided_slice %5 {offsets = [0, 0, 0], sizes = [2, 1, 64], strides = [1, 1, 1]} : vector<2x16x64xf32> to vector<2x1x64xf32>
    %842 = vector.shape_cast %841 : vector<2x1x64xf32> to vector<2x64xf32>
    %843 = arith.addf %840, %842 : vector<2x64xf32>
    %844 = vector.extract_strided_slice %839 {offsets = [0, 0], sizes = [2, 48], strides = [1, 1]} : vector<2x64xf32> to vector<2x48xf32>
    %845 = arith.negf %844 : vector<2x48xf32>
    %846 = math.exp %845 : vector<2x48xf32>
    %cst_63 = arith.constant 1.000000e+00 : f32
    %847 = vector.broadcast %cst_63 : f32 to vector<2x48xf32>
    %848 = arith.addf %847, %846 : vector<2x48xf32>
    %849 = arith.divf %847, %848 : vector<2x48xf32>
    %850 = vector.extract_strided_slice %839 {offsets = [0, 48], sizes = [2, 16], strides = [1, 1]} : vector<2x64xf32> to vector<2x16xf32>
    %851 = math.tanh %850 : vector<2x16xf32>
    %852 = vector.extract_strided_slice %843 {offsets = [0, 0], sizes = [2, 48], strides = [1, 1]} : vector<2x64xf32> to vector<2x48xf32>
    %853 = arith.negf %852 : vector<2x48xf32>
    %854 = math.exp %853 : vector<2x48xf32>
    %cst_64 = arith.constant 1.000000e+00 : f32
    %855 = vector.broadcast %cst_64 : f32 to vector<2x48xf32>
    %856 = arith.addf %855, %854 : vector<2x48xf32>
    %857 = arith.divf %855, %856 : vector<2x48xf32>
    %858 = vector.extract_strided_slice %843 {offsets = [0, 48], sizes = [2, 16], strides = [1, 1]} : vector<2x64xf32> to vector<2x16xf32>
    %859 = math.tanh %858 : vector<2x16xf32>
    %860 = vector.extract_strided_slice %7 {offsets = [0, 0, 0], sizes = [2, 1, 1], strides = [1, 1, 1]} : vector<2x16x1xf32> to vector<2x1x1xf32>
    %861 = vector.shape_cast %860 : vector<2x1x1xf32> to vector<2x1xf32>
    %862 = vector.extract_strided_slice %849 {offsets = [0, 16], sizes = [2, 16], strides = [1, 1]} : vector<2x48xf32> to vector<2x16xf32>
    %863 = vector.extract_strided_slice %834 {offsets = [0, 0], sizes = [2, 16], strides = [1, 1]} : vector<2x32xf32> to vector<2x16xf32>
    %864 = arith.mulf %862, %863 : vector<2x16xf32>
    %865 = vector.extract_strided_slice %849 {offsets = [0, 0], sizes = [2, 16], strides = [1, 1]} : vector<2x48xf32> to vector<2x16xf32>
    %866 = arith.mulf %865, %851 : vector<2x16xf32>
    %867 = arith.addf %864, %866 : vector<2x16xf32>
    %868 = vector.extract_strided_slice %857 {offsets = [0, 16], sizes = [2, 16], strides = [1, 1]} : vector<2x48xf32> to vector<2x16xf32>
    %869 = vector.extract_strided_slice %834 {offsets = [0, 16], sizes = [2, 16], strides = [1, 1]} : vector<2x32xf32> to vector<2x16xf32>
    %870 = arith.mulf %868, %869 : vector<2x16xf32>
    %871 = vector.extract_strided_slice %857 {offsets = [0, 0], sizes = [2, 16], strides = [1, 1]} : vector<2x48xf32> to vector<2x16xf32>
    %872 = arith.mulf %871, %859 : vector<2x16xf32>
    %873 = arith.addf %870, %872 : vector<2x16xf32>
    %874 = vector.broadcast %861 : vector<2x1xf32> to vector<2x16xf32>
    %875 = arith.mulf %873, %874 : vector<2x16xf32>
    %876 = vector.extract_strided_slice %849 {offsets = [0, 32], sizes = [2, 16], strides = [1, 1]} : vector<2x48xf32> to vector<2x16xf32>
    %877 = math.tanh %867 : vector<2x16xf32>
    %878 = arith.mulf %876, %877 : vector<2x16xf32>
    %879 = vector.extract_strided_slice %857 {offsets = [0, 32], sizes = [2, 16], strides = [1, 1]} : vector<2x48xf32> to vector<2x16xf32>
    %880 = math.tanh %875 : vector<2x16xf32>
    %881 = arith.mulf %879, %880 : vector<2x16xf32>
    %882 = vector.broadcast %861 : vector<2x1xf32> to vector<2x16xf32>
    %883 = arith.mulf %881, %882 : vector<2x16xf32>
    %884 = vector.extract_strided_slice %6 {offsets = [0, 15, 0], sizes = [2, 1, 1], strides = [1, 1, 1]} : vector<2x16x1xf32> to vector<2x1x1xf32>
    %885 = vector.shape_cast %884 : vector<2x1x1xf32> to vector<2x1xf32>
    %886 = vector.broadcast %885 : vector<2x1xf32> to vector<2x16xf32>
    %887 = arith.mulf %878, %886 : vector<2x16xf32>
    %888 = tpu.concatenate %878, %883 in 1 : vector<2x16xf32>, vector<2x16xf32> -> vector<2x32xf32>
    %889 = tpu.concatenate %867, %875 in 1 : vector<2x16xf32>, vector<2x16xf32> -> vector<2x32xf32>
    %c0_65 = arith.constant 0 : index
    %c0_66 = arith.constant 0 : index
    %890 = vector.load %arg8[%c0_65, %c0_66] : memref<2x32xf32, #tpu.memory_space<vmem>>, vector<2x32xf32>
    tpu.vector_store %arg8[%c0_65, %c0_66], %888 {strides = array<i32>} : memref<2x32xf32, #tpu.memory_space<vmem>>, vector<2x32xf32>,
    %c0_67 = arith.constant 0 : index
    %c0_68 = arith.constant 0 : index
    %891 = vector.load %arg9[%c0_67, %c0_68] : memref<2x32xf32, #tpu.memory_space<vmem>>, vector<2x32xf32>
    tpu.vector_store %arg9[%c0_67, %c0_68], %889 {strides = array<i32>} : memref<2x32xf32, #tpu.memory_space<vmem>>, vector<2x32xf32>,
    %892 = tpu.concatenate %62, %117, %172, %227, %282, %337, %392, %447, %502, %557, %612, %667, %722, %777, %832, %887 in 1 : vector<2x16xf32>, vector<2x16xf32>, vector<2x16xf32>, vector<2x16xf32>, vector<2x16xf32>, vector<2x16xf32>, vector<2x16xf32>, vector<2x16xf32>, vector<2x16xf32>, vector<2x16xf32>, vector<2x16xf32>, vector<2x16xf32>, vector<2x16xf32>, vector<2x16xf32>, vector<2x16xf32>, vector<2x16xf32> -> vector<2x256xf32>
    %c0_69 = arith.constant 0 : index
    %c0_70 = arith.constant 0 : index
    %893 = vector.load %arg6[%c0_69, %c0_70] : memref<2x256xf32, #tpu.memory_space<vmem>>, vector<2x256xf32>
    tpu.vector_store %arg6[%c0_69, %c0_70], %892 {strides = array<i32>} : memref<2x256xf32, #tpu.memory_space<vmem>>, vector<2x256xf32>,
    %894 = tpu.concatenate %883, %828, %773, %718, %663, %608, %553, %498, %443, %388, %333, %278, %223, %168, %113, %58 in 1 : vector<2x16xf32>, vector<2x16xf32>, vector<2x16xf32>, vector<2x16xf32>, vector<2x16xf32>, vector<2x16xf32>, vector<2x16xf32>, vector<2x16xf32>, vector<2x16xf32>, vector<2x16xf32>, vector<2x16xf32>, vector<2x16xf32>, vector<2x16xf32>, vector<2x16xf32>, vector<2x16xf32>, vector<2x16xf32> -> vector<2x256xf32>
    %c0_71 = arith.constant 0 : index
    %c0_72 = arith.constant 0 : index
    %895 = vector.load %arg7[%c0_71, %c0_72] : memref<2x256xf32, #tpu.memory_space<vmem>>, vector<2x256xf32>
    tpu.vector_store %arg7[%c0_71, %c0_72], %894 {strides = array<i32>} : memref<2x256xf32, #tpu.memory_space<vmem>>, vector<2x256xf32>,
    return
  }
  func.func @transform_0(%arg0: i32) -> (i32, i32, i32) {
    %c0_i32 = arith.constant 0 : i32
    %c0_i32_0 = arith.constant 0 : i32
    %c0_i32_1 = arith.constant 0 : i32
    return %c0_i32, %arg0, %c0_i32_0 : i32, i32, i32
  }
  func.func @transform_1(%arg0: i32) -> (i32, i32, i32) {
    %c0_i32 = arith.constant 0 : i32
    %0 = arith.subi %c0_i32, %arg0 : i32
    %c0_i32_0 = arith.constant 0 : i32
    %c0_i32_1 = arith.constant 0 : i32
    %c0_i32_2 = arith.constant 0 : i32
    return %c0_i32_0, %0, %c0_i32_1 : i32, i32, i32
  }
  func.func @transform_2(%arg0: i32) -> (i32, i32) {
    %c0_i32 = arith.constant 0 : i32
    %c0_i32_0 = arith.constant 0 : i32
    %c0_i32_1 = arith.constant 0 : i32
    return %c0_i32, %c0_i32_0 : i32, i32
  }
  func.func @transform_3(%arg0: i32) -> (i32, i32, i32) {
    %c0_i32 = arith.constant 0 : i32
    %c0_i32_0 = arith.constant 0 : i32
    %c0_i32_1 = arith.constant 0 : i32
    return %c0_i32, %arg0, %c0_i32_0 : i32, i32, i32
  }
  func.func @transform_4(%arg0: i32) -> (i32, i32, i32) {
    %c0_i32 = arith.constant 0 : i32
    %0 = arith.subi %c0_i32, %arg0 : i32
    %c0_i32_0 = arith.constant 0 : i32
    %c0_i32_1 = arith.constant 0 : i32
    %c0_i32_2 = arith.constant 0 : i32
    return %c0_i32_0, %0, %c0_i32_1 : i32, i32, i32
  }
  func.func @transform_5(%arg0: i32) -> (i32, i32) {
    %c0_i32 = arith.constant 0 : i32
    %c0_i32_0 = arith.constant 0 : i32
    return %c0_i32, %arg0 : i32, i32
  }
  func.func @transform_6(%arg0: i32) -> (i32, i32) {
    %c0_i32 = arith.constant 0 : i32
    %0 = arith.subi %c0_i32, %arg0 : i32
    %c0_i32_0 = arith.constant 0 : i32
    %c0_i32_1 = arith.constant 0 : i32
    return %c0_i32_0, %0 : i32, i32
  }
}

module attributes {stable_mosaic.version = 11 : i64} {
  func.func @_q2c_kernel(%arg0: memref<2x16x1xf32, #tpu.memory_space<vmem>>, %arg1: memref<2x16x32xf32, #tpu.memory_space<vmem>>, %arg2: memref<2x32xf32, #tpu.memory_space<vmem>>) attributes {dimension_semantics = [], scalar_prefetch = 0 : i64, scratch_operands = 0 : i64, tpu.core_type = #tpu.core_type<tc>} {
    %c0 = arith.constant 0 : index
    %c0_0 = arith.constant 0 : index
    %c0_1 = arith.constant 0 : index
    %0 = vector.load %arg0[%c0, %c0_0, %c0_1] : memref<2x16x1xf32, #tpu.memory_space<vmem>>, vector<2x16x1xf32>
    %cst = arith.constant dense<0xFF800000> : vector<2x1xf32>
    %1 = vector.multi_reduction <maximumf>, %0, %cst [1] : vector<2x16x1xf32> to vector<2x1xf32>
    %2 = vector.shape_cast %1 : vector<2x1xf32> to vector<2x1x1xf32>
    %3 = vector.broadcast %2 : vector<2x1x1xf32> to vector<2x16x1xf32>
    %4 = arith.subf %0, %3 : vector<2x16x1xf32>
    %5 = math.exp %4 : vector<2x16x1xf32>
    %cst_2 = arith.constant dense<0.000000e+00> : vector<2x1xf32>
    %6 = vector.multi_reduction <add>, %5, %cst_2 [1] : vector<2x16x1xf32> to vector<2x1xf32>
    %7 = vector.shape_cast %6 : vector<2x1xf32> to vector<2x1x1xf32>
    %8 = tpu.reciprocal %7 : vector<2x1x1xf32> -> vector<2x1x1xf32>
    %9 = vector.broadcast %8 : vector<2x1x1xf32> to vector<2x16x1xf32>
    %10 = arith.mulf %5, %9 : vector<2x16x1xf32>
    %c0_3 = arith.constant 0 : index
    %c0_4 = arith.constant 0 : index
    %c0_5 = arith.constant 0 : index
    %11 = vector.load %arg1[%c0_3, %c0_4, %c0_5] : memref<2x16x32xf32, #tpu.memory_space<vmem>>, vector<2x16x32xf32>
    %12 = vector.broadcast %10 : vector<2x16x1xf32> to vector<2x16x32xf32>
    %13 = arith.mulf %12, %11 : vector<2x16x32xf32>
    %cst_6 = arith.constant dense<0.000000e+00> : vector<2x32xf32>
    %14 = vector.multi_reduction <add>, %13, %cst_6 [1] : vector<2x16x32xf32> to vector<2x32xf32>
    %c0_7 = arith.constant 0 : index
    %c0_8 = arith.constant 0 : index
    %15 = vector.load %arg2[%c0_7, %c0_8] : memref<2x32xf32, #tpu.memory_space<vmem>>, vector<2x32xf32>
    tpu.vector_store %arg2[%c0_7, %c0_8], %14 {strides = array<i32>} : memref<2x32xf32, #tpu.memory_space<vmem>>, vector<2x32xf32>,
    return
  }
}

module attributes {stable_mosaic.version = 11 : i64} {
  func.func @_attn_g_kernel(%arg0: i32, %arg1: memref<2x16x32xf32, #tpu.memory_space<vmem>>, %arg2: memref<2x16x32xf32, #tpu.memory_space<vmem>>, %arg3: memref<2x32xf32, #tpu.memory_space<vmem>>, %arg4: memref<2x16x128xf32, #tpu.memory_space<vmem>>) attributes {dimension_semantics = [#tpu.dimension_semantics<parallel>], iteration_bounds = array<i64: 1>, scalar_prefetch = 0 : i64, scratch_operands = 0 : i64, tpu.core_type = #tpu.core_type<tc>, window_params = [{transform_indices = @transform_0, window_bounds = array<i64: 2, 16, 32>}, {transform_indices = @transform_1, window_bounds = array<i64: 2, 16, 32>}, {pipeline_mode = #tpu.pipeline_mode<synchronous>, transform_indices = @transform_2, window_bounds = array<i64: 2, 32>}, {transform_indices = @transform_3, window_bounds = array<i64: 2, 16, 128>}]} {
    %c0 = arith.constant 0 : index
    %c0_0 = arith.constant 0 : index
    %c0_1 = arith.constant 0 : index
    %0 = vector.load %arg1[%c0, %c0_0, %c0_1] : memref<2x16x32xf32, #tpu.memory_space<vmem>>, vector<2x16x32xf32>
    %c0_2 = arith.constant 0 : index
    %c0_3 = arith.constant 0 : index
    %c0_4 = arith.constant 0 : index
    %1 = vector.load %arg2[%c0_2, %c0_3, %c0_4] : memref<2x16x32xf32, #tpu.memory_space<vmem>>, vector<2x16x32xf32>
    %c0_5 = arith.constant 0 : index
    %c0_6 = arith.constant 0 : index
    %2 = vector.load %arg3[%c0_5, %c0_6] : memref<2x32xf32, #tpu.memory_space<vmem>>, vector<2x32xf32>
    %3 = vector.shape_cast %2 : vector<2x32xf32> to vector<2x1x32xf32>
    %4 = arith.mulf %0, %1 : vector<2x16x32xf32>
    %5 = vector.broadcast %3 : vector<2x1x32xf32> to vector<2x16x32xf32>
    %6 = arith.mulf %0, %5 : vector<2x16x32xf32>
    %7 = tpu.concatenate %0, %1, %4, %6 in 2 : vector<2x16x32xf32>, vector<2x16x32xf32>, vector<2x16x32xf32>, vector<2x16x32xf32> -> vector<2x16x128xf32>
    %c0_7 = arith.constant 0 : index
    %c0_8 = arith.constant 0 : index
    %c0_9 = arith.constant 0 : index
    %8 = vector.load %arg4[%c0_7, %c0_8, %c0_9] : memref<2x16x128xf32, #tpu.memory_space<vmem>>, vector<2x16x128xf32>
    tpu.vector_store %arg4[%c0_7, %c0_8, %c0_9], %7 {strides = array<i32>} : memref<2x16x128xf32, #tpu.memory_space<vmem>>, vector<2x16x128xf32>,
    return
  }
  func.func @transform_0(%arg0: i32) -> (i32, i32, i32) {
    %c0_i32 = arith.constant 0 : i32
    %c0_i32_0 = arith.constant 0 : i32
    %c0_i32_1 = arith.constant 0 : i32
    return %c0_i32, %arg0, %c0_i32_0 : i32, i32, i32
  }
  func.func @transform_1(%arg0: i32) -> (i32, i32, i32) {
    %c0_i32 = arith.constant 0 : i32
    %c0_i32_0 = arith.constant 0 : i32
    %c0_i32_1 = arith.constant 0 : i32
    return %c0_i32, %arg0, %c0_i32_0 : i32, i32, i32
  }
  func.func @transform_2(%arg0: i32) -> (i32, i32) {
    %c0_i32 = arith.constant 0 : i32
    %c0_i32_0 = arith.constant 0 : i32
    %c0_i32_1 = arith.constant 0 : i32
    return %c0_i32, %c0_i32_0 : i32, i32
  }
  func.func @transform_3(%arg0: i32) -> (i32, i32, i32) {
    %c0_i32 = arith.constant 0 : i32
    %c0_i32_0 = arith.constant 0 : i32
    %c0_i32_1 = arith.constant 0 : i32
    return %c0_i32, %arg0, %c0_i32_0 : i32, i32, i32
  }
}

module attributes {stable_mosaic.version = 11 : i64} {
  func.func @_proj_kernel(%arg0: i32, %arg1: memref<32x128xf32, #tpu.memory_space<vmem>>, %arg2: memref<128x128xf32, #tpu.memory_space<vmem>>, %arg3: memref<1x128xf32, #tpu.memory_space<vmem>>, %arg4: memref<32x64xf32, #tpu.memory_space<vmem>>, %arg5: memref<32x64xf32, #tpu.memory_space<vmem>>) attributes {dimension_semantics = [#tpu.dimension_semantics<parallel>], iteration_bounds = array<i64: 1>, scalar_prefetch = 0 : i64, scratch_operands = 0 : i64, tpu.core_type = #tpu.core_type<tc>, window_params = [{transform_indices = @transform_0, window_bounds = array<i64: 32, 128>}, {pipeline_mode = #tpu.pipeline_mode<synchronous>, transform_indices = @transform_1, window_bounds = array<i64: 128, 128>}, {pipeline_mode = #tpu.pipeline_mode<synchronous>, transform_indices = @transform_2, window_bounds = array<i64: 1, 128>}, {transform_indices = @transform_3, window_bounds = array<i64: 32, 64>}, {transform_indices = @transform_4, window_bounds = array<i64: 32, 64>}]} {
    %c0 = arith.constant 0 : index
    %c0_0 = arith.constant 0 : index
    %0 = vector.load %arg1[%c0, %c0_0] : memref<32x128xf32, #tpu.memory_space<vmem>>, vector<32x128xf32>
    %1 = arith.truncf %0 : vector<32x128xf32> to vector<32x128xbf16>
    %c0_1 = arith.constant 0 : index
    %c0_2 = arith.constant 0 : index
    %2 = vector.load %arg2[%c0_1, %c0_2] : memref<128x128xf32, #tpu.memory_space<vmem>>, vector<128x128xf32>
    %3 = arith.truncf %2 : vector<128x128xf32> to vector<128x128xbf16>
    %cst = arith.constant dense<0.000000e+00> : vector<32x128xf32>
    %4 = tpu.matmul %1, %3, %cst {dimension_numbers = #tpu.dot_dimension_numbers<[1], [0], [0], [1], [0, 0, 1, 1], [], []>} : vector<32x128xbf16>, vector<128x128xbf16>, vector<32x128xf32> -> vector<32x128xf32>
    %c0_3 = arith.constant 0 : index
    %c0_4 = arith.constant 0 : index
    %5 = vector.load %arg3[%c0_3, %c0_4] : memref<1x128xf32, #tpu.memory_space<vmem>>, vector<1x128xf32>
    %6 = vector.broadcast %5 : vector<1x128xf32> to vector<32x128xf32>
    %7 = arith.addf %4, %6 : vector<32x128xf32>
    %8 = vector.extract_strided_slice %7 {offsets = [0, 0], sizes = [32, 64], strides = [1, 1]} : vector<32x128xf32> to vector<32x64xf32>
    %c0_5 = arith.constant 0 : index
    %c0_6 = arith.constant 0 : index
    %9 = vector.load %arg4[%c0_5, %c0_6] : memref<32x64xf32, #tpu.memory_space<vmem>>, vector<32x64xf32>
    tpu.vector_store %arg4[%c0_5, %c0_6], %8 {strides = array<i32>} : memref<32x64xf32, #tpu.memory_space<vmem>>, vector<32x64xf32>,
    %10 = vector.extract_strided_slice %7 {offsets = [0, 64], sizes = [32, 64], strides = [1, 1]} : vector<32x128xf32> to vector<32x64xf32>
    %c0_7 = arith.constant 0 : index
    %c0_8 = arith.constant 0 : index
    %11 = vector.load %arg5[%c0_7, %c0_8] : memref<32x64xf32, #tpu.memory_space<vmem>>, vector<32x64xf32>
    tpu.vector_store %arg5[%c0_7, %c0_8], %10 {strides = array<i32>} : memref<32x64xf32, #tpu.memory_space<vmem>>, vector<32x64xf32>,
    return
  }
  func.func @transform_0(%arg0: i32) -> (i32, i32) {
    %c0_i32 = arith.constant 0 : i32
    %c0_i32_0 = arith.constant 0 : i32
    return %arg0, %c0_i32 : i32, i32
  }
  func.func @transform_1(%arg0: i32) -> (i32, i32) {
    %c0_i32 = arith.constant 0 : i32
    %c0_i32_0 = arith.constant 0 : i32
    %c0_i32_1 = arith.constant 0 : i32
    return %c0_i32, %c0_i32_0 : i32, i32
  }
  func.func @transform_2(%arg0: i32) -> (i32, i32) {
    %c0_i32 = arith.constant 0 : i32
    %c0_i32_0 = arith.constant 0 : i32
    %c0_i32_1 = arith.constant 0 : i32
    return %c0_i32, %c0_i32_0 : i32, i32
  }
  func.func @transform_3(%arg0: i32) -> (i32, i32) {
    %c0_i32 = arith.constant 0 : i32
    %c0_i32_0 = arith.constant 0 : i32
    return %arg0, %c0_i32 : i32, i32
  }
  func.func @transform_4(%arg0: i32) -> (i32, i32) {
    %c0_i32 = arith.constant 0 : i32
    %c0_i32_0 = arith.constant 0 : i32
    return %arg0, %c0_i32 : i32, i32
  }
}

module attributes {stable_mosaic.version = 11 : i64} {
  func.func @_out_logits_kernel(%arg0: i32, %arg1: memref<2x16x128xf32, #tpu.memory_space<vmem>>, %arg2: memref<2x16x32xf32, #tpu.memory_space<vmem>>, %arg3: memref<2x16x32xf32, #tpu.memory_space<vmem>>, %arg4: memref<128x2xf32, #tpu.memory_space<vmem>>, %arg5: memref<32x2xf32, #tpu.memory_space<vmem>>, %arg6: memref<1x2xf32, #tpu.memory_space<vmem>>, %arg7: memref<2x16x1xf32, #tpu.memory_space<vmem>>, %arg8: memref<2x16x2xf32, #tpu.memory_space<vmem>>) attributes {dimension_semantics = [#tpu.dimension_semantics<parallel>], iteration_bounds = array<i64: 1>, scalar_prefetch = 0 : i64, scratch_operands = 0 : i64, tpu.core_type = #tpu.core_type<tc>, window_params = [{transform_indices = @transform_0, window_bounds = array<i64: 2, 16, 128>}, {transform_indices = @transform_1, window_bounds = array<i64: 2, 16, 32>}, {transform_indices = @transform_2, window_bounds = array<i64: 2, 16, 32>}, {pipeline_mode = #tpu.pipeline_mode<synchronous>, transform_indices = @transform_3, window_bounds = array<i64: 128, 2>}, {pipeline_mode = #tpu.pipeline_mode<synchronous>, transform_indices = @transform_4, window_bounds = array<i64: 32, 2>}, {pipeline_mode = #tpu.pipeline_mode<synchronous>, transform_indices = @transform_5, window_bounds = array<i64: 1, 2>}, {transform_indices = @transform_6, window_bounds = array<i64: 2, 16, 1>}, {transform_indices = @transform_7, window_bounds = array<i64: 2, 16, 2>}]} {
    %c0 = arith.constant 0 : index
    %c0_0 = arith.constant 0 : index
    %c0_1 = arith.constant 0 : index
    %0 = vector.load %arg1[%c0, %c0_0, %c0_1] : memref<2x16x128xf32, #tpu.memory_space<vmem>>, vector<2x16x128xf32>
    %c0_2 = arith.constant 0 : index
    %c0_3 = arith.constant 0 : index
    %c0_4 = arith.constant 0 : index
    %1 = vector.load %arg2[%c0_2, %c0_3, %c0_4] : memref<2x16x32xf32, #tpu.memory_space<vmem>>, vector<2x16x32xf32>
    %c0_5 = arith.constant 0 : index
    %c0_6 = arith.constant 0 : index
    %c0_7 = arith.constant 0 : index
    %2 = vector.load %arg3[%c0_5, %c0_6, %c0_7] : memref<2x16x32xf32, #tpu.memory_space<vmem>>, vector<2x16x32xf32>
    %c0_8 = arith.constant 0 : index
    %c0_9 = arith.constant 0 : index
    %3 = vector.load %arg4[%c0_8, %c0_9] : memref<128x2xf32, #tpu.memory_space<vmem>>, vector<128x2xf32>
    %4 = vector.shape_cast %3 : vector<128x2xf32> to vector<1x128x2xf32>
    %5 = vector.broadcast %4 : vector<1x128x2xf32> to vector<2x128x2xf32>
    %c0_10 = arith.constant 0 : index
    %c0_11 = arith.constant 0 : index
    %6 = vector.load %arg5[%c0_10, %c0_11] : memref<32x2xf32, #tpu.memory_space<vmem>>, vector<32x2xf32>
    %7 = vector.shape_cast %6 : vector<32x2xf32> to vector<1x32x2xf32>
    %8 = vector.broadcast %7 : vector<1x32x2xf32> to vector<2x32x2xf32>
    "tpu.trace_start"() <{level = 10 : i32, message = "btd,bdk->btk"}> : () -> ()
    %cst = arith.constant dense<0.000000e+00> : vector<2x16x2xf32>
    %9 = tpu.matmul %0, %5, %cst {dimension_numbers = #tpu.dot_dimension_numbers<[2], [1], [1], [2], [0, 0, 0, 1, 1, 2], [0], [0]>} : vector<2x16x128xf32>, vector<2x128x2xf32>, vector<2x16x2xf32> -> vector<2x16x2xf32>
    %cst_12 = arith.constant dense<0.000000e+00> : vector<2x16x2xf32>
    %10 = tpu.matmul %1, %8, %cst_12 {dimension_numbers = #tpu.dot_dimension_numbers<[2], [1], [1], [2], [0, 0, 0, 1, 1, 2], [0], [0]>} : vector<2x16x32xf32>, vector<2x32x2xf32>, vector<2x16x2xf32> -> vector<2x16x2xf32>
    %cst_13 = arith.constant dense<0.000000e+00> : vector<2x16x2xf32>
    %11 = tpu.matmul %2, %8, %cst_13 {dimension_numbers = #tpu.dot_dimension_numbers<[2], [1], [1], [2], [0, 0, 0, 1, 1, 2], [0], [0]>} : vector<2x16x32xf32>, vector<2x32x2xf32>, vector<2x16x2xf32> -> vector<2x16x2xf32>
    "tpu.trace_stop"() : () -> ()
    %12 = vector.extract_strided_slice %10 {offsets = [0, 0, 0], sizes = [2, 16, 1], strides = [1, 1, 1]} : vector<2x16x2xf32> to vector<2x16x1xf32>
    %13 = vector.extract_strided_slice %11 {offsets = [0, 0, 1], sizes = [2, 16, 1], strides = [1, 1, 1]} : vector<2x16x2xf32> to vector<2x16x1xf32>
    %14 = tpu.concatenate %12, %13 in 2 : vector<2x16x1xf32>, vector<2x16x1xf32> -> vector<2x16x2xf32>
    %15 = arith.addf %9, %14 : vector<2x16x2xf32>
    %c0_14 = arith.constant 0 : index
    %c0_15 = arith.constant 0 : index
    %16 = vector.load %arg6[%c0_14, %c0_15] : memref<1x2xf32, #tpu.memory_space<vmem>>, vector<1x2xf32>
    %17 = vector.shape_cast %16 : vector<1x2xf32> to vector<1x1x2xf32>
    %18 = vector.broadcast %17 : vector<1x1x2xf32> to vector<2x16x2xf32>
    %19 = arith.addf %15, %18 : vector<2x16x2xf32>
    %c0_16 = arith.constant 0 : index
    %c0_17 = arith.constant 0 : index
    %c0_18 = arith.constant 0 : index
    %20 = vector.load %arg7[%c0_16, %c0_17, %c0_18] : memref<2x16x1xf32, #tpu.memory_space<vmem>>, vector<2x16x1xf32>
    %cst_19 = arith.constant 0.000000e+00 : f32
    %21 = vector.broadcast %cst_19 : f32 to vector<2x16x1xf32>
    %22 = arith.cmpf ogt, %20, %21 : vector<2x16x1xf32>
    %cst_20 = arith.constant -1.000000e+30 : f32
    %23 = vector.shape_cast %22 : vector<2x16x1xi1> to vector<2x16x1xi1>
    %24 = vector.broadcast %23 : vector<2x16x1xi1> to vector<2x16x2xi1>
    %25 = vector.broadcast %cst_20 : f32 to vector<2x16x2xf32>
    %26 = arith.select %24, %19, %25 : vector<2x16x2xi1>, vector<2x16x2xf32>
    %c0_21 = arith.constant 0 : index
    %c0_22 = arith.constant 0 : index
    %c0_23 = arith.constant 0 : index
    %27 = vector.load %arg8[%c0_21, %c0_22, %c0_23] : memref<2x16x2xf32, #tpu.memory_space<vmem>>, vector<2x16x2xf32>
    tpu.vector_store %arg8[%c0_21, %c0_22, %c0_23], %26 {strides = array<i32>} : memref<2x16x2xf32, #tpu.memory_space<vmem>>, vector<2x16x2xf32>,
    return
  }
  func.func @transform_0(%arg0: i32) -> (i32, i32, i32) {
    %c0_i32 = arith.constant 0 : i32
    %c0_i32_0 = arith.constant 0 : i32
    %c0_i32_1 = arith.constant 0 : i32
    return %c0_i32, %arg0, %c0_i32_0 : i32, i32, i32
  }
  func.func @transform_1(%arg0: i32) -> (i32, i32, i32) {
    %c0_i32 = arith.constant 0 : i32
    %c0_i32_0 = arith.constant 0 : i32
    %c0_i32_1 = arith.constant 0 : i32
    return %c0_i32, %arg0, %c0_i32_0 : i32, i32, i32
  }
  func.func @transform_2(%arg0: i32) -> (i32, i32, i32) {
    %c0_i32 = arith.constant 0 : i32
    %c0_i32_0 = arith.constant 0 : i32
    %c0_i32_1 = arith.constant 0 : i32
    return %c0_i32, %arg0, %c0_i32_0 : i32, i32, i32
  }
  func.func @transform_3(%arg0: i32) -> (i32, i32) {
    %c0_i32 = arith.constant 0 : i32
    %c0_i32_0 = arith.constant 0 : i32
    %c0_i32_1 = arith.constant 0 : i32
    return %c0_i32, %c0_i32_0 : i32, i32
  }
  func.func @transform_4(%arg0: i32) -> (i32, i32) {
    %c0_i32 = arith.constant 0 : i32
    %c0_i32_0 = arith.constant 0 : i32
    %c0_i32_1 = arith.constant 0 : i32
    return %c0_i32, %c0_i32_0 : i32, i32
  }
  func.func @transform_5(%arg0: i32) -> (i32, i32) {
    %c0_i32 = arith.constant 0 : i32
    %c0_i32_0 = arith.constant 0 : i32
    %c0_i32_1 = arith.constant 0 : i32
    return %c0_i32, %c0_i32_0 : i32, i32
  }
  func.func @transform_6(%arg0: i32) -> (i32, i32, i32) {
    %c0_i32 = arith.constant 0 : i32
    %c0_i32_0 = arith.constant 0 : i32
    %c0_i32_1 = arith.constant 0 : i32
    return %c0_i32, %arg0, %c0_i32_0 : i32, i32, i32
  }
  func.func @transform_7(%arg0: i32) -> (i32, i32, i32) {
    %c0_i32 = arith.constant 0 : i32
    %c0_i32_0 = arith.constant 0 : i32
    %c0_i32_1 = arith.constant 0 : i32
    return %c0_i32, %arg0, %c0_i32_0 : i32, i32, i32
  }
}

module attributes {stable_mosaic.version = 11 : i64} {
  func.func @_proj_kernel(%arg0: i32, %arg1: memref<32x32xf32, #tpu.memory_space<vmem>>, %arg2: memref<32x128xf32, #tpu.memory_space<vmem>>, %arg3: memref<1x128xf32, #tpu.memory_space<vmem>>, %arg4: memref<32x64xf32, #tpu.memory_space<vmem>>, %arg5: memref<32x64xf32, #tpu.memory_space<vmem>>) attributes {dimension_semantics = [#tpu.dimension_semantics<parallel>], iteration_bounds = array<i64: 1>, scalar_prefetch = 0 : i64, scratch_operands = 0 : i64, tpu.core_type = #tpu.core_type<tc>, window_params = [{transform_indices = @transform_0, window_bounds = array<i64: 32, 32>}, {pipeline_mode = #tpu.pipeline_mode<synchronous>, transform_indices = @transform_1, window_bounds = array<i64: 32, 128>}, {pipeline_mode = #tpu.pipeline_mode<synchronous>, transform_indices = @transform_2, window_bounds = array<i64: 1, 128>}, {transform_indices = @transform_3, window_bounds = array<i64: 32, 64>}, {transform_indices = @transform_4, window_bounds = array<i64: 32, 64>}]} {
    %c0 = arith.constant 0 : index
    %c0_0 = arith.constant 0 : index
    %0 = vector.load %arg1[%c0, %c0_0] : memref<32x32xf32, #tpu.memory_space<vmem>>, vector<32x32xf32>
    %1 = arith.truncf %0 : vector<32x32xf32> to vector<32x32xbf16>
    %c0_1 = arith.constant 0 : index
    %c0_2 = arith.constant 0 : index
    %2 = vector.load %arg2[%c0_1, %c0_2] : memref<32x128xf32, #tpu.memory_space<vmem>>, vector<32x128xf32>
    %3 = arith.truncf %2 : vector<32x128xf32> to vector<32x128xbf16>
    %cst = arith.constant dense<0.000000e+00> : vector<32x128xf32>
    %4 = tpu.matmul %1, %3, %cst {dimension_numbers = #tpu.dot_dimension_numbers<[1], [0], [0], [1], [0, 0, 1, 1], [], []>} : vector<32x32xbf16>, vector<32x128xbf16>, vector<32x128xf32> -> vector<32x128xf32>
    %c0_3 = arith.constant 0 : index
    %c0_4 = arith.constant 0 : index
    %5 = vector.load %arg3[%c0_3, %c0_4] : memref<1x128xf32, #tpu.memory_space<vmem>>, vector<1x128xf32>
    %6 = vector.broadcast %5 : vector<1x128xf32> to vector<32x128xf32>
    %7 = arith.addf %4, %6 : vector<32x128xf32>
    %8 = vector.extract_strided_slice %7 {offsets = [0, 0], sizes = [32, 64], strides = [1, 1]} : vector<32x128xf32> to vector<32x64xf32>
    %c0_5 = arith.constant 0 : index
    %c0_6 = arith.constant 0 : index
    %9 = vector.load %arg4[%c0_5, %c0_6] : memref<32x64xf32, #tpu.memory_space<vmem>>, vector<32x64xf32>
    tpu.vector_store %arg4[%c0_5, %c0_6], %8 {strides = array<i32>} : memref<32x64xf32, #tpu.memory_space<vmem>>, vector<32x64xf32>,
    %10 = vector.extract_strided_slice %7 {offsets = [0, 64], sizes = [32, 64], strides = [1, 1]} : vector<32x128xf32> to vector<32x64xf32>
    %c0_7 = arith.constant 0 : index
    %c0_8 = arith.constant 0 : index
    %11 = vector.load %arg5[%c0_7, %c0_8] : memref<32x64xf32, #tpu.memory_space<vmem>>, vector<32x64xf32>
    tpu.vector_store %arg5[%c0_7, %c0_8], %10 {strides = array<i32>} : memref<32x64xf32, #tpu.memory_space<vmem>>, vector<32x64xf32>,
    return
  }
  func.func @transform_0(%arg0: i32) -> (i32, i32) {
    %c0_i32 = arith.constant 0 : i32
    %c0_i32_0 = arith.constant 0 : i32
    return %arg0, %c0_i32 : i32, i32
  }
  func.func @transform_1(%arg0: i32) -> (i32, i32) {
    %c0_i32 = arith.constant 0 : i32
    %c0_i32_0 = arith.constant 0 : i32
    %c0_i32_1 = arith.constant 0 : i32
    return %c0_i32, %c0_i32_0 : i32, i32
  }
  func.func @transform_2(%arg0: i32) -> (i32, i32) {
    %c0_i32 = arith.constant 0 : i32
    %c0_i32_0 = arith.constant 0 : i32
    %c0_i32_1 = arith.constant 0 : i32
    return %c0_i32, %c0_i32_0 : i32, i32
  }
  func.func @transform_3(%arg0: i32) -> (i32, i32) {
    %c0_i32 = arith.constant 0 : i32
    %c0_i32_0 = arith.constant 0 : i32
    return %arg0, %c0_i32 : i32, i32
  }
  func.func @transform_4(%arg0: i32) -> (i32, i32) {
    %c0_i32 = arith.constant 0 : i32
    %c0_i32_0 = arith.constant 0 : i32
    return %arg0, %c0_i32 : i32, i32
  }
}

module attributes {stable_mosaic.version = 11 : i64} {
  func.func @_softmax_pair_kernel(%arg0: memref<2x16x2xf32, #tpu.memory_space<vmem>>, %arg1: memref<2x16x1xf32, #tpu.memory_space<vmem>>, %arg2: memref<2x16x1xf32, #tpu.memory_space<vmem>>) attributes {dimension_semantics = [], scalar_prefetch = 0 : i64, scratch_operands = 0 : i64, tpu.core_type = #tpu.core_type<tc>} {
    %c0 = arith.constant 0 : index
    %c0_0 = arith.constant 0 : index
    %c0_1 = arith.constant 0 : index
    %0 = vector.load %arg0[%c0, %c0_0, %c0_1] : memref<2x16x2xf32, #tpu.memory_space<vmem>>, vector<2x16x2xf32>
    %cst = arith.constant dense<0xFF800000> : vector<2x2xf32>
    %1 = vector.multi_reduction <maximumf>, %0, %cst [1] : vector<2x16x2xf32> to vector<2x2xf32>
    %2 = vector.shape_cast %1 : vector<2x2xf32> to vector<2x1x2xf32>
    %3 = vector.broadcast %2 : vector<2x1x2xf32> to vector<2x16x2xf32>
    %4 = arith.subf %0, %3 : vector<2x16x2xf32>
    %5 = math.exp %4 : vector<2x16x2xf32>
    %cst_2 = arith.constant dense<0.000000e+00> : vector<2x2xf32>
    %6 = vector.multi_reduction <add>, %5, %cst_2 [1] : vector<2x16x2xf32> to vector<2x2xf32>
    %7 = vector.shape_cast %6 : vector<2x2xf32> to vector<2x1x2xf32>
    %8 = tpu.reciprocal %7 : vector<2x1x2xf32> -> vector<2x1x2xf32>
    %9 = vector.broadcast %8 : vector<2x1x2xf32> to vector<2x16x2xf32>
    %10 = arith.mulf %5, %9 : vector<2x16x2xf32>
    %11 = vector.extract_strided_slice %10 {offsets = [0, 0, 0], sizes = [2, 16, 1], strides = [1, 1, 1]} : vector<2x16x2xf32> to vector<2x16x1xf32>
    %c0_3 = arith.constant 0 : index
    %c0_4 = arith.constant 0 : index
    %c0_5 = arith.constant 0 : index
    %12 = vector.load %arg1[%c0_3, %c0_4, %c0_5] : memref<2x16x1xf32, #tpu.memory_space<vmem>>, vector<2x16x1xf32>
    tpu.vector_store %arg1[%c0_3, %c0_4, %c0_5], %11 {strides = array<i32>} : memref<2x16x1xf32, #tpu.memory_space<vmem>>, vector<2x16x1xf32>,
    %13 = vector.extract_strided_slice %10 {offsets = [0, 0, 1], sizes = [2, 16, 1], strides = [1, 1, 1]} : vector<2x16x2xf32> to vector<2x16x1xf32>
    %c0_6 = arith.constant 0 : index
    %c0_7 = arith.constant 0 : index
    %c0_8 = arith.constant 0 : index
    %14 = vector.load %arg2[%c0_6, %c0_7, %c0_8] : memref<2x16x1xf32, #tpu.memory_space<vmem>>, vector<2x16x1xf32>
    tpu.vector_store %arg2[%c0_6, %c0_7, %c0_8], %13 {strides = array<i32>} : memref<2x16x1xf32, #tpu.memory_space<vmem>>, vector<2x16x1xf32>,
    return
  }
}

</mosaic_0001>

<llo_original>
// kernel: bidaf_forward.14
$region0: #{bidaf_forward.14}
  #allocation0 [shape = 'u32[]', space=smem, size = 0x4, offset = 0x4, fixed_abs, tag = 'smem constant byte address 0x4 - core index']
  #allocation1 [shape = 'u32[72,128]{1,0:T(1,128)}', space=vmem, size = 0x9000, scoped, tag = 'internal scratch']
  %s0 = inlined_call_operand.vmem [shape: f32[48,16], index: 0, kind: input, shape index: {}]
  %s1 = inlined_call_operand.vmem [shape: f32[16,128], index: 1, kind: input, shape index: {}]
  %s2 = inlined_call_operand.vmem [shape: f32[1,128], index: 2, kind: input, shape index: {}]
  %s3 = inlined_call_operand.vmem [shape: f32[48,64], index: 3, kind: output, shape index: {0}]
  %s4 = inlined_call_operand.vmem [shape: f32[48,64], index: 4, kind: output, shape index: {1}]
  %5 = xla_tuple %s3, %s4
  %s6 = sld [smem:[#allocation0]]
  $region30: #{bidaf_forward.14} parent=0
    _
  %s8 = ssub.s32 1, %s6
  %s9 = scalar_select 0, %s8, %s6
  // Predicated region
  $region2: #{bidaf_forward.14} parent=0 // pred_check
    _
  $region3: #{bidaf_forward.14} parent=0 // pred_check_branch
    %11 = sbr.rel (0) target = $region5
  $region4: #{bidaf_forward.14} parent=0 // pred_region
    _
  $region5: #{bidaf_forward.14} parent=0 // pred_fallthru
    _
  // Predicated region
  $region6: #{bidaf_forward.14} parent=0 // pred_check
    _
  $region7: #{bidaf_forward.14} parent=0 // pred_check_branch
    %13 = sbr.rel (0) target = $region9
  $region8: #{bidaf_forward.14} parent=0 // pred_region
    _
  $region9: #{bidaf_forward.14} parent=0 // pred_fallthru
    _
  // Predicated region
  $region10: #{bidaf_forward.14} parent=0 // pred_check
    _
  $region11: #{bidaf_forward.14} parent=0 // pred_check_branch
    %15 = sbr.rel (0) target = $region13
  $region12: #{bidaf_forward.14} parent=0 // pred_region
    _
  $region13: #{bidaf_forward.14} parent=0 // pred_fallthru
    _
  %v17 = vld [vmem:[%s0] sm:$0xff]
  %v18 = vld [vmem:[%s0 + $0x8] sm:$0xff]
  %v19 = vld [vmem:[%s0 + $0x10] sm:$0xff]
  %v20 = vld [vmem:[%s0 + $0x18] sm:$0xff]
  %v21 = vld [vmem:[%s0 + $0x20] sm:$0xff]
  %v22 = vld [vmem:[%s0 + $0x28] sm:$0xff]
  %v23 = vpack.c.bf16 %v18, %v17
  %v24 = vpack.c.bf16 %v20, %v19
  %v25 = vpack.c.bf16 %v22, %v21
  %v26 = vld [vmem:[%s1] sm:$0xff]
  %v27 = vld [vmem:[%s1 + $0x8] sm:$0xff]
  %v28 = vpack.c.bf16 %v27, %v26
  %v29 = vld [vmem:[%s2] sm:$0x1]
  %v31 = vperm.slane %v29, 0
  %vm33 = vcmask 130048
  %v35 = vsel %vm33, %v23, 0
  %v38 = vsel %vm33, %v24, 0
  %v41 = vsel %vm33, %v25, 0
  %43 = vmatpush.bf16.msra.mxu0 0
  %44 = vmatpush.bf16.msra.mxu0 0
  %45 = vmatpush.bf16.msra.mxu0 0
  %46 = vmatpush.bf16.msra.mxu0 0
  %47 = vmatpush.bf16.msra.mxu0 0
  %48 = vmatpush.bf16.msra.mxu0 0
  %49 = vmatpush.bf16.msra.mxu0 0
  %50 = vmatpush.bf16.msra.mxu0 %v28
  %51 = vmatmul.bf16.gmra.mxu0 %v35
  %v52 = vpop.f32.mrf.mxu0
  %v53 = vadd.f32 %v31, %v52
  %v54 = vpop.f32.mrf.mxu0
  %v55 = vadd.f32 %v31, %v54
  %56 = vmatmul.bf16.gmra.mxu0 %v38
  %v57 = vpop.f32.mrf.mxu0
  %v58 = vadd.f32 %v31, %v57
  %v59 = vpop.f32.mrf.mxu0
  %v60 = vadd.f32 %v31, %v59
  %61 = vmatmul.bf16.gmra.mxu0 %v41
  %v62 = vpop.f32.mrf.mxu0
  %v63 = vadd.f32 %v31, %v62
  %v64 = vpop.f32.mrf.mxu0
  %v65 = vadd.f32 %v31, %v64
  %66 = vdwg.mxu0
  %vm67 = vcmask 523264
  %68 = vst.msk [vmem:[%s3] sm:$0xff] %vm67, %v53
  %69 = vst.msk [vmem:[%s3 + $0x8] sm:$0xff] %vm67, %v55
  %70 = vst.msk [vmem:[%s3 + $0x10] sm:$0xff] %vm67, %v58
  %71 = vst.msk [vmem:[%s3 + $0x18] sm:$0xff] %vm67, %v60
  %72 = vst.msk [vmem:[%s3 + $0x20] sm:$0xff] %vm67, %v63
  %73 = vst.msk [vmem:[%s3 + $0x28] sm:$0xff] %vm67, %v65
  %80 = vrot.lane.b32.xlu0 %v53, 64
  %v81 = vpop.permute.xlu0 %80
  %82 = vrot.lane.b32.xlu0 %v55, 64
  %v83 = vpop.permute.xlu0 %82
  %84 = vrot.lane.b32.xlu0 %v58, 64
  %v85 = vpop.permute.xlu0 %84
  %86 = vrot.lane.b32.xlu0 %v60, 64
  %v87 = vpop.permute.xlu0 %86
  %88 = vrot.lane.b32.xlu0 %v63, 64
  %v89 = vpop.permute.xlu0 %88
  %90 = vrot.lane.b32.xlu0 %v65, 64
  %v91 = vpop.permute.xlu0 %90
  %98 = vst.msk [vmem:[%s4] sm:$0xff] %vm67, %v81
  %99 = vst.msk [vmem:[%s4 + $0x8] sm:$0xff] %vm67, %v83
  %100 = vst.msk [vmem:[%s4 + $0x10] sm:$0xff] %vm67, %v85
  %101 = vst.msk [vmem:[%s4 + $0x18] sm:$0xff] %vm67, %v87
  %102 = vst.msk [vmem:[%s4 + $0x20] sm:$0xff] %vm67, %v89
  %103 = vst.msk [vmem:[%s4 + $0x28] sm:$0xff] %vm67, %v91
  // Predicated region
  $region14: #{bidaf_forward.14} parent=0 // pred_check
    _
  $region15: #{bidaf_forward.14} parent=0 // pred_check_branch
    %105 = sbr.rel (0) target = $region17
  $region16: #{bidaf_forward.14} parent=0 // pred_region
    _
  $region17: #{bidaf_forward.14} parent=0 // pred_fallthru
    _
  // Predicated region
  $region18: #{bidaf_forward.14} parent=0 // pred_check
    _
  $region19: #{bidaf_forward.14} parent=0 // pred_check_branch
    %107 = sbr.rel (0) target = $region21
  $region20: #{bidaf_forward.14} parent=0 // pred_region
    _
  $region21: #{bidaf_forward.14} parent=0 // pred_fallthru
    _
  // Predicated region
  $region22: #{bidaf_forward.14} parent=0 // pred_check
    _
  $region23: #{bidaf_forward.14} parent=0 // pred_check_branch
    %109 = sbr.rel (0) target = $region25
  $region24: #{bidaf_forward.14} parent=0 // pred_region
    _
  $region25: #{bidaf_forward.14} parent=0 // pred_fallthru
    _
  // Predicated region
  $region26: #{bidaf_forward.14} parent=0 // pred_check
    _
  $region27: #{bidaf_forward.14} parent=0 // pred_check_branch
    %111 = sbr.rel (0) target = $region29
  $region28: #{bidaf_forward.14} parent=0 // pred_region
    _
  $region29: #{bidaf_forward.14} parent=0 // pred_fallthru
    _

// kernel: bidaf_forward.17
$region0: #{bidaf_forward.17}
  #allocation0 [shape = 'u32[]', space=smem, size = 0x4, offset = 0x4, fixed_abs, tag = 'smem constant byte address 0x4 - core index']
  #allocation1 [shape = 'u32[72,128]{1,0:T(1,128)}', space=vmem, size = 0x9000, scoped, tag = 'internal scratch']
  #allocation2 [shape = 'f32[1,1]{1,0:T(1,128)S(1)}', space=vmem, size = 0x200, scoped, tag = 'scoped memory for bidaf_forward.17']
  %s0 = inlined_call_operand.vmem [shape: f32[2,16,32], index: 0, kind: input, shape index: {}]
  %s1 = inlined_call_operand.vmem [shape: f32[2,8,32], index: 1, kind: input, shape index: {}]
  %s2 = inlined_call_operand.vmem [shape: f32[3,32], index: 2, kind: input, shape index: {}]
  %s3 = inlined_call_operand.<no memory space> [shape: f32[1,1], index: 3, kind: input, shape index: {}]
  %s4 = inlined_call_operand.vmem [shape: f32[2,16,1], index: 4, kind: input, shape index: {}]
  %s5 = inlined_call_operand.vmem [shape: f32[2,8], index: 5, kind: input, shape index: {}]
  %s6 = inlined_call_operand.vmem [shape: f32[2,16,32], index: 6, kind: output, shape index: {0}]
  %s7 = inlined_call_operand.vmem [shape: f32[2,16,1], index: 7, kind: output, shape index: {1}]
  %8 = xla_tuple %s6, %s7
  %s9 = sld [smem:[#allocation0]]
  $region42: #{bidaf_forward.17} parent=0
    _
  %s11 = ssub.s32 1, %s9
  %s12 = scalar_select 0, %s11, %s9
  %v13 = vstv %s3
  %14 = vst [vmem:[#allocation2] sm:$0x1] %v13
  // Predicated region
  $region2: #{bidaf_forward.17} parent=0 // pred_check
    _
  $region3: #{bidaf_forward.17} parent=0 // pred_check_branch
    %16 = sbr.rel (0) target = $region5
  $region4: #{bidaf_forward.17} parent=0 // pred_region
    _
  $region5: #{bidaf_forward.17} parent=0 // pred_fallthru
    _
  // Predicated region
  $region6: #{bidaf_forward.17} parent=0 // pred_check
    _
  $region7: #{bidaf_forward.17} parent=0 // pred_check_branch
    %18 = sbr.rel (0) target = $region9
  $region8: #{bidaf_forward.17} parent=0 // pred_region
    _
  $region9: #{bidaf_forward.17} parent=0 // pred_fallthru
    _
  // Predicated region
  $region10: #{bidaf_forward.17} parent=0 // pred_check
    _
  $region11: #{bidaf_forward.17} parent=0 // pred_check_branch
    %20 = sbr.rel (0) target = $region13
  $region12: #{bidaf_forward.17} parent=0 // pred_region
    _
  $region13: #{bidaf_forward.17} parent=0 // pred_fallthru
    _
  // Predicated region
  $region14: #{bidaf_forward.17} parent=0 // pred_check
    _
  $region15: #{bidaf_forward.17} parent=0 // pred_check_branch
    %22 = sbr.rel (0) target = $region17
  $region16: #{bidaf_forward.17} parent=0 // pred_region
    _
  $region17: #{bidaf_forward.17} parent=0 // pred_fallthru
    _
  // Predicated region
  $region18: #{bidaf_forward.17} parent=0 // pred_check
    _
  $region19: #{bidaf_forward.17} parent=0 // pred_check_branch
    %24 = sbr.rel (0) target = $region21
  $region20: #{bidaf_forward.17} parent=0 // pred_region
    _
  $region21: #{bidaf_forward.17} parent=0 // pred_fallthru
    _
  // Predicated region
  $region22: #{bidaf_forward.17} parent=0 // pred_check
    _
  $region23: #{bidaf_forward.17} parent=0 // pred_check_branch
    %26 = sbr.rel (0) target = $region25
  $region24: #{bidaf_forward.17} parent=0 // pred_region
    _
  $region25: #{bidaf_forward.17} parent=0 // pred_fallthru
    _
  %v28 = vld [vmem:[%s0] sm:$0xff]
  %v29 = vld [vmem:[%s0 + $0x8] sm:$0xff]
  %v30 = vld [vmem:[%s0 + $0x10] sm:$0xff]
  %v31 = vld [vmem:[%s0 + $0x18] sm:$0xff]
  %v32 = vld [vmem:[%s1] sm:$0xff]
  %v33 = vld [vmem:[%s1 + $0x8] sm:$0xff]
  %v34 = vld [vmem:[%s2] sm:$0x7]
  %v35 = vpack.c.bf16 %v32, %v32
  %v36 = vpack.c.bf16 %v33, %v33
  %v37 = vperm.slane %v34, 2
  %v38 = vmul.f32 %v28, %v37
  %v39 = vmul.f32 %v29, %v37
  %v40 = vmul.f32 %v30, %v37
  %v41 = vmul.f32 %v31, %v37
  %v42 = vpack.c.bf16 %v38, %v38
  %v43 = vpack.c.bf16 %v39, %v39
  %v44 = vpack.c.bf16 %v40, %v40
  %v45 = vpack.c.bf16 %v41, %v41
  %v46 = vperm.slane %v34, 0
  %v47 = vmul.f32 %v28, %v46
  %v48 = vmul.f32 %v29, %v46
  %v49 = vmul.f32 %v30, %v46
  %v50 = vmul.f32 %v31, %v46
  %vm51 = vcmask 261120
  %v52 = vsel %vm51, %v47, 0.0
  %53 = vadd.xlane.f32.xlu0 %v52
  %v54 = vpop.xlane.xlu0 %53
  %v55 = vsel %vm51, %v48, 0.0
  %56 = vadd.xlane.f32.xlu0 %v55
  %v57 = vpop.xlane.xlu0 %56
  %v58 = vsel %vm51, %v49, 0.0
  %59 = vadd.xlane.f32.xlu0 %v58
  %v60 = vpop.xlane.xlu0 %59
  %v61 = vsel %vm51, %v50, 0.0
  %62 = vadd.xlane.f32.xlu0 %v61
  %v63 = vpop.xlane.xlu0 %62
  %v64 = vperm.slane %v34, 1
  %v65 = vmul.f32 %v32, %v64
  %v66 = vmul.f32 %v33, %v64
  %v67 = vsel %vm51, %v65, 0.0
  %68 = vadd.xlane.f32.xlu0 %v67
  %v69 = vpop.xlane.xlu0 %68
  %v70 = vsel %vm51, %v66, 0.0
  %71 = vadd.xlane.f32.xlu0 %v70
  %v72 = vpop.xlane.xlu0 %71
  %v75 = vunpack.c.l.b16 %v42
  %v76 = vunpack.c.l.b16 %v43
  %v77 = vpack.c.b16 %v76, %v75
  %v79 = vsel %vm51, %v77, 0
  %v82 = vsel %vm51, %v35, 0
  %84 = vmatpush.bf16.xpose.msra.mxu0 0
  %85 = vmatpush.bf16.xpose.msra.mxu0 0
  %86 = vmatpush.bf16.xpose.msra.mxu0 0
  %87 = vmatpush.bf16.xpose.msra.mxu0 0
  %88 = vmatpush.bf16.xpose.msra.mxu0 0
  %89 = vmatpush.bf16.xpose.msra.mxu0 0
  %90 = vmatpush.bf16.xpose.msra.mxu0 0
  %91 = vmatpush.bf16.xpose.msra.mxu0 %v82
  %92 = vmatmul.bf16.gmra.mxu0 %v79
  %v93 = vpop.f32.mrf.mxu0
  %v94 = vadd.f32 %v54, %v93
  %v95 = vpop.f32.mrf.mxu0
  %v96 = vadd.f32 %v57, %v95
  %97 = vdwg.mxu0
  %v100 = vunpack.c.l.b16 %v44
  %v101 = vunpack.c.l.b16 %v45
  %v102 = vpack.c.b16 %v101, %v100
  %v104 = vsel %vm51, %v102, 0
  %v107 = vsel %vm51, %v36, 0
  %109 = vmatpush.bf16.xpose.msra.mxu0 0
  %110 = vmatpush.bf16.xpose.msra.mxu0 0
  %111 = vmatpush.bf16.xpose.msra.mxu0 0
  %112 = vmatpush.bf16.xpose.msra.mxu0 0
  %113 = vmatpush.bf16.xpose.msra.mxu0 0
  %114 = vmatpush.bf16.xpose.msra.mxu0 0
  %115 = vmatpush.bf16.xpose.msra.mxu0 0
  %116 = vmatpush.bf16.xpose.msra.mxu0 %v107
  %117 = vmatmul.bf16.gmra.mxu0 %v104
  %v118 = vpop.f32.mrf.mxu0
  %v119 = vadd.f32 %v60, %v118
  %v120 = vpop.f32.mrf.mxu0
  %v121 = vadd.f32 %v63, %v120
  %122 = vdwg.mxu0
  %v125 = vlaneseq
  %v126 = vand.u32 %v125, 127
  %v127 = vperm.slane %v69, %v126
  %v128 = vperm.slane %v72, %v126
  %vm129 = vcmask 1042434
  %v130 = vsel %vm129, %v127, %v127
  %vm131 = vcmask 1043459
  %v132 = vsel %vm131, %v127, %v130
  %vm133 = vcmask 1044484
  %v134 = vsel %vm133, %v127, %v132
  %vm135 = vcmask 1045509
  %v136 = vsel %vm135, %v127, %v134
  %vm137 = vcmask 1046534
  %v138 = vsel %vm137, %v127, %v136
  %vm139 = vcmask 1047559
  %v140 = vsel %vm139, %v127, %v138
  %v141 = vsel %vm129, %v128, %v128
  %v142 = vsel %vm131, %v128, %v141
  %v143 = vsel %vm133, %v128, %v142
  %v144 = vsel %vm135, %v128, %v143
  %v145 = vsel %vm137, %v128, %v144
  %v146 = vsel %vm139, %v128, %v145
  %v149 = vadd.f32 %v94, %v140
  %v150 = vadd.f32 %v96, %v140
  %v151 = vadd.f32 %v119, %v146
  %v152 = vadd.f32 %v121, %v146
  %v153 = vld [vmem:[#allocation2] sm:$0x1]
  %v155 = vperm.slane %v153, 0
  %156 = vset.pattern.permute.xlu0 0
  %157 = vperm.xlu0 %156, %v155
  %v158 = vpop.permute.xlu0 %157
  %v160 = vadd.f32 %v149, %v158
  %v161 = vadd.f32 %v150, %v158
  %v162 = vadd.f32 %v151, %v158
  %v163 = vadd.f32 %v152, %v158
  %v164 = vld [vmem:[%s5] sm:$0x3]
  %v166 = vrot.slane %v164, 1
  %vm168 = vcmp.gt.f32.partialorder %v164, 0.0
  %vm169 = vcmp.gt.f32.partialorder %v166, 0.0
  %v170 = vsel %vm168, 1, 0
  %v171 = vsel %vm169, 1, 0
  %v172 = vperm.slane %v170, 0
  %v173 = vperm.slane %v171, 0
  %vm174 = vcmp.eq.s32.totalorder %v172, 1
  %vm175 = vcmp.eq.s32.totalorder %v173, 1
  %v176 = vsel %vm174, %v160, -1e+30
  %v177 = vsel %vm174, %v161, -1e+30
  %v178 = vsel %vm175, %v162, -1e+30
  %v179 = vsel %vm175, %v163, -1e+30
  %vm180 = vcmask 64512
  %v181 = vsel %vm180, %v176, -inf
  %182 = vmax.xlane.f32.xlu0 %v181
  %v183 = vpop.xlane.xlu0 %182
  %v184 = vsel %vm180, %v177, -inf
  %185 = vmax.xlane.f32.xlu0 %v184
  %v186 = vpop.xlane.xlu0 %185
  %v187 = vsel %vm180, %v178, -inf
  %188 = vmax.xlane.f32.xlu0 %v187
  %v189 = vpop.xlane.xlu0 %188
  %v190 = vsel %vm180, %v179, -inf
  %191 = vmax.xlane.f32.xlu0 %v190
  %v192 = vpop.xlane.xlu0 %191
  %v193 = vsub.f32 %v176, %v183
  %v194 = vsub.f32 %v177, %v186
  %v195 = vsub.f32 %v178, %v189
  %v196 = vsub.f32 %v179, %v192
  %v197 = vmul.f32 %v193, 1.442695
  %v198 = vpow.pop %v197
  %v199 = vmul.f32 %v194, 1.442695
  %v200 = vpow.pop %v199
  %v201 = vmul.f32 %v195, 1.442695
  %v202 = vpow.pop %v201
  %v203 = vmul.f32 %v196, 1.442695
  %v204 = vpow.pop %v203
  %v205 = vsel %vm180, %v198, 0.0
  %206 = vadd.xlane.f32.xlu0 %v205
  %v207 = vpop.xlane.xlu0 %206
  %v208 = vsel %vm180, %v200, 0.0
  %209 = vadd.xlane.f32.xlu0 %v208
  %v210 = vpop.xlane.xlu0 %209
  %v211 = vsel %vm180, %v202, 0.0
  %212 = vadd.xlane.f32.xlu0 %v211
  %v213 = vpop.xlane.xlu0 %212
  %v214 = vsel %vm180, %v204, 0.0
  %215 = vadd.xlane.f32.xlu0 %v214
  %v216 = vpop.xlane.xlu0 %215
  %v217 = vrcp.pop %v207
  %v218 = vmul.f32 %v207, %v217
  %v219 = vsub.f32 1.0, %v218
  %v220 = vmul.f32 %v217, %v219
  %v221 = vadd.f32 %v217, %v220
  %vm222 = vweird.f32 %v207
  %vm223 = vweird.f32 %v217
  %vm224 = vmor %vm222, %vm223
  %v225 = vsel %vm224, %v217, %v221
  %v226 = vand.u32 2147483647, %v207
  %vm227 = vcmp.eq.f32.partialorder %v226, 8.507059e+37
  %v228 = vand.u32 %v207, 2147483648
  %v229 = vor.u32 1.1754944e-38, %v228
  %v230 = vsel %vm227, %v229, %v225
  %v231 = vrcp.pop %v210
  %v232 = vmul.f32 %v210, %v231
  %v233 = vsub.f32 1.0, %v232
  %v234 = vmul.f32 %v231, %v233
  %v235 = vadd.f32 %v231, %v234
  %vm236 = vweird.f32 %v210
  %vm237 = vweird.f32 %v231
  %vm238 = vmor %vm236, %vm237
  %v239 = vsel %vm238, %v231, %v235
  %v240 = vand.u32 2147483647, %v210
  %vm241 = vcmp.eq.f32.partialorder %v240, 8.507059e+37
  %v242 = vand.u32 %v210, 2147483648
  %v243 = vor.u32 1.1754944e-38, %v242
  %v244 = vsel %vm241, %v243, %v239
  %v245 = vrcp.pop %v213
  %v246 = vmul.f32 %v213, %v245
  %v247 = vsub.f32 1.0, %v246
  %v248 = vmul.f32 %v245, %v247
  %v249 = vadd.f32 %v245, %v248
  %vm250 = vweird.f32 %v213
  %vm251 = vweird.f32 %v245
  %vm252 = vmor %vm250, %vm251
  %v253 = vsel %vm252, %v245, %v249
  %v254 = vand.u32 2147483647, %v213
  %vm255 = vcmp.eq.f32.partialorder %v254, 8.507059e+37
  %v256 = vand.u32 %v213, 2147483648
  %v257 = vor.u32 1.1754944e-38, %v256
  %v258 = vsel %vm255, %v257, %v253
  %v259 = vrcp.pop %v216
  %v260 = vmul.f32 %v216, %v259
  %v261 = vsub.f32 1.0, %v260
  %v262 = vmul.f32 %v259, %v261
  %v263 = vadd.f32 %v259, %v262
  %vm264 = vweird.f32 %v216
  %vm265 = vweird.f32 %v259
  %vm266 = vmor %vm264, %vm265
  %v267 = vsel %vm266, %v259, %v263
  %v268 = vand.u32 2147483647, %v216
  %vm269 = vcmp.eq.f32.partialorder %v268, 8.507059e+37
  %v270 = vand.u32 %v216, 2147483648
  %v271 = vor.u32 1.1754944e-38, %v270
  %v272 = vsel %vm269, %v271, %v267
  %v273 = vmul.f32 %v198, %v230
  %v274 = vmul.f32 %v200, %v244
  %v275 = vmul.f32 %v202, %v258
  %v276 = vmul.f32 %v204, %v272
  %v277 = vpack.c.bf16 %v273, %v273
  %v278 = vpack.c.bf16 %v274, %v274
  %v279 = vpack.c.bf16 %v275, %v275
  %v280 = vpack.c.bf16 %v276, %v276
  %v283 = vunpack.c.l.b16 %v277
  %v284 = vunpack.c.l.b16 %v278
  %v285 = vpack.c.b16 %v284, %v283
  %v287 = vsel %vm180, %v285, 0
  %vm289 = vcmask 1043456
  %v290 = vsel %vm289, %v35, 0
  %292 = vmatpush.bf16.msra.mxu0 0
  %293 = vmatpush.bf16.msra.mxu0 0
  %294 = vmatpush.bf16.msra.mxu0 0
  %295 = vmatpush.bf16.msra.mxu0 0
  %296 = vmatpush.bf16.msra.mxu0 0
  %297 = vmatpush.bf16.msra.mxu0 0
  %298 = vmatpush.bf16.msra.mxu0 0
  %299 = vmatpush.bf16.msra.mxu0 %v290
  %300 = vmatmul.bf16.gmra.mxu0 %v287
  %v301 = vpop.f32.mrf.mxu0
  %v302 = vadd.f32 0.0, %v301
  %v303 = vpop.f32.mrf.mxu0
  %v304 = vadd.f32 0.0, %v303
  %305 = vdwg.mxu0
  %v308 = vunpack.c.l.b16 %v279
  %v309 = vunpack.c.l.b16 %v280
  %v310 = vpack.c.b16 %v309, %v308
  %v312 = vsel %vm180, %v310, 0
  %v314 = vsel %vm289, %v36, 0
  %316 = vmatpush.bf16.msra.mxu0 0
  %317 = vmatpush.bf16.msra.mxu0 0
  %318 = vmatpush.bf16.msra.mxu0 0
  %319 = vmatpush.bf16.msra.mxu0 0
  %320 = vmatpush.bf16.msra.mxu0 0
  %321 = vmatpush.bf16.msra.mxu0 0
  %322 = vmatpush.bf16.msra.mxu0 0
  %323 = vmatpush.bf16.msra.mxu0 %v314
  %324 = vmatmul.bf16.gmra.mxu0 %v312
  %v325 = vpop.f32.mrf.mxu0
  %v326 = vadd.f32 0.0, %v325
  %v327 = vpop.f32.mrf.mxu0
  %v328 = vadd.f32 0.0, %v327
  %329 = vdwg.mxu0
  %330 = vst.msk [vmem:[%s6] sm:$0xff] %vm51, %v302
  %331 = vst.msk [vmem:[%s6 + $0x8] sm:$0xff] %vm51, %v304
  %332 = vst.msk [vmem:[%s6 + $0x10] sm:$0xff] %vm51, %v326
  %333 = vst.msk [vmem:[%s6 + $0x18] sm:$0xff] %vm51, %v328
  %v334 = vld [vmem:[%s4] sm:$0xff]
  %v335 = vld [vmem:[%s4 + $0x8] sm:$0xff]
  %v336 = vld [vmem:[%s4 + $0x10] sm:$0xff]
  %v337 = vld [vmem:[%s4 + $0x18] sm:$0xff]
  %vm338 = vcmp.gt.f32.partialorder %v334, 0.0
  %vm339 = vcmp.gt.f32.partialorder %v335, 0.0
  %vm340 = vcmp.gt.f32.partialorder %v336, 0.0
  %vm341 = vcmp.gt.f32.partialorder %v337, 0.0
  %v342 = vsel %vm338, %v183, -1e+30
  %v343 = vsel %vm339, %v186, -1e+30
  %v344 = vsel %vm340, %v189, -1e+30
  %v345 = vsel %vm341, %v192, -1e+30
  %vm346 = vcmask 7168
  %347 = vst.msk [vmem:[%s7] sm:$0xff] %vm346, %v342
  %348 = vst.msk [vmem:[%s7 + $0x8] sm:$0xff] %vm346, %v343
  %349 = vst.msk [vmem:[%s7 + $0x10] sm:$0xff] %vm346, %v344
  %350 = vst.msk [vmem:[%s7 + $0x18] sm:$0xff] %vm346, %v345
  // Predicated region
  $region26: #{bidaf_forward.17} parent=0 // pred_check
    _
  $region27: #{bidaf_forward.17} parent=0 // pred_check_branch
    %352 = sbr.rel (0) target = $region29
  $region28: #{bidaf_forward.17} parent=0 // pred_region
    _
  $region29: #{bidaf_forward.17} parent=0 // pred_fallthru
    _
  // Predicated region
  $region30: #{bidaf_forward.17} parent=0 // pred_check
    _
  $region31: #{bidaf_forward.17} parent=0 // pred_check_branch
    %354 = sbr.rel (0) target = $region33
  $region32: #{bidaf_forward.17} parent=0 // pred_region
    _
  $region33: #{bidaf_forward.17} parent=0 // pred_fallthru
    _
  // Predicated region
  $region34: #{bidaf_forward.17} parent=0 // pred_check
    _
  $region35: #{bidaf_forward.17} parent=0 // pred_check_branch
    %356 = sbr.rel (0) target = $region37
  $region36: #{bidaf_forward.17} parent=0 // pred_region
    _
  $region37: #{bidaf_forward.17} parent=0 // pred_fallthru
    _
  // Predicated region
  $region38: #{bidaf_forward.17} parent=0 // pred_check
    _
  $region39: #{bidaf_forward.17} parent=0 // pred_check_branch
    %358 = sbr.rel (0) target = $region41
  $region40: #{bidaf_forward.17} parent=0 // pred_region
    _
  $region41: #{bidaf_forward.17} parent=0 // pred_fallthru
    _

// kernel: bidaf_forward.18
$region0: #{bidaf_forward.18}
  #allocation0 [shape = 'u32[]', space=smem, size = 0x4, offset = 0x4, fixed_abs, tag = 'smem constant byte address 0x4 - core index']
  #allocation1 [shape = 'u32[72,128]{1,0:T(1,128)}', space=vmem, size = 0x9000, scoped, tag = 'internal scratch']
  %s0 = inlined_call_operand.vmem [shape: f32[2,16,1], index: 0, kind: input, shape index: {}]
  %s1 = inlined_call_operand.vmem [shape: f32[2,16,32], index: 1, kind: input, shape index: {}]
  %s2 = inlined_call_operand.vmem [shape: f32[2,32], index: 2, kind: output, shape index: {}]
  %s3 = sld [smem:[#allocation0]]
  $region18: #{bidaf_forward.18} parent=0
    _
  %s5 = ssub.s32 1, %s3
  %s6 = scalar_select 0, %s5, %s3
  // Predicated region
  $region2: #{bidaf_forward.18} parent=0 // pred_check
    _
  $region3: #{bidaf_forward.18} parent=0 // pred_check_branch
    %8 = sbr.rel (0) target = $region5
  $region4: #{bidaf_forward.18} parent=0 // pred_region
    _
  $region5: #{bidaf_forward.18} parent=0 // pred_fallthru
    _
  // Predicated region
  $region6: #{bidaf_forward.18} parent=0 // pred_check
    _
  $region7: #{bidaf_forward.18} parent=0 // pred_check_branch
    %10 = sbr.rel (0) target = $region9
  $region8: #{bidaf_forward.18} parent=0 // pred_region
    _
  $region9: #{bidaf_forward.18} parent=0 // pred_fallthru
    _
  %v11 = vld [vmem:[%s0] sm:$0xff]
  %v12 = vld [vmem:[%s0 + $0x8] sm:$0xff]
  %v13 = vld [vmem:[%s0 + $0x10] sm:$0xff]
  %v14 = vld [vmem:[%s0 + $0x18] sm:$0xff]
  %vm15 = vcmask 7168
  %v16 = vsel %vm15, %v11, -inf
  %v17 = vsel %vm15, %v12, -inf
  %v18 = vmax.f32 %v16, %v17
  %v19 = vrot.slane %v18, 4
  %v20 = vmax.f32 %v18, %v19
  %v21 = vrot.slane %v20, 2
  %v22 = vmax.f32 %v20, %v21
  %v23 = vrot.slane %v22, 1
  %v24 = vmax.f32 %v22, %v23
  %v25 = vsel %vm15, %v13, -inf
  %v26 = vsel %vm15, %v14, -inf
  %v27 = vmax.f32 %v25, %v26
  %v28 = vrot.slane %v27, 4
  %v29 = vmax.f32 %v27, %v28
  %v30 = vrot.slane %v29, 2
  %v31 = vmax.f32 %v29, %v30
  %v32 = vrot.slane %v31, 1
  %v33 = vmax.f32 %v31, %v32
  %v34 = vsub.f32 %v11, %v24
  %v35 = vsub.f32 %v12, %v24
  %v36 = vsub.f32 %v13, %v33
  %v37 = vsub.f32 %v14, %v33
  %v38 = vmul.f32 %v34, 1.442695
  %v39 = vpow.pop %v38
  %v40 = vmul.f32 %v35, 1.442695
  %v41 = vpow.pop %v40
  %v42 = vmul.f32 %v36, 1.442695
  %v43 = vpow.pop %v42
  %v44 = vmul.f32 %v37, 1.442695
  %v45 = vpow.pop %v44
  %v46 = vsel %vm15, %v39, 0.0
  %v47 = vsel %vm15, %v41, 0.0
  %v48 = vadd.f32 %v46, %v47
  %v49 = vrot.slane %v48, 4
  %v50 = vadd.f32 %v48, %v49
  %v51 = vrot.slane %v50, 2
  %v52 = vadd.f32 %v50, %v51
  %v53 = vrot.slane %v52, 1
  %v54 = vadd.f32 %v52, %v53
  %v55 = vsel %vm15, %v43, 0.0
  %v56 = vsel %vm15, %v45, 0.0
  %v57 = vadd.f32 %v55, %v56
  %v58 = vrot.slane %v57, 4
  %v59 = vadd.f32 %v57, %v58
  %v60 = vrot.slane %v59, 2
  %v61 = vadd.f32 %v59, %v60
  %v62 = vrot.slane %v61, 1
  %v63 = vadd.f32 %v61, %v62
  %v64 = vrcp.pop %v54
  %v65 = vmul.f32 %v54, %v64
  %v66 = vsub.f32 1.0, %v65
  %v67 = vmul.f32 %v64, %v66
  %v68 = vadd.f32 %v64, %v67
  %vm69 = vweird.f32 %v54
  %vm70 = vweird.f32 %v64
  %vm71 = vmor %vm69, %vm70
  %v72 = vsel %vm71, %v64, %v68
  %v73 = vand.u32 2147483647, %v54
  %vm74 = vcmp.eq.f32.partialorder %v73, 8.507059e+37
  %v75 = vand.u32 %v54, 2147483648
  %v76 = vor.u32 1.1754944e-38, %v75
  %v77 = vsel %vm74, %v76, %v72
  %v78 = vrcp.pop %v63
  %v79 = vmul.f32 %v63, %v78
  %v80 = vsub.f32 1.0, %v79
  %v81 = vmul.f32 %v78, %v80
  %v82 = vadd.f32 %v78, %v81
  %vm83 = vweird.f32 %v63
  %vm84 = vweird.f32 %v78
  %vm85 = vmor %vm83, %vm84
  %v86 = vsel %vm85, %v78, %v82
  %v87 = vand.u32 2147483647, %v63
  %vm88 = vcmp.eq.f32.partialorder %v87, 8.507059e+37
  %v89 = vand.u32 %v63, 2147483648
  %v90 = vor.u32 1.1754944e-38, %v89
  %v91 = vsel %vm88, %v90, %v86
  %v92 = vmul.f32 %v39, %v77
  %v93 = vmul.f32 %v41, %v77
  %v94 = vmul.f32 %v43, %v91
  %v95 = vmul.f32 %v45, %v91
  %v96 = vld [vmem:[%s1] sm:$0xff]
  %v97 = vld [vmem:[%s1 + $0x8] sm:$0xff]
  %v98 = vld [vmem:[%s1 + $0x10] sm:$0xff]
  %v99 = vld [vmem:[%s1 + $0x18] sm:$0xff]
  %101 = vset.pattern.permute.xlu0 0
  %102 = vperm.xlu0 %101, %v92
  %v103 = vpop.permute.xlu0 %102
  %106 = vset.pattern.permute.xlu0 0
  %107 = vperm.xlu0 %106, %v93
  %v108 = vpop.permute.xlu0 %107
  %111 = vset.pattern.permute.xlu0 0
  %112 = vperm.xlu0 %111, %v94
  %v113 = vpop.permute.xlu0 %112
  %116 = vset.pattern.permute.xlu0 0
  %117 = vperm.xlu0 %116, %v95
  %v118 = vpop.permute.xlu0 %117
  %v120 = vmul.f32 %v103, %v96
  %v121 = vmul.f32 %v108, %v97
  %v122 = vmul.f32 %v113, %v98
  %v123 = vmul.f32 %v118, %v99
  %vm124 = vcmask 261120
  %v125 = vsel %vm124, %v120, 0.0
  %v126 = vsel %vm124, %v121, 0.0
  %v127 = vadd.f32 %v125, %v126
  %v128 = vrot.slane %v127, 4
  %v129 = vadd.f32 %v127, %v128
  %v130 = vrot.slane %v129, 2
  %v131 = vadd.f32 %v129, %v130
  %v132 = vrot.slane %v131, 1
  %v133 = vadd.f32 %v131, %v132
  %v134 = vsel %vm124, %v122, 0.0
  %v135 = vsel %vm124, %v123, 0.0
  %v136 = vadd.f32 %v134, %v135
  %v137 = vrot.slane %v136, 4
  %v138 = vadd.f32 %v136, %v137
  %v139 = vrot.slane %v138, 2
  %v140 = vadd.f32 %v138, %v139
  %v141 = vrot.slane %v140, 1
  %v142 = vadd.f32 %v140, %v141
  %vm145 = vcmask 1041409
  %v146 = vsel %vm145, %v142, %v133
  %vm148 = vcmask 254976
  %149 = vst.msk [vmem:[%s2] sm:$0x3] %vm148, %v146
  // Predicated region
  $region10: #{bidaf_forward.18} parent=0 // pred_check
    _
  $region11: #{bidaf_forward.18} parent=0 // pred_check_branch
    %151 = sbr.rel (0) target = $region13
  $region12: #{bidaf_forward.18} parent=0 // pred_region
    _
  $region13: #{bidaf_forward.18} parent=0 // pred_fallthru
    _
  // Predicated region
  $region14: #{bidaf_forward.18} parent=0 // pred_check
    _
  $region15: #{bidaf_forward.18} parent=0 // pred_check_branch
    %153 = sbr.rel (0) target = $region17
  $region16: #{bidaf_forward.18} parent=0 // pred_region
    _
  $region17: #{bidaf_forward.18} parent=0 // pred_fallthru
    _

// kernel: bidaf_forward.16
$region0: #{bidaf_forward.16}
  #allocation0 [shape = 'u32[]', space=smem, size = 0x4, offset = 0x4, fixed_abs, tag = 'smem constant byte address 0x4 - core index']
  #allocation1 [shape = 'u32[72,128]{1,0:T(1,128)}', space=vmem, size = 0x9000, scoped, tag = 'internal scratch']
  #allocation2 [shape = 'f32[2,32]{1,0:T(2,128)}', space=vmem, size = 0x400, scoped, tag = 'scratch operand']
  #allocation3 [shape = 'f32[2,32]{1,0:T(2,128)}', space=vmem, size = 0x400, scoped, tag = 'scratch operand']
  %s0 = inlined_call_operand.vmem [shape: f32[2,8,64], index: 0, kind: input, shape index: {}]
  %s1 = inlined_call_operand.vmem [shape: f32[2,8,64], index: 1, kind: input, shape index: {}]
  %s2 = inlined_call_operand.vmem [shape: f32[32,128], index: 2, kind: input, shape index: {}]
  %s3 = inlined_call_operand.vmem [shape: f32[2,8,1], index: 3, kind: input, shape index: {}, may-alias: {3,4}]
  %s4 = inlined_call_operand.vmem [shape: f32[2,8,1], index: 4, kind: input, shape index: {}, may-alias: {3,4}]
  %s5 = inlined_call_operand.vmem [shape: f32[2,128], index: 5, kind: output, shape index: {0}]
  %s6 = inlined_call_operand.vmem [shape: f32[2,128], index: 6, kind: output, shape index: {1}]
  %7 = xla_tuple %s5, %s6
  %s8 = sld [smem:[#allocation0]]
  $region42: #{bidaf_forward.16} parent=0
    _
  %s10 = ssub.s32 1, %s8
  %s11 = scalar_select 0, %s10, %s8
  // Predicated region
  $region2: #{bidaf_forward.16} parent=0 // pred_check
    _
  $region3: #{bidaf_forward.16} parent=0 // pred_check_branch
    %13 = sbr.rel (0) target = $region5
  $region4: #{bidaf_forward.16} parent=0 // pred_region
    _
  $region5: #{bidaf_forward.16} parent=0 // pred_fallthru
    _
  // Predicated region
  $region6: #{bidaf_forward.16} parent=0 // pred_check
    _
  $region7: #{bidaf_forward.16} parent=0 // pred_check_branch
    %15 = sbr.rel (0) target = $region9
  $region8: #{bidaf_forward.16} parent=0 // pred_region
    %s16 = ssub.s32 0, 0
    %p17 = scmp.lt.s32.totalorder %s16, 0
    %s18 = scalar_select %p17, %s16, 0
    %s19 = smul.addr %s18, 8
    %s20 = scalar_lea.vmem %s1, %s19
    %s21 = ssub.s32 0, 0
  $region9: #{bidaf_forward.16} parent=0 // pred_fallthru
    _
  // Predicated region
  $region10: #{bidaf_forward.16} parent=0 // pred_check
    _
  $region11: #{bidaf_forward.16} parent=0 // pred_check_branch
    %23 = sbr.rel (0) target = $region13
  $region12: #{bidaf_forward.16} parent=0 // pred_region
    _
  $region13: #{bidaf_forward.16} parent=0 // pred_fallthru
    _
  // Predicated region
  $region14: #{bidaf_forward.16} parent=0 // pred_check
    _
  $region15: #{bidaf_forward.16} parent=0 // pred_check_branch
    %25 = sbr.rel (0) target = $region17
  $region16: #{bidaf_forward.16} parent=0 // pred_region
    _
  $region17: #{bidaf_forward.16} parent=0 // pred_fallthru
    _
  // Predicated region
  $region18: #{bidaf_forward.16} parent=0 // pred_check
    _
  $region19: #{bidaf_forward.16} parent=0 // pred_check_branch
    %27 = sbr.rel (0) target = $region21
  $region20: #{bidaf_forward.16} parent=0 // pred_region
    %s28 = ssub.s32 0, 0
    %p29 = scmp.lt.s32.totalorder %s28, 0
    %s30 = scalar_select %p29, %s28, 0
    %s31 = smul.addr %s30, 8
    %s32 = scalar_lea.vmem %s4, %s31
    %s33 = ssub.s32 0, 0
  $region21: #{bidaf_forward.16} parent=0 // pred_fallthru
    _
  %s34 = ssub.s32 0, 0
  %p35 = scmp.lt.s32.totalorder %s34, 0
  %s36 = scalar_select %p35, %s34, 0
  %s37 = smul.addr %s36, 8
  %s38 = scalar_lea.vmem %s1, %s37
  %s39 = ssub.s32 0, 0
  %p40 = scmp.lt.s32.totalorder %s39, 0
  %s41 = scalar_select %p40, %s39, 0
  %s42 = smul.addr %s41, 8
  %s43 = scalar_lea.vmem %s4, %s42
  %s44 = ssub.s32 0, 0
  %p45 = scmp.lt.s32.totalorder %s44, 0
  %s46 = scalar_select %p45, %s44, 0
  %s47 = smul.addr %s46, 2
  %s48 = scalar_lea.vmem %s6, %s47
  %s49 = ssub.s32 0, 0
  %p50 = scmp.lt.s32.totalorder %s49, 0
  %s51 = scalar_select %p50, %s49, 0
  %s52 = smul.addr %s51, 8
  %s53 = scalar_lea.vmem %s1, %s52
  %s54 = ssub.s32 0, 0
  %s55 = ssub.s32 0, 0
  %p56 = scmp.lt.s32.totalorder %s55, 0
  %s57 = scalar_select %p56, %s55, 0
  %s58 = smul.addr %s57, 8
  %s59 = scalar_lea.vmem %s4, %s58
  %s60 = ssub.s32 0, 0
  %s61 = ssub.s32 0, 0
  %p62 = scmp.lt.s32.totalorder %s61, 0
  %s63 = scalar_select %p62, %s61, 0
  %s64 = smul.addr %s63, 2
  %s65 = scalar_lea.vmem %s6, %s64
  %s66 = ssub.s32 0, 0
  %p67 = scmp.eq.s32.totalorder 0, 0
  // Predicated region
  $region22: #{bidaf_forward.16} parent=0 // pred_check
    %p68 = pneg %p67
  $region23: #{bidaf_forward.16} parent=0 // pred_check_branch
    %70 = sbr.rel (%p68) target = $region25
  $region24: #{bidaf_forward.16} parent=0 // pred_region
    %vm71 = vcmask 254976
    %72 = vst.msk [vmem:[#allocation2] sm:$0x3] %vm71, 0.0
    %73 = vst.msk [vmem:[#allocation3] sm:$0x3] %vm71, 0.0
  $region25: #{bidaf_forward.16} parent=0 // pred_fallthru
    _
  %v74 = vld [vmem:[%s2] sm:$0xff]
  %v75 = vld [vmem:[%s2 + $0x8] sm:$0xff]
  %v76 = vld [vmem:[%s2 + $0x10] sm:$0xff]
  %v77 = vld [vmem:[%s2 + $0x18] sm:$0xff]
  %v78 = vld [vmem:[%s0] sm:$0xff]
  %v79 = vld [vmem:[%s0 + $0x8] sm:$0xff]
  %v80 = vld [vmem:[%s53] sm:$0xff]
  %v81 = vld [vmem:[%s53 + $0x8] sm:$0xff]
  %v82 = vld [vmem:[%s3] sm:$0xff]
  %v83 = vld [vmem:[%s3 + $0x8] sm:$0xff]
  %v84 = vld [vmem:[%s59] sm:$0xff]
  %v85 = vld [vmem:[%s59 + $0x8] sm:$0xff]
  %v86 = vld [vmem:[#allocation2] sm:$0x3]
  %v87 = vld [vmem:[#allocation3] sm:$0x3]
  %vm88 = vcmask 261120
  %v90 = vsel %vm88, %v86, 0
  %92 = vmatpush.msra.mxu0 0.0
  %93 = vmatpush.msra.mxu0 0.0
  %94 = vmatpush.msra.mxu0 0.0
  %95 = vmatpush.msra.mxu0 0.0
  %96 = vmatpush.msra.mxu0 0.0
  %97 = vmatpush.msra.mxu0 0.0
  %98 = vmatpush.msra.mxu0 0.0
  %99 = vmatpush.msra.mxu0 0.0
  %100 = vmatpush.msra.mxu0 0.0
  %101 = vmatpush.msra.mxu0 0.0
  %102 = vmatpush.msra.mxu0 0.0
  %103 = vmatpush.msra.mxu0 0.0
  %104 = vmatpush.msra.mxu0 %v77
  %105 = vmatpush.msra.mxu0 %v76
  %106 = vmatpush.msra.mxu0 %v75
  %107 = vmatpush.msra.mxu0 %v74
  %108 = vmatmul.f32.gmra.mxu0 %v90
  %v109 = vpop.f32.mrf.mxu0
  %v110 = vadd.f32 0.0, %v109
  %111 = vdwg.mxu0
  %v114 = vrot.slane %v79, 7
  %vm115 = vcmask 1041409
  %v116 = vsel %vm115, %v114, %v78
  %v118 = vadd.f32 %v110, %v116
  %v121 = vrot.slane %v80, 7
  %v122 = vrot.slane %v81, 6
  %v123 = vsel %vm115, %v122, %v121
  %124 = vrot.lane.b32.xlu0 %v123, 64
  %v125 = vpop.permute.xlu0 %124
  %v127 = vadd.f32 %v110, %v125
  %v128 = vxor.u32 %v118, 2147483648
  %v129 = vmul.f32 %v128, 1.442695
  %v130 = vpow.pop %v129
  %v131 = vadd.f32 %v130, 1.0
  %v132 = vrcp.pop %v131
  %v133 = vmul.f32 %v131, %v132
  %v134 = vsub.f32 1.0, %v133
  %v135 = vmul.f32 %v132, %v134
  %v136 = vadd.f32 %v132, %v135
  %vm137 = vweird.f32 %v131
  %vm138 = vweird.f32 %v132
  %vm139 = vmor %vm137, %vm138
  %v140 = vsel %vm139, %v132, %v136
  %v141 = vand.u32 2147483647, %v131
  %vm142 = vcmp.eq.f32.partialorder %v141, 8.507059e+37
  %v143 = vand.u32 %v131, 2147483648
  %v144 = vor.u32 1.1754944e-38, %v143
  %v145 = vsel %vm142, %v144, %v140
  %v146 = vmul.f32 1.0, %v145
  %v147 = vtanh.pop %v118
  %v148 = vxor.u32 %v127, 2147483648
  %v149 = vmul.f32 %v148, 1.442695
  %v150 = vpow.pop %v149
  %v151 = vadd.f32 %v150, 1.0
  %v152 = vrcp.pop %v151
  %v153 = vmul.f32 %v151, %v152
  %v154 = vsub.f32 1.0, %v153
  %v155 = vmul.f32 %v152, %v154
  %v156 = vadd.f32 %v152, %v155
  %vm157 = vweird.f32 %v151
  %vm158 = vweird.f32 %v152
  %vm159 = vmor %vm157, %vm158
  %v160 = vsel %vm159, %v152, %v156
  %v161 = vand.u32 2147483647, %v151
  %vm162 = vcmp.eq.f32.partialorder %v161, 8.507059e+37
  %v163 = vand.u32 %v151, 2147483648
  %v164 = vor.u32 1.1754944e-38, %v163
  %v165 = vsel %vm162, %v164, %v160
  %v166 = vmul.f32 1.0, %v165
  %v167 = vtanh.pop %v127
  %169 = vrot.lane.b32.xlu0 %v87, 16
  %v170 = vpop.permute.xlu0 %169
  %v172 = vmul.f32 %v146, %v170
  %174 = vrot.lane.b32.xlu0 %v147, 80
  %v175 = vpop.permute.xlu0 %174
  %v177 = vmul.f32 %v146, %v175
  %179 = vrot.lane.b32.xlu0 %v177, 16
  %v180 = vpop.permute.xlu0 %179
  %v182 = vadd.f32 %v172, %v180
  %183 = vrot.lane.b32.xlu0 %v87, 64
  %v184 = vpop.permute.xlu0 %183
  %v186 = vmul.f32 %v166, %v184
  %188 = vrot.lane.b32.xlu0 %v167, 80
  %v189 = vpop.permute.xlu0 %188
  %v191 = vmul.f32 %v166, %v189
  %193 = vrot.lane.b32.xlu0 %v191, 16
  %v194 = vpop.permute.xlu0 %193
  %v196 = vadd.f32 %v186, %v194
  %198 = vset.pattern.permute.xlu0 0
  %199 = vperm.xlu0 %198, %v84
  %v200 = vpop.permute.xlu0 %199
  %202 = vset.pattern.permute.xlu0 0
  %203 = vperm.xlu0 %202, %v85
  %v204 = vpop.permute.xlu0 %203
  %v205 = vrot.slane %v200, 7
  %v206 = vrot.slane %v204, 6
  %v207 = vsel %vm115, %v206, %v205
  %v209 = vmul.f32 %v196, %v207
  %v210 = vtanh.pop %v182
  %212 = vrot.lane.b32.xlu0 %v210, 16
  %v213 = vpop.permute.xlu0 %212
  %v215 = vmul.f32 %v146, %v213
  %v216 = vtanh.pop %v209
  %218 = vrot.lane.b32.xlu0 %v216, 16
  %v219 = vpop.permute.xlu0 %218
  %v221 = vmul.f32 %v166, %v219
  %v222 = vmul.f32 %v221, %v207
  %224 = vset.pattern.permute.xlu0 0
  %225 = vperm.xlu0 %224, %v82
  %v226 = vpop.permute.xlu0 %225
  %228 = vset.pattern.permute.xlu0 0
  %229 = vperm.xlu0 %228, %v83
  %v230 = vpop.permute.xlu0 %229
  %v231 = vrot.slane %v230, 7
  %v232 = vsel %vm115, %v231, %v226
  %v234 = vmul.f32 %v215, %v232
  %236 = vrot.lane.b32.xlu0 %v215, 96
  %v237 = vpop.permute.xlu0 %236
  %240 = vrot.lane.b32.xlu0 %v222, 48
  %v241 = vpop.permute.xlu0 %240
  %vm243 = vcmask 130048
  %v244 = vsel %vm243, %v237, %v241
  %246 = vrot.lane.b32.xlu0 %v182, 112
  %v247 = vpop.permute.xlu0 %246
  %250 = vrot.lane.b32.xlu0 %v209, 64
  %v251 = vpop.permute.xlu0 %250
  %v253 = vsel %vm243, %v247, %v251
  %v255 = vsel %vm88, %v244, 0
  %257 = vmatpush.msra.mxu0 0.0
  %258 = vmatpush.msra.mxu0 0.0
  %259 = vmatpush.msra.mxu0 0.0
  %260 = vmatpush.msra.mxu0 0.0
  %261 = vmatpush.msra.mxu0 0.0
  %262 = vmatpush.msra.mxu0 0.0
  %263 = vmatpush.msra.mxu0 0.0
  %264 = vmatpush.msra.mxu0 0.0
  %265 = vmatpush.msra.mxu0 0.0
  %266 = vmatpush.msra.mxu0 0.0
  %267 = vmatpush.msra.mxu0 0.0
  %268 = vmatpush.msra.mxu0 0.0
  %269 = vmatpush.msra.mxu0 %v77
  %270 = vmatpush.msra.mxu0 %v76
  %271 = vmatpush.msra.mxu0 %v75
  %272 = vmatpush.msra.mxu0 %v74
  %273 = vmatmul.f32.gmra.mxu0 %v255
  %v274 = vpop.f32.mrf.mxu0
  %v275 = vadd.f32 0.0, %v274
  %276 = vdwg.mxu0
  %v277 = vrot.slane %v78, 1
  %v278 = vsel %vm115, %v79, %v277
  %v280 = vadd.f32 %v275, %v278
  %v281 = vrot.slane %v80, 6
  %v282 = vrot.slane %v81, 5
  %v283 = vsel %vm115, %v282, %v281
  %284 = vrot.lane.b32.xlu0 %v283, 64
  %v285 = vpop.permute.xlu0 %284
  %v287 = vadd.f32 %v275, %v285
  %v288 = vxor.u32 %v280, 2147483648
  %v289 = vmul.f32 %v288, 1.442695
  %v290 = vpow.pop %v289
  %v291 = vadd.f32 %v290, 1.0
  %v292 = vrcp.pop %v291
  %v293 = vmul.f32 %v291, %v292
  %v294 = vsub.f32 1.0, %v293
  %v295 = vmul.f32 %v292, %v294
  %v296 = vadd.f32 %v292, %v295
  %vm297 = vweird.f32 %v291
  %vm298 = vweird.f32 %v292
  %vm299 = vmor %vm297, %vm298
  %v300 = vsel %vm299, %v292, %v296
  %v301 = vand.u32 2147483647, %v291
  %vm302 = vcmp.eq.f32.partialorder %v301, 8.507059e+37
  %v303 = vand.u32 %v291, 2147483648
  %v304 = vor.u32 1.1754944e-38, %v303
  %v305 = vsel %vm302, %v304, %v300
  %v306 = vmul.f32 1.0, %v305
  %v307 = vtanh.pop %v280
  %v308 = vxor.u32 %v287, 2147483648
  %v309 = vmul.f32 %v308, 1.442695
  %v310 = vpow.pop %v309
  %v311 = vadd.f32 %v310, 1.0
  %v312 = vrcp.pop %v311
  %v313 = vmul.f32 %v311, %v312
  %v314 = vsub.f32 1.0, %v313
  %v315 = vmul.f32 %v312, %v314
  %v316 = vadd.f32 %v312, %v315
  %vm317 = vweird.f32 %v311
  %vm318 = vweird.f32 %v312
  %vm319 = vmor %vm317, %vm318
  %v320 = vsel %vm319, %v312, %v316
  %v321 = vand.u32 2147483647, %v311
  %vm322 = vcmp.eq.f32.partialorder %v321, 8.507059e+37
  %v323 = vand.u32 %v311, 2147483648
  %v324 = vor.u32 1.1754944e-38, %v323
  %v325 = vsel %vm322, %v324, %v320
  %v326 = vmul.f32 1.0, %v325
  %v327 = vtanh.pop %v287
  %329 = vrot.lane.b32.xlu0 %v253, 16
  %v330 = vpop.permute.xlu0 %329
  %v332 = vmul.f32 %v306, %v330
  %334 = vrot.lane.b32.xlu0 %v307, 80
  %v335 = vpop.permute.xlu0 %334
  %v337 = vmul.f32 %v306, %v335
  %339 = vrot.lane.b32.xlu0 %v337, 16
  %v340 = vpop.permute.xlu0 %339
  %v342 = vadd.f32 %v332, %v340
  %343 = vrot.lane.b32.xlu0 %v253, 64
  %v344 = vpop.permute.xlu0 %343
  %v346 = vmul.f32 %v326, %v344
  %348 = vrot.lane.b32.xlu0 %v327, 80
  %v349 = vpop.permute.xlu0 %348
  %v351 = vmul.f32 %v326, %v349
  %353 = vrot.lane.b32.xlu0 %v351, 16
  %v354 = vpop.permute.xlu0 %353
  %v356 = vadd.f32 %v346, %v354
  %v357 = vrot.slane %v200, 6
  %v358 = vrot.slane %v204, 5
  %v359 = vsel %vm115, %v358, %v357
  %v361 = vmul.f32 %v356, %v359
  %v362 = vtanh.pop %v342
  %364 = vrot.lane.b32.xlu0 %v362, 16
  %v365 = vpop.permute.xlu0 %364
  %v367 = vmul.f32 %v306, %v365
  %v368 = vtanh.pop %v361
  %370 = vrot.lane.b32.xlu0 %v368, 16
  %v371 = vpop.permute.xlu0 %370
  %v373 = vmul.f32 %v326, %v371
  %v374 = vmul.f32 %v373, %v359
  %v375 = vrot.slane %v226, 1
  %v376 = vsel %vm115, %v230, %v375
  %v378 = vmul.f32 %v367, %v376
  %380 = vrot.lane.b32.xlu0 %v367, 96
  %v381 = vpop.permute.xlu0 %380
  %384 = vrot.lane.b32.xlu0 %v374, 48
  %v385 = vpop.permute.xlu0 %384
  %v387 = vsel %vm243, %v381, %v385
  %389 = vrot.lane.b32.xlu0 %v342, 112
  %v390 = vpop.permute.xlu0 %389
  %393 = vrot.lane.b32.xlu0 %v361, 64
  %v394 = vpop.permute.xlu0 %393
  %v396 = vsel %vm243, %v390, %v394
  %v398 = vsel %vm88, %v387, 0
  %400 = vmatpush.msra.mxu0 0.0
  %401 = vmatpush.msra.mxu0 0.0
  %402 = vmatpush.msra.mxu0 0.0
  %403 = vmatpush.msra.mxu0 0.0
  %404 = vmatpush.msra.mxu0 0.0
  %405 = vmatpush.msra.mxu0 0.0
  %406 = vmatpush.msra.mxu0 0.0
  %407 = vmatpush.msra.mxu0 0.0
  %408 = vmatpush.msra.mxu0 0.0
  %409 = vmatpush.msra.mxu0 0.0
  %410 = vmatpush.msra.mxu0 0.0
  %411 = vmatpush.msra.mxu0 0.0
  %412 = vmatpush.msra.mxu0 %v77
  %413 = vmatpush.msra.mxu0 %v76
  %414 = vmatpush.msra.mxu0 %v75
  %415 = vmatpush.msra.mxu0 %v74
  %416 = vmatmul.f32.gmra.mxu0 %v398
  %v417 = vpop.f32.mrf.mxu0
  %v418 = vadd.f32 0.0, %v417
  %419 = vdwg.mxu0
  %v420 = vrot.slane %v78, 2
  %v421 = vrot.slane %v79, 1
  %v422 = vsel %vm115, %v421, %v420
  %v424 = vadd.f32 %v418, %v422
  %v425 = vrot.slane %v80, 5
  %v426 = vrot.slane %v81, 4
  %v427 = vsel %vm115, %v426, %v425
  %428 = vrot.lane.b32.xlu0 %v427, 64
  %v429 = vpop.permute.xlu0 %428
  %v431 = vadd.f32 %v418, %v429
  %v432 = vxor.u32 %v424, 2147483648
  %v433 = vmul.f32 %v432, 1.442695
  %v434 = vpow.pop %v433
  %v435 = vadd.f32 %v434, 1.0
  %v436 = vrcp.pop %v435
  %v437 = vmul.f32 %v435, %v436
  %v438 = vsub.f32 1.0, %v437
  %v439 = vmul.f32 %v436, %v438
  %v440 = vadd.f32 %v436, %v439
  %vm441 = vweird.f32 %v435
  %vm442 = vweird.f32 %v436
  %vm443 = vmor %vm441, %vm442
  %v444 = vsel %vm443, %v436, %v440
  %v445 = vand.u32 2147483647, %v435
  %vm446 = vcmp.eq.f32.partialorder %v445, 8.507059e+37
  %v447 = vand.u32 %v435, 2147483648
  %v448 = vor.u32 1.1754944e-38, %v447
  %v449 = vsel %vm446, %v448, %v444
  %v450 = vmul.f32 1.0, %v449
  %v451 = vtanh.pop %v424
  %v452 = vxor.u32 %v431, 2147483648
  %v453 = vmul.f32 %v452, 1.442695
  %v454 = vpow.pop %v453
  %v455 = vadd.f32 %v454, 1.0
  %v456 = vrcp.pop %v455
  %v457 = vmul.f32 %v455, %v456
  %v458 = vsub.f32 1.0, %v457
  %v459 = vmul.f32 %v456, %v458
  %v460 = vadd.f32 %v456, %v459
  %vm461 = vweird.f32 %v455
  %vm462 = vweird.f32 %v456
  %vm463 = vmor %vm461, %vm462
  %v464 = vsel %vm463, %v456, %v460
  %v465 = vand.u32 2147483647, %v455
  %vm466 = vcmp.eq.f32.partialorder %v465, 8.507059e+37
  %v467 = vand.u32 %v455, 2147483648
  %v468 = vor.u32 1.1754944e-38, %v467
  %v469 = vsel %vm466, %v468, %v464
  %v470 = vmul.f32 1.0, %v469
  %v471 = vtanh.pop %v431
  %473 = vrot.lane.b32.xlu0 %v396, 16
  %v474 = vpop.permute.xlu0 %473
  %v476 = vmul.f32 %v450, %v474
  %478 = vrot.lane.b32.xlu0 %v451, 80
  %v479 = vpop.permute.xlu0 %478
  %v481 = vmul.f32 %v450, %v479
  %483 = vrot.lane.b32.xlu0 %v481, 16
  %v484 = vpop.permute.xlu0 %483
  %v486 = vadd.f32 %v476, %v484
  %487 = vrot.lane.b32.xlu0 %v396, 64
  %v488 = vpop.permute.xlu0 %487
  %v490 = vmul.f32 %v470, %v488
  %492 = vrot.lane.b32.xlu0 %v471, 80
  %v493 = vpop.permute.xlu0 %492
  %v495 = vmul.f32 %v470, %v493
  %497 = vrot.lane.b32.xlu0 %v495, 16
  %v498 = vpop.permute.xlu0 %497
  %v500 = vadd.f32 %v490, %v498
  %v501 = vrot.slane %v200, 5
  %v502 = vrot.slane %v204, 4
  %v503 = vsel %vm115, %v502, %v501
  %v505 = vmul.f32 %v500, %v503
  %v506 = vtanh.pop %v486
  %508 = vrot.lane.b32.xlu0 %v506, 16
  %v509 = vpop.permute.xlu0 %508
  %v511 = vmul.f32 %v450, %v509
  %v512 = vtanh.pop %v505
  %514 = vrot.lane.b32.xlu0 %v512, 16
  %v515 = vpop.permute.xlu0 %514
  %v517 = vmul.f32 %v470, %v515
  %v518 = vmul.f32 %v517, %v503
  %v519 = vrot.slane %v226, 2
  %v520 = vrot.slane %v230, 1
  %v521 = vsel %vm115, %v520, %v519
  %v523 = vmul.f32 %v511, %v521
  %525 = vrot.lane.b32.xlu0 %v511, 96
  %v526 = vpop.permute.xlu0 %525
  %529 = vrot.lane.b32.xlu0 %v518, 48
  %v530 = vpop.permute.xlu0 %529
  %v532 = vsel %vm243, %v526, %v530
  %534 = vrot.lane.b32.xlu0 %v486, 112
  %v535 = vpop.permute.xlu0 %534
  %538 = vrot.lane.b32.xlu0 %v505, 64
  %v539 = vpop.permute.xlu0 %538
  %v541 = vsel %vm243, %v535, %v539
  %v543 = vsel %vm88, %v532, 0
  %545 = vmatpush.msra.mxu0 0.0
  %546 = vmatpush.msra.mxu0 0.0
  %547 = vmatpush.msra.mxu0 0.0
  %548 = vmatpush.msra.mxu0 0.0
  %549 = vmatpush.msra.mxu0 0.0
  %550 = vmatpush.msra.mxu0 0.0
  %551 = vmatpush.msra.mxu0 0.0
  %552 = vmatpush.msra.mxu0 0.0
  %553 = vmatpush.msra.mxu0 0.0
  %554 = vmatpush.msra.mxu0 0.0
  %555 = vmatpush.msra.mxu0 0.0
  %556 = vmatpush.msra.mxu0 0.0
  %557 = vmatpush.msra.mxu0 %v77
  %558 = vmatpush.msra.mxu0 %v76
  %559 = vmatpush.msra.mxu0 %v75
  %560 = vmatpush.msra.mxu0 %v74
  %561 = vmatmul.f32.gmra.mxu0 %v543
  %v562 = vpop.f32.mrf.mxu0
  %v563 = vadd.f32 0.0, %v562
  %564 = vdwg.mxu0
  %v565 = vrot.slane %v78, 3
  %v566 = vrot.slane %v79, 2
  %v567 = vsel %vm115, %v566, %v565
  %v569 = vadd.f32 %v563, %v567
  %v570 = vrot.slane %v80, 4
  %v571 = vrot.slane %v81, 3
  %v572 = vsel %vm115, %v571, %v570
  %573 = vrot.lane.b32.xlu0 %v572, 64
  %v574 = vpop.permute.xlu0 %573
  %v576 = vadd.f32 %v563, %v574
  %v577 = vxor.u32 %v569, 2147483648
  %v578 = vmul.f32 %v577, 1.442695
  %v579 = vpow.pop %v578
  %v580 = vadd.f32 %v579, 1.0
  %v581 = vrcp.pop %v580
  %v582 = vmul.f32 %v580, %v581
  %v583 = vsub.f32 1.0, %v582
  %v584 = vmul.f32 %v581, %v583
  %v585 = vadd.f32 %v581, %v584
  %vm586 = vweird.f32 %v580
  %vm587 = vweird.f32 %v581
  %vm588 = vmor %vm586, %vm587
  %v589 = vsel %vm588, %v581, %v585
  %v590 = vand.u32 2147483647, %v580
  %vm591 = vcmp.eq.f32.partialorder %v590, 8.507059e+37
  %v592 = vand.u32 %v580, 2147483648
  %v593 = vor.u32 1.1754944e-38, %v592
  %v594 = vsel %vm591, %v593, %v589
  %v595 = vmul.f32 1.0, %v594
  %v596 = vtanh.pop %v569
  %v597 = vxor.u32 %v576, 2147483648
  %v598 = vmul.f32 %v597, 1.442695
  %v599 = vpow.pop %v598
  %v600 = vadd.f32 %v599, 1.0
  %v601 = vrcp.pop %v600
  %v602 = vmul.f32 %v600, %v601
  %v603 = vsub.f32 1.0, %v602
  %v604 = vmul.f32 %v601, %v603
  %v605 = vadd.f32 %v601, %v604
  %vm606 = vweird.f32 %v600
  %vm607 = vweird.f32 %v601
  %vm608 = vmor %vm606, %vm607
  %v609 = vsel %vm608, %v601, %v605
  %v610 = vand.u32 2147483647, %v600
  %vm611 = vcmp.eq.f32.partialorder %v610, 8.507059e+37
  %v612 = vand.u32 %v600, 2147483648
  %v613 = vor.u32 1.1754944e-38, %v612
  %v614 = vsel %vm611, %v613, %v609
  %v615 = vmul.f32 1.0, %v614
  %v616 = vtanh.pop %v576
  %618 = vrot.lane.b32.xlu0 %v541, 16
  %v619 = vpop.permute.xlu0 %618
  %v621 = vmul.f32 %v595, %v619
  %623 = vrot.lane.b32.xlu0 %v596, 80
  %v624 = vpop.permute.xlu0 %623
  %v626 = vmul.f32 %v595, %v624
  %628 = vrot.lane.b32.xlu0 %v626, 16
  %v629 = vpop.permute.xlu0 %628
  %v631 = vadd.f32 %v621, %v629
  %632 = vrot.lane.b32.xlu0 %v541, 64
  %v633 = vpop.permute.xlu0 %632
  %v635 = vmul.f32 %v615, %v633
  %637 = vrot.lane.b32.xlu0 %v616, 80
  %v638 = vpop.permute.xlu0 %637
  %v640 = vmul.f32 %v615, %v638
  %642 = vrot.lane.b32.xlu0 %v640, 16
  %v643 = vpop.permute.xlu0 %642
  %v645 = vadd.f32 %v635, %v643
  %v646 = vrot.slane %v200, 4
  %v647 = vrot.slane %v204, 3
  %v648 = vsel %vm115, %v647, %v646
  %v650 = vmul.f32 %v645, %v648
  %v651 = vtanh.pop %v631
  %653 = vrot.lane.b32.xlu0 %v651, 16
  %v654 = vpop.permute.xlu0 %653
  %v656 = vmul.f32 %v595, %v654
  %v657 = vtanh.pop %v650
  %659 = vrot.lane.b32.xlu0 %v657, 16
  %v660 = vpop.permute.xlu0 %659
  %v662 = vmul.f32 %v615, %v660
  %v663 = vmul.f32 %v662, %v648
  %v664 = vrot.slane %v226, 3
  %v665 = vrot.slane %v230, 2
  %v666 = vsel %vm115, %v665, %v664
  %v668 = vmul.f32 %v656, %v666
  %670 = vrot.lane.b32.xlu0 %v656, 96
  %v671 = vpop.permute.xlu0 %670
  %674 = vrot.lane.b32.xlu0 %v663, 48
  %v675 = vpop.permute.xlu0 %674
  %v677 = vsel %vm243, %v671, %v675
  %679 = vrot.lane.b32.xlu0 %v631, 112
  %v680 = vpop.permute.xlu0 %679
  %683 = vrot.lane.b32.xlu0 %v650, 64
  %v684 = vpop.permute.xlu0 %683
  %v686 = vsel %vm243, %v680, %v684
  %v688 = vsel %vm88, %v677, 0
  %690 = vmatpush.msra.mxu0 0.0
  %691 = vmatpush.msra.mxu0 0.0
  %692 = vmatpush.msra.mxu0 0.0
  %693 = vmatpush.msra.mxu0 0.0
  %694 = vmatpush.msra.mxu0 0.0
  %695 = vmatpush.msra.mxu0 0.0
  %696 = vmatpush.msra.mxu0 0.0
  %697 = vmatpush.msra.mxu0 0.0
  %698 = vmatpush.msra.mxu0 0.0
  %699 = vmatpush.msra.mxu0 0.0
  %700 = vmatpush.msra.mxu0 0.0
  %701 = vmatpush.msra.mxu0 0.0
  %702 = vmatpush.msra.mxu0 %v77
  %703 = vmatpush.msra.mxu0 %v76
  %704 = vmatpush.msra.mxu0 %v75
  %705 = vmatpush.msra.mxu0 %v74
  %706 = vmatmul.f32.gmra.mxu0 %v688
  %v707 = vpop.f32.mrf.mxu0
  %v708 = vadd.f32 0.0, %v707
  %709 = vdwg.mxu0
  %v710 = vrot.slane %v78, 4
  %v711 = vrot.slane %v79, 3
  %v712 = vsel %vm115, %v711, %v710
  %v714 = vadd.f32 %v708, %v712
  %v715 = vrot.slane %v80, 3
  %v716 = vrot.slane %v81, 2
  %v717 = vsel %vm115, %v716, %v715
  %718 = vrot.lane.b32.xlu0 %v717, 64
  %v719 = vpop.permute.xlu0 %718
  %v721 = vadd.f32 %v708, %v719
  %v722 = vxor.u32 %v714, 2147483648
  %v723 = vmul.f32 %v722, 1.442695
  %v724 = vpow.pop %v723
  %v725 = vadd.f32 %v724, 1.0
  %v726 = vrcp.pop %v725
  %v727 = vmul.f32 %v725, %v726
  %v728 = vsub.f32 1.0, %v727
  %v729 = vmul.f32 %v726, %v728
  %v730 = vadd.f32 %v726, %v729
  %vm731 = vweird.f32 %v725
  %vm732 = vweird.f32 %v726
  %vm733 = vmor %vm731, %vm732
  %v734 = vsel %vm733, %v726, %v730
  %v735 = vand.u32 2147483647, %v725
  %vm736 = vcmp.eq.f32.partialorder %v735, 8.507059e+37
  %v737 = vand.u32 %v725, 2147483648
  %v738 = vor.u32 1.1754944e-38, %v737
  %v739 = vsel %vm736, %v738, %v734
  %v740 = vmul.f32 1.0, %v739
  %v741 = vtanh.pop %v714
  %v742 = vxor.u32 %v721, 2147483648
  %v743 = vmul.f32 %v742, 1.442695
  %v744 = vpow.pop %v743
  %v745 = vadd.f32 %v744, 1.0
  %v746 = vrcp.pop %v745
  %v747 = vmul.f32 %v745, %v746
  %v748 = vsub.f32 1.0, %v747
  %v749 = vmul.f32 %v746, %v748
  %v750 = vadd.f32 %v746, %v749
  %vm751 = vweird.f32 %v745
  %vm752 = vweird.f32 %v746
  %vm753 = vmor %vm751, %vm752
  %v754 = vsel %vm753, %v746, %v750
  %v755 = vand.u32 2147483647, %v745
  %vm756 = vcmp.eq.f32.partialorder %v755, 8.507059e+37
  %v757 = vand.u32 %v745, 2147483648
  %v758 = vor.u32 1.1754944e-38, %v757
  %v759 = vsel %vm756, %v758, %v754
  %v760 = vmul.f32 1.0, %v759
  %v761 = vtanh.pop %v721
  %763 = vrot.lane.b32.xlu0 %v686, 16
  %v764 = vpop.permute.xlu0 %763
  %v766 = vmul.f32 %v740, %v764
  %768 = vrot.lane.b32.xlu0 %v741, 80
  %v769 = vpop.permute.xlu0 %768
  %v771 = vmul.f32 %v740, %v769
  %773 = vrot.lane.b32.xlu0 %v771, 16
  %v774 = vpop.permute.xlu0 %773
  %v776 = vadd.f32 %v766, %v774
  %777 = vrot.lane.b32.xlu0 %v686, 64
  %v778 = vpop.permute.xlu0 %777
  %v780 = vmul.f32 %v760, %v778
  %782 = vrot.lane.b32.xlu0 %v761, 80
  %v783 = vpop.permute.xlu0 %782
  %v785 = vmul.f32 %v760, %v783
  %787 = vrot.lane.b32.xlu0 %v785, 16
  %v788 = vpop.permute.xlu0 %787
  %v790 = vadd.f32 %v780, %v788
  %v791 = vrot.slane %v200, 3
  %v792 = vrot.slane %v204, 2
  %v793 = vsel %vm115, %v792, %v791
  %v795 = vmul.f32 %v790, %v793
  %v796 = vtanh.pop %v776
  %798 = vrot.lane.b32.xlu0 %v796, 16
  %v799 = vpop.permute.xlu0 %798
  %v801 = vmul.f32 %v740, %v799
  %v802 = vtanh.pop %v795
  %804 = vrot.lane.b32.xlu0 %v802, 16
  %v805 = vpop.permute.xlu0 %804
  %v807 = vmul.f32 %v760, %v805
  %v808 = vmul.f32 %v807, %v793
  %v809 = vrot.slane %v226, 4
  %v810 = vrot.slane %v230, 3
  %v811 = vsel %vm115, %v810, %v809
  %v813 = vmul.f32 %v801, %v811
  %815 = vrot.lane.b32.xlu0 %v801, 96
  %v816 = vpop.permute.xlu0 %815
  %819 = vrot.lane.b32.xlu0 %v808, 48
  %v820 = vpop.permute.xlu0 %819
  %v822 = vsel %vm243, %v816, %v820
  %824 = vrot.lane.b32.xlu0 %v776, 112
  %v825 = vpop.permute.xlu0 %824
  %828 = vrot.lane.b32.xlu0 %v795, 64
  %v829 = vpop.permute.xlu0 %828
  %v831 = vsel %vm243, %v825, %v829
  %v833 = vsel %vm88, %v822, 0
  %835 = vmatpush.msra.mxu0 0.0
  %836 = vmatpush.msra.mxu0 0.0
  %837 = vmatpush.msra.mxu0 0.0
  %838 = vmatpush.msra.mxu0 0.0
  %839 = vmatpush.msra.mxu0 0.0
  %840 = vmatpush.msra.mxu0 0.0
  %841 = vmatpush.msra.mxu0 0.0
  %842 = vmatpush.msra.mxu0 0.0
  %843 = vmatpush.msra.mxu0 0.0
  %844 = vmatpush.msra.mxu0 0.0
  %845 = vmatpush.msra.mxu0 0.0
  %846 = vmatpush.msra.mxu0 0.0
  %847 = vmatpush.msra.mxu0 %v77
  %848 = vmatpush.msra.mxu0 %v76
  %849 = vmatpush.msra.mxu0 %v75
  %850 = vmatpush.msra.mxu0 %v74
  %851 = vmatmul.f32.gmra.mxu0 %v833
  %v852 = vpop.f32.mrf.mxu0
  %v853 = vadd.f32 0.0, %v852
  %854 = vdwg.mxu0
  %v855 = vrot.slane %v78, 5
  %v856 = vrot.slane %v79, 4
  %v857 = vsel %vm115, %v856, %v855
  %v859 = vadd.f32 %v853, %v857
  %v860 = vrot.slane %v80, 2
  %v861 = vrot.slane %v81, 1
  %v862 = vsel %vm115, %v861, %v860
  %863 = vrot.lane.b32.xlu0 %v862, 64
  %v864 = vpop.permute.xlu0 %863
  %v866 = vadd.f32 %v853, %v864
  %v867 = vxor.u32 %v859, 2147483648
  %v868 = vmul.f32 %v867, 1.442695
  %v869 = vpow.pop %v868
  %v870 = vadd.f32 %v869, 1.0
  %v871 = vrcp.pop %v870
  %v872 = vmul.f32 %v870, %v871
  %v873 = vsub.f32 1.0, %v872
  %v874 = vmul.f32 %v871, %v873
  %v875 = vadd.f32 %v871, %v874
  %vm876 = vweird.f32 %v870
  %vm877 = vweird.f32 %v871
  %vm878 = vmor %vm876, %vm877
  %v879 = vsel %vm878, %v871, %v875
  %v880 = vand.u32 2147483647, %v870
  %vm881 = vcmp.eq.f32.partialorder %v880, 8.507059e+37
  %v882 = vand.u32 %v870, 2147483648
  %v883 = vor.u32 1.1754944e-38, %v882
  %v884 = vsel %vm881, %v883, %v879
  %v885 = vmul.f32 1.0, %v884
  %v886 = vtanh.pop %v859
  %v887 = vxor.u32 %v866, 2147483648
  %v888 = vmul.f32 %v887, 1.442695
  %v889 = vpow.pop %v888
  %v890 = vadd.f32 %v889, 1.0
  %v891 = vrcp.pop %v890
  %v892 = vmul.f32 %v890, %v891
  %v893 = vsub.f32 1.0, %v892
  %v894 = vmul.f32 %v891, %v893
  %v895 = vadd.f32 %v891, %v894
  %vm896 = vweird.f32 %v890
  %vm897 = vweird.f32 %v891
  %vm898 = vmor %vm896, %vm897
  %v899 = vsel %vm898, %v891, %v895
  %v900 = vand.u32 2147483647, %v890
  %vm901 = vcmp.eq.f32.partialorder %v900, 8.507059e+37
  %v902 = vand.u32 %v890, 2147483648
  %v903 = vor.u32 1.1754944e-38, %v902
  %v904 = vsel %vm901, %v903, %v899
  %v905 = vmul.f32 1.0, %v904
  %v906 = vtanh.pop %v866
  %908 = vrot.lane.b32.xlu0 %v831, 16
  %v909 = vpop.permute.xlu0 %908
  %v911 = vmul.f32 %v885, %v909
  %913 = vrot.lane.b32.xlu0 %v886, 80
  %v914 = vpop.permute.xlu0 %913
  %v916 = vmul.f32 %v885, %v914
  %918 = vrot.lane.b32.xlu0 %v916, 16
  %v919 = vpop.permute.xlu0 %918
  %v921 = vadd.f32 %v911, %v919
  %922 = vrot.lane.b32.xlu0 %v831, 64
  %v923 = vpop.permute.xlu0 %922
  %v925 = vmul.f32 %v905, %v923
  %927 = vrot.lane.b32.xlu0 %v906, 80
  %v928 = vpop.permute.xlu0 %927
  %v930 = vmul.f32 %v905, %v928
  %932 = vrot.lane.b32.xlu0 %v930, 16
  %v933 = vpop.permute.xlu0 %932
  %v935 = vadd.f32 %v925, %v933
  %v936 = vrot.slane %v200, 2
  %v937 = vrot.slane %v204, 1
  %v938 = vsel %vm115, %v937, %v936
  %v940 = vmul.f32 %v935, %v938
  %v941 = vtanh.pop %v921
  %943 = vrot.lane.b32.xlu0 %v941, 16
  %v944 = vpop.permute.xlu0 %943
  %v946 = vmul.f32 %v885, %v944
  %v947 = vtanh.pop %v940
  %949 = vrot.lane.b32.xlu0 %v947, 16
  %v950 = vpop.permute.xlu0 %949
  %v952 = vmul.f32 %v905, %v950
  %v953 = vmul.f32 %v952, %v938
  %v954 = vrot.slane %v226, 5
  %v955 = vrot.slane %v230, 4
  %v956 = vsel %vm115, %v955, %v954
  %v958 = vmul.f32 %v946, %v956
  %960 = vrot.lane.b32.xlu0 %v946, 96
  %v961 = vpop.permute.xlu0 %960
  %964 = vrot.lane.b32.xlu0 %v953, 48
  %v965 = vpop.permute.xlu0 %964
  %v967 = vsel %vm243, %v961, %v965
  %969 = vrot.lane.b32.xlu0 %v921, 112
  %v970 = vpop.permute.xlu0 %969
  %973 = vrot.lane.b32.xlu0 %v940, 64
  %v974 = vpop.permute.xlu0 %973
  %v976 = vsel %vm243, %v970, %v974
  %v978 = vsel %vm88, %v967, 0
  %980 = vmatpush.msra.mxu0 0.0
  %981 = vmatpush.msra.mxu0 0.0
  %982 = vmatpush.msra.mxu0 0.0
  %983 = vmatpush.msra.mxu0 0.0
  %984 = vmatpush.msra.mxu0 0.0
  %985 = vmatpush.msra.mxu0 0.0
  %986 = vmatpush.msra.mxu0 0.0
  %987 = vmatpush.msra.mxu0 0.0
  %988 = vmatpush.msra.mxu0 0.0
  %989 = vmatpush.msra.mxu0 0.0
  %990 = vmatpush.msra.mxu0 0.0
  %991 = vmatpush.msra.mxu0 0.0
  %992 = vmatpush.msra.mxu0 %v77
  %993 = vmatpush.msra.mxu0 %v76
  %994 = vmatpush.msra.mxu0 %v75
  %995 = vmatpush.msra.mxu0 %v74
  %996 = vmatmul.f32.gmra.mxu0 %v978
  %v997 = vpop.f32.mrf.mxu0
  %v998 = vadd.f32 0.0, %v997
  %999 = vdwg.mxu0
  %v1000 = vrot.slane %v78, 6
  %v1001 = vrot.slane %v79, 5
  %v1002 = vsel %vm115, %v1001, %v1000
  %v1004 = vadd.f32 %v998, %v1002
  %v1005 = vrot.slane %v80, 1
  %v1006 = vsel %vm115, %v81, %v1005
  %1007 = vrot.lane.b32.xlu0 %v1006, 64
  %v1008 = vpop.permute.xlu0 %1007
  %v1010 = vadd.f32 %v998, %v1008
  %v1011 = vxor.u32 %v1004, 2147483648
  %v1012 = vmul.f32 %v1011, 1.442695
  %v1013 = vpow.pop %v1012
  %v1014 = vadd.f32 %v1013, 1.0
  %v1015 = vrcp.pop %v1014
  %v1016 = vmul.f32 %v1014, %v1015
  %v1017 = vsub.f32 1.0, %v1016
  %v1018 = vmul.f32 %v1015, %v1017
  %v1019 = vadd.f32 %v1015, %v1018
  %vm1020 = vweird.f32 %v1014
  %vm1021 = vweird.f32 %v1015
  %vm1022 = vmor %vm1020, %vm1021
  %v1023 = vsel %vm1022, %v1015, %v1019
  %v1024 = vand.u32 2147483647, %v1014
  %vm1025 = vcmp.eq.f32.partialorder %v1024, 8.507059e+37
  %v1026 = vand.u32 %v1014, 2147483648
  %v1027 = vor.u32 1.1754944e-38, %v1026
  %v1028 = vsel %vm1025, %v1027, %v1023
  %v1029 = vmul.f32 1.0, %v1028
  %v1030 = vtanh.pop %v1004
  %v1031 = vxor.u32 %v1010, 2147483648
  %v1032 = vmul.f32 %v1031, 1.442695
  %v1033 = vpow.pop %v1032
  %v1034 = vadd.f32 %v1033, 1.0
  %v1035 = vrcp.pop %v1034
  %v1036 = vmul.f32 %v1034, %v1035
  %v1037 = vsub.f32 1.0, %v1036
  %v1038 = vmul.f32 %v1035, %v1037
  %v1039 = vadd.f32 %v1035, %v1038
  %vm1040 = vweird.f32 %v1034
  %vm1041 = vweird.f32 %v1035
  %vm1042 = vmor %vm1040, %vm1041
  %v1043 = vsel %vm1042, %v1035, %v1039
  %v1044 = vand.u32 2147483647, %v1034
  %vm1045 = vcmp.eq.f32.partialorder %v1044, 8.507059e+37
  %v1046 = vand.u32 %v1034, 2147483648
  %v1047 = vor.u32 1.1754944e-38, %v1046
  %v1048 = vsel %vm1045, %v1047, %v1043
  %v1049 = vmul.f32 1.0, %v1048
  %v1050 = vtanh.pop %v1010
  %1052 = vrot.lane.b32.xlu0 %v976, 16
  %v1053 = vpop.permute.xlu0 %1052
  %v1055 = vmul.f32 %v1029, %v1053
  %1057 = vrot.lane.b32.xlu0 %v1030, 80
  %v1058 = vpop.permute.xlu0 %1057
  %v1060 = vmul.f32 %v1029, %v1058
  %1062 = vrot.lane.b32.xlu0 %v1060, 16
  %v1063 = vpop.permute.xlu0 %1062
  %v1065 = vadd.f32 %v1055, %v1063
  %1066 = vrot.lane.b32.xlu0 %v976, 64
  %v1067 = vpop.permute.xlu0 %1066
  %v1069 = vmul.f32 %v1049, %v1067
  %1071 = vrot.lane.b32.xlu0 %v1050, 80
  %v1072 = vpop.permute.xlu0 %1071
  %v1074 = vmul.f32 %v1049, %v1072
  %1076 = vrot.lane.b32.xlu0 %v1074, 16
  %v1077 = vpop.permute.xlu0 %1076
  %v1079 = vadd.f32 %v1069, %v1077
  %v1080 = vrot.slane %v200, 1
  %v1081 = vsel %vm115, %v204, %v1080
  %v1083 = vmul.f32 %v1079, %v1081
  %v1084 = vtanh.pop %v1065
  %1086 = vrot.lane.b32.xlu0 %v1084, 16
  %v1087 = vpop.permute.xlu0 %1086
  %v1089 = vmul.f32 %v1029, %v1087
  %v1090 = vtanh.pop %v1083
  %1092 = vrot.lane.b32.xlu0 %v1090, 16
  %v1093 = vpop.permute.xlu0 %1092
  %v1095 = vmul.f32 %v1049, %v1093
  %v1096 = vmul.f32 %v1095, %v1081
  %v1097 = vrot.slane %v226, 6
  %v1098 = vrot.slane %v230, 5
  %v1099 = vsel %vm115, %v1098, %v1097
  %v1101 = vmul.f32 %v1089, %v1099
  %1103 = vrot.lane.b32.xlu0 %v1089, 96
  %v1104 = vpop.permute.xlu0 %1103
  %1107 = vrot.lane.b32.xlu0 %v1096, 48
  %v1108 = vpop.permute.xlu0 %1107
  %v1110 = vsel %vm243, %v1104, %v1108
  %1112 = vrot.lane.b32.xlu0 %v1065, 112
  %v1113 = vpop.permute.xlu0 %1112
  %1116 = vrot.lane.b32.xlu0 %v1083, 64
  %v1117 = vpop.permute.xlu0 %1116
  %v1119 = vsel %vm243, %v1113, %v1117
  %v1121 = vsel %vm88, %v1110, 0
  %1123 = vmatpush.msra.mxu0 0.0
  %1124 = vmatpush.msra.mxu0 0.0
  %1125 = vmatpush.msra.mxu0 0.0
  %1126 = vmatpush.msra.mxu0 0.0
  %1127 = vmatpush.msra.mxu0 0.0
  %1128 = vmatpush.msra.mxu0 0.0
  %1129 = vmatpush.msra.mxu0 0.0
  %1130 = vmatpush.msra.mxu0 0.0
  %1131 = vmatpush.msra.mxu0 0.0
  %1132 = vmatpush.msra.mxu0 0.0
  %1133 = vmatpush.msra.mxu0 0.0
  %1134 = vmatpush.msra.mxu0 0.0
  %1135 = vmatpush.msra.mxu0 %v77
  %1136 = vmatpush.msra.mxu0 %v76
  %1137 = vmatpush.msra.mxu0 %v75
  %1138 = vmatpush.msra.mxu0 %v74
  %1139 = vmatmul.f32.gmra.mxu0 %v1121
  %v1140 = vpop.f32.mrf.mxu0
  %v1141 = vadd.f32 0.0, %v1140
  %1142 = vdwg.mxu0
  %v1143 = vrot.slane %v78, 7
  %v1144 = vrot.slane %v79, 6
  %v1145 = vsel %vm115, %v1144, %v1143
  %v1147 = vadd.f32 %v1141, %v1145
  %v1148 = vrot.slane %v81, 7
  %v1149 = vsel %vm115, %v1148, %v80
  %1150 = vrot.lane.b32.xlu0 %v1149, 64
  %v1151 = vpop.permute.xlu0 %1150
  %v1153 = vadd.f32 %v1141, %v1151
  %v1154 = vxor.u32 %v1147, 2147483648
  %v1155 = vmul.f32 %v1154, 1.442695
  %v1156 = vpow.pop %v1155
  %v1157 = vadd.f32 %v1156, 1.0
  %v1158 = vrcp.pop %v1157
  %v1159 = vmul.f32 %v1157, %v1158
  %v1160 = vsub.f32 1.0, %v1159
  %v1161 = vmul.f32 %v1158, %v1160
  %v1162 = vadd.f32 %v1158, %v1161
  %vm1163 = vweird.f32 %v1157
  %vm1164 = vweird.f32 %v1158
  %vm1165 = vmor %vm1163, %vm1164
  %v1166 = vsel %vm1165, %v1158, %v1162
  %v1167 = vand.u32 2147483647, %v1157
  %vm1168 = vcmp.eq.f32.partialorder %v1167, 8.507059e+37
  %v1169 = vand.u32 %v1157, 2147483648
  %v1170 = vor.u32 1.1754944e-38, %v1169
  %v1171 = vsel %vm1168, %v1170, %v1166
  %v1172 = vmul.f32 1.0, %v1171
  %v1173 = vtanh.pop %v1147
  %v1174 = vxor.u32 %v1153, 2147483648
  %v1175 = vmul.f32 %v1174, 1.442695
  %v1176 = vpow.pop %v1175
  %v1177 = vadd.f32 %v1176, 1.0
  %v1178 = vrcp.pop %v1177
  %v1179 = vmul.f32 %v1177, %v1178
  %v1180 = vsub.f32 1.0, %v1179
  %v1181 = vmul.f32 %v1178, %v1180
  %v1182 = vadd.f32 %v1178, %v1181
  %vm1183 = vweird.f32 %v1177
  %vm1184 = vweird.f32 %v1178
  %vm1185 = vmor %vm1183, %vm1184
  %v1186 = vsel %vm1185, %v1178, %v1182
  %v1187 = vand.u32 2147483647, %v1177
  %vm1188 = vcmp.eq.f32.partialorder %v1187, 8.507059e+37
  %v1189 = vand.u32 %v1177, 2147483648
  %v1190 = vor.u32 1.1754944e-38, %v1189
  %v1191 = vsel %vm1188, %v1190, %v1186
  %v1192 = vmul.f32 1.0, %v1191
  %v1193 = vtanh.pop %v1153
  %1195 = vrot.lane.b32.xlu0 %v1119, 16
  %v1196 = vpop.permute.xlu0 %1195
  %v1198 = vmul.f32 %v1172, %v1196
  %1200 = vrot.lane.b32.xlu0 %v1173, 80
  %v1201 = vpop.permute.xlu0 %1200
  %v1203 = vmul.f32 %v1172, %v1201
  %1205 = vrot.lane.b32.xlu0 %v1203, 16
  %v1206 = vpop.permute.xlu0 %1205
  %v1208 = vadd.f32 %v1198, %v1206
  %1209 = vrot.lane.b32.xlu0 %v1119, 64
  %v1210 = vpop.permute.xlu0 %1209
  %v1212 = vmul.f32 %v1192, %v1210
  %1214 = vrot.lane.b32.xlu0 %v1193, 80
  %v1215 = vpop.permute.xlu0 %1214
  %v1217 = vmul.f32 %v1192, %v1215
  %1219 = vrot.lane.b32.xlu0 %v1217, 16
  %v1220 = vpop.permute.xlu0 %1219
  %v1222 = vadd.f32 %v1212, %v1220
  %v1223 = vrot.slane %v204, 7
  %v1224 = vsel %vm115, %v1223, %v200
  %v1226 = vmul.f32 %v1222, %v1224
  %v1227 = vtanh.pop %v1208
  %1229 = vrot.lane.b32.xlu0 %v1227, 16
  %v1230 = vpop.permute.xlu0 %1229
  %v1232 = vmul.f32 %v1172, %v1230
  %v1233 = vtanh.pop %v1226
  %1235 = vrot.lane.b32.xlu0 %v1233, 16
  %v1236 = vpop.permute.xlu0 %1235
  %v1238 = vmul.f32 %v1192, %v1236
  %v1239 = vmul.f32 %v1238, %v1224
  %v1240 = vrot.slane %v226, 7
  %v1241 = vrot.slane %v230, 6
  %v1242 = vsel %vm115, %v1241, %v1240
  %v1244 = vmul.f32 %v1232, %v1242
  %1246 = vrot.lane.b32.xlu0 %v1232, 96
  %v1247 = vpop.permute.xlu0 %1246
  %1250 = vrot.lane.b32.xlu0 %v1239, 48
  %v1251 = vpop.permute.xlu0 %1250
  %v1253 = vsel %vm243, %v1247, %v1251
  %1255 = vrot.lane.b32.xlu0 %v1208, 112
  %v1256 = vpop.permute.xlu0 %1255
  %1259 = vrot.lane.b32.xlu0 %v1226, 64
  %v1260 = vpop.permute.xlu0 %1259
  %v1262 = vsel %vm243, %v1256, %v1260
  %vm1263 = vcmask 254976
  %1264 = vst.msk [vmem:[#allocation2] sm:$0x3] %vm1263, %v1253
  %1265 = vst.msk [vmem:[#allocation3] sm:$0x3] %vm1263, %v1262
  %1267 = vrot.lane.b32.xlu0 %v234, 96
  %v1268 = vpop.permute.xlu0 %1267
  %1271 = vrot.lane.b32.xlu0 %v378, 112
  %v1272 = vpop.permute.xlu0 %1271
  %1275 = vrot.lane.b32.xlu0 %v668, 16
  %v1276 = vpop.permute.xlu0 %1275
  %1279 = vrot.lane.b32.xlu0 %v813, 32
  %v1280 = vpop.permute.xlu0 %1279
  %1283 = vrot.lane.b32.xlu0 %v958, 48
  %v1284 = vpop.permute.xlu0 %1283
  %1287 = vrot.lane.b32.xlu0 %v1101, 64
  %v1288 = vpop.permute.xlu0 %1287
  %1291 = vrot.lane.b32.xlu0 %v1244, 80
  %v1292 = vpop.permute.xlu0 %1291
  %v1294 = vsel %vm243, %v1268, %v1272
  %v1295 = vsel %vm88, %v1294, %v523
  %vm1296 = vcmask 392192
  %v1297 = vsel %vm1296, %v1295, %v1276
  %vm1298 = vcmask 523264
  %v1299 = vsel %vm1298, %v1297, %v1280
  %vm1300 = vcmask 654336
  %v1301 = vsel %vm1300, %v1299, %v1284
  %vm1302 = vcmask 785408
  %v1303 = vsel %vm1302, %v1301, %v1288
  %vm1304 = vcmask 916480
  %v1305 = vsel %vm1304, %v1303, %v1292
  %1306 = vst [vmem:[%s5] sm:$0x3] %v1305
  %1307 = vrot.lane.b32.xlu0 %v1239, 32
  %v1308 = vpop.permute.xlu0 %1307
  %1310 = vrot.lane.b32.xlu0 %v953, 64
  %v1311 = vpop.permute.xlu0 %1310
  %1313 = vrot.lane.b32.xlu0 %v808, 80
  %v1314 = vpop.permute.xlu0 %1313
  %1316 = vrot.lane.b32.xlu0 %v663, 96
  %v1317 = vpop.permute.xlu0 %1316
  %1319 = vrot.lane.b32.xlu0 %v518, 112
  %v1320 = vpop.permute.xlu0 %1319
  %1322 = vrot.lane.b32.xlu0 %v222, 16
  %v1323 = vpop.permute.xlu0 %1322
  %v1325 = vsel %vm243, %v1308, %v1108
  %v1326 = vsel %vm88, %v1325, %v1311
  %v1327 = vsel %vm1296, %v1326, %v1314
  %v1328 = vsel %vm1298, %v1327, %v1317
  %v1329 = vsel %vm1300, %v1328, %v1320
  %v1330 = vsel %vm1302, %v1329, %v374
  %v1331 = vsel %vm1304, %v1330, %v1323
  %1332 = vst [vmem:[%s65] sm:$0x3] %v1331
  %s1333 = ssub.s32 0, 0
  %p1334 = scmp.lt.s32.totalorder %s1333, 0
  %s1335 = scalar_select %p1334, %s1333, 0
  %s1336 = smul.addr %s1335, 2
  %s1337 = scalar_lea.vmem %s6, %s1336
  // Predicated region
  $region26: #{bidaf_forward.16} parent=0 // pred_check
    _
  $region27: #{bidaf_forward.16} parent=0 // pred_check_branch
    %1339 = sbr.rel (0) target = $region29
  $region28: #{bidaf_forward.16} parent=0 // pred_region
    _
  $region29: #{bidaf_forward.16} parent=0 // pred_fallthru
    _
  // Predicated region
  $region30: #{bidaf_forward.16} parent=0 // pred_check
    _
  $region31: #{bidaf_forward.16} parent=0 // pred_check_branch
    %1341 = sbr.rel (0) target = $region33
  $region32: #{bidaf_forward.16} parent=0 // pred_region
    %s1342 = ssub.s32 0, 0
  $region33: #{bidaf_forward.16} parent=0 // pred_fallthru
    _
  // Predicated region
  $region34: #{bidaf_forward.16} parent=0 // pred_check
    _
  $region35: #{bidaf_forward.16} parent=0 // pred_check_branch
    %1344 = sbr.rel (0) target = $region37
  $region36: #{bidaf_forward.16} parent=0 // pred_region
    _
  $region37: #{bidaf_forward.16} parent=0 // pred_fallthru
    _
  // Predicated region
  $region38: #{bidaf_forward.16} parent=0 // pred_check
    _
  $region39: #{bidaf_forward.16} parent=0 // pred_check_branch
    %1346 = sbr.rel (0) target = $region41
  $region40: #{bidaf_forward.16} parent=0 // pred_region
    %s1347 = ssub.s32 0, 0
    %p1348 = scmp.lt.s32.totalorder %s1347, 0
    %s1349 = scalar_select %p1348, %s1347, 0
    %s1350 = smul.addr %s1349, 2
    %s1351 = scalar_lea.vmem %s6, %s1350
  $region41: #{bidaf_forward.16} parent=0 // pred_fallthru
    _

// kernel: bidaf_forward.19
$region0: #{bidaf_forward.19}
  #allocation0 [shape = 'u32[]', space=smem, size = 0x4, offset = 0x4, fixed_abs, tag = 'smem constant byte address 0x4 - core index']
  #allocation1 [shape = 'u32[72,128]{1,0:T(1,128)}', space=vmem, size = 0x9000, scoped, tag = 'internal scratch']
  %s0 = inlined_call_operand.vmem [shape: f32[2,16,32], index: 0, kind: input, shape index: {}]
  %s1 = inlined_call_operand.vmem [shape: f32[2,16,32], index: 1, kind: input, shape index: {}]
  %s2 = inlined_call_operand.vmem [shape: f32[2,32], index: 2, kind: input, shape index: {}]
  %s3 = inlined_call_operand.vmem [shape: f32[2,16,128], index: 3, kind: output, shape index: {}]
  %s4 = sld [smem:[#allocation0]]
  $region22: #{bidaf_forward.19} parent=0
    _
  %s6 = ssub.s32 1, %s4
  %s7 = scalar_select 0, %s6, %s4
  // Predicated region
  $region2: #{bidaf_forward.19} parent=0 // pred_check
    _
  $region3: #{bidaf_forward.19} parent=0 // pred_check_branch
    %9 = sbr.rel (0) target = $region5
  $region4: #{bidaf_forward.19} parent=0 // pred_region
    _
  $region5: #{bidaf_forward.19} parent=0 // pred_fallthru
    _
  // Predicated region
  $region6: #{bidaf_forward.19} parent=0 // pred_check
    _
  $region7: #{bidaf_forward.19} parent=0 // pred_check_branch
    %11 = sbr.rel (0) target = $region9
  $region8: #{bidaf_forward.19} parent=0 // pred_region
    _
  $region9: #{bidaf_forward.19} parent=0 // pred_fallthru
    _
  // Predicated region
  $region10: #{bidaf_forward.19} parent=0 // pred_check
    _
  $region11: #{bidaf_forward.19} parent=0 // pred_check_branch
    %13 = sbr.rel (0) target = $region13
  $region12: #{bidaf_forward.19} parent=0 // pred_region
    _
  $region13: #{bidaf_forward.19} parent=0 // pred_fallthru
    _
  %v14 = vld [vmem:[%s0] sm:$0xff]
  %v15 = vld [vmem:[%s0 + $0x8] sm:$0xff]
  %v16 = vld [vmem:[%s0 + $0x10] sm:$0xff]
  %v17 = vld [vmem:[%s0 + $0x18] sm:$0xff]
  %v18 = vld [vmem:[%s1] sm:$0xff]
  %v19 = vld [vmem:[%s1 + $0x8] sm:$0xff]
  %v20 = vld [vmem:[%s1 + $0x10] sm:$0xff]
  %v21 = vld [vmem:[%s1 + $0x18] sm:$0xff]
  %v22 = vld [vmem:[%s2] sm:$0x3]
  %v24 = vrot.slane %v22, 1
  %v25 = vmul.f32 %v14, %v18
  %v26 = vmul.f32 %v15, %v19
  %v27 = vmul.f32 %v16, %v20
  %v28 = vmul.f32 %v17, %v21
  %v29 = vperm.slane %v22, 0
  %v30 = vperm.slane %v24, 0
  %v33 = vmul.f32 %v14, %v29
  %v34 = vmul.f32 %v15, %v29
  %v35 = vmul.f32 %v16, %v30
  %v36 = vmul.f32 %v17, %v30
  %41 = vrot.lane.b32.xlu0 %v18, 32
  %v42 = vpop.permute.xlu0 %41
  %43 = vrot.lane.b32.xlu0 %v19, 32
  %v44 = vpop.permute.xlu0 %43
  %45 = vrot.lane.b32.xlu0 %v20, 32
  %v46 = vpop.permute.xlu0 %45
  %47 = vrot.lane.b32.xlu0 %v21, 32
  %v48 = vpop.permute.xlu0 %47
  %57 = vrot.lane.b32.xlu0 %v25, 64
  %v58 = vpop.permute.xlu0 %57
  %59 = vrot.lane.b32.xlu0 %v26, 64
  %v60 = vpop.permute.xlu0 %59
  %61 = vrot.lane.b32.xlu0 %v27, 64
  %v62 = vpop.permute.xlu0 %61
  %63 = vrot.lane.b32.xlu0 %v28, 64
  %v64 = vpop.permute.xlu0 %63
  %73 = vrot.lane.b32.xlu0 %v33, 96
  %v74 = vpop.permute.xlu0 %73
  %75 = vrot.lane.b32.xlu0 %v34, 96
  %v76 = vpop.permute.xlu0 %75
  %77 = vrot.lane.b32.xlu0 %v35, 96
  %v78 = vpop.permute.xlu0 %77
  %79 = vrot.lane.b32.xlu0 %v36, 96
  %v80 = vpop.permute.xlu0 %79
  %vm85 = vcmask 261120
  %v86 = vsel %vm85, %v14, %v42
  %v87 = vsel %vm85, %v15, %v44
  %v88 = vsel %vm85, %v16, %v46
  %v89 = vsel %vm85, %v17, %v48
  %vm90 = vcmask 523264
  %v91 = vsel %vm90, %v86, %v58
  %v92 = vsel %vm90, %v87, %v60
  %v93 = vsel %vm90, %v88, %v62
  %v94 = vsel %vm90, %v89, %v64
  %vm95 = vcmask 785408
  %v96 = vsel %vm95, %v91, %v74
  %v97 = vsel %vm95, %v92, %v76
  %v98 = vsel %vm95, %v93, %v78
  %v99 = vsel %vm95, %v94, %v80
  %100 = vst [vmem:[%s3] sm:$0xff] %v96
  %101 = vst [vmem:[%s3 + $0x8] sm:$0xff] %v97
  %102 = vst [vmem:[%s3 + $0x10] sm:$0xff] %v98
  %103 = vst [vmem:[%s3 + $0x18] sm:$0xff] %v99
  // Predicated region
  $region14: #{bidaf_forward.19} parent=0 // pred_check
    _
  $region15: #{bidaf_forward.19} parent=0 // pred_check_branch
    %105 = sbr.rel (0) target = $region17
  $region16: #{bidaf_forward.19} parent=0 // pred_region
    _
  $region17: #{bidaf_forward.19} parent=0 // pred_fallthru
    _
  // Predicated region
  $region18: #{bidaf_forward.19} parent=0 // pred_check
    _
  $region19: #{bidaf_forward.19} parent=0 // pred_check_branch
    %107 = sbr.rel (0) target = $region21
  $region20: #{bidaf_forward.19} parent=0 // pred_region
    _
  $region21: #{bidaf_forward.19} parent=0 // pred_fallthru
    _

// kernel: bidaf_forward.20
$region0: #{bidaf_forward.20}
  #allocation0 [shape = 'u32[]', space=smem, size = 0x4, offset = 0x4, fixed_abs, tag = 'smem constant byte address 0x4 - core index']
  #allocation1 [shape = 'u32[72,128]{1,0:T(1,128)}', space=vmem, size = 0x9000, scoped, tag = 'internal scratch']
  %s0 = inlined_call_operand.vmem [shape: f32[32,128], index: 0, kind: input, shape index: {}]
  %s1 = inlined_call_operand.vmem [shape: f32[128,128], index: 1, kind: input, shape index: {}]
  %s2 = inlined_call_operand.vmem [shape: f32[1,128], index: 2, kind: input, shape index: {}]
  %s3 = inlined_call_operand.vmem [shape: f32[32,64], index: 3, kind: output, shape index: {0}]
  %s4 = inlined_call_operand.vmem [shape: f32[32,64], index: 4, kind: output, shape index: {1}]
  %5 = xla_tuple %s3, %s4
  %s6 = sld [smem:[#allocation0]]
  $region30: #{bidaf_forward.20} parent=0
    _
  %s8 = ssub.s32 1, %s6
  %s9 = scalar_select 0, %s8, %s6
  // Predicated region
  $region2: #{bidaf_forward.20} parent=0 // pred_check
    _
  $region3: #{bidaf_forward.20} parent=0 // pred_check_branch
    %11 = sbr.rel (0) target = $region5
  $region4: #{bidaf_forward.20} parent=0 // pred_region
    _
  $region5: #{bidaf_forward.20} parent=0 // pred_fallthru
    _
  // Predicated region
  $region6: #{bidaf_forward.20} parent=0 // pred_check
    _
  $region7: #{bidaf_forward.20} parent=0 // pred_check_branch
    %13 = sbr.rel (0) target = $region9
  $region8: #{bidaf_forward.20} parent=0 // pred_region
    _
  $region9: #{bidaf_forward.20} parent=0 // pred_fallthru
    _
  // Predicated region
  $region10: #{bidaf_forward.20} parent=0 // pred_check
    _
  $region11: #{bidaf_forward.20} parent=0 // pred_check_branch
    %15 = sbr.rel (0) target = $region13
  $region12: #{bidaf_forward.20} parent=0 // pred_region
    _
  $region13: #{bidaf_forward.20} parent=0 // pred_fallthru
    _
  %v16 = vld [vmem:[%s0] sm:$0xff]
  %v17 = vld [vmem:[%s0 + $0x8] sm:$0xff]
  %v18 = vld [vmem:[%s0 + $0x10] sm:$0xff]
  %v19 = vld [vmem:[%s0 + $0x18] sm:$0xff]
  %v20 = vpack.c.bf16 %v17, %v16
  %v21 = vpack.c.bf16 %v19, %v18
  %v22 = vld [vmem:[%s1] sm:$0xff]
  %v23 = vld [vmem:[%s1 + $0x8] sm:$0xff]
  %v24 = vld [vmem:[%s1 + $0x10] sm:$0xff]
  %v25 = vld [vmem:[%s1 + $0x18] sm:$0xff]
  %v26 = vld [vmem:[%s1 + $0x20] sm:$0xff]
  %v27 = vld [vmem:[%s1 + $0x28] sm:$0xff]
  %v28 = vld [vmem:[%s1 + $0x30] sm:$0xff]
  %v29 = vld [vmem:[%s1 + $0x38] sm:$0xff]
  %v30 = vld [vmem:[%s1 + $0x40] sm:$0xff]
  %v31 = vld [vmem:[%s1 + $0x48] sm:$0xff]
  %v32 = vld [vmem:[%s1 + $0x50] sm:$0xff]
  %v33 = vld [vmem:[%s1 + $0x58] sm:$0xff]
  %v34 = vld [vmem:[%s1 + $0x60] sm:$0xff]
  %v35 = vld [vmem:[%s1 + $0x68] sm:$0xff]
  %v36 = vld [vmem:[%s1 + $0x70] sm:$0xff]
  %v37 = vld [vmem:[%s1 + $0x78] sm:$0xff]
  %v38 = vpack.c.bf16 %v23, %v22
  %v39 = vpack.c.bf16 %v25, %v24
  %v40 = vpack.c.bf16 %v27, %v26
  %v41 = vpack.c.bf16 %v29, %v28
  %v42 = vpack.c.bf16 %v31, %v30
  %v43 = vpack.c.bf16 %v33, %v32
  %v44 = vpack.c.bf16 %v35, %v34
  %v45 = vpack.c.bf16 %v37, %v36
  %v46 = vld [vmem:[%s2] sm:$0x1]
  %v48 = vperm.slane %v46, 0
  %50 = vmatpush.bf16.msra.mxu0 %v45
  %51 = vmatpush.bf16.msra.mxu0 %v44
  %52 = vmatpush.bf16.msra.mxu0 %v43
  %53 = vmatpush.bf16.msra.mxu0 %v42
  %54 = vmatpush.bf16.msra.mxu0 %v41
  %55 = vmatpush.bf16.msra.mxu0 %v40
  %56 = vmatpush.bf16.msra.mxu0 %v39
  %57 = vmatpush.bf16.msra.mxu0 %v38
  %58 = vmatmul.bf16.gmra.mxu0 %v20
  %v59 = vpop.f32.mrf.mxu0
  %v60 = vadd.f32 %v48, %v59
  %v61 = vpop.f32.mrf.mxu0
  %v62 = vadd.f32 %v48, %v61
  %63 = vmatmul.bf16.gmra.mxu0 %v21
  %v64 = vpop.f32.mrf.mxu0
  %v65 = vadd.f32 %v48, %v64
  %v66 = vpop.f32.mrf.mxu0
  %v67 = vadd.f32 %v48, %v66
  %68 = vdwg.mxu0
  %vm69 = vcmask 523264
  %70 = vst.msk [vmem:[%s3] sm:$0xff] %vm69, %v60
  %71 = vst.msk [vmem:[%s3 + $0x8] sm:$0xff] %vm69, %v62
  %72 = vst.msk [vmem:[%s3 + $0x10] sm:$0xff] %vm69, %v65
  %73 = vst.msk [vmem:[%s3 + $0x18] sm:$0xff] %vm69, %v67
  %78 = vrot.lane.b32.xlu0 %v60, 64
  %v79 = vpop.permute.xlu0 %78
  %80 = vrot.lane.b32.xlu0 %v62, 64
  %v81 = vpop.permute.xlu0 %80
  %82 = vrot.lane.b32.xlu0 %v65, 64
  %v83 = vpop.permute.xlu0 %82
  %84 = vrot.lane.b32.xlu0 %v67, 64
  %v85 = vpop.permute.xlu0 %84
  %90 = vst.msk [vmem:[%s4] sm:$0xff] %vm69, %v79
  %91 = vst.msk [vmem:[%s4 + $0x8] sm:$0xff] %vm69, %v81
  %92 = vst.msk [vmem:[%s4 + $0x10] sm:$0xff] %vm69, %v83
  %93 = vst.msk [vmem:[%s4 + $0x18] sm:$0xff] %vm69, %v85
  // Predicated region
  $region14: #{bidaf_forward.20} parent=0 // pred_check
    _
  $region15: #{bidaf_forward.20} parent=0 // pred_check_branch
    %95 = sbr.rel (0) target = $region17
  $region16: #{bidaf_forward.20} parent=0 // pred_region
    _
  $region17: #{bidaf_forward.20} parent=0 // pred_fallthru
    _
  // Predicated region
  $region18: #{bidaf_forward.20} parent=0 // pred_check
    _
  $region19: #{bidaf_forward.20} parent=0 // pred_check_branch
    %97 = sbr.rel (0) target = $region21
  $region20: #{bidaf_forward.20} parent=0 // pred_region
    _
  $region21: #{bidaf_forward.20} parent=0 // pred_fallthru
    _
  // Predicated region
  $region22: #{bidaf_forward.20} parent=0 // pred_check
    _
  $region23: #{bidaf_forward.20} parent=0 // pred_check_branch
    %99 = sbr.rel (0) target = $region25
  $region24: #{bidaf_forward.20} parent=0 // pred_region
    _
  $region25: #{bidaf_forward.20} parent=0 // pred_fallthru
    _
  // Predicated region
  $region26: #{bidaf_forward.20} parent=0 // pred_check
    _
  $region27: #{bidaf_forward.20} parent=0 // pred_check_branch
    %101 = sbr.rel (0) target = $region29
  $region28: #{bidaf_forward.20} parent=0 // pred_region
    _
  $region29: #{bidaf_forward.20} parent=0 // pred_fallthru
    _

// kernel: bidaf_forward.27
$region0: #{bidaf_forward.27}
  #allocation0 [shape = 'u32[]', space=smem, size = 0x4, offset = 0x4, fixed_abs, tag = 'smem constant byte address 0x4 - core index']
  #allocation1 [shape = 'u32[72,128]{1,0:T(1,128)}', space=vmem, size = 0x9000, scoped, tag = 'internal scratch']
  %s0 = inlined_call_operand.vmem [shape: f32[2,16,2], index: 0, kind: input, shape index: {}]
  %s1 = inlined_call_operand.vmem [shape: f32[2,16,1], index: 1, kind: output, shape index: {0}]
  %s2 = inlined_call_operand.vmem [shape: f32[2,16,1], index: 2, kind: output, shape index: {1}]
  %3 = xla_tuple %s1, %s2
  %s4 = sld [smem:[#allocation0]]
  $region22: #{bidaf_forward.27} parent=0
    _
  %s6 = ssub.s32 1, %s4
  %s7 = scalar_select 0, %s6, %s4
  // Predicated region
  $region2: #{bidaf_forward.27} parent=0 // pred_check
    _
  $region3: #{bidaf_forward.27} parent=0 // pred_check_branch
    %9 = sbr.rel (0) target = $region5
  $region4: #{bidaf_forward.27} parent=0 // pred_region
    _
  $region5: #{bidaf_forward.27} parent=0 // pred_fallthru
    _
  %v10 = vld [vmem:[%s0] sm:$0xff]
  %v11 = vld [vmem:[%s0 + $0x8] sm:$0xff]
  %v12 = vld [vmem:[%s0 + $0x10] sm:$0xff]
  %v13 = vld [vmem:[%s0 + $0x18] sm:$0xff]
  %vm14 = vcmask 15360
  %v15 = vsel %vm14, %v10, -inf
  %v16 = vsel %vm14, %v11, -inf
  %v17 = vmax.f32 %v15, %v16
  %v18 = vrot.slane %v17, 4
  %v19 = vmax.f32 %v17, %v18
  %v20 = vrot.slane %v19, 2
  %v21 = vmax.f32 %v19, %v20
  %v22 = vrot.slane %v21, 1
  %v23 = vmax.f32 %v21, %v22
  %v24 = vsel %vm14, %v12, -inf
  %v25 = vsel %vm14, %v13, -inf
  %v26 = vmax.f32 %v24, %v25
  %v27 = vrot.slane %v26, 4
  %v28 = vmax.f32 %v26, %v27
  %v29 = vrot.slane %v28, 2
  %v30 = vmax.f32 %v28, %v29
  %v31 = vrot.slane %v30, 1
  %v32 = vmax.f32 %v30, %v31
  %v33 = vsub.f32 %v10, %v23
  %v34 = vsub.f32 %v11, %v23
  %v35 = vsub.f32 %v12, %v32
  %v36 = vsub.f32 %v13, %v32
  %v37 = vmul.f32 %v33, 1.442695
  %v38 = vpow.pop %v37
  %v39 = vmul.f32 %v34, 1.442695
  %v40 = vpow.pop %v39
  %v41 = vmul.f32 %v35, 1.442695
  %v42 = vpow.pop %v41
  %v43 = vmul.f32 %v36, 1.442695
  %v44 = vpow.pop %v43
  %v45 = vsel %vm14, %v38, 0.0
  %v46 = vsel %vm14, %v40, 0.0
  %v47 = vadd.f32 %v45, %v46
  %v48 = vrot.slane %v47, 4
  %v49 = vadd.f32 %v47, %v48
  %v50 = vrot.slane %v49, 2
  %v51 = vadd.f32 %v49, %v50
  %v52 = vrot.slane %v51, 1
  %v53 = vadd.f32 %v51, %v52
  %v54 = vsel %vm14, %v42, 0.0
  %v55 = vsel %vm14, %v44, 0.0
  %v56 = vadd.f32 %v54, %v55
  %v57 = vrot.slane %v56, 4
  %v58 = vadd.f32 %v56, %v57
  %v59 = vrot.slane %v58, 2
  %v60 = vadd.f32 %v58, %v59
  %v61 = vrot.slane %v60, 1
  %v62 = vadd.f32 %v60, %v61
  %v63 = vrcp.pop %v53
  %v64 = vmul.f32 %v53, %v63
  %v65 = vsub.f32 1.0, %v64
  %v66 = vmul.f32 %v63, %v65
  %v67 = vadd.f32 %v63, %v66
  %vm68 = vweird.f32 %v53
  %vm69 = vweird.f32 %v63
  %vm70 = vmor %vm68, %vm69
  %v71 = vsel %vm70, %v63, %v67
  %v72 = vand.u32 2147483647, %v53
  %vm73 = vcmp.eq.f32.partialorder %v72, 8.507059e+37
  %v74 = vand.u32 %v53, 2147483648
  %v75 = vor.u32 1.1754944e-38, %v74
  %v76 = vsel %vm73, %v75, %v71
  %v77 = vrcp.pop %v62
  %v78 = vmul.f32 %v62, %v77
  %v79 = vsub.f32 1.0, %v78
  %v80 = vmul.f32 %v77, %v79
  %v81 = vadd.f32 %v77, %v80
  %vm82 = vweird.f32 %v62
  %vm83 = vweird.f32 %v77
  %vm84 = vmor %vm82, %vm83
  %v85 = vsel %vm84, %v77, %v81
  %v86 = vand.u32 2147483647, %v62
  %vm87 = vcmp.eq.f32.partialorder %v86, 8.507059e+37
  %v88 = vand.u32 %v62, 2147483648
  %v89 = vor.u32 1.1754944e-38, %v88
  %v90 = vsel %vm87, %v89, %v85
  %v91 = vmul.f32 %v38, %v76
  %v92 = vmul.f32 %v40, %v76
  %v93 = vmul.f32 %v42, %v90
  %v94 = vmul.f32 %v44, %v90
  %vm95 = vcmask 7168
  %96 = vst.msk [vmem:[%s1] sm:$0xff] %vm95, %v91
  %97 = vst.msk [vmem:[%s1 + $0x8] sm:$0xff] %vm95, %v92
  %98 = vst.msk [vmem:[%s1 + $0x10] sm:$0xff] %vm95, %v93
  %99 = vst.msk [vmem:[%s1 + $0x18] sm:$0xff] %vm95, %v94
  %104 = vrot.lane.b32.xlu0 %v91, 127
  %v105 = vpop.permute.xlu0 %104
  %106 = vrot.lane.b32.xlu0 %v92, 127
  %v107 = vpop.permute.xlu0 %106
  %108 = vrot.lane.b32.xlu0 %v93, 127
  %v109 = vpop.permute.xlu0 %108
  %110 = vrot.lane.b32.xlu0 %v94, 127
  %v111 = vpop.permute.xlu0 %110
  %116 = vst.msk [vmem:[%s2] sm:$0xff] %vm95, %v105
  %117 = vst.msk [vmem:[%s2 + $0x8] sm:$0xff] %vm95, %v107
  %118 = vst.msk [vmem:[%s2 + $0x10] sm:$0xff] %vm95, %v109
  %119 = vst.msk [vmem:[%s2 + $0x18] sm:$0xff] %vm95, %v111
  // Predicated region
  $region6: #{bidaf_forward.27} parent=0 // pred_check
    _
  $region7: #{bidaf_forward.27} parent=0 // pred_check_branch
    %121 = sbr.rel (0) target = $region9
  $region8: #{bidaf_forward.27} parent=0 // pred_region
    _
  $region9: #{bidaf_forward.27} parent=0 // pred_fallthru
    _
  // Predicated region
  $region10: #{bidaf_forward.27} parent=0 // pred_check
    _
  $region11: #{bidaf_forward.27} parent=0 // pred_check_branch
    %123 = sbr.rel (0) target = $region13
  $region12: #{bidaf_forward.27} parent=0 // pred_region
    _
  $region13: #{bidaf_forward.27} parent=0 // pred_fallthru
    _
  // Predicated region
  $region14: #{bidaf_forward.27} parent=0 // pred_check
    _
  $region15: #{bidaf_forward.27} parent=0 // pred_check_branch
    %125 = sbr.rel (0) target = $region17
  $region16: #{bidaf_forward.27} parent=0 // pred_region
    _
  $region17: #{bidaf_forward.27} parent=0 // pred_fallthru
    _
  // Predicated region
  $region18: #{bidaf_forward.27} parent=0 // pred_check
    _
  $region19: #{bidaf_forward.27} parent=0 // pred_check_branch
    %127 = sbr.rel (0) target = $region21
  $region20: #{bidaf_forward.27} parent=0 // pred_region
    _
  $region21: #{bidaf_forward.27} parent=0 // pred_fallthru
    _

// kernel: bidaf_forward.15
$region0: #{bidaf_forward.15}
  #allocation0 [shape = 'u32[]', space=smem, size = 0x4, offset = 0x4, fixed_abs, tag = 'smem constant byte address 0x4 - core index']
  #allocation1 [shape = 'u32[72,128]{1,0:T(1,128)}', space=vmem, size = 0x9000, scoped, tag = 'internal scratch']
  #allocation2 [shape = 'f32[2,32]{1,0:T(2,128)}', space=vmem, size = 0x400, scoped, tag = 'scratch operand']
  #allocation3 [shape = 'f32[2,32]{1,0:T(2,128)}', space=vmem, size = 0x400, scoped, tag = 'scratch operand']
  %s0 = inlined_call_operand.vmem [shape: f32[2,16,64], index: 0, kind: input, shape index: {}]
  %s1 = inlined_call_operand.vmem [shape: f32[2,16,64], index: 1, kind: input, shape index: {}]
  %s2 = inlined_call_operand.vmem [shape: f32[32,128], index: 2, kind: input, shape index: {}]
  %s3 = inlined_call_operand.vmem [shape: f32[2,16,1], index: 3, kind: input, shape index: {}, may-alias: {3,4}]
  %s4 = inlined_call_operand.vmem [shape: f32[2,16,1], index: 4, kind: input, shape index: {}, may-alias: {3,4}]
  %s5 = inlined_call_operand.vmem [shape: f32[2,256], index: 5, kind: output, shape index: {0}]
  %s6 = inlined_call_operand.vmem [shape: f32[2,256], index: 6, kind: output, shape index: {1}]
  %7 = xla_tuple %s5, %s6
  %s8 = sld [smem:[#allocation0]]
  $region42: #{bidaf_forward.15} parent=0
    _
  %s10 = ssub.s32 1, %s8
  %s11 = scalar_select 0, %s10, %s8
  // Predicated region
  $region2: #{bidaf_forward.15} parent=0 // pred_check
    _
  $region3: #{bidaf_forward.15} parent=0 // pred_check_branch
    %13 = sbr.rel (0) target = $region5
  $region4: #{bidaf_forward.15} parent=0 // pred_region
    _
  $region5: #{bidaf_forward.15} parent=0 // pred_fallthru
    _
  // Predicated region
  $region6: #{bidaf_forward.15} parent=0 // pred_check
    _
  $region7: #{bidaf_forward.15} parent=0 // pred_check_branch
    %15 = sbr.rel (0) target = $region9
  $region8: #{bidaf_forward.15} parent=0 // pred_region
    %s16 = ssub.s32 0, 0
    %s17 = smul.u32 2, %s16
    %p18 = scmp.lt.s32.totalorder %s17, 1
    %s19 = scalar_select %p18, %s17, 1
    %s20 = smul.addr %s19, 8
    %s21 = scalar_lea.vmem %s1, %s20
    %s22 = ssub.s32 0, 0
    %s23 = smul.u32 2, %s22
  $region9: #{bidaf_forward.15} parent=0 // pred_fallthru
    _
  // Predicated region
  $region10: #{bidaf_forward.15} parent=0 // pred_check
    _
  $region11: #{bidaf_forward.15} parent=0 // pred_check_branch
    %25 = sbr.rel (0) target = $region13
  $region12: #{bidaf_forward.15} parent=0 // pred_region
    _
  $region13: #{bidaf_forward.15} parent=0 // pred_fallthru
    _
  // Predicated region
  $region14: #{bidaf_forward.15} parent=0 // pred_check
    _
  $region15: #{bidaf_forward.15} parent=0 // pred_check_branch
    %27 = sbr.rel (0) target = $region17
  $region16: #{bidaf_forward.15} parent=0 // pred_region
    _
  $region17: #{bidaf_forward.15} parent=0 // pred_fallthru
    _
  // Predicated region
  $region18: #{bidaf_forward.15} parent=0 // pred_check
    _
  $region19: #{bidaf_forward.15} parent=0 // pred_check_branch
    %29 = sbr.rel (0) target = $region21
  $region20: #{bidaf_forward.15} parent=0 // pred_region
    %s30 = ssub.s32 0, 0
    %s31 = smul.u32 2, %s30
    %p32 = scmp.lt.s32.totalorder %s31, 1
    %s33 = scalar_select %p32, %s31, 1
    %s34 = smul.addr %s33, 8
    %s35 = scalar_lea.vmem %s4, %s34
    %s36 = ssub.s32 0, 0
    %s37 = smul.u32 2, %s36
  $region21: #{bidaf_forward.15} parent=0 // pred_fallthru
    _
  %s38 = ssub.s32 0, 0
  %s39 = smul.u32 2, %s38
  %p40 = scmp.lt.s32.totalorder %s39, 1
  %s41 = scalar_select %p40, %s39, 1
  %s42 = smul.addr %s41, 8
  %s43 = scalar_lea.vmem %s1, %s42
  %s44 = ssub.s32 0, 0
  %s45 = smul.u32 2, %s44
  %p46 = scmp.lt.s32.totalorder %s45, 1
  %s47 = scalar_select %p46, %s45, 1
  %s48 = smul.addr %s47, 8
  %s49 = scalar_lea.vmem %s4, %s48
  %s50 = ssub.s32 0, 0
  %s51 = smul.u32 2, %s50
  %p52 = scmp.lt.s32.totalorder %s51, 1
  %s53 = scalar_select %p52, %s51, 1
  %s54 = smul.addr %s53, 2
  %s55 = scalar_lea.vmem %s6, %s54
  %s56 = ssub.s32 0, 0
  %s57 = smul.u32 2, %s56
  %p58 = scmp.lt.s32.totalorder %s57, 1
  %s59 = scalar_select %p58, %s57, 1
  %s60 = smul.addr %s59, 8
  %s61 = scalar_lea.vmem %s1, %s60
  %s62 = ssub.s32 0, 0
  %s63 = smul.u32 2, %s62
  %s64 = ssub.s32 0, 0
  %s65 = smul.u32 2, %s64
  %p66 = scmp.lt.s32.totalorder %s65, 1
  %s67 = scalar_select %p66, %s65, 1
  %s68 = smul.addr %s67, 8
  %s69 = scalar_lea.vmem %s4, %s68
  %s70 = ssub.s32 0, 0
  %s71 = smul.u32 2, %s70
  %s72 = ssub.s32 0, 0
  %s73 = smul.u32 2, %s72
  %p74 = scmp.lt.s32.totalorder %s73, 1
  %s75 = scalar_select %p74, %s73, 1
  %s76 = smul.addr %s75, 2
  %s77 = scalar_lea.vmem %s6, %s76
  %s78 = ssub.s32 0, 0
  %s79 = smul.u32 2, %s78
  %p80 = scmp.eq.s32.totalorder 0, 0
  // Predicated region
  $region22: #{bidaf_forward.15} parent=0 // pred_check
    %p81 = pneg %p80
  $region23: #{bidaf_forward.15} parent=0 // pred_check_branch
    %83 = sbr.rel (%p81) target = $region25
  $region24: #{bidaf_forward.15} parent=0 // pred_region
    %vm84 = vcmask 254976
    %85 = vst.msk [vmem:[#allocation2] sm:$0x3] %vm84, 0.0
    %86 = vst.msk [vmem:[#allocation3] sm:$0x3] %vm84, 0.0
  $region25: #{bidaf_forward.15} parent=0 // pred_fallthru
    _
  %v87 = vld [vmem:[%s2] sm:$0xff]
  %v88 = vld [vmem:[%s2 + $0x8] sm:$0xff]
  %v89 = vld [vmem:[%s2 + $0x10] sm:$0xff]
  %v90 = vld [vmem:[%s2 + $0x18] sm:$0xff]
  %v91 = vld [vmem:[%s0] sm:$0xff]
  %v92 = vld [vmem:[%s0 + $0x8] sm:$0xff]
  %v93 = vld [vmem:[%s0 + $0x10] sm:$0xff]
  %v94 = vld [vmem:[%s0 + $0x18] sm:$0xff]
  %v95 = vld [vmem:[%s61] sm:$0xff]
  %v96 = vld [vmem:[%s61 + $0x8] sm:$0xff]
  %v97 = vld [vmem:[%s61 + $0x10] sm:$0xff]
  %v98 = vld [vmem:[%s61 + $0x18] sm:$0xff]
  %v99 = vld [vmem:[%s3] sm:$0xff]
  %v100 = vld [vmem:[%s3 + $0x8] sm:$0xff]
  %v101 = vld [vmem:[%s3 + $0x10] sm:$0xff]
  %v102 = vld [vmem:[%s3 + $0x18] sm:$0xff]
  %v103 = vld [vmem:[%s69] sm:$0xff]
  %v104 = vld [vmem:[%s69 + $0x8] sm:$0xff]
  %v105 = vld [vmem:[%s69 + $0x10] sm:$0xff]
  %v106 = vld [vmem:[%s69 + $0x18] sm:$0xff]
  %v107 = vld [vmem:[#allocation2] sm:$0x3]
  %v108 = vld [vmem:[#allocation3] sm:$0x3]
  %vm109 = vcmask 261120
  %v111 = vsel %vm109, %v107, 0
  %113 = vmatpush.msra.mxu0 0.0
  %114 = vmatpush.msra.mxu0 0.0
  %115 = vmatpush.msra.mxu0 0.0
  %116 = vmatpush.msra.mxu0 0.0
  %117 = vmatpush.msra.mxu0 0.0
  %118 = vmatpush.msra.mxu0 0.0
  %119 = vmatpush.msra.mxu0 0.0
  %120 = vmatpush.msra.mxu0 0.0
  %121 = vmatpush.msra.mxu0 0.0
  %122 = vmatpush.msra.mxu0 0.0
  %123 = vmatpush.msra.mxu0 0.0
  %124 = vmatpush.msra.mxu0 0.0
  %125 = vmatpush.msra.mxu0 %v90
  %126 = vmatpush.msra.mxu0 %v89
  %127 = vmatpush.msra.mxu0 %v88
  %128 = vmatpush.msra.mxu0 %v87
  %129 = vmatmul.f32.gmra.mxu0 %v111
  %v130 = vpop.f32.mrf.mxu0
  %v131 = vadd.f32 0.0, %v130
  %132 = vdwg.mxu0
  %v135 = vrot.slane %v93, 7
  %vm136 = vcmask 1041409
  %v137 = vsel %vm136, %v135, %v91
  %v139 = vadd.f32 %v131, %v137
  %v142 = vrot.slane %v96, 7
  %v143 = vrot.slane %v98, 6
  %v144 = vsel %vm136, %v143, %v142
  %145 = vrot.lane.b32.xlu0 %v144, 64
  %v146 = vpop.permute.xlu0 %145
  %v148 = vadd.f32 %v131, %v146
  %v149 = vxor.u32 %v139, 2147483648
  %v150 = vmul.f32 %v149, 1.442695
  %v151 = vpow.pop %v150
  %v152 = vadd.f32 %v151, 1.0
  %v153 = vrcp.pop %v152
  %v154 = vmul.f32 %v152, %v153
  %v155 = vsub.f32 1.0, %v154
  %v156 = vmul.f32 %v153, %v155
  %v157 = vadd.f32 %v153, %v156
  %vm158 = vweird.f32 %v152
  %vm159 = vweird.f32 %v153
  %vm160 = vmor %vm158, %vm159
  %v161 = vsel %vm160, %v153, %v157
  %v162 = vand.u32 2147483647, %v152
  %vm163 = vcmp.eq.f32.partialorder %v162, 8.507059e+37
  %v164 = vand.u32 %v152, 2147483648
  %v165 = vor.u32 1.1754944e-38, %v164
  %v166 = vsel %vm163, %v165, %v161
  %v167 = vmul.f32 1.0, %v166
  %v168 = vtanh.pop %v139
  %v169 = vxor.u32 %v148, 2147483648
  %v170 = vmul.f32 %v169, 1.442695
  %v171 = vpow.pop %v170
  %v172 = vadd.f32 %v171, 1.0
  %v173 = vrcp.pop %v172
  %v174 = vmul.f32 %v172, %v173
  %v175 = vsub.f32 1.0, %v174
  %v176 = vmul.f32 %v173, %v175
  %v177 = vadd.f32 %v173, %v176
  %vm178 = vweird.f32 %v172
  %vm179 = vweird.f32 %v173
  %vm180 = vmor %vm178, %vm179
  %v181 = vsel %vm180, %v173, %v177
  %v182 = vand.u32 2147483647, %v172
  %vm183 = vcmp.eq.f32.partialorder %v182, 8.507059e+37
  %v184 = vand.u32 %v172, 2147483648
  %v185 = vor.u32 1.1754944e-38, %v184
  %v186 = vsel %vm183, %v185, %v181
  %v187 = vmul.f32 1.0, %v186
  %v188 = vtanh.pop %v148
  %190 = vrot.lane.b32.xlu0 %v108, 16
  %v191 = vpop.permute.xlu0 %190
  %v193 = vmul.f32 %v167, %v191
  %195 = vrot.lane.b32.xlu0 %v168, 80
  %v196 = vpop.permute.xlu0 %195
  %v198 = vmul.f32 %v167, %v196
  %200 = vrot.lane.b32.xlu0 %v198, 16
  %v201 = vpop.permute.xlu0 %200
  %v203 = vadd.f32 %v193, %v201
  %204 = vrot.lane.b32.xlu0 %v108, 64
  %v205 = vpop.permute.xlu0 %204
  %v207 = vmul.f32 %v187, %v205
  %209 = vrot.lane.b32.xlu0 %v188, 80
  %v210 = vpop.permute.xlu0 %209
  %v212 = vmul.f32 %v187, %v210
  %214 = vrot.lane.b32.xlu0 %v212, 16
  %v215 = vpop.permute.xlu0 %214
  %v217 = vadd.f32 %v207, %v215
  %219 = vset.pattern.permute.xlu0 0
  %220 = vperm.xlu0 %219, %v104
  %v221 = vpop.permute.xlu0 %220
  %223 = vset.pattern.permute.xlu0 0
  %224 = vperm.xlu0 %223, %v106
  %v225 = vpop.permute.xlu0 %224
  %v226 = vrot.slane %v221, 7
  %v227 = vrot.slane %v225, 6
  %v228 = vsel %vm136, %v227, %v226
  %v230 = vmul.f32 %v217, %v228
  %v231 = vtanh.pop %v203
  %233 = vrot.lane.b32.xlu0 %v231, 16
  %v234 = vpop.permute.xlu0 %233
  %v236 = vmul.f32 %v167, %v234
  %v237 = vtanh.pop %v230
  %239 = vrot.lane.b32.xlu0 %v237, 16
  %v240 = vpop.permute.xlu0 %239
  %v242 = vmul.f32 %v187, %v240
  %v243 = vmul.f32 %v242, %v228
  %245 = vset.pattern.permute.xlu0 0
  %246 = vperm.xlu0 %245, %v99
  %v247 = vpop.permute.xlu0 %246
  %249 = vset.pattern.permute.xlu0 0
  %250 = vperm.xlu0 %249, %v101
  %v251 = vpop.permute.xlu0 %250
  %v252 = vrot.slane %v251, 7
  %v253 = vsel %vm136, %v252, %v247
  %v255 = vmul.f32 %v236, %v253
  %257 = vrot.lane.b32.xlu0 %v236, 96
  %v258 = vpop.permute.xlu0 %257
  %261 = vrot.lane.b32.xlu0 %v243, 48
  %v262 = vpop.permute.xlu0 %261
  %vm264 = vcmask 130048
  %v265 = vsel %vm264, %v258, %v262
  %267 = vrot.lane.b32.xlu0 %v203, 112
  %v268 = vpop.permute.xlu0 %267
  %271 = vrot.lane.b32.xlu0 %v230, 64
  %v272 = vpop.permute.xlu0 %271
  %v274 = vsel %vm264, %v268, %v272
  %v276 = vsel %vm109, %v265, 0
  %278 = vmatpush.msra.mxu0 0.0
  %279 = vmatpush.msra.mxu0 0.0
  %280 = vmatpush.msra.mxu0 0.0
  %281 = vmatpush.msra.mxu0 0.0
  %282 = vmatpush.msra.mxu0 0.0
  %283 = vmatpush.msra.mxu0 0.0
  %284 = vmatpush.msra.mxu0 0.0
  %285 = vmatpush.msra.mxu0 0.0
  %286 = vmatpush.msra.mxu0 0.0
  %287 = vmatpush.msra.mxu0 0.0
  %288 = vmatpush.msra.mxu0 0.0
  %289 = vmatpush.msra.mxu0 0.0
  %290 = vmatpush.msra.mxu0 %v90
  %291 = vmatpush.msra.mxu0 %v89
  %292 = vmatpush.msra.mxu0 %v88
  %293 = vmatpush.msra.mxu0 %v87
  %294 = vmatmul.f32.gmra.mxu0 %v276
  %v295 = vpop.f32.mrf.mxu0
  %v296 = vadd.f32 0.0, %v295
  %297 = vdwg.mxu0
  %v298 = vrot.slane %v91, 1
  %v299 = vsel %vm136, %v93, %v298
  %v301 = vadd.f32 %v296, %v299
  %v302 = vrot.slane %v96, 6
  %v303 = vrot.slane %v98, 5
  %v304 = vsel %vm136, %v303, %v302
  %305 = vrot.lane.b32.xlu0 %v304, 64
  %v306 = vpop.permute.xlu0 %305
  %v308 = vadd.f32 %v296, %v306
  %v309 = vxor.u32 %v301, 2147483648
  %v310 = vmul.f32 %v309, 1.442695
  %v311 = vpow.pop %v310
  %v312 = vadd.f32 %v311, 1.0
  %v313 = vrcp.pop %v312
  %v314 = vmul.f32 %v312, %v313
  %v315 = vsub.f32 1.0, %v314
  %v316 = vmul.f32 %v313, %v315
  %v317 = vadd.f32 %v313, %v316
  %vm318 = vweird.f32 %v312
  %vm319 = vweird.f32 %v313
  %vm320 = vmor %vm318, %vm319
  %v321 = vsel %vm320, %v313, %v317
  %v322 = vand.u32 2147483647, %v312
  %vm323 = vcmp.eq.f32.partialorder %v322, 8.507059e+37
  %v324 = vand.u32 %v312, 2147483648
  %v325 = vor.u32 1.1754944e-38, %v324
  %v326 = vsel %vm323, %v325, %v321
  %v327 = vmul.f32 1.0, %v326
  %v328 = vtanh.pop %v301
  %v329 = vxor.u32 %v308, 2147483648
  %v330 = vmul.f32 %v329, 1.442695
  %v331 = vpow.pop %v330
  %v332 = vadd.f32 %v331, 1.0
  %v333 = vrcp.pop %v332
  %v334 = vmul.f32 %v332, %v333
  %v335 = vsub.f32 1.0, %v334
  %v336 = vmul.f32 %v333, %v335
  %v337 = vadd.f32 %v333, %v336
  %vm338 = vweird.f32 %v332
  %vm339 = vweird.f32 %v333
  %vm340 = vmor %vm338, %vm339
  %v341 = vsel %vm340, %v333, %v337
  %v342 = vand.u32 2147483647, %v332
  %vm343 = vcmp.eq.f32.partialorder %v342, 8.507059e+37
  %v344 = vand.u32 %v332, 2147483648
  %v345 = vor.u32 1.1754944e-38, %v344
  %v346 = vsel %vm343, %v345, %v341
  %v347 = vmul.f32 1.0, %v346
  %v348 = vtanh.pop %v308
  %350 = vrot.lane.b32.xlu0 %v274, 16
  %v351 = vpop.permute.xlu0 %350
  %v353 = vmul.f32 %v327, %v351
  %355 = vrot.lane.b32.xlu0 %v328, 80
  %v356 = vpop.permute.xlu0 %355
  %v358 = vmul.f32 %v327, %v356
  %360 = vrot.lane.b32.xlu0 %v358, 16
  %v361 = vpop.permute.xlu0 %360
  %v363 = vadd.f32 %v353, %v361
  %364 = vrot.lane.b32.xlu0 %v274, 64
  %v365 = vpop.permute.xlu0 %364
  %v367 = vmul.f32 %v347, %v365
  %369 = vrot.lane.b32.xlu0 %v348, 80
  %v370 = vpop.permute.xlu0 %369
  %v372 = vmul.f32 %v347, %v370
  %374 = vrot.lane.b32.xlu0 %v372, 16
  %v375 = vpop.permute.xlu0 %374
  %v377 = vadd.f32 %v367, %v375
  %v378 = vrot.slane %v221, 6
  %v379 = vrot.slane %v225, 5
  %v380 = vsel %vm136, %v379, %v378
  %v382 = vmul.f32 %v377, %v380
  %v383 = vtanh.pop %v363
  %385 = vrot.lane.b32.xlu0 %v383, 16
  %v386 = vpop.permute.xlu0 %385
  %v388 = vmul.f32 %v327, %v386
  %v389 = vtanh.pop %v382
  %391 = vrot.lane.b32.xlu0 %v389, 16
  %v392 = vpop.permute.xlu0 %391
  %v394 = vmul.f32 %v347, %v392
  %v395 = vmul.f32 %v394, %v380
  %v396 = vrot.slane %v247, 1
  %v397 = vsel %vm136, %v251, %v396
  %v399 = vmul.f32 %v388, %v397
  %401 = vrot.lane.b32.xlu0 %v388, 96
  %v402 = vpop.permute.xlu0 %401
  %405 = vrot.lane.b32.xlu0 %v395, 48
  %v406 = vpop.permute.xlu0 %405
  %v408 = vsel %vm264, %v402, %v406
  %410 = vrot.lane.b32.xlu0 %v363, 112
  %v411 = vpop.permute.xlu0 %410
  %414 = vrot.lane.b32.xlu0 %v382, 64
  %v415 = vpop.permute.xlu0 %414
  %v417 = vsel %vm264, %v411, %v415
  %v419 = vsel %vm109, %v408, 0
  %421 = vmatpush.msra.mxu0 0.0
  %422 = vmatpush.msra.mxu0 0.0
  %423 = vmatpush.msra.mxu0 0.0
  %424 = vmatpush.msra.mxu0 0.0
  %425 = vmatpush.msra.mxu0 0.0
  %426 = vmatpush.msra.mxu0 0.0
  %427 = vmatpush.msra.mxu0 0.0
  %428 = vmatpush.msra.mxu0 0.0
  %429 = vmatpush.msra.mxu0 0.0
  %430 = vmatpush.msra.mxu0 0.0
  %431 = vmatpush.msra.mxu0 0.0
  %432 = vmatpush.msra.mxu0 0.0
  %433 = vmatpush.msra.mxu0 %v90
  %434 = vmatpush.msra.mxu0 %v89
  %435 = vmatpush.msra.mxu0 %v88
  %436 = vmatpush.msra.mxu0 %v87
  %437 = vmatmul.f32.gmra.mxu0 %v419
  %v438 = vpop.f32.mrf.mxu0
  %v439 = vadd.f32 0.0, %v438
  %440 = vdwg.mxu0
  %v441 = vrot.slane %v91, 2
  %v442 = vrot.slane %v93, 1
  %v443 = vsel %vm136, %v442, %v441
  %v445 = vadd.f32 %v439, %v443
  %v446 = vrot.slane %v96, 5
  %v447 = vrot.slane %v98, 4
  %v448 = vsel %vm136, %v447, %v446
  %449 = vrot.lane.b32.xlu0 %v448, 64
  %v450 = vpop.permute.xlu0 %449
  %v452 = vadd.f32 %v439, %v450
  %v453 = vxor.u32 %v445, 2147483648
  %v454 = vmul.f32 %v453, 1.442695
  %v455 = vpow.pop %v454
  %v456 = vadd.f32 %v455, 1.0
  %v457 = vrcp.pop %v456
  %v458 = vmul.f32 %v456, %v457
  %v459 = vsub.f32 1.0, %v458
  %v460 = vmul.f32 %v457, %v459
  %v461 = vadd.f32 %v457, %v460
  %vm462 = vweird.f32 %v456
  %vm463 = vweird.f32 %v457
  %vm464 = vmor %vm462, %vm463
  %v465 = vsel %vm464, %v457, %v461
  %v466 = vand.u32 2147483647, %v456
  %vm467 = vcmp.eq.f32.partialorder %v466, 8.507059e+37
  %v468 = vand.u32 %v456, 2147483648
  %v469 = vor.u32 1.1754944e-38, %v468
  %v470 = vsel %vm467, %v469, %v465
  %v471 = vmul.f32 1.0, %v470
  %v472 = vtanh.pop %v445
  %v473 = vxor.u32 %v452, 2147483648
  %v474 = vmul.f32 %v473, 1.442695
  %v475 = vpow.pop %v474
  %v476 = vadd.f32 %v475, 1.0
  %v477 = vrcp.pop %v476
  %v478 = vmul.f32 %v476, %v477
  %v479 = vsub.f32 1.0, %v478
  %v480 = vmul.f32 %v477, %v479
  %v481 = vadd.f32 %v477, %v480
  %vm482 = vweird.f32 %v476
  %vm483 = vweird.f32 %v477
  %vm484 = vmor %vm482, %vm483
  %v485 = vsel %vm484, %v477, %v481
  %v486 = vand.u32 2147483647, %v476
  %vm487 = vcmp.eq.f32.partialorder %v486, 8.507059e+37
  %v488 = vand.u32 %v476, 2147483648
  %v489 = vor.u32 1.1754944e-38, %v488
  %v490 = vsel %vm487, %v489, %v485
  %v491 = vmul.f32 1.0, %v490
  %v492 = vtanh.pop %v452
  %494 = vrot.lane.b32.xlu0 %v417, 16
  %v495 = vpop.permute.xlu0 %494
  %v497 = vmul.f32 %v471, %v495
  %499 = vrot.lane.b32.xlu0 %v472, 80
  %v500 = vpop.permute.xlu0 %499
  %v502 = vmul.f32 %v471, %v500
  %504 = vrot.lane.b32.xlu0 %v502, 16
  %v505 = vpop.permute.xlu0 %504
  %v507 = vadd.f32 %v497, %v505
  %508 = vrot.lane.b32.xlu0 %v417, 64
  %v509 = vpop.permute.xlu0 %508
  %v511 = vmul.f32 %v491, %v509
  %513 = vrot.lane.b32.xlu0 %v492, 80
  %v514 = vpop.permute.xlu0 %513
  %v516 = vmul.f32 %v491, %v514
  %518 = vrot.lane.b32.xlu0 %v516, 16
  %v519 = vpop.permute.xlu0 %518
  %v521 = vadd.f32 %v511, %v519
  %v522 = vrot.slane %v221, 5
  %v523 = vrot.slane %v225, 4
  %v524 = vsel %vm136, %v523, %v522
  %v526 = vmul.f32 %v521, %v524
  %v527 = vtanh.pop %v507
  %529 = vrot.lane.b32.xlu0 %v527, 16
  %v530 = vpop.permute.xlu0 %529
  %v532 = vmul.f32 %v471, %v530
  %v533 = vtanh.pop %v526
  %535 = vrot.lane.b32.xlu0 %v533, 16
  %v536 = vpop.permute.xlu0 %535
  %v538 = vmul.f32 %v491, %v536
  %v539 = vmul.f32 %v538, %v524
  %v540 = vrot.slane %v247, 2
  %v541 = vrot.slane %v251, 1
  %v542 = vsel %vm136, %v541, %v540
  %v544 = vmul.f32 %v532, %v542
  %546 = vrot.lane.b32.xlu0 %v532, 96
  %v547 = vpop.permute.xlu0 %546
  %550 = vrot.lane.b32.xlu0 %v539, 48
  %v551 = vpop.permute.xlu0 %550
  %v553 = vsel %vm264, %v547, %v551
  %555 = vrot.lane.b32.xlu0 %v507, 112
  %v556 = vpop.permute.xlu0 %555
  %559 = vrot.lane.b32.xlu0 %v526, 64
  %v560 = vpop.permute.xlu0 %559
  %v562 = vsel %vm264, %v556, %v560
  %v564 = vsel %vm109, %v553, 0
  %566 = vmatpush.msra.mxu0 0.0
  %567 = vmatpush.msra.mxu0 0.0
  %568 = vmatpush.msra.mxu0 0.0
  %569 = vmatpush.msra.mxu0 0.0
  %570 = vmatpush.msra.mxu0 0.0
  %571 = vmatpush.msra.mxu0 0.0
  %572 = vmatpush.msra.mxu0 0.0
  %573 = vmatpush.msra.mxu0 0.0
  %574 = vmatpush.msra.mxu0 0.0
  %575 = vmatpush.msra.mxu0 0.0
  %576 = vmatpush.msra.mxu0 0.0
  %577 = vmatpush.msra.mxu0 0.0
  %578 = vmatpush.msra.mxu0 %v90
  %579 = vmatpush.msra.mxu0 %v89
  %580 = vmatpush.msra.mxu0 %v88
  %581 = vmatpush.msra.mxu0 %v87
  %582 = vmatmul.f32.gmra.mxu0 %v564
  %v583 = vpop.f32.mrf.mxu0
  %v584 = vadd.f32 0.0, %v583
  %585 = vdwg.mxu0
  %v586 = vrot.slane %v91, 3
  %v587 = vrot.slane %v93, 2
  %v588 = vsel %vm136, %v587, %v586
  %v590 = vadd.f32 %v584, %v588
  %v591 = vrot.slane %v96, 4
  %v592 = vrot.slane %v98, 3
  %v593 = vsel %vm136, %v592, %v591
  %594 = vrot.lane.b32.xlu0 %v593, 64
  %v595 = vpop.permute.xlu0 %594
  %v597 = vadd.f32 %v584, %v595
  %v598 = vxor.u32 %v590, 2147483648
  %v599 = vmul.f32 %v598, 1.442695
  %v600 = vpow.pop %v599
  %v601 = vadd.f32 %v600, 1.0
  %v602 = vrcp.pop %v601
  %v603 = vmul.f32 %v601, %v602
  %v604 = vsub.f32 1.0, %v603
  %v605 = vmul.f32 %v602, %v604
  %v606 = vadd.f32 %v602, %v605
  %vm607 = vweird.f32 %v601
  %vm608 = vweird.f32 %v602
  %vm609 = vmor %vm607, %vm608
  %v610 = vsel %vm609, %v602, %v606
  %v611 = vand.u32 2147483647, %v601
  %vm612 = vcmp.eq.f32.partialorder %v611, 8.507059e+37
  %v613 = vand.u32 %v601, 2147483648
  %v614 = vor.u32 1.1754944e-38, %v613
  %v615 = vsel %vm612, %v614, %v610
  %v616 = vmul.f32 1.0, %v615
  %v617 = vtanh.pop %v590
  %v618 = vxor.u32 %v597, 2147483648
  %v619 = vmul.f32 %v618, 1.442695
  %v620 = vpow.pop %v619
  %v621 = vadd.f32 %v620, 1.0
  %v622 = vrcp.pop %v621
  %v623 = vmul.f32 %v621, %v622
  %v624 = vsub.f32 1.0, %v623
  %v625 = vmul.f32 %v622, %v624
  %v626 = vadd.f32 %v622, %v625
  %vm627 = vweird.f32 %v621
  %vm628 = vweird.f32 %v622
  %vm629 = vmor %vm627, %vm628
  %v630 = vsel %vm629, %v622, %v626
  %v631 = vand.u32 2147483647, %v621
  %vm632 = vcmp.eq.f32.partialorder %v631, 8.507059e+37
  %v633 = vand.u32 %v621, 2147483648
  %v634 = vor.u32 1.1754944e-38, %v633
  %v635 = vsel %vm632, %v634, %v630
  %v636 = vmul.f32 1.0, %v635
  %v637 = vtanh.pop %v597
  %639 = vrot.lane.b32.xlu0 %v562, 16
  %v640 = vpop.permute.xlu0 %639
  %v642 = vmul.f32 %v616, %v640
  %644 = vrot.lane.b32.xlu0 %v617, 80
  %v645 = vpop.permute.xlu0 %644
  %v647 = vmul.f32 %v616, %v645
  %649 = vrot.lane.b32.xlu0 %v647, 16
  %v650 = vpop.permute.xlu0 %649
  %v652 = vadd.f32 %v642, %v650
  %653 = vrot.lane.b32.xlu0 %v562, 64
  %v654 = vpop.permute.xlu0 %653
  %v656 = vmul.f32 %v636, %v654
  %658 = vrot.lane.b32.xlu0 %v637, 80
  %v659 = vpop.permute.xlu0 %658
  %v661 = vmul.f32 %v636, %v659
  %663 = vrot.lane.b32.xlu0 %v661, 16
  %v664 = vpop.permute.xlu0 %663
  %v666 = vadd.f32 %v656, %v664
  %v667 = vrot.slane %v221, 4
  %v668 = vrot.slane %v225, 3
  %v669 = vsel %vm136, %v668, %v667
  %v671 = vmul.f32 %v666, %v669
  %v672 = vtanh.pop %v652
  %674 = vrot.lane.b32.xlu0 %v672, 16
  %v675 = vpop.permute.xlu0 %674
  %v677 = vmul.f32 %v616, %v675
  %v678 = vtanh.pop %v671
  %680 = vrot.lane.b32.xlu0 %v678, 16
  %v681 = vpop.permute.xlu0 %680
  %v683 = vmul.f32 %v636, %v681
  %v684 = vmul.f32 %v683, %v669
  %v685 = vrot.slane %v247, 3
  %v686 = vrot.slane %v251, 2
  %v687 = vsel %vm136, %v686, %v685
  %v689 = vmul.f32 %v677, %v687
  %691 = vrot.lane.b32.xlu0 %v677, 96
  %v692 = vpop.permute.xlu0 %691
  %695 = vrot.lane.b32.xlu0 %v684, 48
  %v696 = vpop.permute.xlu0 %695
  %v698 = vsel %vm264, %v692, %v696
  %700 = vrot.lane.b32.xlu0 %v652, 112
  %v701 = vpop.permute.xlu0 %700
  %704 = vrot.lane.b32.xlu0 %v671, 64
  %v705 = vpop.permute.xlu0 %704
  %v707 = vsel %vm264, %v701, %v705
  %v709 = vsel %vm109, %v698, 0
  %711 = vmatpush.msra.mxu0 0.0
  %712 = vmatpush.msra.mxu0 0.0
  %713 = vmatpush.msra.mxu0 0.0
  %714 = vmatpush.msra.mxu0 0.0
  %715 = vmatpush.msra.mxu0 0.0
  %716 = vmatpush.msra.mxu0 0.0
  %717 = vmatpush.msra.mxu0 0.0
  %718 = vmatpush.msra.mxu0 0.0
  %719 = vmatpush.msra.mxu0 0.0
  %720 = vmatpush.msra.mxu0 0.0
  %721 = vmatpush.msra.mxu0 0.0
  %722 = vmatpush.msra.mxu0 0.0
  %723 = vmatpush.msra.mxu0 %v90
  %724 = vmatpush.msra.mxu0 %v89
  %725 = vmatpush.msra.mxu0 %v88
  %726 = vmatpush.msra.mxu0 %v87
  %727 = vmatmul.f32.gmra.mxu0 %v709
  %v728 = vpop.f32.mrf.mxu0
  %v729 = vadd.f32 0.0, %v728
  %730 = vdwg.mxu0
  %v731 = vrot.slane %v91, 4
  %v732 = vrot.slane %v93, 3
  %v733 = vsel %vm136, %v732, %v731
  %v735 = vadd.f32 %v729, %v733
  %v736 = vrot.slane %v96, 3
  %v737 = vrot.slane %v98, 2
  %v738 = vsel %vm136, %v737, %v736
  %739 = vrot.lane.b32.xlu0 %v738, 64
  %v740 = vpop.permute.xlu0 %739
  %v742 = vadd.f32 %v729, %v740
  %v743 = vxor.u32 %v735, 2147483648
  %v744 = vmul.f32 %v743, 1.442695
  %v745 = vpow.pop %v744
  %v746 = vadd.f32 %v745, 1.0
  %v747 = vrcp.pop %v746
  %v748 = vmul.f32 %v746, %v747
  %v749 = vsub.f32 1.0, %v748
  %v750 = vmul.f32 %v747, %v749
  %v751 = vadd.f32 %v747, %v750
  %vm752 = vweird.f32 %v746
  %vm753 = vweird.f32 %v747
  %vm754 = vmor %vm752, %vm753
  %v755 = vsel %vm754, %v747, %v751
  %v756 = vand.u32 2147483647, %v746
  %vm757 = vcmp.eq.f32.partialorder %v756, 8.507059e+37
  %v758 = vand.u32 %v746, 2147483648
  %v759 = vor.u32 1.1754944e-38, %v758
  %v760 = vsel %vm757, %v759, %v755
  %v761 = vmul.f32 1.0, %v760
  %v762 = vtanh.pop %v735
  %v763 = vxor.u32 %v742, 2147483648
  %v764 = vmul.f32 %v763, 1.442695
  %v765 = vpow.pop %v764
  %v766 = vadd.f32 %v765, 1.0
  %v767 = vrcp.pop %v766
  %v768 = vmul.f32 %v766, %v767
  %v769 = vsub.f32 1.0, %v768
  %v770 = vmul.f32 %v767, %v769
  %v771 = vadd.f32 %v767, %v770
  %vm772 = vweird.f32 %v766
  %vm773 = vweird.f32 %v767
  %vm774 = vmor %vm772, %vm773
  %v775 = vsel %vm774, %v767, %v771
  %v776 = vand.u32 2147483647, %v766
  %vm777 = vcmp.eq.f32.partialorder %v776, 8.507059e+37
  %v778 = vand.u32 %v766, 2147483648
  %v779 = vor.u32 1.1754944e-38, %v778
  %v780 = vsel %vm777, %v779, %v775
  %v781 = vmul.f32 1.0, %v780
  %v782 = vtanh.pop %v742
  %784 = vrot.lane.b32.xlu0 %v707, 16
  %v785 = vpop.permute.xlu0 %784
  %v787 = vmul.f32 %v761, %v785
  %789 = vrot.lane.b32.xlu0 %v762, 80
  %v790 = vpop.permute.xlu0 %789
  %v792 = vmul.f32 %v761, %v790
  %794 = vrot.lane.b32.xlu0 %v792, 16
  %v795 = vpop.permute.xlu0 %794
  %v797 = vadd.f32 %v787, %v795
  %798 = vrot.lane.b32.xlu0 %v707, 64
  %v799 = vpop.permute.xlu0 %798
  %v801 = vmul.f32 %v781, %v799
  %803 = vrot.lane.b32.xlu0 %v782, 80
  %v804 = vpop.permute.xlu0 %803
  %v806 = vmul.f32 %v781, %v804
  %808 = vrot.lane.b32.xlu0 %v806, 16
  %v809 = vpop.permute.xlu0 %808
  %v811 = vadd.f32 %v801, %v809
  %v812 = vrot.slane %v221, 3
  %v813 = vrot.slane %v225, 2
  %v814 = vsel %vm136, %v813, %v812
  %v816 = vmul.f32 %v811, %v814
  %v817 = vtanh.pop %v797
  %819 = vrot.lane.b32.xlu0 %v817, 16
  %v820 = vpop.permute.xlu0 %819
  %v822 = vmul.f32 %v761, %v820
  %v823 = vtanh.pop %v816
  %825 = vrot.lane.b32.xlu0 %v823, 16
  %v826 = vpop.permute.xlu0 %825
  %v828 = vmul.f32 %v781, %v826
  %v829 = vmul.f32 %v828, %v814
  %v830 = vrot.slane %v247, 4
  %v831 = vrot.slane %v251, 3
  %v832 = vsel %vm136, %v831, %v830
  %v834 = vmul.f32 %v822, %v832
  %836 = vrot.lane.b32.xlu0 %v822, 96
  %v837 = vpop.permute.xlu0 %836
  %840 = vrot.lane.b32.xlu0 %v829, 48
  %v841 = vpop.permute.xlu0 %840
  %v843 = vsel %vm264, %v837, %v841
  %845 = vrot.lane.b32.xlu0 %v797, 112
  %v846 = vpop.permute.xlu0 %845
  %849 = vrot.lane.b32.xlu0 %v816, 64
  %v850 = vpop.permute.xlu0 %849
  %v852 = vsel %vm264, %v846, %v850
  %v854 = vsel %vm109, %v843, 0
  %856 = vmatpush.msra.mxu0 0.0
  %857 = vmatpush.msra.mxu0 0.0
  %858 = vmatpush.msra.mxu0 0.0
  %859 = vmatpush.msra.mxu0 0.0
  %860 = vmatpush.msra.mxu0 0.0
  %861 = vmatpush.msra.mxu0 0.0
  %862 = vmatpush.msra.mxu0 0.0
  %863 = vmatpush.msra.mxu0 0.0
  %864 = vmatpush.msra.mxu0 0.0
  %865 = vmatpush.msra.mxu0 0.0
  %866 = vmatpush.msra.mxu0 0.0
  %867 = vmatpush.msra.mxu0 0.0
  %868 = vmatpush.msra.mxu0 %v90
  %869 = vmatpush.msra.mxu0 %v89
  %870 = vmatpush.msra.mxu0 %v88
  %871 = vmatpush.msra.mxu0 %v87
  %872 = vmatmul.f32.gmra.mxu0 %v854
  %v873 = vpop.f32.mrf.mxu0
  %v874 = vadd.f32 0.0, %v873
  %875 = vdwg.mxu0
  %v876 = vrot.slane %v91, 5
  %v877 = vrot.slane %v93, 4
  %v878 = vsel %vm136, %v877, %v876
  %v880 = vadd.f32 %v874, %v878
  %v881 = vrot.slane %v96, 2
  %v882 = vrot.slane %v98, 1
  %v883 = vsel %vm136, %v882, %v881
  %884 = vrot.lane.b32.xlu0 %v883, 64
  %v885 = vpop.permute.xlu0 %884
  %v887 = vadd.f32 %v874, %v885
  %v888 = vxor.u32 %v880, 2147483648
  %v889 = vmul.f32 %v888, 1.442695
  %v890 = vpow.pop %v889
  %v891 = vadd.f32 %v890, 1.0
  %v892 = vrcp.pop %v891
  %v893 = vmul.f32 %v891, %v892
  %v894 = vsub.f32 1.0, %v893
  %v895 = vmul.f32 %v892, %v894
  %v896 = vadd.f32 %v892, %v895
  %vm897 = vweird.f32 %v891
  %vm898 = vweird.f32 %v892
  %vm899 = vmor %vm897, %vm898
  %v900 = vsel %vm899, %v892, %v896
  %v901 = vand.u32 2147483647, %v891
  %vm902 = vcmp.eq.f32.partialorder %v901, 8.507059e+37
  %v903 = vand.u32 %v891, 2147483648
  %v904 = vor.u32 1.1754944e-38, %v903
  %v905 = vsel %vm902, %v904, %v900
  %v906 = vmul.f32 1.0, %v905
  %v907 = vtanh.pop %v880
  %v908 = vxor.u32 %v887, 2147483648
  %v909 = vmul.f32 %v908, 1.442695
  %v910 = vpow.pop %v909
  %v911 = vadd.f32 %v910, 1.0
  %v912 = vrcp.pop %v911
  %v913 = vmul.f32 %v911, %v912
  %v914 = vsub.f32 1.0, %v913
  %v915 = vmul.f32 %v912, %v914
  %v916 = vadd.f32 %v912, %v915
  %vm917 = vweird.f32 %v911
  %vm918 = vweird.f32 %v912
  %vm919 = vmor %vm917, %vm918
  %v920 = vsel %vm919, %v912, %v916
  %v921 = vand.u32 2147483647, %v911
  %vm922 = vcmp.eq.f32.partialorder %v921, 8.507059e+37
  %v923 = vand.u32 %v911, 2147483648
  %v924 = vor.u32 1.1754944e-38, %v923
  %v925 = vsel %vm922, %v924, %v920
  %v926 = vmul.f32 1.0, %v925
  %v927 = vtanh.pop %v887
  %929 = vrot.lane.b32.xlu0 %v852, 16
  %v930 = vpop.permute.xlu0 %929
  %v932 = vmul.f32 %v906, %v930
  %934 = vrot.lane.b32.xlu0 %v907, 80
  %v935 = vpop.permute.xlu0 %934
  %v937 = vmul.f32 %v906, %v935
  %939 = vrot.lane.b32.xlu0 %v937, 16
  %v940 = vpop.permute.xlu0 %939
  %v942 = vadd.f32 %v932, %v940
  %943 = vrot.lane.b32.xlu0 %v852, 64
  %v944 = vpop.permute.xlu0 %943
  %v946 = vmul.f32 %v926, %v944
  %948 = vrot.lane.b32.xlu0 %v927, 80
  %v949 = vpop.permute.xlu0 %948
  %v951 = vmul.f32 %v926, %v949
  %953 = vrot.lane.b32.xlu0 %v951, 16
  %v954 = vpop.permute.xlu0 %953
  %v956 = vadd.f32 %v946, %v954
  %v957 = vrot.slane %v221, 2
  %v958 = vrot.slane %v225, 1
  %v959 = vsel %vm136, %v958, %v957
  %v961 = vmul.f32 %v956, %v959
  %v962 = vtanh.pop %v942
  %964 = vrot.lane.b32.xlu0 %v962, 16
  %v965 = vpop.permute.xlu0 %964
  %v967 = vmul.f32 %v906, %v965
  %v968 = vtanh.pop %v961
  %970 = vrot.lane.b32.xlu0 %v968, 16
  %v971 = vpop.permute.xlu0 %970
  %v973 = vmul.f32 %v926, %v971
  %v974 = vmul.f32 %v973, %v959
  %v975 = vrot.slane %v247, 5
  %v976 = vrot.slane %v251, 4
  %v977 = vsel %vm136, %v976, %v975
  %v979 = vmul.f32 %v967, %v977
  %981 = vrot.lane.b32.xlu0 %v967, 96
  %v982 = vpop.permute.xlu0 %981
  %985 = vrot.lane.b32.xlu0 %v974, 48
  %v986 = vpop.permute.xlu0 %985
  %v988 = vsel %vm264, %v982, %v986
  %990 = vrot.lane.b32.xlu0 %v942, 112
  %v991 = vpop.permute.xlu0 %990
  %994 = vrot.lane.b32.xlu0 %v961, 64
  %v995 = vpop.permute.xlu0 %994
  %v997 = vsel %vm264, %v991, %v995
  %v999 = vsel %vm109, %v988, 0
  %1001 = vmatpush.msra.mxu0 0.0
  %1002 = vmatpush.msra.mxu0 0.0
  %1003 = vmatpush.msra.mxu0 0.0
  %1004 = vmatpush.msra.mxu0 0.0
  %1005 = vmatpush.msra.mxu0 0.0
  %1006 = vmatpush.msra.mxu0 0.0
  %1007 = vmatpush.msra.mxu0 0.0
  %1008 = vmatpush.msra.mxu0 0.0
  %1009 = vmatpush.msra.mxu0 0.0
  %1010 = vmatpush.msra.mxu0 0.0
  %1011 = vmatpush.msra.mxu0 0.0
  %1012 = vmatpush.msra.mxu0 0.0
  %1013 = vmatpush.msra.mxu0 %v90
  %1014 = vmatpush.msra.mxu0 %v89
  %1015 = vmatpush.msra.mxu0 %v88
  %1016 = vmatpush.msra.mxu0 %v87
  %1017 = vmatmul.f32.gmra.mxu0 %v999
  %v1018 = vpop.f32.mrf.mxu0
  %v1019 = vadd.f32 0.0, %v1018
  %1020 = vdwg.mxu0
  %v1021 = vrot.slane %v91, 6
  %v1022 = vrot.slane %v93, 5
  %v1023 = vsel %vm136, %v1022, %v1021
  %v1025 = vadd.f32 %v1019, %v1023
  %v1026 = vrot.slane %v96, 1
  %v1027 = vsel %vm136, %v98, %v1026
  %1028 = vrot.lane.b32.xlu0 %v1027, 64
  %v1029 = vpop.permute.xlu0 %1028
  %v1031 = vadd.f32 %v1019, %v1029
  %v1032 = vxor.u32 %v1025, 2147483648
  %v1033 = vmul.f32 %v1032, 1.442695
  %v1034 = vpow.pop %v1033
  %v1035 = vadd.f32 %v1034, 1.0
  %v1036 = vrcp.pop %v1035
  %v1037 = vmul.f32 %v1035, %v1036
  %v1038 = vsub.f32 1.0, %v1037
  %v1039 = vmul.f32 %v1036, %v1038
  %v1040 = vadd.f32 %v1036, %v1039
  %vm1041 = vweird.f32 %v1035
  %vm1042 = vweird.f32 %v1036
  %vm1043 = vmor %vm1041, %vm1042
  %v1044 = vsel %vm1043, %v1036, %v1040
  %v1045 = vand.u32 2147483647, %v1035
  %vm1046 = vcmp.eq.f32.partialorder %v1045, 8.507059e+37
  %v1047 = vand.u32 %v1035, 2147483648
  %v1048 = vor.u32 1.1754944e-38, %v1047
  %v1049 = vsel %vm1046, %v1048, %v1044
  %v1050 = vmul.f32 1.0, %v1049
  %v1051 = vtanh.pop %v1025
  %v1052 = vxor.u32 %v1031, 2147483648
  %v1053 = vmul.f32 %v1052, 1.442695
  %v1054 = vpow.pop %v1053
  %v1055 = vadd.f32 %v1054, 1.0
  %v1056 = vrcp.pop %v1055
  %v1057 = vmul.f32 %v1055, %v1056
  %v1058 = vsub.f32 1.0, %v1057
  %v1059 = vmul.f32 %v1056, %v1058
  %v1060 = vadd.f32 %v1056, %v1059
  %vm1061 = vweird.f32 %v1055
  %vm1062 = vweird.f32 %v1056
  %vm1063 = vmor %vm1061, %vm1062
  %v1064 = vsel %vm1063, %v1056, %v1060
  %v1065 = vand.u32 2147483647, %v1055
  %vm1066 = vcmp.eq.f32.partialorder %v1065, 8.507059e+37
  %v1067 = vand.u32 %v1055, 2147483648
  %v1068 = vor.u32 1.1754944e-38, %v1067
  %v1069 = vsel %vm1066, %v1068, %v1064
  %v1070 = vmul.f32 1.0, %v1069
  %v1071 = vtanh.pop %v1031
  %1073 = vrot.lane.b32.xlu0 %v997, 16
  %v1074 = vpop.permute.xlu0 %1073
  %v1076 = vmul.f32 %v1050, %v1074
  %1078 = vrot.lane.b32.xlu0 %v1051, 80
  %v1079 = vpop.permute.xlu0 %1078
  %v1081 = vmul.f32 %v1050, %v1079
  %1083 = vrot.lane.b32.xlu0 %v1081, 16
  %v1084 = vpop.permute.xlu0 %1083
  %v1086 = vadd.f32 %v1076, %v1084
  %1087 = vrot.lane.b32.xlu0 %v997, 64
  %v1088 = vpop.permute.xlu0 %1087
  %v1090 = vmul.f32 %v1070, %v1088
  %1092 = vrot.lane.b32.xlu0 %v1071, 80
  %v1093 = vpop.permute.xlu0 %1092
  %v1095 = vmul.f32 %v1070, %v1093
  %1097 = vrot.lane.b32.xlu0 %v1095, 16
  %v1098 = vpop.permute.xlu0 %1097
  %v1100 = vadd.f32 %v1090, %v1098
  %v1101 = vrot.slane %v221, 1
  %v1102 = vsel %vm136, %v225, %v1101
  %v1104 = vmul.f32 %v1100, %v1102
  %v1105 = vtanh.pop %v1086
  %1107 = vrot.lane.b32.xlu0 %v1105, 16
  %v1108 = vpop.permute.xlu0 %1107
  %v1110 = vmul.f32 %v1050, %v1108
  %v1111 = vtanh.pop %v1104
  %1113 = vrot.lane.b32.xlu0 %v1111, 16
  %v1114 = vpop.permute.xlu0 %1113
  %v1116 = vmul.f32 %v1070, %v1114
  %v1117 = vmul.f32 %v1116, %v1102
  %v1118 = vrot.slane %v247, 6
  %v1119 = vrot.slane %v251, 5
  %v1120 = vsel %vm136, %v1119, %v1118
  %v1122 = vmul.f32 %v1110, %v1120
  %1124 = vrot.lane.b32.xlu0 %v1110, 96
  %v1125 = vpop.permute.xlu0 %1124
  %1128 = vrot.lane.b32.xlu0 %v1117, 48
  %v1129 = vpop.permute.xlu0 %1128
  %v1131 = vsel %vm264, %v1125, %v1129
  %1133 = vrot.lane.b32.xlu0 %v1086, 112
  %v1134 = vpop.permute.xlu0 %1133
  %1137 = vrot.lane.b32.xlu0 %v1104, 64
  %v1138 = vpop.permute.xlu0 %1137
  %v1140 = vsel %vm264, %v1134, %v1138
  %v1142 = vsel %vm109, %v1131, 0
  %1144 = vmatpush.msra.mxu0 0.0
  %1145 = vmatpush.msra.mxu0 0.0
  %1146 = vmatpush.msra.mxu0 0.0
  %1147 = vmatpush.msra.mxu0 0.0
  %1148 = vmatpush.msra.mxu0 0.0
  %1149 = vmatpush.msra.mxu0 0.0
  %1150 = vmatpush.msra.mxu0 0.0
  %1151 = vmatpush.msra.mxu0 0.0
  %1152 = vmatpush.msra.mxu0 0.0
  %1153 = vmatpush.msra.mxu0 0.0
  %1154 = vmatpush.msra.mxu0 0.0
  %1155 = vmatpush.msra.mxu0 0.0
  %1156 = vmatpush.msra.mxu0 %v90
  %1157 = vmatpush.msra.mxu0 %v89
  %1158 = vmatpush.msra.mxu0 %v88
  %1159 = vmatpush.msra.mxu0 %v87
  %1160 = vmatmul.f32.gmra.mxu0 %v1142
  %v1161 = vpop.f32.mrf.mxu0
  %v1162 = vadd.f32 0.0, %v1161
  %1163 = vdwg.mxu0
  %v1164 = vrot.slane %v91, 7
  %v1165 = vrot.slane %v93, 6
  %v1166 = vsel %vm136, %v1165, %v1164
  %v1168 = vadd.f32 %v1162, %v1166
  %v1169 = vrot.slane %v98, 7
  %v1170 = vsel %vm136, %v1169, %v96
  %1171 = vrot.lane.b32.xlu0 %v1170, 64
  %v1172 = vpop.permute.xlu0 %1171
  %v1174 = vadd.f32 %v1162, %v1172
  %v1175 = vxor.u32 %v1168, 2147483648
  %v1176 = vmul.f32 %v1175, 1.442695
  %v1177 = vpow.pop %v1176
  %v1178 = vadd.f32 %v1177, 1.0
  %v1179 = vrcp.pop %v1178
  %v1180 = vmul.f32 %v1178, %v1179
  %v1181 = vsub.f32 1.0, %v1180
  %v1182 = vmul.f32 %v1179, %v1181
  %v1183 = vadd.f32 %v1179, %v1182
  %vm1184 = vweird.f32 %v1178
  %vm1185 = vweird.f32 %v1179
  %vm1186 = vmor %vm1184, %vm1185
  %v1187 = vsel %vm1186, %v1179, %v1183
  %v1188 = vand.u32 2147483647, %v1178
  %vm1189 = vcmp.eq.f32.partialorder %v1188, 8.507059e+37
  %v1190 = vand.u32 %v1178, 2147483648
  %v1191 = vor.u32 1.1754944e-38, %v1190
  %v1192 = vsel %vm1189, %v1191, %v1187
  %v1193 = vmul.f32 1.0, %v1192
  %v1194 = vtanh.pop %v1168
  %v1195 = vxor.u32 %v1174, 2147483648
  %v1196 = vmul.f32 %v1195, 1.442695
  %v1197 = vpow.pop %v1196
  %v1198 = vadd.f32 %v1197, 1.0
  %v1199 = vrcp.pop %v1198
  %v1200 = vmul.f32 %v1198, %v1199
  %v1201 = vsub.f32 1.0, %v1200
  %v1202 = vmul.f32 %v1199, %v1201
  %v1203 = vadd.f32 %v1199, %v1202
  %vm1204 = vweird.f32 %v1198
  %vm1205 = vweird.f32 %v1199
  %vm1206 = vmor %vm1204, %vm1205
  %v1207 = vsel %vm1206, %v1199, %v1203
  %v1208 = vand.u32 2147483647, %v1198
  %vm1209 = vcmp.eq.f32.partialorder %v1208, 8.507059e+37
  %v1210 = vand.u32 %v1198, 2147483648
  %v1211 = vor.u32 1.1754944e-38, %v1210
  %v1212 = vsel %vm1209, %v1211, %v1207
  %v1213 = vmul.f32 1.0, %v1212
  %v1214 = vtanh.pop %v1174
  %1216 = vrot.lane.b32.xlu0 %v1140, 16
  %v1217 = vpop.permute.xlu0 %1216
  %v1219 = vmul.f32 %v1193, %v1217
  %1221 = vrot.lane.b32.xlu0 %v1194, 80
  %v1222 = vpop.permute.xlu0 %1221
  %v1224 = vmul.f32 %v1193, %v1222
  %1226 = vrot.lane.b32.xlu0 %v1224, 16
  %v1227 = vpop.permute.xlu0 %1226
  %v1229 = vadd.f32 %v1219, %v1227
  %1230 = vrot.lane.b32.xlu0 %v1140, 64
  %v1231 = vpop.permute.xlu0 %1230
  %v1233 = vmul.f32 %v1213, %v1231
  %1235 = vrot.lane.b32.xlu0 %v1214, 80
  %v1236 = vpop.permute.xlu0 %1235
  %v1238 = vmul.f32 %v1213, %v1236
  %1240 = vrot.lane.b32.xlu0 %v1238, 16
  %v1241 = vpop.permute.xlu0 %1240
  %v1243 = vadd.f32 %v1233, %v1241
  %v1244 = vrot.slane %v225, 7
  %v1245 = vsel %vm136, %v1244, %v221
  %v1247 = vmul.f32 %v1243, %v1245
  %v1248 = vtanh.pop %v1229
  %1250 = vrot.lane.b32.xlu0 %v1248, 16
  %v1251 = vpop.permute.xlu0 %1250
  %v1253 = vmul.f32 %v1193, %v1251
  %v1254 = vtanh.pop %v1247
  %1256 = vrot.lane.b32.xlu0 %v1254, 16
  %v1257 = vpop.permute.xlu0 %1256
  %v1259 = vmul.f32 %v1213, %v1257
  %v1260 = vmul.f32 %v1259, %v1245
  %v1261 = vrot.slane %v247, 7
  %v1262 = vrot.slane %v251, 6
  %v1263 = vsel %vm136, %v1262, %v1261
  %v1265 = vmul.f32 %v1253, %v1263
  %1267 = vrot.lane.b32.xlu0 %v1253, 96
  %v1268 = vpop.permute.xlu0 %1267
  %1271 = vrot.lane.b32.xlu0 %v1260, 48
  %v1272 = vpop.permute.xlu0 %1271
  %v1274 = vsel %vm264, %v1268, %v1272
  %1276 = vrot.lane.b32.xlu0 %v1229, 112
  %v1277 = vpop.permute.xlu0 %1276
  %1280 = vrot.lane.b32.xlu0 %v1247, 64
  %v1281 = vpop.permute.xlu0 %1280
  %v1283 = vsel %vm264, %v1277, %v1281
  %v1285 = vsel %vm109, %v1274, 0
  %1287 = vmatpush.msra.mxu0 0.0
  %1288 = vmatpush.msra.mxu0 0.0
  %1289 = vmatpush.msra.mxu0 0.0
  %1290 = vmatpush.msra.mxu0 0.0
  %1291 = vmatpush.msra.mxu0 0.0
  %1292 = vmatpush.msra.mxu0 0.0
  %1293 = vmatpush.msra.mxu0 0.0
  %1294 = vmatpush.msra.mxu0 0.0
  %1295 = vmatpush.msra.mxu0 0.0
  %1296 = vmatpush.msra.mxu0 0.0
  %1297 = vmatpush.msra.mxu0 0.0
  %1298 = vmatpush.msra.mxu0 0.0
  %1299 = vmatpush.msra.mxu0 %v90
  %1300 = vmatpush.msra.mxu0 %v89
  %1301 = vmatpush.msra.mxu0 %v88
  %1302 = vmatpush.msra.mxu0 %v87
  %1303 = vmatmul.f32.gmra.mxu0 %v1285
  %v1304 = vpop.f32.mrf.mxu0
  %v1305 = vadd.f32 0.0, %v1304
  %1306 = vdwg.mxu0
  %v1309 = vrot.slane %v94, 7
  %v1310 = vsel %vm136, %v1309, %v92
  %v1312 = vadd.f32 %v1305, %v1310
  %v1315 = vrot.slane %v95, 7
  %v1316 = vrot.slane %v97, 6
  %v1317 = vsel %vm136, %v1316, %v1315
  %1318 = vrot.lane.b32.xlu0 %v1317, 64
  %v1319 = vpop.permute.xlu0 %1318
  %v1321 = vadd.f32 %v1305, %v1319
  %v1322 = vxor.u32 %v1312, 2147483648
  %v1323 = vmul.f32 %v1322, 1.442695
  %v1324 = vpow.pop %v1323
  %v1325 = vadd.f32 %v1324, 1.0
  %v1326 = vrcp.pop %v1325
  %v1327 = vmul.f32 %v1325, %v1326
  %v1328 = vsub.f32 1.0, %v1327
  %v1329 = vmul.f32 %v1326, %v1328
  %v1330 = vadd.f32 %v1326, %v1329
  %vm1331 = vweird.f32 %v1325
  %vm1332 = vweird.f32 %v1326
  %vm1333 = vmor %vm1331, %vm1332
  %v1334 = vsel %vm1333, %v1326, %v1330
  %v1335 = vand.u32 2147483647, %v1325
  %vm1336 = vcmp.eq.f32.partialorder %v1335, 8.507059e+37
  %v1337 = vand.u32 %v1325, 2147483648
  %v1338 = vor.u32 1.1754944e-38, %v1337
  %v1339 = vsel %vm1336, %v1338, %v1334
  %v1340 = vmul.f32 1.0, %v1339
  %v1341 = vtanh.pop %v1312
  %v1342 = vxor.u32 %v1321, 2147483648
  %v1343 = vmul.f32 %v1342, 1.442695
  %v1344 = vpow.pop %v1343
  %v1345 = vadd.f32 %v1344, 1.0
  %v1346 = vrcp.pop %v1345
  %v1347 = vmul.f32 %v1345, %v1346
  %v1348 = vsub.f32 1.0, %v1347
  %v1349 = vmul.f32 %v1346, %v1348
  %v1350 = vadd.f32 %v1346, %v1349
  %vm1351 = vweird.f32 %v1345
  %vm1352 = vweird.f32 %v1346
  %vm1353 = vmor %vm1351, %vm1352
  %v1354 = vsel %vm1353, %v1346, %v1350
  %v1355 = vand.u32 2147483647, %v1345
  %vm1356 = vcmp.eq.f32.partialorder %v1355, 8.507059e+37
  %v1357 = vand.u32 %v1345, 2147483648
  %v1358 = vor.u32 1.1754944e-38, %v1357
  %v1359 = vsel %vm1356, %v1358, %v1354
  %v1360 = vmul.f32 1.0, %v1359
  %v1361 = vtanh.pop %v1321
  %1363 = vrot.lane.b32.xlu0 %v1283, 16
  %v1364 = vpop.permute.xlu0 %1363
  %v1366 = vmul.f32 %v1340, %v1364
  %1368 = vrot.lane.b32.xlu0 %v1341, 80
  %v1369 = vpop.permute.xlu0 %1368
  %v1371 = vmul.f32 %v1340, %v1369
  %1373 = vrot.lane.b32.xlu0 %v1371, 16
  %v1374 = vpop.permute.xlu0 %1373
  %v1376 = vadd.f32 %v1366, %v1374
  %1377 = vrot.lane.b32.xlu0 %v1283, 64
  %v1378 = vpop.permute.xlu0 %1377
  %v1380 = vmul.f32 %v1360, %v1378
  %1382 = vrot.lane.b32.xlu0 %v1361, 80
  %v1383 = vpop.permute.xlu0 %1382
  %v1385 = vmul.f32 %v1360, %v1383
  %1387 = vrot.lane.b32.xlu0 %v1385, 16
  %v1388 = vpop.permute.xlu0 %1387
  %v1390 = vadd.f32 %v1380, %v1388
  %1392 = vset.pattern.permute.xlu0 0
  %1393 = vperm.xlu0 %1392, %v103
  %v1394 = vpop.permute.xlu0 %1393
  %1396 = vset.pattern.permute.xlu0 0
  %1397 = vperm.xlu0 %1396, %v105
  %v1398 = vpop.permute.xlu0 %1397
  %v1399 = vrot.slane %v1394, 7
  %v1400 = vrot.slane %v1398, 6
  %v1401 = vsel %vm136, %v1400, %v1399
  %v1403 = vmul.f32 %v1390, %v1401
  %v1404 = vtanh.pop %v1376
  %1406 = vrot.lane.b32.xlu0 %v1404, 16
  %v1407 = vpop.permute.xlu0 %1406
  %v1409 = vmul.f32 %v1340, %v1407
  %v1410 = vtanh.pop %v1403
  %1412 = vrot.lane.b32.xlu0 %v1410, 16
  %v1413 = vpop.permute.xlu0 %1412
  %v1415 = vmul.f32 %v1360, %v1413
  %v1416 = vmul.f32 %v1415, %v1401
  %1418 = vset.pattern.permute.xlu0 0
  %1419 = vperm.xlu0 %1418, %v100
  %v1420 = vpop.permute.xlu0 %1419
  %1422 = vset.pattern.permute.xlu0 0
  %1423 = vperm.xlu0 %1422, %v102
  %v1424 = vpop.permute.xlu0 %1423
  %v1425 = vrot.slane %v1424, 7
  %v1426 = vsel %vm136, %v1425, %v1420
  %v1428 = vmul.f32 %v1409, %v1426
  %1430 = vrot.lane.b32.xlu0 %v1409, 96
  %v1431 = vpop.permute.xlu0 %1430
  %1434 = vrot.lane.b32.xlu0 %v1416, 48
  %v1435 = vpop.permute.xlu0 %1434
  %v1437 = vsel %vm264, %v1431, %v1435
  %1439 = vrot.lane.b32.xlu0 %v1376, 112
  %v1440 = vpop.permute.xlu0 %1439
  %1443 = vrot.lane.b32.xlu0 %v1403, 64
  %v1444 = vpop.permute.xlu0 %1443
  %v1446 = vsel %vm264, %v1440, %v1444
  %v1448 = vsel %vm109, %v1437, 0
  %1450 = vmatpush.msra.mxu0 0.0
  %1451 = vmatpush.msra.mxu0 0.0
  %1452 = vmatpush.msra.mxu0 0.0
  %1453 = vmatpush.msra.mxu0 0.0
  %1454 = vmatpush.msra.mxu0 0.0
  %1455 = vmatpush.msra.mxu0 0.0
  %1456 = vmatpush.msra.mxu0 0.0
  %1457 = vmatpush.msra.mxu0 0.0
  %1458 = vmatpush.msra.mxu0 0.0
  %1459 = vmatpush.msra.mxu0 0.0
  %1460 = vmatpush.msra.mxu0 0.0
  %1461 = vmatpush.msra.mxu0 0.0
  %1462 = vmatpush.msra.mxu0 %v90
  %1463 = vmatpush.msra.mxu0 %v89
  %1464 = vmatpush.msra.mxu0 %v88
  %1465 = vmatpush.msra.mxu0 %v87
  %1466 = vmatmul.f32.gmra.mxu0 %v1448
  %v1467 = vpop.f32.mrf.mxu0
  %v1468 = vadd.f32 0.0, %v1467
  %1469 = vdwg.mxu0
  %v1470 = vrot.slane %v92, 1
  %v1471 = vsel %vm136, %v94, %v1470
  %v1473 = vadd.f32 %v1468, %v1471
  %v1474 = vrot.slane %v95, 6
  %v1475 = vrot.slane %v97, 5
  %v1476 = vsel %vm136, %v1475, %v1474
  %1477 = vrot.lane.b32.xlu0 %v1476, 64
  %v1478 = vpop.permute.xlu0 %1477
  %v1480 = vadd.f32 %v1468, %v1478
  %v1481 = vxor.u32 %v1473, 2147483648
  %v1482 = vmul.f32 %v1481, 1.442695
  %v1483 = vpow.pop %v1482
  %v1484 = vadd.f32 %v1483, 1.0
  %v1485 = vrcp.pop %v1484
  %v1486 = vmul.f32 %v1484, %v1485
  %v1487 = vsub.f32 1.0, %v1486
  %v1488 = vmul.f32 %v1485, %v1487
  %v1489 = vadd.f32 %v1485, %v1488
  %vm1490 = vweird.f32 %v1484
  %vm1491 = vweird.f32 %v1485
  %vm1492 = vmor %vm1490, %vm1491
  %v1493 = vsel %vm1492, %v1485, %v1489
  %v1494 = vand.u32 2147483647, %v1484
  %vm1495 = vcmp.eq.f32.partialorder %v1494, 8.507059e+37
  %v1496 = vand.u32 %v1484, 2147483648
  %v1497 = vor.u32 1.1754944e-38, %v1496
  %v1498 = vsel %vm1495, %v1497, %v1493
  %v1499 = vmul.f32 1.0, %v1498
  %v1500 = vtanh.pop %v1473
  %v1501 = vxor.u32 %v1480, 2147483648
  %v1502 = vmul.f32 %v1501, 1.442695
  %v1503 = vpow.pop %v1502
  %v1504 = vadd.f32 %v1503, 1.0
  %v1505 = vrcp.pop %v1504
  %v1506 = vmul.f32 %v1504, %v1505
  %v1507 = vsub.f32 1.0, %v1506
  %v1508 = vmul.f32 %v1505, %v1507
  %v1509 = vadd.f32 %v1505, %v1508
  %vm1510 = vweird.f32 %v1504
  %vm1511 = vweird.f32 %v1505
  %vm1512 = vmor %vm1510, %vm1511
  %v1513 = vsel %vm1512, %v1505, %v1509
  %v1514 = vand.u32 2147483647, %v1504
  %vm1515 = vcmp.eq.f32.partialorder %v1514, 8.507059e+37
  %v1516 = vand.u32 %v1504, 2147483648
  %v1517 = vor.u32 1.1754944e-38, %v1516
  %v1518 = vsel %vm1515, %v1517, %v1513
  %v1519 = vmul.f32 1.0, %v1518
  %v1520 = vtanh.pop %v1480
  %1522 = vrot.lane.b32.xlu0 %v1446, 16
  %v1523 = vpop.permute.xlu0 %1522
  %v1525 = vmul.f32 %v1499, %v1523
  %1527 = vrot.lane.b32.xlu0 %v1500, 80
  %v1528 = vpop.permute.xlu0 %1527
  %v1530 = vmul.f32 %v1499, %v1528
  %1532 = vrot.lane.b32.xlu0 %v1530, 16
  %v1533 = vpop.permute.xlu0 %1532
  %v1535 = vadd.f32 %v1525, %v1533
  %1536 = vrot.lane.b32.xlu0 %v1446, 64
  %v1537 = vpop.permute.xlu0 %1536
  %v1539 = vmul.f32 %v1519, %v1537
  %1541 = vrot.lane.b32.xlu0 %v1520, 80
  %v1542 = vpop.permute.xlu0 %1541
  %v1544 = vmul.f32 %v1519, %v1542
  %1546 = vrot.lane.b32.xlu0 %v1544, 16
  %v1547 = vpop.permute.xlu0 %1546
  %v1549 = vadd.f32 %v1539, %v1547
  %v1550 = vrot.slane %v1394, 6
  %v1551 = vrot.slane %v1398, 5
  %v1552 = vsel %vm136, %v1551, %v1550
  %v1554 = vmul.f32 %v1549, %v1552
  %v1555 = vtanh.pop %v1535
  %1557 = vrot.lane.b32.xlu0 %v1555, 16
  %v1558 = vpop.permute.xlu0 %1557
  %v1560 = vmul.f32 %v1499, %v1558
  %v1561 = vtanh.pop %v1554
  %1563 = vrot.lane.b32.xlu0 %v1561, 16
  %v1564 = vpop.permute.xlu0 %1563
  %v1566 = vmul.f32 %v1519, %v1564
  %v1567 = vmul.f32 %v1566, %v1552
  %v1568 = vrot.slane %v1420, 1
  %v1569 = vsel %vm136, %v1424, %v1568
  %v1571 = vmul.f32 %v1560, %v1569
  %1573 = vrot.lane.b32.xlu0 %v1560, 96
  %v1574 = vpop.permute.xlu0 %1573
  %1577 = vrot.lane.b32.xlu0 %v1567, 48
  %v1578 = vpop.permute.xlu0 %1577
  %v1580 = vsel %vm264, %v1574, %v1578
  %1582 = vrot.lane.b32.xlu0 %v1535, 112
  %v1583 = vpop.permute.xlu0 %1582
  %1586 = vrot.lane.b32.xlu0 %v1554, 64
  %v1587 = vpop.permute.xlu0 %1586
  %v1589 = vsel %vm264, %v1583, %v1587
  %v1591 = vsel %vm109, %v1580, 0
  %1593 = vmatpush.msra.mxu0 0.0
  %1594 = vmatpush.msra.mxu0 0.0
  %1595 = vmatpush.msra.mxu0 0.0
  %1596 = vmatpush.msra.mxu0 0.0
  %1597 = vmatpush.msra.mxu0 0.0
  %1598 = vmatpush.msra.mxu0 0.0
  %1599 = vmatpush.msra.mxu0 0.0
  %1600 = vmatpush.msra.mxu0 0.0
  %1601 = vmatpush.msra.mxu0 0.0
  %1602 = vmatpush.msra.mxu0 0.0
  %1603 = vmatpush.msra.mxu0 0.0
  %1604 = vmatpush.msra.mxu0 0.0
  %1605 = vmatpush.msra.mxu0 %v90
  %1606 = vmatpush.msra.mxu0 %v89
  %1607 = vmatpush.msra.mxu0 %v88
  %1608 = vmatpush.msra.mxu0 %v87
  %1609 = vmatmul.f32.gmra.mxu0 %v1591
  %v1610 = vpop.f32.mrf.mxu0
  %v1611 = vadd.f32 0.0, %v1610
  %1612 = vdwg.mxu0
  %v1613 = vrot.slane %v92, 2
  %v1614 = vrot.slane %v94, 1
  %v1615 = vsel %vm136, %v1614, %v1613
  %v1617 = vadd.f32 %v1611, %v1615
  %v1618 = vrot.slane %v95, 5
  %v1619 = vrot.slane %v97, 4
  %v1620 = vsel %vm136, %v1619, %v1618
  %1621 = vrot.lane.b32.xlu0 %v1620, 64
  %v1622 = vpop.permute.xlu0 %1621
  %v1624 = vadd.f32 %v1611, %v1622
  %v1625 = vxor.u32 %v1617, 2147483648
  %v1626 = vmul.f32 %v1625, 1.442695
  %v1627 = vpow.pop %v1626
  %v1628 = vadd.f32 %v1627, 1.0
  %v1629 = vrcp.pop %v1628
  %v1630 = vmul.f32 %v1628, %v1629
  %v1631 = vsub.f32 1.0, %v1630
  %v1632 = vmul.f32 %v1629, %v1631
  %v1633 = vadd.f32 %v1629, %v1632
  %vm1634 = vweird.f32 %v1628
  %vm1635 = vweird.f32 %v1629
  %vm1636 = vmor %vm1634, %vm1635
  %v1637 = vsel %vm1636, %v1629, %v1633
  %v1638 = vand.u32 2147483647, %v1628
  %vm1639 = vcmp.eq.f32.partialorder %v1638, 8.507059e+37
  %v1640 = vand.u32 %v1628, 2147483648
  %v1641 = vor.u32 1.1754944e-38, %v1640
  %v1642 = vsel %vm1639, %v1641, %v1637
  %v1643 = vmul.f32 1.0, %v1642
  %v1644 = vtanh.pop %v1617
  %v1645 = vxor.u32 %v1624, 2147483648
  %v1646 = vmul.f32 %v1645, 1.442695
  %v1647 = vpow.pop %v1646
  %v1648 = vadd.f32 %v1647, 1.0
  %v1649 = vrcp.pop %v1648
  %v1650 = vmul.f32 %v1648, %v1649
  %v1651 = vsub.f32 1.0, %v1650
  %v1652 = vmul.f32 %v1649, %v1651
  %v1653 = vadd.f32 %v1649, %v1652
  %vm1654 = vweird.f32 %v1648
  %vm1655 = vweird.f32 %v1649
  %vm1656 = vmor %vm1654, %vm1655
  %v1657 = vsel %vm1656, %v1649, %v1653
  %v1658 = vand.u32 2147483647, %v1648
  %vm1659 = vcmp.eq.f32.partialorder %v1658, 8.507059e+37
  %v1660 = vand.u32 %v1648, 2147483648
  %v1661 = vor.u32 1.1754944e-38, %v1660
  %v1662 = vsel %vm1659, %v1661, %v1657
  %v1663 = vmul.f32 1.0, %v1662
  %v1664 = vtanh.pop %v1624
  %1666 = vrot.lane.b32.xlu0 %v1589, 16
  %v1667 = vpop.permute.xlu0 %1666
  %v1669 = vmul.f32 %v1643, %v1667
  %1671 = vrot.lane.b32.xlu0 %v1644, 80
  %v1672 = vpop.permute.xlu0 %1671
  %v1674 = vmul.f32 %v1643, %v1672
  %1676 = vrot.lane.b32.xlu0 %v1674, 16
  %v1677 = vpop.permute.xlu0 %1676
  %v1679 = vadd.f32 %v1669, %v1677
  %1680 = vrot.lane.b32.xlu0 %v1589, 64
  %v1681 = vpop.permute.xlu0 %1680
  %v1683 = vmul.f32 %v1663, %v1681
  %1685 = vrot.lane.b32.xlu0 %v1664, 80
  %v1686 = vpop.permute.xlu0 %1685
  %v1688 = vmul.f32 %v1663, %v1686
  %1690 = vrot.lane.b32.xlu0 %v1688, 16
  %v1691 = vpop.permute.xlu0 %1690
  %v1693 = vadd.f32 %v1683, %v1691
  %v1694 = vrot.slane %v1394, 5
  %v1695 = vrot.slane %v1398, 4
  %v1696 = vsel %vm136, %v1695, %v1694
  %v1698 = vmul.f32 %v1693, %v1696
  %v1699 = vtanh.pop %v1679
  %1701 = vrot.lane.b32.xlu0 %v1699, 16
  %v1702 = vpop.permute.xlu0 %1701
  %v1704 = vmul.f32 %v1643, %v1702
  %v1705 = vtanh.pop %v1698
  %1707 = vrot.lane.b32.xlu0 %v1705, 16
  %v1708 = vpop.permute.xlu0 %1707
  %v1710 = vmul.f32 %v1663, %v1708
  %v1711 = vmul.f32 %v1710, %v1696
  %v1712 = vrot.slane %v1420, 2
  %v1713 = vrot.slane %v1424, 1
  %v1714 = vsel %vm136, %v1713, %v1712
  %v1716 = vmul.f32 %v1704, %v1714
  %1718 = vrot.lane.b32.xlu0 %v1704, 96
  %v1719 = vpop.permute.xlu0 %1718
  %1722 = vrot.lane.b32.xlu0 %v1711, 48
  %v1723 = vpop.permute.xlu0 %1722
  %v1725 = vsel %vm264, %v1719, %v1723
  %1727 = vrot.lane.b32.xlu0 %v1679, 112
  %v1728 = vpop.permute.xlu0 %1727
  %1731 = vrot.lane.b32.xlu0 %v1698, 64
  %v1732 = vpop.permute.xlu0 %1731
  %v1734 = vsel %vm264, %v1728, %v1732
  %v1736 = vsel %vm109, %v1725, 0
  %1738 = vmatpush.msra.mxu0 0.0
  %1739 = vmatpush.msra.mxu0 0.0
  %1740 = vmatpush.msra.mxu0 0.0
  %1741 = vmatpush.msra.mxu0 0.0
  %1742 = vmatpush.msra.mxu0 0.0
  %1743 = vmatpush.msra.mxu0 0.0
  %1744 = vmatpush.msra.mxu0 0.0
  %1745 = vmatpush.msra.mxu0 0.0
  %1746 = vmatpush.msra.mxu0 0.0
  %1747 = vmatpush.msra.mxu0 0.0
  %1748 = vmatpush.msra.mxu0 0.0
  %1749 = vmatpush.msra.mxu0 0.0
  %1750 = vmatpush.msra.mxu0 %v90
  %1751 = vmatpush.msra.mxu0 %v89
  %1752 = vmatpush.msra.mxu0 %v88
  %1753 = vmatpush.msra.mxu0 %v87
  %1754 = vmatmul.f32.gmra.mxu0 %v1736
  %v1755 = vpop.f32.mrf.mxu0
  %v1756 = vadd.f32 0.0, %v1755
  %1757 = vdwg.mxu0
  %v1758 = vrot.slane %v92, 3
  %v1759 = vrot.slane %v94, 2
  %v1760 = vsel %vm136, %v1759, %v1758
  %v1762 = vadd.f32 %v1756, %v1760
  %v1763 = vrot.slane %v95, 4
  %v1764 = vrot.slane %v97, 3
  %v1765 = vsel %vm136, %v1764, %v1763
  %1766 = vrot.lane.b32.xlu0 %v1765, 64
  %v1767 = vpop.permute.xlu0 %1766
  %v1769 = vadd.f32 %v1756, %v1767
  %v1770 = vxor.u32 %v1762, 2147483648
  %v1771 = vmul.f32 %v1770, 1.442695
  %v1772 = vpow.pop %v1771
  %v1773 = vadd.f32 %v1772, 1.0
  %v1774 = vrcp.pop %v1773
  %v1775 = vmul.f32 %v1773, %v1774
  %v1776 = vsub.f32 1.0, %v1775
  %v1777 = vmul.f32 %v1774, %v1776
  %v1778 = vadd.f32 %v1774, %v1777
  %vm1779 = vweird.f32 %v1773
  %vm1780 = vweird.f32 %v1774
  %vm1781 = vmor %vm1779, %vm1780
  %v1782 = vsel %vm1781, %v1774, %v1778
  %v1783 = vand.u32 2147483647, %v1773
  %vm1784 = vcmp.eq.f32.partialorder %v1783, 8.507059e+37
  %v1785 = vand.u32 %v1773, 2147483648
  %v1786 = vor.u32 1.1754944e-38, %v1785
  %v1787 = vsel %vm1784, %v1786, %v1782
  %v1788 = vmul.f32 1.0, %v1787
  %v1789 = vtanh.pop %v1762
  %v1790 = vxor.u32 %v1769, 2147483648
  %v1791 = vmul.f32 %v1790, 1.442695
  %v1792 = vpow.pop %v1791
  %v1793 = vadd.f32 %v1792, 1.0
  %v1794 = vrcp.pop %v1793
  %v1795 = vmul.f32 %v1793, %v1794
  %v1796 = vsub.f32 1.0, %v1795
  %v1797 = vmul.f32 %v1794, %v1796
  %v1798 = vadd.f32 %v1794, %v1797
  %vm1799 = vweird.f32 %v1793
  %vm1800 = vweird.f32 %v1794
  %vm1801 = vmor %vm1799, %vm1800
  %v1802 = vsel %vm1801, %v1794, %v1798
  %v1803 = vand.u32 2147483647, %v1793
  %vm1804 = vcmp.eq.f32.partialorder %v1803, 8.507059e+37
  %v1805 = vand.u32 %v1793, 2147483648
  %v1806 = vor.u32 1.1754944e-38, %v1805
  %v1807 = vsel %vm1804, %v1806, %v1802
  %v1808 = vmul.f32 1.0, %v1807
  %v1809 = vtanh.pop %v1769
  %1811 = vrot.lane.b32.xlu0 %v1734, 16
  %v1812 = vpop.permute.xlu0 %1811
  %v1814 = vmul.f32 %v1788, %v1812
  %1816 = vrot.lane.b32.xlu0 %v1789, 80
  %v1817 = vpop.permute.xlu0 %1816
  %v1819 = vmul.f32 %v1788, %v1817
  %1821 = vrot.lane.b32.xlu0 %v1819, 16
  %v1822 = vpop.permute.xlu0 %1821
  %v1824 = vadd.f32 %v1814, %v1822
  %1825 = vrot.lane.b32.xlu0 %v1734, 64
  %v1826 = vpop.permute.xlu0 %1825
  %v1828 = vmul.f32 %v1808, %v1826
  %1830 = vrot.lane.b32.xlu0 %v1809, 80
  %v1831 = vpop.permute.xlu0 %1830
  %v1833 = vmul.f32 %v1808, %v1831
  %1835 = vrot.lane.b32.xlu0 %v1833, 16
  %v1836 = vpop.permute.xlu0 %1835
  %v1838 = vadd.f32 %v1828, %v1836
  %v1839 = vrot.slane %v1394, 4
  %v1840 = vrot.slane %v1398, 3
  %v1841 = vsel %vm136, %v1840, %v1839
  %v1843 = vmul.f32 %v1838, %v1841
  %v1844 = vtanh.pop %v1824
  %1846 = vrot.lane.b32.xlu0 %v1844, 16
  %v1847 = vpop.permute.xlu0 %1846
  %v1849 = vmul.f32 %v1788, %v1847
  %v1850 = vtanh.pop %v1843
  %1852 = vrot.lane.b32.xlu0 %v1850, 16
  %v1853 = vpop.permute.xlu0 %1852
  %v1855 = vmul.f32 %v1808, %v1853
  %v1856 = vmul.f32 %v1855, %v1841
  %v1857 = vrot.slane %v1420, 3
  %v1858 = vrot.slane %v1424, 2
  %v1859 = vsel %vm136, %v1858, %v1857
  %v1861 = vmul.f32 %v1849, %v1859
  %1863 = vrot.lane.b32.xlu0 %v1849, 96
  %v1864 = vpop.permute.xlu0 %1863
  %1867 = vrot.lane.b32.xlu0 %v1856, 48
  %v1868 = vpop.permute.xlu0 %1867
  %v1870 = vsel %vm264, %v1864, %v1868
  %1872 = vrot.lane.b32.xlu0 %v1824, 112
  %v1873 = vpop.permute.xlu0 %1872
  %1876 = vrot.lane.b32.xlu0 %v1843, 64
  %v1877 = vpop.permute.xlu0 %1876
  %v1879 = vsel %vm264, %v1873, %v1877
  %v1881 = vsel %vm109, %v1870, 0
  %1883 = vmatpush.msra.mxu0 0.0
  %1884 = vmatpush.msra.mxu0 0.0
  %1885 = vmatpush.msra.mxu0 0.0
  %1886 = vmatpush.msra.mxu0 0.0
  %1887 = vmatpush.msra.mxu0 0.0
  %1888 = vmatpush.msra.mxu0 0.0
  %1889 = vmatpush.msra.mxu0 0.0
  %1890 = vmatpush.msra.mxu0 0.0
  %1891 = vmatpush.msra.mxu0 0.0
  %1892 = vmatpush.msra.mxu0 0.0
  %1893 = vmatpush.msra.mxu0 0.0
  %1894 = vmatpush.msra.mxu0 0.0
  %1895 = vmatpush.msra.mxu0 %v90
  %1896 = vmatpush.msra.mxu0 %v89
  %1897 = vmatpush.msra.mxu0 %v88
  %1898 = vmatpush.msra.mxu0 %v87
  %1899 = vmatmul.f32.gmra.mxu0 %v1881
  %v1900 = vpop.f32.mrf.mxu0
  %v1901 = vadd.f32 0.0, %v1900
  %1902 = vdwg.mxu0
  %v1903 = vrot.slane %v92, 4
  %v1904 = vrot.slane %v94, 3
  %v1905 = vsel %vm136, %v1904, %v1903
  %v1907 = vadd.f32 %v1901, %v1905
  %v1908 = vrot.slane %v95, 3
  %v1909 = vrot.slane %v97, 2
  %v1910 = vsel %vm136, %v1909, %v1908
  %1911 = vrot.lane.b32.xlu0 %v1910, 64
  %v1912 = vpop.permute.xlu0 %1911
  %v1914 = vadd.f32 %v1901, %v1912
  %v1915 = vxor.u32 %v1907, 2147483648
  %v1916 = vmul.f32 %v1915, 1.442695
  %v1917 = vpow.pop %v1916
  %v1918 = vadd.f32 %v1917, 1.0
  %v1919 = vrcp.pop %v1918
  %v1920 = vmul.f32 %v1918, %v1919
  %v1921 = vsub.f32 1.0, %v1920
  %v1922 = vmul.f32 %v1919, %v1921
  %v1923 = vadd.f32 %v1919, %v1922
  %vm1924 = vweird.f32 %v1918
  %vm1925 = vweird.f32 %v1919
  %vm1926 = vmor %vm1924, %vm1925
  %v1927 = vsel %vm1926, %v1919, %v1923
  %v1928 = vand.u32 2147483647, %v1918
  %vm1929 = vcmp.eq.f32.partialorder %v1928, 8.507059e+37
  %v1930 = vand.u32 %v1918, 2147483648
  %v1931 = vor.u32 1.1754944e-38, %v1930
  %v1932 = vsel %vm1929, %v1931, %v1927
  %v1933 = vmul.f32 1.0, %v1932
  %v1934 = vtanh.pop %v1907
  %v1935 = vxor.u32 %v1914, 2147483648
  %v1936 = vmul.f32 %v1935, 1.442695
  %v1937 = vpow.pop %v1936
  %v1938 = vadd.f32 %v1937, 1.0
  %v1939 = vrcp.pop %v1938
  %v1940 = vmul.f32 %v1938, %v1939
  %v1941 = vsub.f32 1.0, %v1940
  %v1942 = vmul.f32 %v1939, %v1941
  %v1943 = vadd.f32 %v1939, %v1942
  %vm1944 = vweird.f32 %v1938
  %vm1945 = vweird.f32 %v1939
  %vm1946 = vmor %vm1944, %vm1945
  %v1947 = vsel %vm1946, %v1939, %v1943
  %v1948 = vand.u32 2147483647, %v1938
  %vm1949 = vcmp.eq.f32.partialorder %v1948, 8.507059e+37
  %v1950 = vand.u32 %v1938, 2147483648
  %v1951 = vor.u32 1.1754944e-38, %v1950
  %v1952 = vsel %vm1949, %v1951, %v1947
  %v1953 = vmul.f32 1.0, %v1952
  %v1954 = vtanh.pop %v1914
  %1956 = vrot.lane.b32.xlu0 %v1879, 16
  %v1957 = vpop.permute.xlu0 %1956
  %v1959 = vmul.f32 %v1933, %v1957
  %1961 = vrot.lane.b32.xlu0 %v1934, 80
  %v1962 = vpop.permute.xlu0 %1961
  %v1964 = vmul.f32 %v1933, %v1962
  %1966 = vrot.lane.b32.xlu0 %v1964, 16
  %v1967 = vpop.permute.xlu0 %1966
  %v1969 = vadd.f32 %v1959, %v1967
  %1970 = vrot.lane.b32.xlu0 %v1879, 64
  %v1971 = vpop.permute.xlu0 %1970
  %v1973 = vmul.f32 %v1953, %v1971
  %1975 = vrot.lane.b32.xlu0 %v1954, 80
  %v1976 = vpop.permute.xlu0 %1975
  %v1978 = vmul.f32 %v1953, %v1976
  %1980 = vrot.lane.b32.xlu0 %v1978, 16
  %v1981 = vpop.permute.xlu0 %1980
  %v1983 = vadd.f32 %v1973, %v1981
  %v1984 = vrot.slane %v1394, 3
  %v1985 = vrot.slane %v1398, 2
  %v1986 = vsel %vm136, %v1985, %v1984
  %v1988 = vmul.f32 %v1983, %v1986
  %v1989 = vtanh.pop %v1969
  %1991 = vrot.lane.b32.xlu0 %v1989, 16
  %v1992 = vpop.permute.xlu0 %1991
  %v1994 = vmul.f32 %v1933, %v1992
  %v1995 = vtanh.pop %v1988
  %1997 = vrot.lane.b32.xlu0 %v1995, 16
  %v1998 = vpop.permute.xlu0 %1997
  %v2000 = vmul.f32 %v1953, %v1998
  %v2001 = vmul.f32 %v2000, %v1986
  %v2002 = vrot.slane %v1420, 4
  %v2003 = vrot.slane %v1424, 3
  %v2004 = vsel %vm136, %v2003, %v2002
  %v2006 = vmul.f32 %v1994, %v2004
  %2008 = vrot.lane.b32.xlu0 %v1994, 96
  %v2009 = vpop.permute.xlu0 %2008
  %2012 = vrot.lane.b32.xlu0 %v2001, 48
  %v2013 = vpop.permute.xlu0 %2012
  %v2015 = vsel %vm264, %v2009, %v2013
  %2017 = vrot.lane.b32.xlu0 %v1969, 112
  %v2018 = vpop.permute.xlu0 %2017
  %2021 = vrot.lane.b32.xlu0 %v1988, 64
  %v2022 = vpop.permute.xlu0 %2021
  %v2024 = vsel %vm264, %v2018, %v2022
  %v2026 = vsel %vm109, %v2015, 0
  %2028 = vmatpush.msra.mxu0 0.0
  %2029 = vmatpush.msra.mxu0 0.0
  %2030 = vmatpush.msra.mxu0 0.0
  %2031 = vmatpush.msra.mxu0 0.0
  %2032 = vmatpush.msra.mxu0 0.0
  %2033 = vmatpush.msra.mxu0 0.0
  %2034 = vmatpush.msra.mxu0 0.0
  %2035 = vmatpush.msra.mxu0 0.0
  %2036 = vmatpush.msra.mxu0 0.0
  %2037 = vmatpush.msra.mxu0 0.0
  %2038 = vmatpush.msra.mxu0 0.0
  %2039 = vmatpush.msra.mxu0 0.0
  %2040 = vmatpush.msra.mxu0 %v90
  %2041 = vmatpush.msra.mxu0 %v89
  %2042 = vmatpush.msra.mxu0 %v88
  %2043 = vmatpush.msra.mxu0 %v87
  %2044 = vmatmul.f32.gmra.mxu0 %v2026
  %v2045 = vpop.f32.mrf.mxu0
  %v2046 = vadd.f32 0.0, %v2045
  %2047 = vdwg.mxu0
  %v2048 = vrot.slane %v92, 5
  %v2049 = vrot.slane %v94, 4
  %v2050 = vsel %vm136, %v2049, %v2048
  %v2052 = vadd.f32 %v2046, %v2050
  %v2053 = vrot.slane %v95, 2
  %v2054 = vrot.slane %v97, 1
  %v2055 = vsel %vm136, %v2054, %v2053
  %2056 = vrot.lane.b32.xlu0 %v2055, 64
  %v2057 = vpop.permute.xlu0 %2056
  %v2059 = vadd.f32 %v2046, %v2057
  %v2060 = vxor.u32 %v2052, 2147483648
  %v2061 = vmul.f32 %v2060, 1.442695
  %v2062 = vpow.pop %v2061
  %v2063 = vadd.f32 %v2062, 1.0
  %v2064 = vrcp.pop %v2063
  %v2065 = vmul.f32 %v2063, %v2064
  %v2066 = vsub.f32 1.0, %v2065
  %v2067 = vmul.f32 %v2064, %v2066
  %v2068 = vadd.f32 %v2064, %v2067
  %vm2069 = vweird.f32 %v2063
  %vm2070 = vweird.f32 %v2064
  %vm2071 = vmor %vm2069, %vm2070
  %v2072 = vsel %vm2071, %v2064, %v2068
  %v2073 = vand.u32 2147483647, %v2063
  %vm2074 = vcmp.eq.f32.partialorder %v2073, 8.507059e+37
  %v2075 = vand.u32 %v2063, 2147483648
  %v2076 = vor.u32 1.1754944e-38, %v2075
  %v2077 = vsel %vm2074, %v2076, %v2072
  %v2078 = vmul.f32 1.0, %v2077
  %v2079 = vtanh.pop %v2052
  %v2080 = vxor.u32 %v2059, 2147483648
  %v2081 = vmul.f32 %v2080, 1.442695
  %v2082 = vpow.pop %v2081
  %v2083 = vadd.f32 %v2082, 1.0
  %v2084 = vrcp.pop %v2083
  %v2085 = vmul.f32 %v2083, %v2084
  %v2086 = vsub.f32 1.0, %v2085
  %v2087 = vmul.f32 %v2084, %v2086
  %v2088 = vadd.f32 %v2084, %v2087
  %vm2089 = vweird.f32 %v2083
  %vm2090 = vweird.f32 %v2084
  %vm2091 = vmor %vm2089, %vm2090
  %v2092 = vsel %vm2091, %v2084, %v2088
  %v2093 = vand.u32 2147483647, %v2083
  %vm2094 = vcmp.eq.f32.partialorder %v2093, 8.507059e+37
  %v2095 = vand.u32 %v2083, 2147483648
  %v2096 = vor.u32 1.1754944e-38, %v2095
  %v2097 = vsel %vm2094, %v2096, %v2092
  %v2098 = vmul.f32 1.0, %v2097
  %v2099 = vtanh.pop %v2059
  %2101 = vrot.lane.b32.xlu0 %v2024, 16
  %v2102 = vpop.permute.xlu0 %2101
  %v2104 = vmul.f32 %v2078, %v2102
  %2106 = vrot.lane.b32.xlu0 %v2079, 80
  %v2107 = vpop.permute.xlu0 %2106
  %v2109 = vmul.f32 %v2078, %v2107
  %2111 = vrot.lane.b32.xlu0 %v2109, 16
  %v2112 = vpop.permute.xlu0 %2111
  %v2114 = vadd.f32 %v2104, %v2112
  %2115 = vrot.lane.b32.xlu0 %v2024, 64
  %v2116 = vpop.permute.xlu0 %2115
  %v2118 = vmul.f32 %v2098, %v2116
  %2120 = vrot.lane.b32.xlu0 %v2099, 80
  %v2121 = vpop.permute.xlu0 %2120
  %v2123 = vmul.f32 %v2098, %v2121
  %2125 = vrot.lane.b32.xlu0 %v2123, 16
  %v2126 = vpop.permute.xlu0 %2125
  %v2128 = vadd.f32 %v2118, %v2126
  %v2129 = vrot.slane %v1394, 2
  %v2130 = vrot.slane %v1398, 1
  %v2131 = vsel %vm136, %v2130, %v2129
  %v2133 = vmul.f32 %v2128, %v2131
  %v2134 = vtanh.pop %v2114
  %2136 = vrot.lane.b32.xlu0 %v2134, 16
  %v2137 = vpop.permute.xlu0 %2136
  %v2139 = vmul.f32 %v2078, %v2137
  %v2140 = vtanh.pop %v2133
  %2142 = vrot.lane.b32.xlu0 %v2140, 16
  %v2143 = vpop.permute.xlu0 %2142
  %v2145 = vmul.f32 %v2098, %v2143
  %v2146 = vmul.f32 %v2145, %v2131
  %v2147 = vrot.slane %v1420, 5
  %v2148 = vrot.slane %v1424, 4
  %v2149 = vsel %vm136, %v2148, %v2147
  %v2151 = vmul.f32 %v2139, %v2149
  %2153 = vrot.lane.b32.xlu0 %v2139, 96
  %v2154 = vpop.permute.xlu0 %2153
  %2157 = vrot.lane.b32.xlu0 %v2146, 48
  %v2158 = vpop.permute.xlu0 %2157
  %v2160 = vsel %vm264, %v2154, %v2158
  %2162 = vrot.lane.b32.xlu0 %v2114, 112
  %v2163 = vpop.permute.xlu0 %2162
  %2166 = vrot.lane.b32.xlu0 %v2133, 64
  %v2167 = vpop.permute.xlu0 %2166
  %v2169 = vsel %vm264, %v2163, %v2167
  %v2171 = vsel %vm109, %v2160, 0
  %2173 = vmatpush.msra.mxu0 0.0
  %2174 = vmatpush.msra.mxu0 0.0
  %2175 = vmatpush.msra.mxu0 0.0
  %2176 = vmatpush.msra.mxu0 0.0
  %2177 = vmatpush.msra.mxu0 0.0
  %2178 = vmatpush.msra.mxu0 0.0
  %2179 = vmatpush.msra.mxu0 0.0
  %2180 = vmatpush.msra.mxu0 0.0
  %2181 = vmatpush.msra.mxu0 0.0
  %2182 = vmatpush.msra.mxu0 0.0
  %2183 = vmatpush.msra.mxu0 0.0
  %2184 = vmatpush.msra.mxu0 0.0
  %2185 = vmatpush.msra.mxu0 %v90
  %2186 = vmatpush.msra.mxu0 %v89
  %2187 = vmatpush.msra.mxu0 %v88
  %2188 = vmatpush.msra.mxu0 %v87
  %2189 = vmatmul.f32.gmra.mxu0 %v2171
  %v2190 = vpop.f32.mrf.mxu0
  %v2191 = vadd.f32 0.0, %v2190
  %2192 = vdwg.mxu0
  %v2193 = vrot.slane %v92, 6
  %v2194 = vrot.slane %v94, 5
  %v2195 = vsel %vm136, %v2194, %v2193
  %v2197 = vadd.f32 %v2191, %v2195
  %v2198 = vrot.slane %v95, 1
  %v2199 = vsel %vm136, %v97, %v2198
  %2200 = vrot.lane.b32.xlu0 %v2199, 64
  %v2201 = vpop.permute.xlu0 %2200
  %v2203 = vadd.f32 %v2191, %v2201
  %v2204 = vxor.u32 %v2197, 2147483648
  %v2205 = vmul.f32 %v2204, 1.442695
  %v2206 = vpow.pop %v2205
  %v2207 = vadd.f32 %v2206, 1.0
  %v2208 = vrcp.pop %v2207
  %v2209 = vmul.f32 %v2207, %v2208
  %v2210 = vsub.f32 1.0, %v2209
  %v2211 = vmul.f32 %v2208, %v2210
  %v2212 = vadd.f32 %v2208, %v2211
  %vm2213 = vweird.f32 %v2207
  %vm2214 = vweird.f32 %v2208
  %vm2215 = vmor %vm2213, %vm2214
  %v2216 = vsel %vm2215, %v2208, %v2212
  %v2217 = vand.u32 2147483647, %v2207
  %vm2218 = vcmp.eq.f32.partialorder %v2217, 8.507059e+37
  %v2219 = vand.u32 %v2207, 2147483648
  %v2220 = vor.u32 1.1754944e-38, %v2219
  %v2221 = vsel %vm2218, %v2220, %v2216
  %v2222 = vmul.f32 1.0, %v2221
  %v2223 = vtanh.pop %v2197
  %v2224 = vxor.u32 %v2203, 2147483648
  %v2225 = vmul.f32 %v2224, 1.442695
  %v2226 = vpow.pop %v2225
  %v2227 = vadd.f32 %v2226, 1.0
  %v2228 = vrcp.pop %v2227
  %v2229 = vmul.f32 %v2227, %v2228
  %v2230 = vsub.f32 1.0, %v2229
  %v2231 = vmul.f32 %v2228, %v2230
  %v2232 = vadd.f32 %v2228, %v2231
  %vm2233 = vweird.f32 %v2227
  %vm2234 = vweird.f32 %v2228
  %vm2235 = vmor %vm2233, %vm2234
  %v2236 = vsel %vm2235, %v2228, %v2232
  %v2237 = vand.u32 2147483647, %v2227
  %vm2238 = vcmp.eq.f32.partialorder %v2237, 8.507059e+37
  %v2239 = vand.u32 %v2227, 2147483648
  %v2240 = vor.u32 1.1754944e-38, %v2239
  %v2241 = vsel %vm2238, %v2240, %v2236
  %v2242 = vmul.f32 1.0, %v2241
  %v2243 = vtanh.pop %v2203
  %2245 = vrot.lane.b32.xlu0 %v2169, 16
  %v2246 = vpop.permute.xlu0 %2245
  %v2248 = vmul.f32 %v2222, %v2246
  %2250 = vrot.lane.b32.xlu0 %v2223, 80
  %v2251 = vpop.permute.xlu0 %2250
  %v2253 = vmul.f32 %v2222, %v2251
  %2255 = vrot.lane.b32.xlu0 %v2253, 16
  %v2256 = vpop.permute.xlu0 %2255
  %v2258 = vadd.f32 %v2248, %v2256
  %2259 = vrot.lane.b32.xlu0 %v2169, 64
  %v2260 = vpop.permute.xlu0 %2259
  %v2262 = vmul.f32 %v2242, %v2260
  %2264 = vrot.lane.b32.xlu0 %v2243, 80
  %v2265 = vpop.permute.xlu0 %2264
  %v2267 = vmul.f32 %v2242, %v2265
  %2269 = vrot.lane.b32.xlu0 %v2267, 16
  %v2270 = vpop.permute.xlu0 %2269
  %v2272 = vadd.f32 %v2262, %v2270
  %v2273 = vrot.slane %v1394, 1
  %v2274 = vsel %vm136, %v1398, %v2273
  %v2276 = vmul.f32 %v2272, %v2274
  %v2277 = vtanh.pop %v2258
  %2279 = vrot.lane.b32.xlu0 %v2277, 16
  %v2280 = vpop.permute.xlu0 %2279
  %v2282 = vmul.f32 %v2222, %v2280
  %v2283 = vtanh.pop %v2276
  %2285 = vrot.lane.b32.xlu0 %v2283, 16
  %v2286 = vpop.permute.xlu0 %2285
  %v2288 = vmul.f32 %v2242, %v2286
  %v2289 = vmul.f32 %v2288, %v2274
  %v2290 = vrot.slane %v1420, 6
  %v2291 = vrot.slane %v1424, 5
  %v2292 = vsel %vm136, %v2291, %v2290
  %v2294 = vmul.f32 %v2282, %v2292
  %2296 = vrot.lane.b32.xlu0 %v2282, 96
  %v2297 = vpop.permute.xlu0 %2296
  %2300 = vrot.lane.b32.xlu0 %v2289, 48
  %v2301 = vpop.permute.xlu0 %2300
  %v2303 = vsel %vm264, %v2297, %v2301
  %2305 = vrot.lane.b32.xlu0 %v2258, 112
  %v2306 = vpop.permute.xlu0 %2305
  %2309 = vrot.lane.b32.xlu0 %v2276, 64
  %v2310 = vpop.permute.xlu0 %2309
  %v2312 = vsel %vm264, %v2306, %v2310
  %v2314 = vsel %vm109, %v2303, 0
  %2316 = vmatpush.msra.mxu0 0.0
  %2317 = vmatpush.msra.mxu0 0.0
  %2318 = vmatpush.msra.mxu0 0.0
  %2319 = vmatpush.msra.mxu0 0.0
  %2320 = vmatpush.msra.mxu0 0.0
  %2321 = vmatpush.msra.mxu0 0.0
  %2322 = vmatpush.msra.mxu0 0.0
  %2323 = vmatpush.msra.mxu0 0.0
  %2324 = vmatpush.msra.mxu0 0.0
  %2325 = vmatpush.msra.mxu0 0.0
  %2326 = vmatpush.msra.mxu0 0.0
  %2327 = vmatpush.msra.mxu0 0.0
  %2328 = vmatpush.msra.mxu0 %v90
  %2329 = vmatpush.msra.mxu0 %v89
  %2330 = vmatpush.msra.mxu0 %v88
  %2331 = vmatpush.msra.mxu0 %v87
  %2332 = vmatmul.f32.gmra.mxu0 %v2314
  %v2333 = vpop.f32.mrf.mxu0
  %v2334 = vadd.f32 0.0, %v2333
  %2335 = vdwg.mxu0
  %v2336 = vrot.slane %v92, 7
  %v2337 = vrot.slane %v94, 6
  %v2338 = vsel %vm136, %v2337, %v2336
  %v2340 = vadd.f32 %v2334, %v2338
  %v2341 = vrot.slane %v97, 7
  %v2342 = vsel %vm136, %v2341, %v95
  %2343 = vrot.lane.b32.xlu0 %v2342, 64
  %v2344 = vpop.permute.xlu0 %2343
  %v2346 = vadd.f32 %v2334, %v2344
  %v2347 = vxor.u32 %v2340, 2147483648
  %v2348 = vmul.f32 %v2347, 1.442695
  %v2349 = vpow.pop %v2348
  %v2350 = vadd.f32 %v2349, 1.0
  %v2351 = vrcp.pop %v2350
  %v2352 = vmul.f32 %v2350, %v2351
  %v2353 = vsub.f32 1.0, %v2352
  %v2354 = vmul.f32 %v2351, %v2353
  %v2355 = vadd.f32 %v2351, %v2354
  %vm2356 = vweird.f32 %v2350
  %vm2357 = vweird.f32 %v2351
  %vm2358 = vmor %vm2356, %vm2357
  %v2359 = vsel %vm2358, %v2351, %v2355
  %v2360 = vand.u32 2147483647, %v2350
  %vm2361 = vcmp.eq.f32.partialorder %v2360, 8.507059e+37
  %v2362 = vand.u32 %v2350, 2147483648
  %v2363 = vor.u32 1.1754944e-38, %v2362
  %v2364 = vsel %vm2361, %v2363, %v2359
  %v2365 = vmul.f32 1.0, %v2364
  %v2366 = vtanh.pop %v2340
  %v2367 = vxor.u32 %v2346, 2147483648
  %v2368 = vmul.f32 %v2367, 1.442695
  %v2369 = vpow.pop %v2368
  %v2370 = vadd.f32 %v2369, 1.0
  %v2371 = vrcp.pop %v2370
  %v2372 = vmul.f32 %v2370, %v2371
  %v2373 = vsub.f32 1.0, %v2372
  %v2374 = vmul.f32 %v2371, %v2373
  %v2375 = vadd.f32 %v2371, %v2374
  %vm2376 = vweird.f32 %v2370
  %vm2377 = vweird.f32 %v2371
  %vm2378 = vmor %vm2376, %vm2377
  %v2379 = vsel %vm2378, %v2371, %v2375
  %v2380 = vand.u32 2147483647, %v2370
  %vm2381 = vcmp.eq.f32.partialorder %v2380, 8.507059e+37
  %v2382 = vand.u32 %v2370, 2147483648
  %v2383 = vor.u32 1.1754944e-38, %v2382
  %v2384 = vsel %vm2381, %v2383, %v2379
  %v2385 = vmul.f32 1.0, %v2384
  %v2386 = vtanh.pop %v2346
  %2388 = vrot.lane.b32.xlu0 %v2312, 16
  %v2389 = vpop.permute.xlu0 %2388
  %v2391 = vmul.f32 %v2365, %v2389
  %2393 = vrot.lane.b32.xlu0 %v2366, 80
  %v2394 = vpop.permute.xlu0 %2393
  %v2396 = vmul.f32 %v2365, %v2394
  %2398 = vrot.lane.b32.xlu0 %v2396, 16
  %v2399 = vpop.permute.xlu0 %2398
  %v2401 = vadd.f32 %v2391, %v2399
  %2402 = vrot.lane.b32.xlu0 %v2312, 64
  %v2403 = vpop.permute.xlu0 %2402
  %v2405 = vmul.f32 %v2385, %v2403
  %2407 = vrot.lane.b32.xlu0 %v2386, 80
  %v2408 = vpop.permute.xlu0 %2407
  %v2410 = vmul.f32 %v2385, %v2408
  %2412 = vrot.lane.b32.xlu0 %v2410, 16
  %v2413 = vpop.permute.xlu0 %2412
  %v2415 = vadd.f32 %v2405, %v2413
  %v2416 = vrot.slane %v1398, 7
  %v2417 = vsel %vm136, %v2416, %v1394
  %v2419 = vmul.f32 %v2415, %v2417
  %v2420 = vtanh.pop %v2401
  %2422 = vrot.lane.b32.xlu0 %v2420, 16
  %v2423 = vpop.permute.xlu0 %2422
  %v2425 = vmul.f32 %v2365, %v2423
  %v2426 = vtanh.pop %v2419
  %2428 = vrot.lane.b32.xlu0 %v2426, 16
  %v2429 = vpop.permute.xlu0 %2428
  %v2431 = vmul.f32 %v2385, %v2429
  %v2432 = vmul.f32 %v2431, %v2417
  %v2433 = vrot.slane %v1420, 7
  %v2434 = vrot.slane %v1424, 6
  %v2435 = vsel %vm136, %v2434, %v2433
  %v2437 = vmul.f32 %v2425, %v2435
  %2439 = vrot.lane.b32.xlu0 %v2425, 96
  %v2440 = vpop.permute.xlu0 %2439
  %2443 = vrot.lane.b32.xlu0 %v2432, 48
  %v2444 = vpop.permute.xlu0 %2443
  %v2446 = vsel %vm264, %v2440, %v2444
  %2448 = vrot.lane.b32.xlu0 %v2401, 112
  %v2449 = vpop.permute.xlu0 %2448
  %2452 = vrot.lane.b32.xlu0 %v2419, 64
  %v2453 = vpop.permute.xlu0 %2452
  %v2455 = vsel %vm264, %v2449, %v2453
  %vm2456 = vcmask 254976
  %2457 = vst.msk [vmem:[#allocation2] sm:$0x3] %vm2456, %v2446
  %2458 = vst.msk [vmem:[#allocation3] sm:$0x3] %vm2456, %v2455
  %2460 = vrot.lane.b32.xlu0 %v255, 96
  %v2461 = vpop.permute.xlu0 %2460
  %2464 = vrot.lane.b32.xlu0 %v399, 112
  %v2465 = vpop.permute.xlu0 %2464
  %2468 = vrot.lane.b32.xlu0 %v689, 16
  %v2469 = vpop.permute.xlu0 %2468
  %2472 = vrot.lane.b32.xlu0 %v834, 32
  %v2473 = vpop.permute.xlu0 %2472
  %2476 = vrot.lane.b32.xlu0 %v979, 48
  %v2477 = vpop.permute.xlu0 %2476
  %2480 = vrot.lane.b32.xlu0 %v1122, 64
  %v2481 = vpop.permute.xlu0 %2480
  %2484 = vrot.lane.b32.xlu0 %v1265, 80
  %v2485 = vpop.permute.xlu0 %2484
  %2488 = vrot.lane.b32.xlu0 %v1428, 96
  %v2489 = vpop.permute.xlu0 %2488
  %2492 = vrot.lane.b32.xlu0 %v1571, 112
  %v2493 = vpop.permute.xlu0 %2492
  %2496 = vrot.lane.b32.xlu0 %v1861, 16
  %v2497 = vpop.permute.xlu0 %2496
  %2500 = vrot.lane.b32.xlu0 %v2006, 32
  %v2501 = vpop.permute.xlu0 %2500
  %2504 = vrot.lane.b32.xlu0 %v2151, 48
  %v2505 = vpop.permute.xlu0 %2504
  %2508 = vrot.lane.b32.xlu0 %v2294, 64
  %v2509 = vpop.permute.xlu0 %2508
  %2512 = vrot.lane.b32.xlu0 %v2437, 80
  %v2513 = vpop.permute.xlu0 %2512
  %v2515 = vsel %vm264, %v2461, %v2465
  %v2516 = vsel %vm109, %v2515, %v544
  %vm2517 = vcmask 392192
  %v2518 = vsel %vm2517, %v2516, %v2469
  %vm2519 = vcmask 523264
  %v2520 = vsel %vm2519, %v2518, %v2473
  %vm2521 = vcmask 654336
  %v2522 = vsel %vm2521, %v2520, %v2477
  %vm2523 = vcmask 785408
  %v2524 = vsel %vm2523, %v2522, %v2481
  %vm2525 = vcmask 916480
  %v2526 = vsel %vm2525, %v2524, %v2485
  %v2527 = vsel %vm264, %v2489, %v2493
  %v2528 = vsel %vm109, %v2527, %v1716
  %v2529 = vsel %vm2517, %v2528, %v2497
  %v2530 = vsel %vm2519, %v2529, %v2501
  %v2531 = vsel %vm2521, %v2530, %v2505
  %v2532 = vsel %vm2523, %v2531, %v2509
  %v2533 = vsel %vm2525, %v2532, %v2513
  %v2536 = vrot.slane %v2533, 6
  %vm2537 = vcmask 1041408
  %v2538 = vsel %vm2537, %v2526, %v2536
  %2540 = vst [vmem:[%s5] sm:$0xf] %v2538
  %2541 = vrot.lane.b32.xlu0 %v2432, 32
  %v2542 = vpop.permute.xlu0 %2541
  %2544 = vrot.lane.b32.xlu0 %v2146, 64
  %v2545 = vpop.permute.xlu0 %2544
  %2547 = vrot.lane.b32.xlu0 %v2001, 80
  %v2548 = vpop.permute.xlu0 %2547
  %2550 = vrot.lane.b32.xlu0 %v1856, 96
  %v2551 = vpop.permute.xlu0 %2550
  %2553 = vrot.lane.b32.xlu0 %v1711, 112
  %v2554 = vpop.permute.xlu0 %2553
  %2556 = vrot.lane.b32.xlu0 %v1416, 16
  %v2557 = vpop.permute.xlu0 %2556
  %2559 = vrot.lane.b32.xlu0 %v1260, 32
  %v2560 = vpop.permute.xlu0 %2559
  %2562 = vrot.lane.b32.xlu0 %v974, 64
  %v2563 = vpop.permute.xlu0 %2562
  %2565 = vrot.lane.b32.xlu0 %v829, 80
  %v2566 = vpop.permute.xlu0 %2565
  %2568 = vrot.lane.b32.xlu0 %v684, 96
  %v2569 = vpop.permute.xlu0 %2568
  %2571 = vrot.lane.b32.xlu0 %v539, 112
  %v2572 = vpop.permute.xlu0 %2571
  %2574 = vrot.lane.b32.xlu0 %v243, 16
  %v2575 = vpop.permute.xlu0 %2574
  %v2577 = vsel %vm264, %v2542, %v2301
  %v2578 = vsel %vm109, %v2577, %v2545
  %v2579 = vsel %vm2517, %v2578, %v2548
  %v2580 = vsel %vm2519, %v2579, %v2551
  %v2581 = vsel %vm2521, %v2580, %v2554
  %v2582 = vsel %vm2523, %v2581, %v1567
  %v2583 = vsel %vm2525, %v2582, %v2557
  %v2584 = vsel %vm264, %v2560, %v1129
  %v2585 = vsel %vm109, %v2584, %v2563
  %v2586 = vsel %vm2517, %v2585, %v2566
  %v2587 = vsel %vm2519, %v2586, %v2569
  %v2588 = vsel %vm2521, %v2587, %v2572
  %v2589 = vsel %vm2523, %v2588, %v395
  %v2590 = vsel %vm2525, %v2589, %v2575
  %v2593 = vrot.slane %v2590, 6
  %v2594 = vsel %vm2537, %v2583, %v2593
  %2596 = vst [vmem:[%s77] sm:$0xf] %v2594
  %s2597 = ssub.s32 0, 0
  %s2598 = smul.u32 2, %s2597
  %p2599 = scmp.lt.s32.totalorder %s2598, 1
  %s2600 = scalar_select %p2599, %s2598, 1
  %s2601 = smul.addr %s2600, 2
  %s2602 = scalar_lea.vmem %s6, %s2601
  // Predicated region
  $region26: #{bidaf_forward.15} parent=0 // pred_check
    _
  $region27: #{bidaf_forward.15} parent=0 // pred_check_branch
    %2604 = sbr.rel (0) target = $region29
  $region28: #{bidaf_forward.15} parent=0 // pred_region
    _
  $region29: #{bidaf_forward.15} parent=0 // pred_fallthru
    _
  // Predicated region
  $region30: #{bidaf_forward.15} parent=0 // pred_check
    _
  $region31: #{bidaf_forward.15} parent=0 // pred_check_branch
    %2606 = sbr.rel (0) target = $region33
  $region32: #{bidaf_forward.15} parent=0 // pred_region
    %s2607 = ssub.s32 0, 0
    %s2608 = smul.u32 2, %s2607
  $region33: #{bidaf_forward.15} parent=0 // pred_fallthru
    _
  // Predicated region
  $region34: #{bidaf_forward.15} parent=0 // pred_check
    _
  $region35: #{bidaf_forward.15} parent=0 // pred_check_branch
    %2610 = sbr.rel (0) target = $region37
  $region36: #{bidaf_forward.15} parent=0 // pred_region
    _
  $region37: #{bidaf_forward.15} parent=0 // pred_fallthru
    _
  // Predicated region
  $region38: #{bidaf_forward.15} parent=0 // pred_check
    _
  $region39: #{bidaf_forward.15} parent=0 // pred_check_branch
    %2612 = sbr.rel (0) target = $region41
  $region40: #{bidaf_forward.15} parent=0 // pred_region
    %s2613 = ssub.s32 0, 0
    %s2614 = smul.u32 2, %s2613
    %p2615 = scmp.lt.s32.totalorder %s2614, 1
    %s2616 = scalar_select %p2615, %s2614, 1
    %s2617 = smul.addr %s2616, 2
    %s2618 = scalar_lea.vmem %s6, %s2617
  $region41: #{bidaf_forward.15} parent=0 // pred_fallthru
    _

// kernel: bidaf_forward.22
$region0: #{bidaf_forward.22}
  #allocation0 [shape = 'u32[]', space=smem, size = 0x4, offset = 0x4, fixed_abs, tag = 'smem constant byte address 0x4 - core index']
  #allocation1 [shape = 'u32[72,128]{1,0:T(1,128)}', space=vmem, size = 0x9000, scoped, tag = 'internal scratch']
  %s0 = inlined_call_operand.vmem [shape: f32[32,32], index: 0, kind: input, shape index: {}]
  %s1 = inlined_call_operand.vmem [shape: f32[32,128], index: 1, kind: input, shape index: {}]
  %s2 = inlined_call_operand.vmem [shape: f32[1,128], index: 2, kind: input, shape index: {}]
  %s3 = inlined_call_operand.vmem [shape: f32[32,64], index: 3, kind: output, shape index: {0}]
  %s4 = inlined_call_operand.vmem [shape: f32[32,64], index: 4, kind: output, shape index: {1}]
  %5 = xla_tuple %s3, %s4
  %s6 = sld [smem:[#allocation0]]
  $region30: #{bidaf_forward.22} parent=0
    _
  %s8 = ssub.s32 1, %s6
  %s9 = scalar_select 0, %s8, %s6
  // Predicated region
  $region2: #{bidaf_forward.22} parent=0 // pred_check
    _
  $region3: #{bidaf_forward.22} parent=0 // pred_check_branch
    %11 = sbr.rel (0) target = $region5
  $region4: #{bidaf_forward.22} parent=0 // pred_region
    _
  $region5: #{bidaf_forward.22} parent=0 // pred_fallthru
    _
  // Predicated region
  $region6: #{bidaf_forward.22} parent=0 // pred_check
    _
  $region7: #{bidaf_forward.22} parent=0 // pred_check_branch
    %13 = sbr.rel (0) target = $region9
  $region8: #{bidaf_forward.22} parent=0 // pred_region
    _
  $region9: #{bidaf_forward.22} parent=0 // pred_fallthru
    _
  // Predicated region
  $region10: #{bidaf_forward.22} parent=0 // pred_check
    _
  $region11: #{bidaf_forward.22} parent=0 // pred_check_branch
    %15 = sbr.rel (0) target = $region13
  $region12: #{bidaf_forward.22} parent=0 // pred_region
    _
  $region13: #{bidaf_forward.22} parent=0 // pred_fallthru
    _
  %v17 = vld [vmem:[%s0] sm:$0xff]
  %v18 = vld [vmem:[%s0 + $0x8] sm:$0xff]
  %v19 = vld [vmem:[%s0 + $0x10] sm:$0xff]
  %v20 = vld [vmem:[%s0 + $0x18] sm:$0xff]
  %v21 = vpack.c.bf16 %v18, %v17
  %v22 = vpack.c.bf16 %v20, %v19
  %v23 = vld [vmem:[%s1] sm:$0xff]
  %v24 = vld [vmem:[%s1 + $0x8] sm:$0xff]
  %v25 = vld [vmem:[%s1 + $0x10] sm:$0xff]
  %v26 = vld [vmem:[%s1 + $0x18] sm:$0xff]
  %v27 = vpack.c.bf16 %v24, %v23
  %v28 = vpack.c.bf16 %v26, %v25
  %v29 = vld [vmem:[%s2] sm:$0x1]
  %v31 = vperm.slane %v29, 0
  %vm33 = vcmask 261120
  %v35 = vsel %vm33, %v21, 0
  %v38 = vsel %vm33, %v22, 0
  %40 = vmatpush.bf16.msra.mxu0 0
  %41 = vmatpush.bf16.msra.mxu0 0
  %42 = vmatpush.bf16.msra.mxu0 0
  %43 = vmatpush.bf16.msra.mxu0 0
  %44 = vmatpush.bf16.msra.mxu0 0
  %45 = vmatpush.bf16.msra.mxu0 0
  %46 = vmatpush.bf16.msra.mxu0 %v28
  %47 = vmatpush.bf16.msra.mxu0 %v27
  %48 = vmatmul.bf16.gmra.mxu0 %v35
  %v49 = vpop.f32.mrf.mxu0
  %v50 = vadd.f32 %v31, %v49
  %v51 = vpop.f32.mrf.mxu0
  %v52 = vadd.f32 %v31, %v51
  %53 = vmatmul.bf16.gmra.mxu0 %v38
  %v54 = vpop.f32.mrf.mxu0
  %v55 = vadd.f32 %v31, %v54
  %v56 = vpop.f32.mrf.mxu0
  %v57 = vadd.f32 %v31, %v56
  %58 = vdwg.mxu0
  %vm59 = vcmask 523264
  %60 = vst.msk [vmem:[%s3] sm:$0xff] %vm59, %v50
  %61 = vst.msk [vmem:[%s3 + $0x8] sm:$0xff] %vm59, %v52
  %62 = vst.msk [vmem:[%s3 + $0x10] sm:$0xff] %vm59, %v55
  %63 = vst.msk [vmem:[%s3 + $0x18] sm:$0xff] %vm59, %v57
  %68 = vrot.lane.b32.xlu0 %v50, 64
  %v69 = vpop.permute.xlu0 %68
  %70 = vrot.lane.b32.xlu0 %v52, 64
  %v71 = vpop.permute.xlu0 %70
  %72 = vrot.lane.b32.xlu0 %v55, 64
  %v73 = vpop.permute.xlu0 %72
  %74 = vrot.lane.b32.xlu0 %v57, 64
  %v75 = vpop.permute.xlu0 %74
  %80 = vst.msk [vmem:[%s4] sm:$0xff] %vm59, %v69
  %81 = vst.msk [vmem:[%s4 + $0x8] sm:$0xff] %vm59, %v71
  %82 = vst.msk [vmem:[%s4 + $0x10] sm:$0xff] %vm59, %v73
  %83 = vst.msk [vmem:[%s4 + $0x18] sm:$0xff] %vm59, %v75
  // Predicated region
  $region14: #{bidaf_forward.22} parent=0 // pred_check
    _
  $region15: #{bidaf_forward.22} parent=0 // pred_check_branch
    %85 = sbr.rel (0) target = $region17
  $region16: #{bidaf_forward.22} parent=0 // pred_region
    _
  $region17: #{bidaf_forward.22} parent=0 // pred_fallthru
    _
  // Predicated region
  $region18: #{bidaf_forward.22} parent=0 // pred_check
    _
  $region19: #{bidaf_forward.22} parent=0 // pred_check_branch
    %87 = sbr.rel (0) target = $region21
  $region20: #{bidaf_forward.22} parent=0 // pred_region
    _
  $region21: #{bidaf_forward.22} parent=0 // pred_fallthru
    _
  // Predicated region
  $region22: #{bidaf_forward.22} parent=0 // pred_check
    _
  $region23: #{bidaf_forward.22} parent=0 // pred_check_branch
    %89 = sbr.rel (0) target = $region25
  $region24: #{bidaf_forward.22} parent=0 // pred_region
    _
  $region25: #{bidaf_forward.22} parent=0 // pred_fallthru
    _
  // Predicated region
  $region26: #{bidaf_forward.22} parent=0 // pred_check
    _
  $region27: #{bidaf_forward.22} parent=0 // pred_check_branch
    %91 = sbr.rel (0) target = $region29
  $region28: #{bidaf_forward.22} parent=0 // pred_region
    _
  $region29: #{bidaf_forward.22} parent=0 // pred_fallthru
    _

// kernel: bidaf_forward.26
$region0: #{bidaf_forward.26}
  #allocation0 [shape = 'u32[]', space=smem, size = 0x4, offset = 0x4, fixed_abs, tag = 'smem constant byte address 0x4 - core index']
  #allocation1 [shape = 'u32[72,128]{1,0:T(1,128)}', space=vmem, size = 0x9000, scoped, tag = 'internal scratch']
  %s0 = inlined_call_operand.vmem [shape: f32[2,16,128], index: 0, kind: input, shape index: {}]
  %s1 = inlined_call_operand.vmem [shape: f32[2,16,32], index: 1, kind: input, shape index: {}]
  %s2 = inlined_call_operand.vmem [shape: f32[2,16,32], index: 2, kind: input, shape index: {}]
  %s3 = inlined_call_operand.vmem [shape: f32[128,2], index: 3, kind: input, shape index: {}]
  %s4 = inlined_call_operand.vmem [shape: f32[32,2], index: 4, kind: input, shape index: {}]
  %s5 = inlined_call_operand.vmem [shape: f32[1,2], index: 5, kind: input, shape index: {}]
  %s6 = inlined_call_operand.vmem [shape: f32[2,16,1], index: 6, kind: input, shape index: {}]
  %s7 = inlined_call_operand.vmem [shape: f32[2,16,2], index: 7, kind: output, shape index: {}]
  %s8 = sld [smem:[#allocation0]]
  $region38: #{bidaf_forward.26} parent=0
    _
  %s10 = ssub.s32 1, %s8
  %s11 = scalar_select 0, %s10, %s8
  // Predicated region
  $region2: #{bidaf_forward.26} parent=0 // pred_check
    _
  $region3: #{bidaf_forward.26} parent=0 // pred_check_branch
    %13 = sbr.rel (0) target = $region5
  $region4: #{bidaf_forward.26} parent=0 // pred_region
    _
  $region5: #{bidaf_forward.26} parent=0 // pred_fallthru
    _
  // Predicated region
  $region6: #{bidaf_forward.26} parent=0 // pred_check
    _
  $region7: #{bidaf_forward.26} parent=0 // pred_check_branch
    %15 = sbr.rel (0) target = $region9
  $region8: #{bidaf_forward.26} parent=0 // pred_region
    _
  $region9: #{bidaf_forward.26} parent=0 // pred_fallthru
    _
  // Predicated region
  $region10: #{bidaf_forward.26} parent=0 // pred_check
    _
  $region11: #{bidaf_forward.26} parent=0 // pred_check_branch
    %17 = sbr.rel (0) target = $region13
  $region12: #{bidaf_forward.26} parent=0 // pred_region
    _
  $region13: #{bidaf_forward.26} parent=0 // pred_fallthru
    _
  // Predicated region
  $region14: #{bidaf_forward.26} parent=0 // pred_check
    _
  $region15: #{bidaf_forward.26} parent=0 // pred_check_branch
    %19 = sbr.rel (0) target = $region17
  $region16: #{bidaf_forward.26} parent=0 // pred_region
    _
  $region17: #{bidaf_forward.26} parent=0 // pred_fallthru
    _
  // Predicated region
  $region18: #{bidaf_forward.26} parent=0 // pred_check
    _
  $region19: #{bidaf_forward.26} parent=0 // pred_check_branch
    %21 = sbr.rel (0) target = $region21
  $region20: #{bidaf_forward.26} parent=0 // pred_region
    _
  $region21: #{bidaf_forward.26} parent=0 // pred_fallthru
    _
  // Predicated region
  $region22: #{bidaf_forward.26} parent=0 // pred_check
    _
  $region23: #{bidaf_forward.26} parent=0 // pred_check_branch
    %23 = sbr.rel (0) target = $region25
  $region24: #{bidaf_forward.26} parent=0 // pred_region
    _
  $region25: #{bidaf_forward.26} parent=0 // pred_fallthru
    _
  // Predicated region
  $region26: #{bidaf_forward.26} parent=0 // pred_check
    _
  $region27: #{bidaf_forward.26} parent=0 // pred_check_branch
    %25 = sbr.rel (0) target = $region29
  $region28: #{bidaf_forward.26} parent=0 // pred_region
    _
  $region29: #{bidaf_forward.26} parent=0 // pred_fallthru
    _
  %v26 = vld [vmem:[%s0] sm:$0xff]
  %v27 = vld [vmem:[%s0 + $0x8] sm:$0xff]
  %v28 = vld [vmem:[%s0 + $0x10] sm:$0xff]
  %v29 = vld [vmem:[%s0 + $0x18] sm:$0xff]
  %v30 = vld [vmem:[%s1] sm:$0xff]
  %v31 = vld [vmem:[%s1 + $0x8] sm:$0xff]
  %v32 = vld [vmem:[%s1 + $0x10] sm:$0xff]
  %v33 = vld [vmem:[%s1 + $0x18] sm:$0xff]
  %v34 = vld [vmem:[%s2] sm:$0xff]
  %v35 = vld [vmem:[%s2 + $0x8] sm:$0xff]
  %v36 = vld [vmem:[%s2 + $0x10] sm:$0xff]
  %v37 = vld [vmem:[%s2 + $0x18] sm:$0xff]
  %v38 = vld [vmem:[%s3] sm:$0xff]
  %v39 = vld [vmem:[%s3 + $0x8] sm:$0xff]
  %v40 = vld [vmem:[%s3 + $0x10] sm:$0xff]
  %v41 = vld [vmem:[%s3 + $0x18] sm:$0xff]
  %v42 = vld [vmem:[%s3 + $0x20] sm:$0xff]
  %v43 = vld [vmem:[%s3 + $0x28] sm:$0xff]
  %v44 = vld [vmem:[%s3 + $0x30] sm:$0xff]
  %v45 = vld [vmem:[%s3 + $0x38] sm:$0xff]
  %v46 = vld [vmem:[%s3 + $0x40] sm:$0xff]
  %v47 = vld [vmem:[%s3 + $0x48] sm:$0xff]
  %v48 = vld [vmem:[%s3 + $0x50] sm:$0xff]
  %v49 = vld [vmem:[%s3 + $0x58] sm:$0xff]
  %v50 = vld [vmem:[%s3 + $0x60] sm:$0xff]
  %v51 = vld [vmem:[%s3 + $0x68] sm:$0xff]
  %v52 = vld [vmem:[%s3 + $0x70] sm:$0xff]
  %v53 = vld [vmem:[%s3 + $0x78] sm:$0xff]
  %v54 = vld [vmem:[%s4] sm:$0xff]
  %v55 = vld [vmem:[%s4 + $0x8] sm:$0xff]
  %v56 = vld [vmem:[%s4 + $0x10] sm:$0xff]
  %v57 = vld [vmem:[%s4 + $0x18] sm:$0xff]
  %vm58 = vcmask 261120
  %v60 = vsel %vm58, %v30, 0
  %v63 = vsel %vm58, %v31, 0
  %65 = vmatpush.msra.mxu0 0.0
  %66 = vmatpush.msra.mxu0 0.0
  %67 = vmatpush.msra.mxu0 0.0
  %68 = vmatpush.msra.mxu0 0.0
  %69 = vmatpush.msra.mxu0 0.0
  %70 = vmatpush.msra.mxu0 0.0
  %71 = vmatpush.msra.mxu0 0.0
  %72 = vmatpush.msra.mxu0 0.0
  %73 = vmatpush.msra.mxu0 0.0
  %74 = vmatpush.msra.mxu0 0.0
  %75 = vmatpush.msra.mxu0 0.0
  %76 = vmatpush.msra.mxu0 0.0
  %77 = vmatpush.msra.mxu0 %v57
  %78 = vmatpush.msra.mxu0 %v56
  %79 = vmatpush.msra.mxu0 %v55
  %80 = vmatpush.msra.mxu0 %v54
  %81 = vmatmul.f32.gmra.mxu0 %v60
  %v82 = vpop.f32.mrf.mxu0
  %v83 = vadd.f32 0.0, %v82
  %84 = vmatmul.f32.gmra.mxu0 %v63
  %v85 = vpop.f32.mrf.mxu0
  %v86 = vadd.f32 0.0, %v85
  %87 = vdwg.mxu0
  %v89 = vsel %vm58, %v32, 0
  %v92 = vsel %vm58, %v33, 0
  %94 = vmatpush.msra.mxu0 0.0
  %95 = vmatpush.msra.mxu0 0.0
  %96 = vmatpush.msra.mxu0 0.0
  %97 = vmatpush.msra.mxu0 0.0
  %98 = vmatpush.msra.mxu0 0.0
  %99 = vmatpush.msra.mxu0 0.0
  %100 = vmatpush.msra.mxu0 0.0
  %101 = vmatpush.msra.mxu0 0.0
  %102 = vmatpush.msra.mxu0 0.0
  %103 = vmatpush.msra.mxu0 0.0
  %104 = vmatpush.msra.mxu0 0.0
  %105 = vmatpush.msra.mxu0 0.0
  %106 = vmatpush.msra.mxu0 %v57
  %107 = vmatpush.msra.mxu0 %v56
  %108 = vmatpush.msra.mxu0 %v55
  %109 = vmatpush.msra.mxu0 %v54
  %110 = vmatmul.f32.gmra.mxu0 %v89
  %v111 = vpop.f32.mrf.mxu0
  %v112 = vadd.f32 0.0, %v111
  %113 = vmatmul.f32.gmra.mxu0 %v92
  %v114 = vpop.f32.mrf.mxu0
  %v115 = vadd.f32 0.0, %v114
  %116 = vdwg.mxu0
  %v118 = vsel %vm58, %v34, 0
  %v121 = vsel %vm58, %v35, 0
  %123 = vmatpush.msra.mxu0 0.0
  %124 = vmatpush.msra.mxu0 0.0
  %125 = vmatpush.msra.mxu0 0.0
  %126 = vmatpush.msra.mxu0 0.0
  %127 = vmatpush.msra.mxu0 0.0
  %128 = vmatpush.msra.mxu0 0.0
  %129 = vmatpush.msra.mxu0 0.0
  %130 = vmatpush.msra.mxu0 0.0
  %131 = vmatpush.msra.mxu0 0.0
  %132 = vmatpush.msra.mxu0 0.0
  %133 = vmatpush.msra.mxu0 0.0
  %134 = vmatpush.msra.mxu0 0.0
  %135 = vmatpush.msra.mxu0 %v57
  %136 = vmatpush.msra.mxu0 %v56
  %137 = vmatpush.msra.mxu0 %v55
  %138 = vmatpush.msra.mxu0 %v54
  %139 = vmatmul.f32.gmra.mxu0 %v118
  %v140 = vpop.f32.mrf.mxu0
  %v141 = vadd.f32 0.0, %v140
  %142 = vmatmul.f32.gmra.mxu0 %v121
  %v143 = vpop.f32.mrf.mxu0
  %v144 = vadd.f32 0.0, %v143
  %145 = vdwg.mxu0
  %v147 = vsel %vm58, %v36, 0
  %v150 = vsel %vm58, %v37, 0
  %152 = vmatpush.msra.mxu0 0.0
  %153 = vmatpush.msra.mxu0 0.0
  %154 = vmatpush.msra.mxu0 0.0
  %155 = vmatpush.msra.mxu0 0.0
  %156 = vmatpush.msra.mxu0 0.0
  %157 = vmatpush.msra.mxu0 0.0
  %158 = vmatpush.msra.mxu0 0.0
  %159 = vmatpush.msra.mxu0 0.0
  %160 = vmatpush.msra.mxu0 0.0
  %161 = vmatpush.msra.mxu0 0.0
  %162 = vmatpush.msra.mxu0 0.0
  %163 = vmatpush.msra.mxu0 0.0
  %164 = vmatpush.msra.mxu0 %v57
  %165 = vmatpush.msra.mxu0 %v56
  %166 = vmatpush.msra.mxu0 %v55
  %167 = vmatpush.msra.mxu0 %v54
  %168 = vmatmul.f32.gmra.mxu0 %v147
  %v169 = vpop.f32.mrf.mxu0
  %v170 = vadd.f32 0.0, %v169
  %171 = vmatmul.f32.gmra.mxu0 %v150
  %v172 = vpop.f32.mrf.mxu0
  %v173 = vadd.f32 0.0, %v172
  %174 = vdwg.mxu0
  %vm175 = vcmask 7168
  %v176 = vsel %vm175, %v83, %v141
  %v177 = vsel %vm175, %v86, %v144
  %v178 = vsel %vm175, %v112, %v170
  %v179 = vsel %vm175, %v115, %v173
  %180 = vmatpush.msra.mxu0 %v53
  %181 = vmatpush.msra.mxu0 %v52
  %182 = vmatpush.msra.mxu0 %v51
  %183 = vmatpush.msra.mxu0 %v50
  %184 = vmatpush.msra.mxu0 %v49
  %185 = vmatpush.msra.mxu0 %v48
  %186 = vmatpush.msra.mxu0 %v47
  %187 = vmatpush.msra.mxu0 %v46
  %188 = vmatpush.msra.mxu0 %v45
  %189 = vmatpush.msra.mxu0 %v44
  %190 = vmatpush.msra.mxu0 %v43
  %191 = vmatpush.msra.mxu0 %v42
  %192 = vmatpush.msra.mxu0 %v41
  %193 = vmatpush.msra.mxu0 %v40
  %194 = vmatpush.msra.mxu0 %v39
  %195 = vmatpush.msra.mxu0 %v38
  %196 = vmatmul.f32.gmra.mxu0 %v26
  %v197 = vpop.f32.mrf.mxu0
  %v198 = vadd.f32 %v176, %v197
  %199 = vmatmul.f32.gmra.mxu0 %v27
  %v200 = vpop.f32.mrf.mxu0
  %v201 = vadd.f32 %v177, %v200
  %202 = vdwg.mxu0
  %203 = vmatpush.msra.mxu0 %v53
  %204 = vmatpush.msra.mxu0 %v52
  %205 = vmatpush.msra.mxu0 %v51
  %206 = vmatpush.msra.mxu0 %v50
  %207 = vmatpush.msra.mxu0 %v49
  %208 = vmatpush.msra.mxu0 %v48
  %209 = vmatpush.msra.mxu0 %v47
  %210 = vmatpush.msra.mxu0 %v46
  %211 = vmatpush.msra.mxu0 %v45
  %212 = vmatpush.msra.mxu0 %v44
  %213 = vmatpush.msra.mxu0 %v43
  %214 = vmatpush.msra.mxu0 %v42
  %215 = vmatpush.msra.mxu0 %v41
  %216 = vmatpush.msra.mxu0 %v40
  %217 = vmatpush.msra.mxu0 %v39
  %218 = vmatpush.msra.mxu0 %v38
  %219 = vmatmul.f32.gmra.mxu0 %v28
  %v220 = vpop.f32.mrf.mxu0
  %v221 = vadd.f32 %v178, %v220
  %222 = vmatmul.f32.gmra.mxu0 %v29
  %v223 = vpop.f32.mrf.mxu0
  %v224 = vadd.f32 %v179, %v223
  %225 = vdwg.mxu0
  %v226 = vld [vmem:[%s5] sm:$0x1]
  %v228 = vperm.slane %v226, 0
  %v230 = vadd.f32 %v198, %v228
  %v231 = vadd.f32 %v201, %v228
  %v232 = vadd.f32 %v221, %v228
  %v233 = vadd.f32 %v224, %v228
  %v234 = vld [vmem:[%s6] sm:$0xff]
  %v235 = vld [vmem:[%s6 + $0x8] sm:$0xff]
  %v236 = vld [vmem:[%s6 + $0x10] sm:$0xff]
  %v237 = vld [vmem:[%s6 + $0x18] sm:$0xff]
  %vm238 = vcmp.gt.f32.partialorder %v234, 0.0
  %vm239 = vcmp.gt.f32.partialorder %v235, 0.0
  %vm240 = vcmp.gt.f32.partialorder %v236, 0.0
  %vm241 = vcmp.gt.f32.partialorder %v237, 0.0
  %v242 = vsel %vm238, 1, 0
  %v243 = vsel %vm239, 1, 0
  %v244 = vsel %vm240, 1, 0
  %v245 = vsel %vm241, 1, 0
  %246 = vset.pattern.permute.xlu0 0
  %247 = vperm.xlu0 %246, %v242
  %v248 = vpop.permute.xlu0 %247
  %249 = vset.pattern.permute.xlu0 0
  %250 = vperm.xlu0 %249, %v243
  %v251 = vpop.permute.xlu0 %250
  %252 = vset.pattern.permute.xlu0 0
  %253 = vperm.xlu0 %252, %v244
  %v254 = vpop.permute.xlu0 %253
  %255 = vset.pattern.permute.xlu0 0
  %256 = vperm.xlu0 %255, %v245
  %v257 = vpop.permute.xlu0 %256
  %vm258 = vcmp.eq.s32.totalorder %v248, 1
  %vm259 = vcmp.eq.s32.totalorder %v251, 1
  %vm260 = vcmp.eq.s32.totalorder %v254, 1
  %vm261 = vcmp.eq.s32.totalorder %v257, 1
  %v262 = vsel %vm258, %v230, -1e+30
  %v263 = vsel %vm259, %v231, -1e+30
  %v264 = vsel %vm260, %v232, -1e+30
  %v265 = vsel %vm261, %v233, -1e+30
  %vm266 = vcmask 15360
  %267 = vst.msk [vmem:[%s7] sm:$0xff] %vm266, %v262
  %268 = vst.msk [vmem:[%s7 + $0x8] sm:$0xff] %vm266, %v263
  %269 = vst.msk [vmem:[%s7 + $0x10] sm:$0xff] %vm266, %v264
  %270 = vst.msk [vmem:[%s7 + $0x18] sm:$0xff] %vm266, %v265
  // Predicated region
  $region30: #{bidaf_forward.26} parent=0 // pred_check
    _
  $region31: #{bidaf_forward.26} parent=0 // pred_check_branch
    %272 = sbr.rel (0) target = $region33
  $region32: #{bidaf_forward.26} parent=0 // pred_region
    _
  $region33: #{bidaf_forward.26} parent=0 // pred_fallthru
    _
  // Predicated region
  $region34: #{bidaf_forward.26} parent=0 // pred_check
    _
  $region35: #{bidaf_forward.26} parent=0 // pred_check_branch
    %274 = sbr.rel (0) target = $region37
  $region36: #{bidaf_forward.26} parent=0 // pred_region
    _
  $region37: #{bidaf_forward.26} parent=0 // pred_fallthru
    _

</llo_original>
